<compile_context>
chip_gen: v7x
topology: tpu7x:2x2x1
jax: 0.10.0
libtpu: 0.0.40
codegen_flags: <defaults>
</compile_context>

<pallas_src>
import functools
import math

import jax
import jax.numpy as jnp
from jax import lax
from jax.experimental import pallas as pl
from jax.experimental.pallas import tpu as pltpu  # noqa: F401  (TPU backend)

F32 = jnp.float32


# --------------------------- in-kernel helpers -------------------------------

def _layernorm(x, g, b, eps=1e-5):
    mu = jnp.mean(x, axis=-1, keepdims=True)
    xc = x - mu
    var = jnp.mean(xc * xc, axis=-1, keepdims=True)
    return xc * lax.rsqrt(var + eps) * g + b


def _gelu(x):
    # TODO(synk): PyTorch F.gelu defaults to the exact erf form; the tanh
    # approximation is used here for robust TPU lowering.
    return jax.nn.gelu(x, approximate=True)


def _favor_features(q, k, omega_bd, head_ind, head_dim, n_feat):
    """Positive random features for FAVOR+ with heads packed on the lane axis.

    q, k: (R, D); omega_bd / head_ind: (D, H*m) block-diagonal, so all heads are
    produced by a single wide matmul.  Max-subtraction stabilization is applied
    (per-query-row for q, global for k) -- both cancel exactly in num/den.
    """
    scale = head_dim ** -0.25
    qs = q * scale
    ks = k * scale
    qproj = (jnp.dot(qs, omega_bd, preferred_element_type=F32)
             - 0.5 * jnp.dot(qs * qs, head_ind, preferred_element_type=F32))
    kproj = (jnp.dot(ks, omega_bd, preferred_element_type=F32)
             - 0.5 * jnp.dot(ks * ks, head_ind, preferred_element_type=F32))
    q_stab = jnp.max(qproj, axis=-1, keepdims=True)
    k_stab = jnp.max(jnp.max(kproj, axis=-1, keepdims=True), axis=0,
                     keepdims=True)
    fs = n_feat ** -0.5
    qf = fs * jnp.exp(qproj - q_stab)
    kf = fs * jnp.exp(kproj - k_stab)
    return qf, kf


def _favor_attend_proj(qf, kf, v, mask, wo, n_heads, n_feat, head_dim):
    """FAVOR+ attention (masked quadratic form, exact) fused with the output
    projection: per-head result is pushed straight through the matching row
    block of wo and accumulated, keeping everything lane-dense.

    TODO(synk): switch to the kv / prefix-sum linear formulation when seq_len
    is scaled up; the quadratic form is exact but O(L^2).
    """
    m, e = n_feat, head_dim
    acc = None
    for h in range(n_heads):
        s = lax.dot_general(qf[:, h * m:(h + 1) * m], kf[:, h * m:(h + 1) * m],
                            (((1,), (1,)), ((), ())),
                            preferred_element_type=F32)
        s = s * mask                                   # batch-block (&causal) mask
        num = jnp.dot(s, v[:, h * e:(h + 1) * e], preferred_element_type=F32)
        den = jnp.sum(s, axis=-1, keepdims=True)
        head_out = num * pl.reciprocal(den + 1e-6, approx=True)
        contrib = jnp.dot(head_out, wo[h * e:(h + 1) * e, :],
                          preferred_element_type=F32)
        acc = contrib if acc is None else acc + contrib
    return acc


def _softmax_attend_proj(q, k, v, bias, wo, n_heads, head_dim):
    """Full softmax attention (per head) fused with the output projection.
    bias is 0 on same-batch key columns, -1e30 elsewhere."""
    e = head_dim
    scale = e ** -0.5
    acc = None
    for h in range(n_heads):
        s = lax.dot_general(q[:, h * e:(h + 1) * e], k[:, h * e:(h + 1) * e],
                            (((1,), (1,)), ((), ())),
                            preferred_element_type=F32)
        s = s * scale + bias
        s = s - jnp.max(s, axis=-1, keepdims=True)
        p = jnp.exp(s)
        p = p * pl.reciprocal(jnp.sum(p, axis=-1, keepdims=True), approx=True)
        head_out = jnp.dot(p, v[:, h * e:(h + 1) * e],
                           preferred_element_type=F32)
        contrib = jnp.dot(head_out, wo[h * e:(h + 1) * e, :],
                          preferred_element_type=F32)
        acc = contrib if acc is None else acc + contrib
    return acc


# ------------------------------ Pallas kernels --------------------------------

def _embedding_kernel(x_ref, mark_ref, sprev_ref, snext_ref,
                      tok0_ref, tok1_ref, tok2_ref, temp_ref, pos_ref, o_ref):
    """DataEmbedding: circular Conv1d(k=3) token embedding + temporal linear +
    positional embedding.  Circular shifts are matmuls with permutation mats."""
    x = x_ref[...]                                   # (R, C_in)
    x_prev = jnp.dot(sprev_ref[...], x, preferred_element_type=F32)
    x_next = jnp.dot(snext_ref[...], x, preferred_element_type=F32)
    val = (jnp.dot(x_prev, tok0_ref[...], preferred_element_type=F32)
           + jnp.dot(x, tok1_ref[...], preferred_element_type=F32)
           + jnp.dot(x_next, tok2_ref[...], preferred_element_type=F32))
    temp = jnp.dot(mark_ref[...], temp_ref[...], preferred_element_type=F32)
    o_ref[...] = val + temp + pos_ref[...]


def _encoder_layer_kernel(x_ref, wqkv_ref, bqkv_ref, wo_ref, bo_ref,
                          omega_ref, hind_ref, mask_ref,
                          ln1g_ref, ln1b_ref, w1_ref, b1_ref,
                          w2_ref, b2_ref, ln2g_ref, ln2b_ref,
                          o_ref, *, n_heads, head_dim, n_feat):
    x = x_ref[...]                                   # (R, D)
    d = n_heads * head_dim
    qkv = jnp.dot(x, wqkv_ref[...], preferred_element_type=F32) + bqkv_ref[...]
    q = qkv[:, :d]
    k = qkv[:, d:2 * d]
    v = qkv[:, 2 * d:]
    qf, kf = _favor_features(q, k, omega_ref[...], hind_ref[...],
                             head_dim, n_feat)
    attn = _favor_attend_proj(qf, kf, v, mask_ref[...], wo_ref[...],
                              n_heads, n_feat, head_dim) + bo_ref[...]
    y = _layernorm(x + attn, ln1g_ref[...], ln1b_ref[...])
    h = _gelu(jnp.dot(y, w1_ref[...], preferred_element_type=F32) + b1_ref[...])
    h = jnp.dot(h, w2_ref[...], preferred_element_type=F32) + b2_ref[...]
    o_ref[...] = _layernorm(y + h, ln2g_ref[...], ln2b_ref[...])


def _conv_layer_kernel(x_ref, sprev_ref, snext_ref, w0_ref, w1_ref, w2_ref,
                       b_ref, pprev_ref, pnext_ref, padp_ref, padn_ref,
                       sel_ref, o_ref):
    """Distilling ConvLayer: circular Conv1d(k=3) (+BatchNorm folded) + ELU +
    MaxPool1d(k=3, s=2, p=1), all via permutation/selection matmuls."""
    x = x_ref[...]                                   # (R, D)
    x_prev = jnp.dot(sprev_ref[...], x, preferred_element_type=F32)
    x_next = jnp.dot(snext_ref[...], x, preferred_element_type=F32)
    y = (jnp.dot(x_prev, w0_ref[...], preferred_element_type=F32)
         + jnp.dot(x, w1_ref[...], preferred_element_type=F32)
         + jnp.dot(x_next, w2_ref[...], preferred_element_type=F32)
         + b_ref[...])
    y = jnp.where(y > 0, y, jnp.exp(jnp.minimum(y, 0.0)) - 1.0)   # ELU
    y_prev = jnp.dot(pprev_ref[...], y, preferred_element_type=F32) + padp_ref[...]
    y_next = jnp.dot(pnext_ref[...], y, preferred_element_type=F32) + padn_ref[...]
    z = jnp.maximum(jnp.maximum(y_prev, y), y_next)
    o_ref[...] = jnp.dot(sel_ref[...], z, preferred_element_type=F32)


def _decoder_layer_kernel(x_ref, cross_ref,
                          s_wqkv_ref, s_bqkv_ref, s_wo_ref, s_bo_ref,
                          omega_ref, hind_ref, smask_ref,
                          ln1g_ref, ln1b_ref,
                          c_wq_ref, c_bq_ref, c_wkv_ref, c_bkv_ref,
                          c_wo_ref, c_bo_ref, cbias_ref,
                          ln2g_ref, ln2b_ref,
                          w1_ref, b1_ref, w2_ref, b2_ref,
                          ln3g_ref, ln3b_ref,
                          o_ref, *, n_heads, head_dim, n_feat):
    d = n_heads * head_dim
    x = x_ref[...]                                   # (Rq, D)
    cross = cross_ref[...]                           # (Rk, D)
    # -- causal FAVOR+ self-attention --
    qkv = jnp.dot(x, s_wqkv_ref[...], preferred_element_type=F32) + s_bqkv_ref[...]
    q = qkv[:, :d]
    k = qkv[:, d:2 * d]
    v = qkv[:, 2 * d:]
    qf, kf = _favor_features(q, k, omega_ref[...], hind_ref[...],
                             head_dim, n_feat)
    sa = _favor_attend_proj(qf, kf, v, smask_ref[...], s_wo_ref[...],
                            n_heads, n_feat, head_dim) + s_bo_ref[...]
    y = _layernorm(x + sa, ln1g_ref[...], ln1b_ref[...])
    # -- full cross attention --
    cq = jnp.dot(y, c_wq_ref[...], preferred_element_type=F32) + c_bq_ref[...]
    ckv = jnp.dot(cross, c_wkv_ref[...], preferred_element_type=F32) + c_bkv_ref[...]
    ck = ckv[:, :d]
    cv = ckv[:, d:]
    ca = _softmax_attend_proj(cq, ck, cv, cbias_ref[...], c_wo_ref[...],
                              n_heads, head_dim) + c_bo_ref[...]
    z = _layernorm(y + ca, ln2g_ref[...], ln2b_ref[...])
    # -- FFN --
    h = _gelu(jnp.dot(z, w1_ref[...], preferred_element_type=F32) + b1_ref[...])
    h = jnp.dot(h, w2_ref[...], preferred_element_type=F32) + b2_ref[...]
    o_ref[...] = _layernorm(z + h, ln3g_ref[...], ln3b_ref[...])


def _layernorm_kernel(x_ref, g_ref, b_ref, o_ref):
    o_ref[...] = _layernorm(x_ref[...], g_ref[...], b_ref[...])


def _norm_proj_kernel(x_ref, g_ref, b_ref, w_ref, pb_ref, o_ref):
    y = _layernorm(x_ref[...], g_ref[...], b_ref[...])
    o_ref[...] = jnp.dot(y, w_ref[...], preferred_element_type=F32) + pb_ref[...]


# --------------------------- host-side constants ------------------------------

def positional_embedding(length, d_model):
    pos = jnp.arange(length, dtype=F32)[:, None]
    div = jnp.exp(jnp.arange(0, d_model, 2, dtype=F32)
                  * (-math.log(10000.0) / d_model))
    pe = jnp.zeros((length, d_model), F32)
    pe = pe.at[:, 0::2].set(jnp.sin(pos * div))
    pe = pe.at[:, 1::2].set(jnp.cos(pos * div))
    return pe


def _circ_shift(length, delta):
    """(S @ x)[l] = x[(l + delta) mod L]"""
    idx = (jnp.arange(length) + delta) % length
    return jax.nn.one_hot(idx, length, dtype=F32)


def _shift_nc(length, delta):
    """Non-circular shift matrix + additive -1e30 pad for out-of-range rows."""
    idx = jnp.arange(length) + delta
    valid = (idx >= 0) & (idx < length)
    mat = jax.nn.one_hot(jnp.clip(idx, 0, length - 1), length, dtype=F32)
    mat = mat * valid[:, None].astype(F32)
    pad = jnp.where(valid, 0.0, -1e30).astype(F32)[:, None]
    return mat, pad


def _block_diag(mat, batch):
    return jnp.kron(jnp.eye(batch, dtype=F32), mat)


def make_embed_consts(batch, length, d_model):
    return dict(
        sprev=_block_diag(_circ_shift(length, -1), batch),
        snext=_block_diag(_circ_shift(length, +1), batch),
        pos=jnp.tile(positional_embedding(length, d_model), (batch, 1)))


def make_conv_consts(batch, length):
    pprev1, padp1 = _shift_nc(length, -1)
    pnext1, padn1 = _shift_nc(length, +1)
    lout = (length - 1) // 2 + 1          # MaxPool1d(k=3, s=2, p=1)
    sel1 = jax.nn.one_hot(jnp.arange(lout) * 2, length, dtype=F32)
    return dict(
        sprev=_block_diag(_circ_shift(length, -1), batch),
        snext=_block_diag(_circ_shift(length, +1), batch),
        pprev=_block_diag(pprev1, batch), pnext=_block_diag(pnext1, batch),
        padp=jnp.tile(padp1, (batch, 1)), padn=jnp.tile(padn1, (batch, 1)),
        sel=_block_diag(sel1, batch), lout=lout)


def make_attn_mask(batch, length, causal):
    ids = jnp.arange(batch * length)
    bi = ids // length
    pi = ids % length
    same = bi[:, None] == bi[None, :]
    if causal:
        same = same & (pi[None, :] <= pi[:, None])
    return same.astype(F32)


def make_cross_bias(batch, len_q, len_k):
    qb = jnp.arange(batch * len_q) // len_q
    kb = jnp.arange(batch * len_k) // len_k
    return jnp.where(qb[:, None] == kb[None, :], 0.0, -1e30).astype(F32)


def make_head_indicator(n_heads, head_dim, n_feat):
    return jnp.kron(jnp.eye(n_heads, dtype=F32),
                    jnp.ones((head_dim, n_feat), F32))


# ------------------------------ block wrappers --------------------------------

def data_embedding(p, consts, x, x_mark):
    b, l, cin = x.shape
    d = p["tok0"].shape[-1]
    rows = b * l
    x2 = x.reshape(rows, cin).astype(F32)
    m2 = x_mark.reshape(rows, x_mark.shape[-1]).astype(F32)
    return pl.pallas_call(
        _embedding_kernel,
        out_shape=jax.ShapeDtypeStruct((rows, d), F32),
    )(x2, m2, consts["sprev"], consts["snext"],
      p["tok0"], p["tok1"], p["tok2"], p["temporal_w"], consts["pos"])


def encoder_layer_fwd(p, x, mask, head_ind, cfg):
    rows, d = x.shape
    kern = functools.partial(_encoder_layer_kernel,
                             n_heads=cfg["n_heads"],
                             head_dim=d // cfg["n_heads"],
                             n_feat=cfg["num_rand_features"])
    return pl.pallas_call(
        kern, out_shape=jax.ShapeDtypeStruct((rows, d), F32),
    )(x, p["wqkv"], p["bqkv"], p["wo"], p["bo"],
      p["omega_bd"], head_ind, mask,
      p["ln1_g"], p["ln1_b"], p["w1"], p["b1"], p["w2"], p["b2"],
      p["ln2_g"], p["ln2_b"])


def conv_layer_fwd(p, cv, x):
    rows_out = cv["sel"].shape[0]
    d = x.shape[-1]
    return pl.pallas_call(
        _conv_layer_kernel,
        out_shape=jax.ShapeDtypeStruct((rows_out, d), F32),
    )(x, cv["sprev"], cv["snext"], p["w0"], p["w1"], p["w2"], p["b"],
      cv["pprev"], cv["pnext"], cv["padp"], cv["padn"], cv["sel"])


def decoder_layer_fwd(p, x, cross, smask, cbias, head_ind, cfg):
    rows, d = x.shape
    kern = functools.partial(_decoder_layer_kernel,
                             n_heads=cfg["n_heads"],
                             head_dim=d // cfg["n_heads"],
                             n_feat=cfg["num_rand_features"])
    return pl.pallas_call(
        kern, out_shape=jax.ShapeDtypeStruct((rows, d), F32),
    )(x, cross,
      p["self_wqkv"], p["self_bqkv"], p["self_wo"], p["self_bo"],
      p["omega_bd"], head_ind, smask,
      p["ln1_g"], p["ln1_b"],
      p["cross_wq"], p["cross_bq"], p["cross_wkv"], p["cross_bkv"],
      p["cross_wo"], p["cross_bo"], cbias,
      p["ln2_g"], p["ln2_b"],
      p["w1"], p["b1"], p["w2"], p["b2"],
      p["ln3_g"], p["ln3_b"])


def layernorm_fwd(x, g, b):
    return pl.pallas_call(
        _layernorm_kernel,
        out_shape=jax.ShapeDtypeStruct(x.shape, F32))(x, g, b)


def norm_proj_fwd(x, g, b, w, pb):
    rows = x.shape[0]
    c_out = w.shape[-1]
    return pl.pallas_call(
        _norm_proj_kernel,
        out_shape=jax.ShapeDtypeStruct((rows, c_out), F32))(x, g, b, w, pb)


# ------------------------------ model forward ---------------------------------

def model_forward(params, cfg, x_enc, x_mark_enc, x_dec, x_mark_dec):
    batch, len_enc, _ = x_enc.shape
    len_dec = x_dec.shape[1]
    d = cfg["d_model"]
    h = cfg["n_heads"]
    e = d // h
    m = cfg["num_rand_features"]
    head_ind = make_head_indicator(h, e, m)

    # ---- encoder ----
    x = data_embedding(params["enc_emb"], make_embed_consts(batch, len_enc, d),
                       x_enc, x_mark_enc)                       # (B*Le, D)
    enc_layers = params["encoder"]["layers"]
    conv_layers = params["encoder"]["convs"]
    cur_len = len_enc
    for i, cp in enumerate(conv_layers):
        mask = make_attn_mask(batch, cur_len, causal=False)
        x = encoder_layer_fwd(enc_layers[i], x, mask, head_ind, cfg)
        cv = make_conv_consts(batch, cur_len)
        x = conv_layer_fwd(cp, cv, x)
        cur_len = cv["lout"]
    mask = make_attn_mask(batch, cur_len, causal=False)
    x = encoder_layer_fwd(enc_layers[-1], x, mask, head_ind, cfg)
    enc_out = layernorm_fwd(x, params["encoder"]["norm_g"],
                            params["encoder"]["norm_b"])        # (B*Lenc, D)
    enc_len = cur_len

    # ---- decoder ----
    y = data_embedding(params["dec_emb"], make_embed_consts(batch, len_dec, d),
                       x_dec, x_mark_dec)                       # (B*Ld, D)
    smask = make_attn_mask(batch, len_dec, causal=True)
    cbias = make_cross_bias(batch, len_dec, enc_len)
    for lp in params["decoder"]["layers"]:
        y = decoder_layer_fwd(lp, y, enc_out, smask, cbias, head_ind, cfg)
    out = norm_proj_fwd(y, params["decoder"]["norm_g"],
                        params["decoder"]["norm_b"],
                        params["decoder"]["proj_w"], params["decoder"]["proj_b"])
    out = out.reshape(batch, len_dec, -1)
    return out[:, -cfg["pred_len"]:, :]


# ------------------------------ parameter init --------------------------------

def init_params(cfg, key):
    keys = iter(jax.random.split(key, 512))

    def nrm(shape, scale=0.02):
        return scale * jax.random.normal(next(keys), shape, dtype=F32)

    d, h = cfg["d_model"], cfg["n_heads"]
    e = d // h
    dff, m = cfg["d_ff"], cfg["num_rand_features"]
    zeros2 = lambda n: jnp.zeros((1, n), F32)
    ones2 = lambda n: jnp.ones((1, n), F32)

    def enc_layer_p():
        omega = jax.random.normal(next(keys), (e, m), F32)
        return dict(wqkv=nrm((d, 3 * d)), bqkv=zeros2(3 * d),
                    wo=nrm((d, d)), bo=zeros2(d),
                    omega_bd=jnp.kron(jnp.eye(h, dtype=F32), omega),
                    w1=nrm((d, dff)), b1=zeros2(dff),
                    w2=nrm((dff, d)), b2=zeros2(d),
                    ln1_g=ones2(d), ln1_b=zeros2(d),
                    ln2_g=ones2(d), ln2_b=zeros2(d))

    def conv_layer_p():
        # Conv1d(k=3, circular, bias) with eval-mode BatchNorm1d folded in.
        w = nrm((3, d, d))
        b = jnp.zeros((d,), F32)
        bn_g, bn_b = jnp.ones((d,), F32), jnp.zeros((d,), F32)
        bn_rm, bn_rv = jnp.zeros((d,), F32), jnp.ones((d,), F32)
        s = bn_g / jnp.sqrt(bn_rv + 1e-5)
        return dict(w0=w[0] * s[None, :], w1=w[1] * s[None, :],
                    w2=w[2] * s[None, :],
                    b=((b - bn_rm) * s + bn_b).reshape(1, d))

    def dec_layer_p():
        omega = jax.random.normal(next(keys), (e, m), F32)
        return dict(self_wqkv=nrm((d, 3 * d)), self_bqkv=zeros2(3 * d),
                    self_wo=nrm((d, d)), self_bo=zeros2(d),
                    omega_bd=jnp.kron(jnp.eye(h, dtype=F32), omega),
                    cross_wq=nrm((d, d)), cross_bq=zeros2(d),
                    cross_wkv=nrm((d, 2 * d)), cross_bkv=zeros2(2 * d),
                    cross_wo=nrm((d, d)), cross_bo=zeros2(d),
                    w1=nrm((d, dff)), b1=zeros2(dff),
                    w2=nrm((dff, d)), b2=zeros2(d),
                    ln1_g=ones2(d), ln1_b=zeros2(d),
                    ln2_g=ones2(d), ln2_b=zeros2(d),
                    ln3_g=ones2(d), ln3_b=zeros2(d))

    return dict(
        enc_emb=dict(tok0=nrm((cfg["enc_in"], d)), tok1=nrm((cfg["enc_in"], d)),
                     tok2=nrm((cfg["enc_in"], d)),
                     temporal_w=nrm((cfg["mark_in"], d))),
        dec_emb=dict(tok0=nrm((cfg["dec_in"], d)), tok1=nrm((cfg["dec_in"], d)),
                     tok2=nrm((cfg["dec_in"], d)),
                     temporal_w=nrm((cfg["mark_in"], d))),
        encoder=dict(layers=[enc_layer_p() for _ in range(cfg["e_layers"])],
                     convs=([conv_layer_p()
                             for _ in range(cfg["e_layers"] - 1)]
                            if cfg["distil"] else []),
                     norm_g=ones2(d), norm_b=zeros2(d)),
        decoder=dict(layers=[dec_layer_p() for _ in range(cfg["d_layers"])],
                     norm_g=ones2(d), norm_b=zeros2(d),
                     proj_w=nrm((d, cfg["c_out"])),
                     proj_b=zeros2(cfg["c_out"])),
    )


# ---------------------------------- main ---------------------------------------

if __name__ == "__main__":
    cfg = dict(enc_in=4, dec_in=4, c_out=4, mark_in=4,   # freq='h' -> 4 marks
               d_model=32, n_heads=4, d_ff=64,
               e_layers=2, d_layers=1, num_rand_features=16,
               seq_len=8, label_len=4, pred_len=4, distil=True)

    key = jax.random.PRNGKey(0)
    k1, k2, k3, k4, kp = jax.random.split(key, 5)
    B = 2
    dec_len = cfg["label_len"] + cfg["pred_len"]
    x_enc = jax.random.normal(k1, (B, cfg["seq_len"], cfg["enc_in"]), F32)
    x_mark_enc = jax.random.normal(k2, (B, cfg["seq_len"], cfg["mark_in"]), F32)
    x_dec = jax.random.normal(k3, (B, dec_len, cfg["dec_in"]), F32)
    x_mark_dec = jax.random.normal(k4, (B, dec_len, cfg["mark_in"]), F32)

    params = init_params(cfg, kp)

    fwd = jax.jit(lambda a, b, c, d: model_forward(params, cfg, a, b, c, d))
    out = jax.block_until_ready(fwd(x_enc, x_mark_enc, x_dec, x_mark_dec))

    assert out.shape == (B, cfg["pred_len"], cfg["c_out"]), out.shape
    assert bool(jnp.all(jnp.isfinite(out)))
    print("KERNEL_OK")
</pallas_src>

<mosaic_0001>
module attributes {stable_mosaic.version = 11 : i64} {
  func.func @_embedding_kernel(%arg0: memref<16x4xf32, #tpu.memory_space<vmem>>, %arg1: memref<16x4xf32, #tpu.memory_space<vmem>>, %arg2: memref<16x16xf32, #tpu.memory_space<vmem>>, %arg3: memref<16x16xf32, #tpu.memory_space<vmem>>, %arg4: memref<4x32xf32, #tpu.memory_space<vmem>>, %arg5: memref<4x32xf32, #tpu.memory_space<vmem>>, %arg6: memref<4x32xf32, #tpu.memory_space<vmem>>, %arg7: memref<4x32xf32, #tpu.memory_space<vmem>>, %arg8: memref<16x32xf32, #tpu.memory_space<vmem>>, %arg9: memref<16x32xf32, #tpu.memory_space<vmem>>) attributes {dimension_semantics = [], scalar_prefetch = 0 : i64, scratch_operands = 0 : i64, tpu.core_type = #tpu.core_type<tc>} {
    %c0 = arith.constant 0 : index
    %c0_0 = arith.constant 0 : index
    %0 = vector.load %arg0[%c0, %c0_0] : memref<16x4xf32, #tpu.memory_space<vmem>>, vector<16x4xf32>
    %c0_1 = arith.constant 0 : index
    %c0_2 = arith.constant 0 : index
    %1 = vector.load %arg2[%c0_1, %c0_2] : memref<16x16xf32, #tpu.memory_space<vmem>>, vector<16x16xf32>
    %cst = arith.constant dense<0.000000e+00> : vector<16x4xf32>
    %2 = tpu.matmul %1, %0, %cst {dimension_numbers = #tpu.dot_dimension_numbers<[1], [0], [0], [1], [0, 0, 1, 1], [], []>} : vector<16x16xf32>, vector<16x4xf32>, vector<16x4xf32> -> vector<16x4xf32>
    %c0_3 = arith.constant 0 : index
    %c0_4 = arith.constant 0 : index
    %3 = vector.load %arg3[%c0_3, %c0_4] : memref<16x16xf32, #tpu.memory_space<vmem>>, vector<16x16xf32>
    %cst_5 = arith.constant dense<0.000000e+00> : vector<16x4xf32>
    %4 = tpu.matmul %3, %0, %cst_5 {dimension_numbers = #tpu.dot_dimension_numbers<[1], [0], [0], [1], [0, 0, 1, 1], [], []>} : vector<16x16xf32>, vector<16x4xf32>, vector<16x4xf32> -> vector<16x4xf32>
    %c0_6 = arith.constant 0 : index
    %c0_7 = arith.constant 0 : index
    %5 = vector.load %arg4[%c0_6, %c0_7] : memref<4x32xf32, #tpu.memory_space<vmem>>, vector<4x32xf32>
    %cst_8 = arith.constant dense<0.000000e+00> : vector<16x32xf32>
    %6 = tpu.matmul %2, %5, %cst_8 {dimension_numbers = #tpu.dot_dimension_numbers<[1], [0], [0], [1], [0, 0, 1, 1], [], []>} : vector<16x4xf32>, vector<4x32xf32>, vector<16x32xf32> -> vector<16x32xf32>
    %c0_9 = arith.constant 0 : index
    %c0_10 = arith.constant 0 : index
    %7 = vector.load %arg5[%c0_9, %c0_10] : memref<4x32xf32, #tpu.memory_space<vmem>>, vector<4x32xf32>
    %cst_11 = arith.constant dense<0.000000e+00> : vector<16x32xf32>
    %8 = tpu.matmul %0, %7, %cst_11 {dimension_numbers = #tpu.dot_dimension_numbers<[1], [0], [0], [1], [0, 0, 1, 1], [], []>} : vector<16x4xf32>, vector<4x32xf32>, vector<16x32xf32> -> vector<16x32xf32>
    %9 = arith.addf %6, %8 : vector<16x32xf32>
    %c0_12 = arith.constant 0 : index
    %c0_13 = arith.constant 0 : index
    %10 = vector.load %arg6[%c0_12, %c0_13] : memref<4x32xf32, #tpu.memory_space<vmem>>, vector<4x32xf32>
    %cst_14 = arith.constant dense<0.000000e+00> : vector<16x32xf32>
    %11 = tpu.matmul %4, %10, %cst_14 {dimension_numbers = #tpu.dot_dimension_numbers<[1], [0], [0], [1], [0, 0, 1, 1], [], []>} : vector<16x4xf32>, vector<4x32xf32>, vector<16x32xf32> -> vector<16x32xf32>
    %12 = arith.addf %9, %11 : vector<16x32xf32>
    %c0_15 = arith.constant 0 : index
    %c0_16 = arith.constant 0 : index
    %13 = vector.load %arg1[%c0_15, %c0_16] : memref<16x4xf32, #tpu.memory_space<vmem>>, vector<16x4xf32>
    %c0_17 = arith.constant 0 : index
    %c0_18 = arith.constant 0 : index
    %14 = vector.load %arg7[%c0_17, %c0_18] : memref<4x32xf32, #tpu.memory_space<vmem>>, vector<4x32xf32>
    %cst_19 = arith.constant dense<0.000000e+00> : vector<16x32xf32>
    %15 = tpu.matmul %13, %14, %cst_19 {dimension_numbers = #tpu.dot_dimension_numbers<[1], [0], [0], [1], [0, 0, 1, 1], [], []>} : vector<16x4xf32>, vector<4x32xf32>, vector<16x32xf32> -> vector<16x32xf32>
    %16 = arith.addf %12, %15 : vector<16x32xf32>
    %c0_20 = arith.constant 0 : index
    %c0_21 = arith.constant 0 : index
    %17 = vector.load %arg8[%c0_20, %c0_21] : memref<16x32xf32, #tpu.memory_space<vmem>>, vector<16x32xf32>
    %18 = arith.addf %16, %17 : vector<16x32xf32>
    %c0_22 = arith.constant 0 : index
    %c0_23 = arith.constant 0 : index
    %19 = vector.load %arg9[%c0_22, %c0_23] : memref<16x32xf32, #tpu.memory_space<vmem>>, vector<16x32xf32>
    tpu.vector_store %arg9[%c0_22, %c0_23], %18 {strides = array<i32>} : memref<16x32xf32, #tpu.memory_space<vmem>>, vector<16x32xf32>,
    return
  }
}

module attributes {stable_mosaic.version = 11 : i64} {
  func.func @_encoder_layer_kernel(%arg0: memref<16x32xf32, #tpu.memory_space<vmem>>, %arg1: memref<32x96xf32, #tpu.memory_space<vmem>>, %arg2: memref<1x96xf32, #tpu.memory_space<vmem>>, %arg3: memref<32x32xf32, #tpu.memory_space<vmem>>, %arg4: memref<1x32xf32, #tpu.memory_space<vmem>>, %arg5: memref<32x64xf32, #tpu.memory_space<vmem>>, %arg6: memref<32x64xf32, #tpu.memory_space<vmem>>, %arg7: memref<16x16xf32, #tpu.memory_space<vmem>>, %arg8: memref<1x32xf32, #tpu.memory_space<vmem>>, %arg9: memref<1x32xf32, #tpu.memory_space<vmem>>, %arg10: memref<32x64xf32, #tpu.memory_space<vmem>>, %arg11: memref<1x64xf32, #tpu.memory_space<vmem>>, %arg12: memref<64x32xf32, #tpu.memory_space<vmem>>, %arg13: memref<1x32xf32, #tpu.memory_space<vmem>>, %arg14: memref<1x32xf32, #tpu.memory_space<vmem>>, %arg15: memref<1x32xf32, #tpu.memory_space<vmem>>, %arg16: memref<16x32xf32, #tpu.memory_space<vmem>>) attributes {dimension_semantics = [], scalar_prefetch = 0 : i64, scratch_operands = 0 : i64, tpu.core_type = #tpu.core_type<tc>} {
    %c0 = arith.constant 0 : index
    %c0_0 = arith.constant 0 : index
    %0 = vector.load %arg0[%c0, %c0_0] : memref<16x32xf32, #tpu.memory_space<vmem>>, vector<16x32xf32>
    %c0_1 = arith.constant 0 : index
    %c0_2 = arith.constant 0 : index
    %1 = vector.load %arg1[%c0_1, %c0_2] : memref<32x96xf32, #tpu.memory_space<vmem>>, vector<32x96xf32>
    %cst = arith.constant dense<0.000000e+00> : vector<16x96xf32>
    %2 = tpu.matmul %0, %1, %cst {dimension_numbers = #tpu.dot_dimension_numbers<[1], [0], [0], [1], [0, 0, 1, 1], [], []>} : vector<16x32xf32>, vector<32x96xf32>, vector<16x96xf32> -> vector<16x96xf32>
    %c0_3 = arith.constant 0 : index
    %c0_4 = arith.constant 0 : index
    %3 = vector.load %arg2[%c0_3, %c0_4] : memref<1x96xf32, #tpu.memory_space<vmem>>, vector<1x96xf32>
    %4 = vector.broadcast %3 : vector<1x96xf32> to vector<16x96xf32>
    %5 = arith.addf %2, %4 : vector<16x96xf32>
    %6 = vector.extract_strided_slice %5 {offsets = [0, 0], sizes = [16, 32], strides = [1, 1]} : vector<16x96xf32> to vector<16x32xf32>
    %7 = vector.extract_strided_slice %5 {offsets = [0, 32], sizes = [16, 32], strides = [1, 1]} : vector<16x96xf32> to vector<16x32xf32>
    %8 = vector.extract_strided_slice %5 {offsets = [0, 64], sizes = [16, 32], strides = [1, 1]} : vector<16x96xf32> to vector<16x32xf32>
    %c0_5 = arith.constant 0 : index
    %c0_6 = arith.constant 0 : index
    %9 = vector.load %arg5[%c0_5, %c0_6] : memref<32x64xf32, #tpu.memory_space<vmem>>, vector<32x64xf32>
    %c0_7 = arith.constant 0 : index
    %c0_8 = arith.constant 0 : index
    %10 = vector.load %arg6[%c0_7, %c0_8] : memref<32x64xf32, #tpu.memory_space<vmem>>, vector<32x64xf32>
    %cst_9 = arith.constant 0.594603539 : f32
    %11 = vector.broadcast %cst_9 : f32 to vector<16x32xf32>
    %12 = arith.mulf %6, %11 : vector<16x32xf32>
    %cst_10 = arith.constant 0.594603539 : f32
    %13 = vector.broadcast %cst_10 : f32 to vector<16x32xf32>
    %14 = arith.mulf %7, %13 : vector<16x32xf32>
    %cst_11 = arith.constant dense<0.000000e+00> : vector<16x64xf32>
    %15 = tpu.matmul %12, %9, %cst_11 {dimension_numbers = #tpu.dot_dimension_numbers<[1], [0], [0], [1], [0, 0, 1, 1], [], []>} : vector<16x32xf32>, vector<32x64xf32>, vector<16x64xf32> -> vector<16x64xf32>
    %16 = arith.mulf %12, %12 : vector<16x32xf32>
    %cst_12 = arith.constant dense<0.000000e+00> : vector<16x64xf32>
    %17 = tpu.matmul %16, %10, %cst_12 {dimension_numbers = #tpu.dot_dimension_numbers<[1], [0], [0], [1], [0, 0, 1, 1], [], []>} : vector<16x32xf32>, vector<32x64xf32>, vector<16x64xf32> -> vector<16x64xf32>
    %cst_13 = arith.constant 5.000000e-01 : f32
    %18 = vector.broadcast %cst_13 : f32 to vector<16x64xf32>
    %19 = arith.mulf %18, %17 : vector<16x64xf32>
    %20 = arith.subf %15, %19 : vector<16x64xf32>
    %cst_14 = arith.constant dense<0.000000e+00> : vector<16x64xf32>
    %21 = tpu.matmul %14, %9, %cst_14 {dimension_numbers = #tpu.dot_dimension_numbers<[1], [0], [0], [1], [0, 0, 1, 1], [], []>} : vector<16x32xf32>, vector<32x64xf32>, vector<16x64xf32> -> vector<16x64xf32>
    %22 = arith.mulf %14, %14 : vector<16x32xf32>
    %cst_15 = arith.constant dense<0.000000e+00> : vector<16x64xf32>
    %23 = tpu.matmul %22, %10, %cst_15 {dimension_numbers = #tpu.dot_dimension_numbers<[1], [0], [0], [1], [0, 0, 1, 1], [], []>} : vector<16x32xf32>, vector<32x64xf32>, vector<16x64xf32> -> vector<16x64xf32>
    %cst_16 = arith.constant 5.000000e-01 : f32
    %24 = vector.broadcast %cst_16 : f32 to vector<16x64xf32>
    %25 = arith.mulf %24, %23 : vector<16x64xf32>
    %26 = arith.subf %21, %25 : vector<16x64xf32>
    %cst_17 = arith.constant dense<0xFF800000> : vector<16xf32>
    %27 = vector.multi_reduction <maximumf>, %20, %cst_17 [1] : vector<16x64xf32> to vector<16xf32>
    %28 = vector.shape_cast %27 : vector<16xf32> to vector<16x1xf32>
    %cst_18 = arith.constant dense<0xFF800000> : vector<16xf32>
    %29 = vector.multi_reduction <maximumf>, %26, %cst_18 [1] : vector<16x64xf32> to vector<16xf32>
    %30 = vector.shape_cast %29 : vector<16xf32> to vector<16x1xf32>
    %cst_19 = arith.constant dense<0xFF800000> : vector<1xf32>
    %31 = vector.multi_reduction <maximumf>, %30, %cst_19 [0] : vector<16x1xf32> to vector<1xf32>
    %32 = vector.shape_cast %31 : vector<1xf32> to vector<1x1xf32>
    %33 = vector.broadcast %28 : vector<16x1xf32> to vector<16x64xf32>
    %34 = arith.subf %20, %33 : vector<16x64xf32>
    %35 = math.exp %34 : vector<16x64xf32>
    %cst_20 = arith.constant 2.500000e-01 : f32
    %36 = vector.broadcast %cst_20 : f32 to vector<16x64xf32>
    %37 = arith.mulf %36, %35 : vector<16x64xf32>
    %38 = vector.broadcast %32 : vector<1x1xf32> to vector<16x64xf32>
    %39 = arith.subf %26, %38 : vector<16x64xf32>
    %40 = math.exp %39 : vector<16x64xf32>
    %cst_21 = arith.constant 2.500000e-01 : f32
    %41 = vector.broadcast %cst_21 : f32 to vector<16x64xf32>
    %42 = arith.mulf %41, %40 : vector<16x64xf32>
    %c0_22 = arith.constant 0 : index
    %c0_23 = arith.constant 0 : index
    %43 = vector.load %arg7[%c0_22, %c0_23] : memref<16x16xf32, #tpu.memory_space<vmem>>, vector<16x16xf32>
    %c0_24 = arith.constant 0 : index
    %c0_25 = arith.constant 0 : index
    %44 = vector.load %arg3[%c0_24, %c0_25] : memref<32x32xf32, #tpu.memory_space<vmem>>, vector<32x32xf32>
    %45 = vector.extract_strided_slice %37 {offsets = [0, 0], sizes = [16, 16], strides = [1, 1]} : vector<16x64xf32> to vector<16x16xf32>
    %46 = vector.extract_strided_slice %42 {offsets = [0, 0], sizes = [16, 16], strides = [1, 1]} : vector<16x64xf32> to vector<16x16xf32>
    %cst_26 = arith.constant dense<0.000000e+00> : vector<16x16xf32>
    %47 = tpu.matmul %45, %46, %cst_26 {dimension_numbers = #tpu.dot_dimension_numbers<[1], [1], [0], [0], [0, 0, 1, 0], [], []>} : vector<16x16xf32>, vector<16x16xf32>, vector<16x16xf32> -> vector<16x16xf32>
    %48 = arith.mulf %47, %43 : vector<16x16xf32>
    %49 = vector.extract_strided_slice %8 {offsets = [0, 0], sizes = [16, 8], strides = [1, 1]} : vector<16x32xf32> to vector<16x8xf32>
    %cst_27 = arith.constant dense<0.000000e+00> : vector<16x8xf32>
    %50 = tpu.matmul %48, %49, %cst_27 {dimension_numbers = #tpu.dot_dimension_numbers<[1], [0], [0], [1], [0, 0, 1, 1], [], []>} : vector<16x16xf32>, vector<16x8xf32>, vector<16x8xf32> -> vector<16x8xf32>
    %cst_28 = arith.constant dense<0.000000e+00> : vector<16xf32>
    %51 = vector.multi_reduction <add>, %48, %cst_28 [1] : vector<16x16xf32> to vector<16xf32>
    %52 = vector.shape_cast %51 : vector<16xf32> to vector<16x1xf32>
    %cst_29 = arith.constant 9.99999997E-7 : f32
    %53 = vector.broadcast %cst_29 : f32 to vector<16x1xf32>
    %54 = arith.addf %52, %53 : vector<16x1xf32>
    %55 = tpu.reciprocal %54 {approx = true} : vector<16x1xf32> -> vector<16x1xf32>
    %56 = vector.broadcast %55 : vector<16x1xf32> to vector<16x8xf32>
    %57 = arith.mulf %50, %56 : vector<16x8xf32>
    %58 = vector.extract_strided_slice %44 {offsets = [0, 0], sizes = [8, 32], strides = [1, 1]} : vector<32x32xf32> to vector<8x32xf32>
    %cst_30 = arith.constant dense<0.000000e+00> : vector<16x32xf32>
    %59 = tpu.matmul %57, %58, %cst_30 {dimension_numbers = #tpu.dot_dimension_numbers<[1], [0], [0], [1], [0, 0, 1, 1], [], []>} : vector<16x8xf32>, vector<8x32xf32>, vector<16x32xf32> -> vector<16x32xf32>
    %60 = vector.extract_strided_slice %37 {offsets = [0, 16], sizes = [16, 16], strides = [1, 1]} : vector<16x64xf32> to vector<16x16xf32>
    %61 = vector.extract_strided_slice %42 {offsets = [0, 16], sizes = [16, 16], strides = [1, 1]} : vector<16x64xf32> to vector<16x16xf32>
    %cst_31 = arith.constant dense<0.000000e+00> : vector<16x16xf32>
    %62 = tpu.matmul %60, %61, %cst_31 {dimension_numbers = #tpu.dot_dimension_numbers<[1], [1], [0], [0], [0, 0, 1, 0], [], []>} : vector<16x16xf32>, vector<16x16xf32>, vector<16x16xf32> -> vector<16x16xf32>
    %63 = arith.mulf %62, %43 : vector<16x16xf32>
    %64 = vector.extract_strided_slice %8 {offsets = [0, 8], sizes = [16, 8], strides = [1, 1]} : vector<16x32xf32> to vector<16x8xf32>
    %cst_32 = arith.constant dense<0.000000e+00> : vector<16x8xf32>
    %65 = tpu.matmul %63, %64, %cst_32 {dimension_numbers = #tpu.dot_dimension_numbers<[1], [0], [0], [1], [0, 0, 1, 1], [], []>} : vector<16x16xf32>, vector<16x8xf32>, vector<16x8xf32> -> vector<16x8xf32>
    %cst_33 = arith.constant dense<0.000000e+00> : vector<16xf32>
    %66 = vector.multi_reduction <add>, %63, %cst_33 [1] : vector<16x16xf32> to vector<16xf32>
    %67 = vector.shape_cast %66 : vector<16xf32> to vector<16x1xf32>
    %cst_34 = arith.constant 9.99999997E-7 : f32
    %68 = vector.broadcast %cst_34 : f32 to vector<16x1xf32>
    %69 = arith.addf %67, %68 : vector<16x1xf32>
    %70 = tpu.reciprocal %69 {approx = true} : vector<16x1xf32> -> vector<16x1xf32>
    %71 = vector.broadcast %70 : vector<16x1xf32> to vector<16x8xf32>
    %72 = arith.mulf %65, %71 : vector<16x8xf32>
    %73 = vector.extract_strided_slice %44 {offsets = [8, 0], sizes = [8, 32], strides = [1, 1]} : vector<32x32xf32> to vector<8x32xf32>
    %cst_35 = arith.constant dense<0.000000e+00> : vector<16x32xf32>
    %74 = tpu.matmul %72, %73, %cst_35 {dimension_numbers = #tpu.dot_dimension_numbers<[1], [0], [0], [1], [0, 0, 1, 1], [], []>} : vector<16x8xf32>, vector<8x32xf32>, vector<16x32xf32> -> vector<16x32xf32>
    %75 = arith.addf %59, %74 : vector<16x32xf32>
    %76 = vector.extract_strided_slice %37 {offsets = [0, 32], sizes = [16, 16], strides = [1, 1]} : vector<16x64xf32> to vector<16x16xf32>
    %77 = vector.extract_strided_slice %42 {offsets = [0, 32], sizes = [16, 16], strides = [1, 1]} : vector<16x64xf32> to vector<16x16xf32>
    %cst_36 = arith.constant dense<0.000000e+00> : vector<16x16xf32>
    %78 = tpu.matmul %76, %77, %cst_36 {dimension_numbers = #tpu.dot_dimension_numbers<[1], [1], [0], [0], [0, 0, 1, 0], [], []>} : vector<16x16xf32>, vector<16x16xf32>, vector<16x16xf32> -> vector<16x16xf32>
    %79 = arith.mulf %78, %43 : vector<16x16xf32>
    %80 = vector.extract_strided_slice %8 {offsets = [0, 16], sizes = [16, 8], strides = [1, 1]} : vector<16x32xf32> to vector<16x8xf32>
    %cst_37 = arith.constant dense<0.000000e+00> : vector<16x8xf32>
    %81 = tpu.matmul %79, %80, %cst_37 {dimension_numbers = #tpu.dot_dimension_numbers<[1], [0], [0], [1], [0, 0, 1, 1], [], []>} : vector<16x16xf32>, vector<16x8xf32>, vector<16x8xf32> -> vector<16x8xf32>
    %cst_38 = arith.constant dense<0.000000e+00> : vector<16xf32>
    %82 = vector.multi_reduction <add>, %79, %cst_38 [1] : vector<16x16xf32> to vector<16xf32>
    %83 = vector.shape_cast %82 : vector<16xf32> to vector<16x1xf32>
    %cst_39 = arith.constant 9.99999997E-7 : f32
    %84 = vector.broadcast %cst_39 : f32 to vector<16x1xf32>
    %85 = arith.addf %83, %84 : vector<16x1xf32>
    %86 = tpu.reciprocal %85 {approx = true} : vector<16x1xf32> -> vector<16x1xf32>
    %87 = vector.broadcast %86 : vector<16x1xf32> to vector<16x8xf32>
    %88 = arith.mulf %81, %87 : vector<16x8xf32>
    %89 = vector.extract_strided_slice %44 {offsets = [16, 0], sizes = [8, 32], strides = [1, 1]} : vector<32x32xf32> to vector<8x32xf32>
    %cst_40 = arith.constant dense<0.000000e+00> : vector<16x32xf32>
    %90 = tpu.matmul %88, %89, %cst_40 {dimension_numbers = #tpu.dot_dimension_numbers<[1], [0], [0], [1], [0, 0, 1, 1], [], []>} : vector<16x8xf32>, vector<8x32xf32>, vector<16x32xf32> -> vector<16x32xf32>
    %91 = arith.addf %75, %90 : vector<16x32xf32>
    %92 = vector.extract_strided_slice %37 {offsets = [0, 48], sizes = [16, 16], strides = [1, 1]} : vector<16x64xf32> to vector<16x16xf32>
    %93 = vector.extract_strided_slice %42 {offsets = [0, 48], sizes = [16, 16], strides = [1, 1]} : vector<16x64xf32> to vector<16x16xf32>
    %cst_41 = arith.constant dense<0.000000e+00> : vector<16x16xf32>
    %94 = tpu.matmul %92, %93, %cst_41 {dimension_numbers = #tpu.dot_dimension_numbers<[1], [1], [0], [0], [0, 0, 1, 0], [], []>} : vector<16x16xf32>, vector<16x16xf32>, vector<16x16xf32> -> vector<16x16xf32>
    %95 = arith.mulf %94, %43 : vector<16x16xf32>
    %96 = vector.extract_strided_slice %8 {offsets = [0, 24], sizes = [16, 8], strides = [1, 1]} : vector<16x32xf32> to vector<16x8xf32>
    %cst_42 = arith.constant dense<0.000000e+00> : vector<16x8xf32>
    %97 = tpu.matmul %95, %96, %cst_42 {dimension_numbers = #tpu.dot_dimension_numbers<[1], [0], [0], [1], [0, 0, 1, 1], [], []>} : vector<16x16xf32>, vector<16x8xf32>, vector<16x8xf32> -> vector<16x8xf32>
    %cst_43 = arith.constant dense<0.000000e+00> : vector<16xf32>
    %98 = vector.multi_reduction <add>, %95, %cst_43 [1] : vector<16x16xf32> to vector<16xf32>
    %99 = vector.shape_cast %98 : vector<16xf32> to vector<16x1xf32>
    %cst_44 = arith.constant 9.99999997E-7 : f32
    %100 = vector.broadcast %cst_44 : f32 to vector<16x1xf32>
    %101 = arith.addf %99, %100 : vector<16x1xf32>
    %102 = tpu.reciprocal %101 {approx = true} : vector<16x1xf32> -> vector<16x1xf32>
    %103 = vector.broadcast %102 : vector<16x1xf32> to vector<16x8xf32>
    %104 = arith.mulf %97, %103 : vector<16x8xf32>
    %105 = vector.extract_strided_slice %44 {offsets = [24, 0], sizes = [8, 32], strides = [1, 1]} : vector<32x32xf32> to vector<8x32xf32>
    %cst_45 = arith.constant dense<0.000000e+00> : vector<16x32xf32>
    %106 = tpu.matmul %104, %105, %cst_45 {dimension_numbers = #tpu.dot_dimension_numbers<[1], [0], [0], [1], [0, 0, 1, 1], [], []>} : vector<16x8xf32>, vector<8x32xf32>, vector<16x32xf32> -> vector<16x32xf32>
    %107 = arith.addf %91, %106 : vector<16x32xf32>
    %c0_46 = arith.constant 0 : index
    %c0_47 = arith.constant 0 : index
    %108 = vector.load %arg4[%c0_46, %c0_47] : memref<1x32xf32, #tpu.memory_space<vmem>>, vector<1x32xf32>
    %109 = vector.broadcast %108 : vector<1x32xf32> to vector<16x32xf32>
    %110 = arith.addf %107, %109 : vector<16x32xf32>
    %111 = arith.addf %0, %110 : vector<16x32xf32>
    %c0_48 = arith.constant 0 : index
    %c0_49 = arith.constant 0 : index
    %112 = vector.load %arg8[%c0_48, %c0_49] : memref<1x32xf32, #tpu.memory_space<vmem>>, vector<1x32xf32>
    %c0_50 = arith.constant 0 : index
    %c0_51 = arith.constant 0 : index
    %113 = vector.load %arg9[%c0_50, %c0_51] : memref<1x32xf32, #tpu.memory_space<vmem>>, vector<1x32xf32>
    %cst_52 = arith.constant dense<0.000000e+00> : vector<16xf32>
    %114 = vector.multi_reduction <add>, %111, %cst_52 [1] : vector<16x32xf32> to vector<16xf32>
    %115 = vector.shape_cast %114 : vector<16xf32> to vector<16x1xf32>
    %cst_53 = arith.constant 3.200000e+01 : f32
    %116 = vector.broadcast %cst_53 : f32 to vector<16x1xf32>
    %117 = arith.divf %115, %116 : vector<16x1xf32>
    %118 = vector.broadcast %117 : vector<16x1xf32> to vector<16x32xf32>
    %119 = arith.subf %111, %118 : vector<16x32xf32>
    %120 = arith.mulf %119, %119 : vector<16x32xf32>
    %cst_54 = arith.constant dense<0.000000e+00> : vector<16xf32>
    %121 = vector.multi_reduction <add>, %120, %cst_54 [1] : vector<16x32xf32> to vector<16xf32>
    %122 = vector.shape_cast %121 : vector<16xf32> to vector<16x1xf32>
    %cst_55 = arith.constant 3.200000e+01 : f32
    %123 = vector.broadcast %cst_55 : f32 to vector<16x1xf32>
    %124 = arith.divf %122, %123 : vector<16x1xf32>
    %cst_56 = arith.constant 9.99999974E-6 : f32
    %125 = vector.broadcast %cst_56 : f32 to vector<16x1xf32>
    %126 = arith.addf %124, %125 : vector<16x1xf32>
    %127 = math.rsqrt %126 : vector<16x1xf32>
    %128 = vector.broadcast %127 : vector<16x1xf32> to vector<16x32xf32>
    %129 = arith.mulf %119, %128 : vector<16x32xf32>
    %130 = vector.broadcast %112 : vector<1x32xf32> to vector<16x32xf32>
    %131 = arith.mulf %129, %130 : vector<16x32xf32>
    %132 = vector.broadcast %113 : vector<1x32xf32> to vector<16x32xf32>
    %133 = arith.addf %131, %132 : vector<16x32xf32>
    %c0_57 = arith.constant 0 : index
    %c0_58 = arith.constant 0 : index
    %134 = vector.load %arg10[%c0_57, %c0_58] : memref<32x64xf32, #tpu.memory_space<vmem>>, vector<32x64xf32>
    %cst_59 = arith.constant dense<0.000000e+00> : vector<16x64xf32>
    %135 = tpu.matmul %133, %134, %cst_59 {dimension_numbers = #tpu.dot_dimension_numbers<[1], [0], [0], [1], [0, 0, 1, 1], [], []>} : vector<16x32xf32>, vector<32x64xf32>, vector<16x64xf32> -> vector<16x64xf32>
    %c0_60 = arith.constant 0 : index
    %c0_61 = arith.constant 0 : index
    %136 = vector.load %arg11[%c0_60, %c0_61] : memref<1x64xf32, #tpu.memory_space<vmem>>, vector<1x64xf32>
    %137 = vector.broadcast %136 : vector<1x64xf32> to vector<16x64xf32>
    %138 = arith.addf %135, %137 : vector<16x64xf32>
    %139 = arith.mulf %138, %138 : vector<16x64xf32>
    %140 = arith.mulf %138, %139 : vector<16x64xf32>
    %cst_62 = arith.constant 4.471500e-02 : f32
    %141 = vector.broadcast %cst_62 : f32 to vector<16x64xf32>
    %142 = arith.mulf %141, %140 : vector<16x64xf32>
    %143 = arith.addf %138, %142 : vector<16x64xf32>
    %cst_63 = arith.constant 0.797884583 : f32
    %144 = vector.broadcast %cst_63 : f32 to vector<16x64xf32>
    %145 = arith.mulf %144, %143 : vector<16x64xf32>
    %146 = math.tanh %145 : vector<16x64xf32>
    %cst_64 = arith.constant 1.000000e+00 : f32
    %147 = vector.broadcast %cst_64 : f32 to vector<16x64xf32>
    %148 = arith.addf %147, %146 : vector<16x64xf32>
    %cst_65 = arith.constant 5.000000e-01 : f32
    %149 = vector.broadcast %cst_65 : f32 to vector<16x64xf32>
    %150 = arith.mulf %149, %148 : vector<16x64xf32>
    %151 = arith.mulf %138, %150 : vector<16x64xf32>
    %c0_66 = arith.constant 0 : index
    %c0_67 = arith.constant 0 : index
    %152 = vector.load %arg12[%c0_66, %c0_67] : memref<64x32xf32, #tpu.memory_space<vmem>>, vector<64x32xf32>
    %cst_68 = arith.constant dense<0.000000e+00> : vector<16x32xf32>
    %153 = tpu.matmul %151, %152, %cst_68 {dimension_numbers = #tpu.dot_dimension_numbers<[1], [0], [0], [1], [0, 0, 1, 1], [], []>} : vector<16x64xf32>, vector<64x32xf32>, vector<16x32xf32> -> vector<16x32xf32>
    %c0_69 = arith.constant 0 : index
    %c0_70 = arith.constant 0 : index
    %154 = vector.load %arg13[%c0_69, %c0_70] : memref<1x32xf32, #tpu.memory_space<vmem>>, vector<1x32xf32>
    %155 = vector.broadcast %154 : vector<1x32xf32> to vector<16x32xf32>
    %156 = arith.addf %153, %155 : vector<16x32xf32>
    %157 = arith.addf %133, %156 : vector<16x32xf32>
    %c0_71 = arith.constant 0 : index
    %c0_72 = arith.constant 0 : index
    %158 = vector.load %arg14[%c0_71, %c0_72] : memref<1x32xf32, #tpu.memory_space<vmem>>, vector<1x32xf32>
    %c0_73 = arith.constant 0 : index
    %c0_74 = arith.constant 0 : index
    %159 = vector.load %arg15[%c0_73, %c0_74] : memref<1x32xf32, #tpu.memory_space<vmem>>, vector<1x32xf32>
    %cst_75 = arith.constant dense<0.000000e+00> : vector<16xf32>
    %160 = vector.multi_reduction <add>, %157, %cst_75 [1] : vector<16x32xf32> to vector<16xf32>
    %161 = vector.shape_cast %160 : vector<16xf32> to vector<16x1xf32>
    %cst_76 = arith.constant 3.200000e+01 : f32
    %162 = vector.broadcast %cst_76 : f32 to vector<16x1xf32>
    %163 = arith.divf %161, %162 : vector<16x1xf32>
    %164 = vector.broadcast %163 : vector<16x1xf32> to vector<16x32xf32>
    %165 = arith.subf %157, %164 : vector<16x32xf32>
    %166 = arith.mulf %165, %165 : vector<16x32xf32>
    %cst_77 = arith.constant dense<0.000000e+00> : vector<16xf32>
    %167 = vector.multi_reduction <add>, %166, %cst_77 [1] : vector<16x32xf32> to vector<16xf32>
    %168 = vector.shape_cast %167 : vector<16xf32> to vector<16x1xf32>
    %cst_78 = arith.constant 3.200000e+01 : f32
    %169 = vector.broadcast %cst_78 : f32 to vector<16x1xf32>
    %170 = arith.divf %168, %169 : vector<16x1xf32>
    %cst_79 = arith.constant 9.99999974E-6 : f32
    %171 = vector.broadcast %cst_79 : f32 to vector<16x1xf32>
    %172 = arith.addf %170, %171 : vector<16x1xf32>
    %173 = math.rsqrt %172 : vector<16x1xf32>
    %174 = vector.broadcast %173 : vector<16x1xf32> to vector<16x32xf32>
    %175 = arith.mulf %165, %174 : vector<16x32xf32>
    %176 = vector.broadcast %158 : vector<1x32xf32> to vector<16x32xf32>
    %177 = arith.mulf %175, %176 : vector<16x32xf32>
    %178 = vector.broadcast %159 : vector<1x32xf32> to vector<16x32xf32>
    %179 = arith.addf %177, %178 : vector<16x32xf32>
    %c0_80 = arith.constant 0 : index
    %c0_81 = arith.constant 0 : index
    %180 = vector.load %arg16[%c0_80, %c0_81] : memref<16x32xf32, #tpu.memory_space<vmem>>, vector<16x32xf32>
    tpu.vector_store %arg16[%c0_80, %c0_81], %179 {strides = array<i32>} : memref<16x32xf32, #tpu.memory_space<vmem>>, vector<16x32xf32>,
    return
  }
}

module attributes {stable_mosaic.version = 11 : i64} {
  func.func @_conv_layer_kernel(%arg0: memref<16x32xf32, #tpu.memory_space<vmem>>, %arg1: memref<16x16xf32, #tpu.memory_space<vmem>>, %arg2: memref<16x16xf32, #tpu.memory_space<vmem>>, %arg3: memref<32x32xf32, #tpu.memory_space<vmem>>, %arg4: memref<32x32xf32, #tpu.memory_space<vmem>>, %arg5: memref<32x32xf32, #tpu.memory_space<vmem>>, %arg6: memref<1x32xf32, #tpu.memory_space<vmem>>, %arg7: memref<16x16xf32, #tpu.memory_space<vmem>>, %arg8: memref<16x16xf32, #tpu.memory_space<vmem>>, %arg9: memref<16x1xf32, #tpu.memory_space<vmem>>, %arg10: memref<16x1xf32, #tpu.memory_space<vmem>>, %arg11: memref<8x16xf32, #tpu.memory_space<vmem>>, %arg12: memref<8x32xf32, #tpu.memory_space<vmem>>) attributes {dimension_semantics = [], scalar_prefetch = 0 : i64, scratch_operands = 0 : i64, tpu.core_type = #tpu.core_type<tc>} {
    %c0 = arith.constant 0 : index
    %c0_0 = arith.constant 0 : index
    %0 = vector.load %arg0[%c0, %c0_0] : memref<16x32xf32, #tpu.memory_space<vmem>>, vector<16x32xf32>
    %c0_1 = arith.constant 0 : index
    %c0_2 = arith.constant 0 : index
    %1 = vector.load %arg1[%c0_1, %c0_2] : memref<16x16xf32, #tpu.memory_space<vmem>>, vector<16x16xf32>
    %cst = arith.constant dense<0.000000e+00> : vector<16x32xf32>
    %2 = tpu.matmul %1, %0, %cst {dimension_numbers = #tpu.dot_dimension_numbers<[1], [0], [0], [1], [0, 0, 1, 1], [], []>} : vector<16x16xf32>, vector<16x32xf32>, vector<16x32xf32> -> vector<16x32xf32>
    %c0_3 = arith.constant 0 : index
    %c0_4 = arith.constant 0 : index
    %3 = vector.load %arg2[%c0_3, %c0_4] : memref<16x16xf32, #tpu.memory_space<vmem>>, vector<16x16xf32>
    %cst_5 = arith.constant dense<0.000000e+00> : vector<16x32xf32>
    %4 = tpu.matmul %3, %0, %cst_5 {dimension_numbers = #tpu.dot_dimension_numbers<[1], [0], [0], [1], [0, 0, 1, 1], [], []>} : vector<16x16xf32>, vector<16x32xf32>, vector<16x32xf32> -> vector<16x32xf32>
    %c0_6 = arith.constant 0 : index
    %c0_7 = arith.constant 0 : index
    %5 = vector.load %arg3[%c0_6, %c0_7] : memref<32x32xf32, #tpu.memory_space<vmem>>, vector<32x32xf32>
    %cst_8 = arith.constant dense<0.000000e+00> : vector<16x32xf32>
    %6 = tpu.matmul %2, %5, %cst_8 {dimension_numbers = #tpu.dot_dimension_numbers<[1], [0], [0], [1], [0, 0, 1, 1], [], []>} : vector<16x32xf32>, vector<32x32xf32>, vector<16x32xf32> -> vector<16x32xf32>
    %c0_9 = arith.constant 0 : index
    %c0_10 = arith.constant 0 : index
    %7 = vector.load %arg4[%c0_9, %c0_10] : memref<32x32xf32, #tpu.memory_space<vmem>>, vector<32x32xf32>
    %cst_11 = arith.constant dense<0.000000e+00> : vector<16x32xf32>
    %8 = tpu.matmul %0, %7, %cst_11 {dimension_numbers = #tpu.dot_dimension_numbers<[1], [0], [0], [1], [0, 0, 1, 1], [], []>} : vector<16x32xf32>, vector<32x32xf32>, vector<16x32xf32> -> vector<16x32xf32>
    %9 = arith.addf %6, %8 : vector<16x32xf32>
    %c0_12 = arith.constant 0 : index
    %c0_13 = arith.constant 0 : index
    %10 = vector.load %arg5[%c0_12, %c0_13] : memref<32x32xf32, #tpu.memory_space<vmem>>, vector<32x32xf32>
    %cst_14 = arith.constant dense<0.000000e+00> : vector<16x32xf32>
    %11 = tpu.matmul %4, %10, %cst_14 {dimension_numbers = #tpu.dot_dimension_numbers<[1], [0], [0], [1], [0, 0, 1, 1], [], []>} : vector<16x32xf32>, vector<32x32xf32>, vector<16x32xf32> -> vector<16x32xf32>
    %12 = arith.addf %9, %11 : vector<16x32xf32>
    %c0_15 = arith.constant 0 : index
    %c0_16 = arith.constant 0 : index
    %13 = vector.load %arg6[%c0_15, %c0_16] : memref<1x32xf32, #tpu.memory_space<vmem>>, vector<1x32xf32>
    %14 = vector.broadcast %13 : vector<1x32xf32> to vector<16x32xf32>
    %15 = arith.addf %12, %14 : vector<16x32xf32>
    %cst_17 = arith.constant 0.000000e+00 : f32
    %16 = vector.broadcast %cst_17 : f32 to vector<16x32xf32>
    %17 = arith.cmpf ogt, %15, %16 : vector<16x32xf32>
    %cst_18 = arith.constant 0.000000e+00 : f32
    %18 = vector.broadcast %cst_18 : f32 to vector<16x32xf32>
    %19 = arith.minimumf %15, %18 : vector<16x32xf32>
    %20 = math.exp %19 : vector<16x32xf32>
    %cst_19 = arith.constant 1.000000e+00 : f32
    %21 = vector.broadcast %cst_19 : f32 to vector<16x32xf32>
    %22 = arith.subf %20, %21 : vector<16x32xf32>
    %23 = arith.select %17, %15, %22 : vector<16x32xi1>, vector<16x32xf32>
    %c0_20 = arith.constant 0 : index
    %c0_21 = arith.constant 0 : index
    %24 = vector.load %arg7[%c0_20, %c0_21] : memref<16x16xf32, #tpu.memory_space<vmem>>, vector<16x16xf32>
    %cst_22 = arith.constant dense<0.000000e+00> : vector<16x32xf32>
    %25 = tpu.matmul %24, %23, %cst_22 {dimension_numbers = #tpu.dot_dimension_numbers<[1], [0], [0], [1], [0, 0, 1, 1], [], []>} : vector<16x16xf32>, vector<16x32xf32>, vector<16x32xf32> -> vector<16x32xf32>
    %c0_23 = arith.constant 0 : index
    %c0_24 = arith.constant 0 : index
    %26 = vector.load %arg9[%c0_23, %c0_24] : memref<16x1xf32, #tpu.memory_space<vmem>>, vector<16x1xf32>
    %27 = vector.broadcast %26 : vector<16x1xf32> to vector<16x32xf32>
    %28 = arith.addf %25, %27 : vector<16x32xf32>
    %c0_25 = arith.constant 0 : index
    %c0_26 = arith.constant 0 : index
    %29 = vector.load %arg8[%c0_25, %c0_26] : memref<16x16xf32, #tpu.memory_space<vmem>>, vector<16x16xf32>
    %cst_27 = arith.constant dense<0.000000e+00> : vector<16x32xf32>
    %30 = tpu.matmul %29, %23, %cst_27 {dimension_numbers = #tpu.dot_dimension_numbers<[1], [0], [0], [1], [0, 0, 1, 1], [], []>} : vector<16x16xf32>, vector<16x32xf32>, vector<16x32xf32> -> vector<16x32xf32>
    %c0_28 = arith.constant 0 : index
    %c0_29 = arith.constant 0 : index
    %31 = vector.load %arg10[%c0_28, %c0_29] : memref<16x1xf32, #tpu.memory_space<vmem>>, vector<16x1xf32>
    %32 = vector.broadcast %31 : vector<16x1xf32> to vector<16x32xf32>
    %33 = arith.addf %30, %32 : vector<16x32xf32>
    %34 = arith.maximumf %28, %23 : vector<16x32xf32>
    %35 = arith.maximumf %34, %33 : vector<16x32xf32>
    %c0_30 = arith.constant 0 : index
    %c0_31 = arith.constant 0 : index
    %36 = vector.load %arg11[%c0_30, %c0_31] : memref<8x16xf32, #tpu.memory_space<vmem>>, vector<8x16xf32>
    %cst_32 = arith.constant dense<0.000000e+00> : vector<8x32xf32>
    %37 = tpu.matmul %36, %35, %cst_32 {dimension_numbers = #tpu.dot_dimension_numbers<[1], [0], [0], [1], [0, 0, 1, 1], [], []>} : vector<8x16xf32>, vector<16x32xf32>, vector<8x32xf32> -> vector<8x32xf32>
    %c0_33 = arith.constant 0 : index
    %c0_34 = arith.constant 0 : index
    %38 = vector.load %arg12[%c0_33, %c0_34] : memref<8x32xf32, #tpu.memory_space<vmem>>, vector<8x32xf32>
    tpu.vector_store %arg12[%c0_33, %c0_34], %37 {strides = array<i32>} : memref<8x32xf32, #tpu.memory_space<vmem>>, vector<8x32xf32>,
    return
  }
}

module attributes {stable_mosaic.version = 11 : i64} {
  func.func @_encoder_layer_kernel(%arg0: memref<8x32xf32, #tpu.memory_space<vmem>>, %arg1: memref<32x96xf32, #tpu.memory_space<vmem>>, %arg2: memref<1x96xf32, #tpu.memory_space<vmem>>, %arg3: memref<32x32xf32, #tpu.memory_space<vmem>>, %arg4: memref<1x32xf32, #tpu.memory_space<vmem>>, %arg5: memref<32x64xf32, #tpu.memory_space<vmem>>, %arg6: memref<32x64xf32, #tpu.memory_space<vmem>>, %arg7: memref<8x8xf32, #tpu.memory_space<vmem>>, %arg8: memref<1x32xf32, #tpu.memory_space<vmem>>, %arg9: memref<1x32xf32, #tpu.memory_space<vmem>>, %arg10: memref<32x64xf32, #tpu.memory_space<vmem>>, %arg11: memref<1x64xf32, #tpu.memory_space<vmem>>, %arg12: memref<64x32xf32, #tpu.memory_space<vmem>>, %arg13: memref<1x32xf32, #tpu.memory_space<vmem>>, %arg14: memref<1x32xf32, #tpu.memory_space<vmem>>, %arg15: memref<1x32xf32, #tpu.memory_space<vmem>>, %arg16: memref<8x32xf32, #tpu.memory_space<vmem>>) attributes {dimension_semantics = [], scalar_prefetch = 0 : i64, scratch_operands = 0 : i64, tpu.core_type = #tpu.core_type<tc>} {
    %c0 = arith.constant 0 : index
    %c0_0 = arith.constant 0 : index
    %0 = vector.load %arg0[%c0, %c0_0] : memref<8x32xf32, #tpu.memory_space<vmem>>, vector<8x32xf32>
    %c0_1 = arith.constant 0 : index
    %c0_2 = arith.constant 0 : index
    %1 = vector.load %arg1[%c0_1, %c0_2] : memref<32x96xf32, #tpu.memory_space<vmem>>, vector<32x96xf32>
    %cst = arith.constant dense<0.000000e+00> : vector<8x96xf32>
    %2 = tpu.matmul %0, %1, %cst {dimension_numbers = #tpu.dot_dimension_numbers<[1], [0], [0], [1], [0, 0, 1, 1], [], []>} : vector<8x32xf32>, vector<32x96xf32>, vector<8x96xf32> -> vector<8x96xf32>
    %c0_3 = arith.constant 0 : index
    %c0_4 = arith.constant 0 : index
    %3 = vector.load %arg2[%c0_3, %c0_4] : memref<1x96xf32, #tpu.memory_space<vmem>>, vector<1x96xf32>
    %4 = vector.broadcast %3 : vector<1x96xf32> to vector<8x96xf32>
    %5 = arith.addf %2, %4 : vector<8x96xf32>
    %6 = vector.extract_strided_slice %5 {offsets = [0, 0], sizes = [8, 32], strides = [1, 1]} : vector<8x96xf32> to vector<8x32xf32>
    %7 = vector.extract_strided_slice %5 {offsets = [0, 32], sizes = [8, 32], strides = [1, 1]} : vector<8x96xf32> to vector<8x32xf32>
    %8 = vector.extract_strided_slice %5 {offsets = [0, 64], sizes = [8, 32], strides = [1, 1]} : vector<8x96xf32> to vector<8x32xf32>
    %c0_5 = arith.constant 0 : index
    %c0_6 = arith.constant 0 : index
    %9 = vector.load %arg5[%c0_5, %c0_6] : memref<32x64xf32, #tpu.memory_space<vmem>>, vector<32x64xf32>
    %c0_7 = arith.constant 0 : index
    %c0_8 = arith.constant 0 : index
    %10 = vector.load %arg6[%c0_7, %c0_8] : memref<32x64xf32, #tpu.memory_space<vmem>>, vector<32x64xf32>
    %cst_9 = arith.constant 0.594603539 : f32
    %11 = vector.broadcast %cst_9 : f32 to vector<8x32xf32>
    %12 = arith.mulf %6, %11 : vector<8x32xf32>
    %cst_10 = arith.constant 0.594603539 : f32
    %13 = vector.broadcast %cst_10 : f32 to vector<8x32xf32>
    %14 = arith.mulf %7, %13 : vector<8x32xf32>
    %cst_11 = arith.constant dense<0.000000e+00> : vector<8x64xf32>
    %15 = tpu.matmul %12, %9, %cst_11 {dimension_numbers = #tpu.dot_dimension_numbers<[1], [0], [0], [1], [0, 0, 1, 1], [], []>} : vector<8x32xf32>, vector<32x64xf32>, vector<8x64xf32> -> vector<8x64xf32>
    %16 = arith.mulf %12, %12 : vector<8x32xf32>
    %cst_12 = arith.constant dense<0.000000e+00> : vector<8x64xf32>
    %17 = tpu.matmul %16, %10, %cst_12 {dimension_numbers = #tpu.dot_dimension_numbers<[1], [0], [0], [1], [0, 0, 1, 1], [], []>} : vector<8x32xf32>, vector<32x64xf32>, vector<8x64xf32> -> vector<8x64xf32>
    %cst_13 = arith.constant 5.000000e-01 : f32
    %18 = vector.broadcast %cst_13 : f32 to vector<8x64xf32>
    %19 = arith.mulf %18, %17 : vector<8x64xf32>
    %20 = arith.subf %15, %19 : vector<8x64xf32>
    %cst_14 = arith.constant dense<0.000000e+00> : vector<8x64xf32>
    %21 = tpu.matmul %14, %9, %cst_14 {dimension_numbers = #tpu.dot_dimension_numbers<[1], [0], [0], [1], [0, 0, 1, 1], [], []>} : vector<8x32xf32>, vector<32x64xf32>, vector<8x64xf32> -> vector<8x64xf32>
    %22 = arith.mulf %14, %14 : vector<8x32xf32>
    %cst_15 = arith.constant dense<0.000000e+00> : vector<8x64xf32>
    %23 = tpu.matmul %22, %10, %cst_15 {dimension_numbers = #tpu.dot_dimension_numbers<[1], [0], [0], [1], [0, 0, 1, 1], [], []>} : vector<8x32xf32>, vector<32x64xf32>, vector<8x64xf32> -> vector<8x64xf32>
    %cst_16 = arith.constant 5.000000e-01 : f32
    %24 = vector.broadcast %cst_16 : f32 to vector<8x64xf32>
    %25 = arith.mulf %24, %23 : vector<8x64xf32>
    %26 = arith.subf %21, %25 : vector<8x64xf32>
    %cst_17 = arith.constant dense<0xFF800000> : vector<8xf32>
    %27 = vector.multi_reduction <maximumf>, %20, %cst_17 [1] : vector<8x64xf32> to vector<8xf32>
    %28 = vector.shape_cast %27 : vector<8xf32> to vector<8x1xf32>
    %cst_18 = arith.constant dense<0xFF800000> : vector<8xf32>
    %29 = vector.multi_reduction <maximumf>, %26, %cst_18 [1] : vector<8x64xf32> to vector<8xf32>
    %30 = vector.shape_cast %29 : vector<8xf32> to vector<8x1xf32>
    %cst_19 = arith.constant dense<0xFF800000> : vector<1xf32>
    %31 = vector.multi_reduction <maximumf>, %30, %cst_19 [0] : vector<8x1xf32> to vector<1xf32>
    %32 = vector.shape_cast %31 : vector<1xf32> to vector<1x1xf32>
    %33 = vector.broadcast %28 : vector<8x1xf32> to vector<8x64xf32>
    %34 = arith.subf %20, %33 : vector<8x64xf32>
    %35 = math.exp %34 : vector<8x64xf32>
    %cst_20 = arith.constant 2.500000e-01 : f32
    %36 = vector.broadcast %cst_20 : f32 to vector<8x64xf32>
    %37 = arith.mulf %36, %35 : vector<8x64xf32>
    %38 = vector.broadcast %32 : vector<1x1xf32> to vector<8x64xf32>
    %39 = arith.subf %26, %38 : vector<8x64xf32>
    %40 = math.exp %39 : vector<8x64xf32>
    %cst_21 = arith.constant 2.500000e-01 : f32
    %41 = vector.broadcast %cst_21 : f32 to vector<8x64xf32>
    %42 = arith.mulf %41, %40 : vector<8x64xf32>
    %c0_22 = arith.constant 0 : index
    %c0_23 = arith.constant 0 : index
    %43 = vector.load %arg7[%c0_22, %c0_23] : memref<8x8xf32, #tpu.memory_space<vmem>>, vector<8x8xf32>
    %c0_24 = arith.constant 0 : index
    %c0_25 = arith.constant 0 : index
    %44 = vector.load %arg3[%c0_24, %c0_25] : memref<32x32xf32, #tpu.memory_space<vmem>>, vector<32x32xf32>
    %45 = vector.extract_strided_slice %37 {offsets = [0, 0], sizes = [8, 16], strides = [1, 1]} : vector<8x64xf32> to vector<8x16xf32>
    %46 = vector.extract_strided_slice %42 {offsets = [0, 0], sizes = [8, 16], strides = [1, 1]} : vector<8x64xf32> to vector<8x16xf32>
    %cst_26 = arith.constant dense<0.000000e+00> : vector<8x8xf32>
    %47 = tpu.matmul %45, %46, %cst_26 {dimension_numbers = #tpu.dot_dimension_numbers<[1], [1], [0], [0], [0, 0, 1, 0], [], []>} : vector<8x16xf32>, vector<8x16xf32>, vector<8x8xf32> -> vector<8x8xf32>
    %48 = arith.mulf %47, %43 : vector<8x8xf32>
    %49 = vector.extract_strided_slice %8 {offsets = [0, 0], sizes = [8, 8], strides = [1, 1]} : vector<8x32xf32> to vector<8x8xf32>
    %cst_27 = arith.constant dense<0.000000e+00> : vector<8x8xf32>
    %50 = tpu.matmul %48, %49, %cst_27 {dimension_numbers = #tpu.dot_dimension_numbers<[1], [0], [0], [1], [0, 0, 1, 1], [], []>} : vector<8x8xf32>, vector<8x8xf32>, vector<8x8xf32> -> vector<8x8xf32>
    %cst_28 = arith.constant dense<0.000000e+00> : vector<8xf32>
    %51 = vector.multi_reduction <add>, %48, %cst_28 [1] : vector<8x8xf32> to vector<8xf32>
    %52 = vector.shape_cast %51 : vector<8xf32> to vector<8x1xf32>
    %cst_29 = arith.constant 9.99999997E-7 : f32
    %53 = vector.broadcast %cst_29 : f32 to vector<8x1xf32>
    %54 = arith.addf %52, %53 : vector<8x1xf32>
    %55 = tpu.reciprocal %54 {approx = true} : vector<8x1xf32> -> vector<8x1xf32>
    %56 = vector.broadcast %55 : vector<8x1xf32> to vector<8x8xf32>
    %57 = arith.mulf %50, %56 : vector<8x8xf32>
    %58 = vector.extract_strided_slice %44 {offsets = [0, 0], sizes = [8, 32], strides = [1, 1]} : vector<32x32xf32> to vector<8x32xf32>
    %cst_30 = arith.constant dense<0.000000e+00> : vector<8x32xf32>
    %59 = tpu.matmul %57, %58, %cst_30 {dimension_numbers = #tpu.dot_dimension_numbers<[1], [0], [0], [1], [0, 0, 1, 1], [], []>} : vector<8x8xf32>, vector<8x32xf32>, vector<8x32xf32> -> vector<8x32xf32>
    %60 = vector.extract_strided_slice %37 {offsets = [0, 16], sizes = [8, 16], strides = [1, 1]} : vector<8x64xf32> to vector<8x16xf32>
    %61 = vector.extract_strided_slice %42 {offsets = [0, 16], sizes = [8, 16], strides = [1, 1]} : vector<8x64xf32> to vector<8x16xf32>
    %cst_31 = arith.constant dense<0.000000e+00> : vector<8x8xf32>
    %62 = tpu.matmul %60, %61, %cst_31 {dimension_numbers = #tpu.dot_dimension_numbers<[1], [1], [0], [0], [0, 0, 1, 0], [], []>} : vector<8x16xf32>, vector<8x16xf32>, vector<8x8xf32> -> vector<8x8xf32>
    %63 = arith.mulf %62, %43 : vector<8x8xf32>
    %64 = vector.extract_strided_slice %8 {offsets = [0, 8], sizes = [8, 8], strides = [1, 1]} : vector<8x32xf32> to vector<8x8xf32>
    %cst_32 = arith.constant dense<0.000000e+00> : vector<8x8xf32>
    %65 = tpu.matmul %63, %64, %cst_32 {dimension_numbers = #tpu.dot_dimension_numbers<[1], [0], [0], [1], [0, 0, 1, 1], [], []>} : vector<8x8xf32>, vector<8x8xf32>, vector<8x8xf32> -> vector<8x8xf32>
    %cst_33 = arith.constant dense<0.000000e+00> : vector<8xf32>
    %66 = vector.multi_reduction <add>, %63, %cst_33 [1] : vector<8x8xf32> to vector<8xf32>
    %67 = vector.shape_cast %66 : vector<8xf32> to vector<8x1xf32>
    %cst_34 = arith.constant 9.99999997E-7 : f32
    %68 = vector.broadcast %cst_34 : f32 to vector<8x1xf32>
    %69 = arith.addf %67, %68 : vector<8x1xf32>
    %70 = tpu.reciprocal %69 {approx = true} : vector<8x1xf32> -> vector<8x1xf32>
    %71 = vector.broadcast %70 : vector<8x1xf32> to vector<8x8xf32>
    %72 = arith.mulf %65, %71 : vector<8x8xf32>
    %73 = vector.extract_strided_slice %44 {offsets = [8, 0], sizes = [8, 32], strides = [1, 1]} : vector<32x32xf32> to vector<8x32xf32>
    %cst_35 = arith.constant dense<0.000000e+00> : vector<8x32xf32>
    %74 = tpu.matmul %72, %73, %cst_35 {dimension_numbers = #tpu.dot_dimension_numbers<[1], [0], [0], [1], [0, 0, 1, 1], [], []>} : vector<8x8xf32>, vector<8x32xf32>, vector<8x32xf32> -> vector<8x32xf32>
    %75 = arith.addf %59, %74 : vector<8x32xf32>
    %76 = vector.extract_strided_slice %37 {offsets = [0, 32], sizes = [8, 16], strides = [1, 1]} : vector<8x64xf32> to vector<8x16xf32>
    %77 = vector.extract_strided_slice %42 {offsets = [0, 32], sizes = [8, 16], strides = [1, 1]} : vector<8x64xf32> to vector<8x16xf32>
    %cst_36 = arith.constant dense<0.000000e+00> : vector<8x8xf32>
    %78 = tpu.matmul %76, %77, %cst_36 {dimension_numbers = #tpu.dot_dimension_numbers<[1], [1], [0], [0], [0, 0, 1, 0], [], []>} : vector<8x16xf32>, vector<8x16xf32>, vector<8x8xf32> -> vector<8x8xf32>
    %79 = arith.mulf %78, %43 : vector<8x8xf32>
    %80 = vector.extract_strided_slice %8 {offsets = [0, 16], sizes = [8, 8], strides = [1, 1]} : vector<8x32xf32> to vector<8x8xf32>
    %cst_37 = arith.constant dense<0.000000e+00> : vector<8x8xf32>
    %81 = tpu.matmul %79, %80, %cst_37 {dimension_numbers = #tpu.dot_dimension_numbers<[1], [0], [0], [1], [0, 0, 1, 1], [], []>} : vector<8x8xf32>, vector<8x8xf32>, vector<8x8xf32> -> vector<8x8xf32>
    %cst_38 = arith.constant dense<0.000000e+00> : vector<8xf32>
    %82 = vector.multi_reduction <add>, %79, %cst_38 [1] : vector<8x8xf32> to vector<8xf32>
    %83 = vector.shape_cast %82 : vector<8xf32> to vector<8x1xf32>
    %cst_39 = arith.constant 9.99999997E-7 : f32
    %84 = vector.broadcast %cst_39 : f32 to vector<8x1xf32>
    %85 = arith.addf %83, %84 : vector<8x1xf32>
    %86 = tpu.reciprocal %85 {approx = true} : vector<8x1xf32> -> vector<8x1xf32>
    %87 = vector.broadcast %86 : vector<8x1xf32> to vector<8x8xf32>
    %88 = arith.mulf %81, %87 : vector<8x8xf32>
    %89 = vector.extract_strided_slice %44 {offsets = [16, 0], sizes = [8, 32], strides = [1, 1]} : vector<32x32xf32> to vector<8x32xf32>
    %cst_40 = arith.constant dense<0.000000e+00> : vector<8x32xf32>
    %90 = tpu.matmul %88, %89, %cst_40 {dimension_numbers = #tpu.dot_dimension_numbers<[1], [0], [0], [1], [0, 0, 1, 1], [], []>} : vector<8x8xf32>, vector<8x32xf32>, vector<8x32xf32> -> vector<8x32xf32>
    %91 = arith.addf %75, %90 : vector<8x32xf32>
    %92 = vector.extract_strided_slice %37 {offsets = [0, 48], sizes = [8, 16], strides = [1, 1]} : vector<8x64xf32> to vector<8x16xf32>
    %93 = vector.extract_strided_slice %42 {offsets = [0, 48], sizes = [8, 16], strides = [1, 1]} : vector<8x64xf32> to vector<8x16xf32>
    %cst_41 = arith.constant dense<0.000000e+00> : vector<8x8xf32>
    %94 = tpu.matmul %92, %93, %cst_41 {dimension_numbers = #tpu.dot_dimension_numbers<[1], [1], [0], [0], [0, 0, 1, 0], [], []>} : vector<8x16xf32>, vector<8x16xf32>, vector<8x8xf32> -> vector<8x8xf32>
    %95 = arith.mulf %94, %43 : vector<8x8xf32>
    %96 = vector.extract_strided_slice %8 {offsets = [0, 24], sizes = [8, 8], strides = [1, 1]} : vector<8x32xf32> to vector<8x8xf32>
    %cst_42 = arith.constant dense<0.000000e+00> : vector<8x8xf32>
    %97 = tpu.matmul %95, %96, %cst_42 {dimension_numbers = #tpu.dot_dimension_numbers<[1], [0], [0], [1], [0, 0, 1, 1], [], []>} : vector<8x8xf32>, vector<8x8xf32>, vector<8x8xf32> -> vector<8x8xf32>
    %cst_43 = arith.constant dense<0.000000e+00> : vector<8xf32>
    %98 = vector.multi_reduction <add>, %95, %cst_43 [1] : vector<8x8xf32> to vector<8xf32>
    %99 = vector.shape_cast %98 : vector<8xf32> to vector<8x1xf32>
    %cst_44 = arith.constant 9.99999997E-7 : f32
    %100 = vector.broadcast %cst_44 : f32 to vector<8x1xf32>
    %101 = arith.addf %99, %100 : vector<8x1xf32>
    %102 = tpu.reciprocal %101 {approx = true} : vector<8x1xf32> -> vector<8x1xf32>
    %103 = vector.broadcast %102 : vector<8x1xf32> to vector<8x8xf32>
    %104 = arith.mulf %97, %103 : vector<8x8xf32>
    %105 = vector.extract_strided_slice %44 {offsets = [24, 0], sizes = [8, 32], strides = [1, 1]} : vector<32x32xf32> to vector<8x32xf32>
    %cst_45 = arith.constant dense<0.000000e+00> : vector<8x32xf32>
    %106 = tpu.matmul %104, %105, %cst_45 {dimension_numbers = #tpu.dot_dimension_numbers<[1], [0], [0], [1], [0, 0, 1, 1], [], []>} : vector<8x8xf32>, vector<8x32xf32>, vector<8x32xf32> -> vector<8x32xf32>
    %107 = arith.addf %91, %106 : vector<8x32xf32>
    %c0_46 = arith.constant 0 : index
    %c0_47 = arith.constant 0 : index
    %108 = vector.load %arg4[%c0_46, %c0_47] : memref<1x32xf32, #tpu.memory_space<vmem>>, vector<1x32xf32>
    %109 = vector.broadcast %108 : vector<1x32xf32> to vector<8x32xf32>
    %110 = arith.addf %107, %109 : vector<8x32xf32>
    %111 = arith.addf %0, %110 : vector<8x32xf32>
    %c0_48 = arith.constant 0 : index
    %c0_49 = arith.constant 0 : index
    %112 = vector.load %arg8[%c0_48, %c0_49] : memref<1x32xf32, #tpu.memory_space<vmem>>, vector<1x32xf32>
    %c0_50 = arith.constant 0 : index
    %c0_51 = arith.constant 0 : index
    %113 = vector.load %arg9[%c0_50, %c0_51] : memref<1x32xf32, #tpu.memory_space<vmem>>, vector<1x32xf32>
    %cst_52 = arith.constant dense<0.000000e+00> : vector<8xf32>
    %114 = vector.multi_reduction <add>, %111, %cst_52 [1] : vector<8x32xf32> to vector<8xf32>
    %115 = vector.shape_cast %114 : vector<8xf32> to vector<8x1xf32>
    %cst_53 = arith.constant 3.200000e+01 : f32
    %116 = vector.broadcast %cst_53 : f32 to vector<8x1xf32>
    %117 = arith.divf %115, %116 : vector<8x1xf32>
    %118 = vector.broadcast %117 : vector<8x1xf32> to vector<8x32xf32>
    %119 = arith.subf %111, %118 : vector<8x32xf32>
    %120 = arith.mulf %119, %119 : vector<8x32xf32>
    %cst_54 = arith.constant dense<0.000000e+00> : vector<8xf32>
    %121 = vector.multi_reduction <add>, %120, %cst_54 [1] : vector<8x32xf32> to vector<8xf32>
    %122 = vector.shape_cast %121 : vector<8xf32> to vector<8x1xf32>
    %cst_55 = arith.constant 3.200000e+01 : f32
    %123 = vector.broadcast %cst_55 : f32 to vector<8x1xf32>
    %124 = arith.divf %122, %123 : vector<8x1xf32>
    %cst_56 = arith.constant 9.99999974E-6 : f32
    %125 = vector.broadcast %cst_56 : f32 to vector<8x1xf32>
    %126 = arith.addf %124, %125 : vector<8x1xf32>
    %127 = math.rsqrt %126 : vector<8x1xf32>
    %128 = vector.broadcast %127 : vector<8x1xf32> to vector<8x32xf32>
    %129 = arith.mulf %119, %128 : vector<8x32xf32>
    %130 = vector.broadcast %112 : vector<1x32xf32> to vector<8x32xf32>
    %131 = arith.mulf %129, %130 : vector<8x32xf32>
    %132 = vector.broadcast %113 : vector<1x32xf32> to vector<8x32xf32>
    %133 = arith.addf %131, %132 : vector<8x32xf32>
    %c0_57 = arith.constant 0 : index
    %c0_58 = arith.constant 0 : index
    %134 = vector.load %arg10[%c0_57, %c0_58] : memref<32x64xf32, #tpu.memory_space<vmem>>, vector<32x64xf32>
    %cst_59 = arith.constant dense<0.000000e+00> : vector<8x64xf32>
    %135 = tpu.matmul %133, %134, %cst_59 {dimension_numbers = #tpu.dot_dimension_numbers<[1], [0], [0], [1], [0, 0, 1, 1], [], []>} : vector<8x32xf32>, vector<32x64xf32>, vector<8x64xf32> -> vector<8x64xf32>
    %c0_60 = arith.constant 0 : index
    %c0_61 = arith.constant 0 : index
    %136 = vector.load %arg11[%c0_60, %c0_61] : memref<1x64xf32, #tpu.memory_space<vmem>>, vector<1x64xf32>
    %137 = vector.broadcast %136 : vector<1x64xf32> to vector<8x64xf32>
    %138 = arith.addf %135, %137 : vector<8x64xf32>
    %139 = arith.mulf %138, %138 : vector<8x64xf32>
    %140 = arith.mulf %138, %139 : vector<8x64xf32>
    %cst_62 = arith.constant 4.471500e-02 : f32
    %141 = vector.broadcast %cst_62 : f32 to vector<8x64xf32>
    %142 = arith.mulf %141, %140 : vector<8x64xf32>
    %143 = arith.addf %138, %142 : vector<8x64xf32>
    %cst_63 = arith.constant 0.797884583 : f32
    %144 = vector.broadcast %cst_63 : f32 to vector<8x64xf32>
    %145 = arith.mulf %144, %143 : vector<8x64xf32>
    %146 = math.tanh %145 : vector<8x64xf32>
    %cst_64 = arith.constant 1.000000e+00 : f32
    %147 = vector.broadcast %cst_64 : f32 to vector<8x64xf32>
    %148 = arith.addf %147, %146 : vector<8x64xf32>
    %cst_65 = arith.constant 5.000000e-01 : f32
    %149 = vector.broadcast %cst_65 : f32 to vector<8x64xf32>
    %150 = arith.mulf %149, %148 : vector<8x64xf32>
    %151 = arith.mulf %138, %150 : vector<8x64xf32>
    %c0_66 = arith.constant 0 : index
    %c0_67 = arith.constant 0 : index
    %152 = vector.load %arg12[%c0_66, %c0_67] : memref<64x32xf32, #tpu.memory_space<vmem>>, vector<64x32xf32>
    %cst_68 = arith.constant dense<0.000000e+00> : vector<8x32xf32>
    %153 = tpu.matmul %151, %152, %cst_68 {dimension_numbers = #tpu.dot_dimension_numbers<[1], [0], [0], [1], [0, 0, 1, 1], [], []>} : vector<8x64xf32>, vector<64x32xf32>, vector<8x32xf32> -> vector<8x32xf32>
    %c0_69 = arith.constant 0 : index
    %c0_70 = arith.constant 0 : index
    %154 = vector.load %arg13[%c0_69, %c0_70] : memref<1x32xf32, #tpu.memory_space<vmem>>, vector<1x32xf32>
    %155 = vector.broadcast %154 : vector<1x32xf32> to vector<8x32xf32>
    %156 = arith.addf %153, %155 : vector<8x32xf32>
    %157 = arith.addf %133, %156 : vector<8x32xf32>
    %c0_71 = arith.constant 0 : index
    %c0_72 = arith.constant 0 : index
    %158 = vector.load %arg14[%c0_71, %c0_72] : memref<1x32xf32, #tpu.memory_space<vmem>>, vector<1x32xf32>
    %c0_73 = arith.constant 0 : index
    %c0_74 = arith.constant 0 : index
    %159 = vector.load %arg15[%c0_73, %c0_74] : memref<1x32xf32, #tpu.memory_space<vmem>>, vector<1x32xf32>
    %cst_75 = arith.constant dense<0.000000e+00> : vector<8xf32>
    %160 = vector.multi_reduction <add>, %157, %cst_75 [1] : vector<8x32xf32> to vector<8xf32>
    %161 = vector.shape_cast %160 : vector<8xf32> to vector<8x1xf32>
    %cst_76 = arith.constant 3.200000e+01 : f32
    %162 = vector.broadcast %cst_76 : f32 to vector<8x1xf32>
    %163 = arith.divf %161, %162 : vector<8x1xf32>
    %164 = vector.broadcast %163 : vector<8x1xf32> to vector<8x32xf32>
    %165 = arith.subf %157, %164 : vector<8x32xf32>
    %166 = arith.mulf %165, %165 : vector<8x32xf32>
    %cst_77 = arith.constant dense<0.000000e+00> : vector<8xf32>
    %167 = vector.multi_reduction <add>, %166, %cst_77 [1] : vector<8x32xf32> to vector<8xf32>
    %168 = vector.shape_cast %167 : vector<8xf32> to vector<8x1xf32>
    %cst_78 = arith.constant 3.200000e+01 : f32
    %169 = vector.broadcast %cst_78 : f32 to vector<8x1xf32>
    %170 = arith.divf %168, %169 : vector<8x1xf32>
    %cst_79 = arith.constant 9.99999974E-6 : f32
    %171 = vector.broadcast %cst_79 : f32 to vector<8x1xf32>
    %172 = arith.addf %170, %171 : vector<8x1xf32>
    %173 = math.rsqrt %172 : vector<8x1xf32>
    %174 = vector.broadcast %173 : vector<8x1xf32> to vector<8x32xf32>
    %175 = arith.mulf %165, %174 : vector<8x32xf32>
    %176 = vector.broadcast %158 : vector<1x32xf32> to vector<8x32xf32>
    %177 = arith.mulf %175, %176 : vector<8x32xf32>
    %178 = vector.broadcast %159 : vector<1x32xf32> to vector<8x32xf32>
    %179 = arith.addf %177, %178 : vector<8x32xf32>
    %c0_80 = arith.constant 0 : index
    %c0_81 = arith.constant 0 : index
    %180 = vector.load %arg16[%c0_80, %c0_81] : memref<8x32xf32, #tpu.memory_space<vmem>>, vector<8x32xf32>
    tpu.vector_store %arg16[%c0_80, %c0_81], %179 {strides = array<i32>} : memref<8x32xf32, #tpu.memory_space<vmem>>, vector<8x32xf32>,
    return
  }
}

module attributes {stable_mosaic.version = 11 : i64} {
  func.func @_layernorm_kernel(%arg0: memref<8x32xf32, #tpu.memory_space<vmem>>, %arg1: memref<1x32xf32, #tpu.memory_space<vmem>>, %arg2: memref<1x32xf32, #tpu.memory_space<vmem>>, %arg3: memref<8x32xf32, #tpu.memory_space<vmem>>) attributes {dimension_semantics = [], scalar_prefetch = 0 : i64, scratch_operands = 0 : i64, tpu.core_type = #tpu.core_type<tc>} {
    %c0 = arith.constant 0 : index
    %c0_0 = arith.constant 0 : index
    %0 = vector.load %arg0[%c0, %c0_0] : memref<8x32xf32, #tpu.memory_space<vmem>>, vector<8x32xf32>
    %c0_1 = arith.constant 0 : index
    %c0_2 = arith.constant 0 : index
    %1 = vector.load %arg1[%c0_1, %c0_2] : memref<1x32xf32, #tpu.memory_space<vmem>>, vector<1x32xf32>
    %c0_3 = arith.constant 0 : index
    %c0_4 = arith.constant 0 : index
    %2 = vector.load %arg2[%c0_3, %c0_4] : memref<1x32xf32, #tpu.memory_space<vmem>>, vector<1x32xf32>
    %cst = arith.constant dense<0.000000e+00> : vector<8xf32>
    %3 = vector.multi_reduction <add>, %0, %cst [1] : vector<8x32xf32> to vector<8xf32>
    %4 = vector.shape_cast %3 : vector<8xf32> to vector<8x1xf32>
    %cst_5 = arith.constant 3.200000e+01 : f32
    %5 = vector.broadcast %cst_5 : f32 to vector<8x1xf32>
    %6 = arith.divf %4, %5 : vector<8x1xf32>
    %7 = vector.broadcast %6 : vector<8x1xf32> to vector<8x32xf32>
    %8 = arith.subf %0, %7 : vector<8x32xf32>
    %9 = arith.mulf %8, %8 : vector<8x32xf32>
    %cst_6 = arith.constant dense<0.000000e+00> : vector<8xf32>
    %10 = vector.multi_reduction <add>, %9, %cst_6 [1] : vector<8x32xf32> to vector<8xf32>
    %11 = vector.shape_cast %10 : vector<8xf32> to vector<8x1xf32>
    %cst_7 = arith.constant 3.200000e+01 : f32
    %12 = vector.broadcast %cst_7 : f32 to vector<8x1xf32>
    %13 = arith.divf %11, %12 : vector<8x1xf32>
    %cst_8 = arith.constant 9.99999974E-6 : f32
    %14 = vector.broadcast %cst_8 : f32 to vector<8x1xf32>
    %15 = arith.addf %13, %14 : vector<8x1xf32>
    %16 = math.rsqrt %15 : vector<8x1xf32>
    %17 = vector.broadcast %16 : vector<8x1xf32> to vector<8x32xf32>
    %18 = arith.mulf %8, %17 : vector<8x32xf32>
    %19 = vector.broadcast %1 : vector<1x32xf32> to vector<8x32xf32>
    %20 = arith.mulf %18, %19 : vector<8x32xf32>
    %21 = vector.broadcast %2 : vector<1x32xf32> to vector<8x32xf32>
    %22 = arith.addf %20, %21 : vector<8x32xf32>
    %c0_9 = arith.constant 0 : index
    %c0_10 = arith.constant 0 : index
    %23 = vector.load %arg3[%c0_9, %c0_10] : memref<8x32xf32, #tpu.memory_space<vmem>>, vector<8x32xf32>
    tpu.vector_store %arg3[%c0_9, %c0_10], %22 {strides = array<i32>} : memref<8x32xf32, #tpu.memory_space<vmem>>, vector<8x32xf32>,
    return
  }
}

module attributes {stable_mosaic.version = 11 : i64} {
  func.func @_decoder_layer_kernel(%arg0: memref<16x32xf32, #tpu.memory_space<vmem>>, %arg1: memref<8x32xf32, #tpu.memory_space<vmem>>, %arg2: memref<32x96xf32, #tpu.memory_space<vmem>>, %arg3: memref<1x96xf32, #tpu.memory_space<vmem>>, %arg4: memref<32x32xf32, #tpu.memory_space<vmem>>, %arg5: memref<1x32xf32, #tpu.memory_space<vmem>>, %arg6: memref<32x64xf32, #tpu.memory_space<vmem>>, %arg7: memref<32x64xf32, #tpu.memory_space<vmem>>, %arg8: memref<16x16xf32, #tpu.memory_space<vmem>>, %arg9: memref<1x32xf32, #tpu.memory_space<vmem>>, %arg10: memref<1x32xf32, #tpu.memory_space<vmem>>, %arg11: memref<32x32xf32, #tpu.memory_space<vmem>>, %arg12: memref<1x32xf32, #tpu.memory_space<vmem>>, %arg13: memref<32x64xf32, #tpu.memory_space<vmem>>, %arg14: memref<1x64xf32, #tpu.memory_space<vmem>>, %arg15: memref<32x32xf32, #tpu.memory_space<vmem>>, %arg16: memref<1x32xf32, #tpu.memory_space<vmem>>, %arg17: memref<16x8xf32, #tpu.memory_space<vmem>>, %arg18: memref<1x32xf32, #tpu.memory_space<vmem>>, %arg19: memref<1x32xf32, #tpu.memory_space<vmem>>, %arg20: memref<32x64xf32, #tpu.memory_space<vmem>>, %arg21: memref<1x64xf32, #tpu.memory_space<vmem>>, %arg22: memref<64x32xf32, #tpu.memory_space<vmem>>, %arg23: memref<1x32xf32, #tpu.memory_space<vmem>>, %arg24: memref<1x32xf32, #tpu.memory_space<vmem>>, %arg25: memref<1x32xf32, #tpu.memory_space<vmem>>, %arg26: memref<16x32xf32, #tpu.memory_space<vmem>>) attributes {dimension_semantics = [], scalar_prefetch = 0 : i64, scratch_operands = 0 : i64, tpu.core_type = #tpu.core_type<tc>} {
    %c0 = arith.constant 0 : index
    %c0_0 = arith.constant 0 : index
    %0 = vector.load %arg0[%c0, %c0_0] : memref<16x32xf32, #tpu.memory_space<vmem>>, vector<16x32xf32>
    %c0_1 = arith.constant 0 : index
    %c0_2 = arith.constant 0 : index
    %1 = vector.load %arg1[%c0_1, %c0_2] : memref<8x32xf32, #tpu.memory_space<vmem>>, vector<8x32xf32>
    %c0_3 = arith.constant 0 : index
    %c0_4 = arith.constant 0 : index
    %2 = vector.load %arg2[%c0_3, %c0_4] : memref<32x96xf32, #tpu.memory_space<vmem>>, vector<32x96xf32>
    %cst = arith.constant dense<0.000000e+00> : vector<16x96xf32>
    %3 = tpu.matmul %0, %2, %cst {dimension_numbers = #tpu.dot_dimension_numbers<[1], [0], [0], [1], [0, 0, 1, 1], [], []>} : vector<16x32xf32>, vector<32x96xf32>, vector<16x96xf32> -> vector<16x96xf32>
    %c0_5 = arith.constant 0 : index
    %c0_6 = arith.constant 0 : index
    %4 = vector.load %arg3[%c0_5, %c0_6] : memref<1x96xf32, #tpu.memory_space<vmem>>, vector<1x96xf32>
    %5 = vector.broadcast %4 : vector<1x96xf32> to vector<16x96xf32>
    %6 = arith.addf %3, %5 : vector<16x96xf32>
    %7 = vector.extract_strided_slice %6 {offsets = [0, 0], sizes = [16, 32], strides = [1, 1]} : vector<16x96xf32> to vector<16x32xf32>
    %8 = vector.extract_strided_slice %6 {offsets = [0, 32], sizes = [16, 32], strides = [1, 1]} : vector<16x96xf32> to vector<16x32xf32>
    %9 = vector.extract_strided_slice %6 {offsets = [0, 64], sizes = [16, 32], strides = [1, 1]} : vector<16x96xf32> to vector<16x32xf32>
    %c0_7 = arith.constant 0 : index
    %c0_8 = arith.constant 0 : index
    %10 = vector.load %arg6[%c0_7, %c0_8] : memref<32x64xf32, #tpu.memory_space<vmem>>, vector<32x64xf32>
    %c0_9 = arith.constant 0 : index
    %c0_10 = arith.constant 0 : index
    %11 = vector.load %arg7[%c0_9, %c0_10] : memref<32x64xf32, #tpu.memory_space<vmem>>, vector<32x64xf32>
    %cst_11 = arith.constant 0.594603539 : f32
    %12 = vector.broadcast %cst_11 : f32 to vector<16x32xf32>
    %13 = arith.mulf %7, %12 : vector<16x32xf32>
    %cst_12 = arith.constant 0.594603539 : f32
    %14 = vector.broadcast %cst_12 : f32 to vector<16x32xf32>
    %15 = arith.mulf %8, %14 : vector<16x32xf32>
    %cst_13 = arith.constant dense<0.000000e+00> : vector<16x64xf32>
    %16 = tpu.matmul %13, %10, %cst_13 {dimension_numbers = #tpu.dot_dimension_numbers<[1], [0], [0], [1], [0, 0, 1, 1], [], []>} : vector<16x32xf32>, vector<32x64xf32>, vector<16x64xf32> -> vector<16x64xf32>
    %17 = arith.mulf %13, %13 : vector<16x32xf32>
    %cst_14 = arith.constant dense<0.000000e+00> : vector<16x64xf32>
    %18 = tpu.matmul %17, %11, %cst_14 {dimension_numbers = #tpu.dot_dimension_numbers<[1], [0], [0], [1], [0, 0, 1, 1], [], []>} : vector<16x32xf32>, vector<32x64xf32>, vector<16x64xf32> -> vector<16x64xf32>
    %cst_15 = arith.constant 5.000000e-01 : f32
    %19 = vector.broadcast %cst_15 : f32 to vector<16x64xf32>
    %20 = arith.mulf %19, %18 : vector<16x64xf32>
    %21 = arith.subf %16, %20 : vector<16x64xf32>
    %cst_16 = arith.constant dense<0.000000e+00> : vector<16x64xf32>
    %22 = tpu.matmul %15, %10, %cst_16 {dimension_numbers = #tpu.dot_dimension_numbers<[1], [0], [0], [1], [0, 0, 1, 1], [], []>} : vector<16x32xf32>, vector<32x64xf32>, vector<16x64xf32> -> vector<16x64xf32>
    %23 = arith.mulf %15, %15 : vector<16x32xf32>
    %cst_17 = arith.constant dense<0.000000e+00> : vector<16x64xf32>
    %24 = tpu.matmul %23, %11, %cst_17 {dimension_numbers = #tpu.dot_dimension_numbers<[1], [0], [0], [1], [0, 0, 1, 1], [], []>} : vector<16x32xf32>, vector<32x64xf32>, vector<16x64xf32> -> vector<16x64xf32>
    %cst_18 = arith.constant 5.000000e-01 : f32
    %25 = vector.broadcast %cst_18 : f32 to vector<16x64xf32>
    %26 = arith.mulf %25, %24 : vector<16x64xf32>
    %27 = arith.subf %22, %26 : vector<16x64xf32>
    %cst_19 = arith.constant dense<0xFF800000> : vector<16xf32>
    %28 = vector.multi_reduction <maximumf>, %21, %cst_19 [1] : vector<16x64xf32> to vector<16xf32>
    %29 = vector.shape_cast %28 : vector<16xf32> to vector<16x1xf32>
    %cst_20 = arith.constant dense<0xFF800000> : vector<16xf32>
    %30 = vector.multi_reduction <maximumf>, %27, %cst_20 [1] : vector<16x64xf32> to vector<16xf32>
    %31 = vector.shape_cast %30 : vector<16xf32> to vector<16x1xf32>
    %cst_21 = arith.constant dense<0xFF800000> : vector<1xf32>
    %32 = vector.multi_reduction <maximumf>, %31, %cst_21 [0] : vector<16x1xf32> to vector<1xf32>
    %33 = vector.shape_cast %32 : vector<1xf32> to vector<1x1xf32>
    %34 = vector.broadcast %29 : vector<16x1xf32> to vector<16x64xf32>
    %35 = arith.subf %21, %34 : vector<16x64xf32>
    %36 = math.exp %35 : vector<16x64xf32>
    %cst_22 = arith.constant 2.500000e-01 : f32
    %37 = vector.broadcast %cst_22 : f32 to vector<16x64xf32>
    %38 = arith.mulf %37, %36 : vector<16x64xf32>
    %39 = vector.broadcast %33 : vector<1x1xf32> to vector<16x64xf32>
    %40 = arith.subf %27, %39 : vector<16x64xf32>
    %41 = math.exp %40 : vector<16x64xf32>
    %cst_23 = arith.constant 2.500000e-01 : f32
    %42 = vector.broadcast %cst_23 : f32 to vector<16x64xf32>
    %43 = arith.mulf %42, %41 : vector<16x64xf32>
    %c0_24 = arith.constant 0 : index
    %c0_25 = arith.constant 0 : index
    %44 = vector.load %arg8[%c0_24, %c0_25] : memref<16x16xf32, #tpu.memory_space<vmem>>, vector<16x16xf32>
    %c0_26 = arith.constant 0 : index
    %c0_27 = arith.constant 0 : index
    %45 = vector.load %arg4[%c0_26, %c0_27] : memref<32x32xf32, #tpu.memory_space<vmem>>, vector<32x32xf32>
    %46 = vector.extract_strided_slice %38 {offsets = [0, 0], sizes = [16, 16], strides = [1, 1]} : vector<16x64xf32> to vector<16x16xf32>
    %47 = vector.extract_strided_slice %43 {offsets = [0, 0], sizes = [16, 16], strides = [1, 1]} : vector<16x64xf32> to vector<16x16xf32>
    %cst_28 = arith.constant dense<0.000000e+00> : vector<16x16xf32>
    %48 = tpu.matmul %46, %47, %cst_28 {dimension_numbers = #tpu.dot_dimension_numbers<[1], [1], [0], [0], [0, 0, 1, 0], [], []>} : vector<16x16xf32>, vector<16x16xf32>, vector<16x16xf32> -> vector<16x16xf32>
    %49 = arith.mulf %48, %44 : vector<16x16xf32>
    %50 = vector.extract_strided_slice %9 {offsets = [0, 0], sizes = [16, 8], strides = [1, 1]} : vector<16x32xf32> to vector<16x8xf32>
    %cst_29 = arith.constant dense<0.000000e+00> : vector<16x8xf32>
    %51 = tpu.matmul %49, %50, %cst_29 {dimension_numbers = #tpu.dot_dimension_numbers<[1], [0], [0], [1], [0, 0, 1, 1], [], []>} : vector<16x16xf32>, vector<16x8xf32>, vector<16x8xf32> -> vector<16x8xf32>
    %cst_30 = arith.constant dense<0.000000e+00> : vector<16xf32>
    %52 = vector.multi_reduction <add>, %49, %cst_30 [1] : vector<16x16xf32> to vector<16xf32>
    %53 = vector.shape_cast %52 : vector<16xf32> to vector<16x1xf32>
    %cst_31 = arith.constant 9.99999997E-7 : f32
    %54 = vector.broadcast %cst_31 : f32 to vector<16x1xf32>
    %55 = arith.addf %53, %54 : vector<16x1xf32>
    %56 = tpu.reciprocal %55 {approx = true} : vector<16x1xf32> -> vector<16x1xf32>
    %57 = vector.broadcast %56 : vector<16x1xf32> to vector<16x8xf32>
    %58 = arith.mulf %51, %57 : vector<16x8xf32>
    %59 = vector.extract_strided_slice %45 {offsets = [0, 0], sizes = [8, 32], strides = [1, 1]} : vector<32x32xf32> to vector<8x32xf32>
    %cst_32 = arith.constant dense<0.000000e+00> : vector<16x32xf32>
    %60 = tpu.matmul %58, %59, %cst_32 {dimension_numbers = #tpu.dot_dimension_numbers<[1], [0], [0], [1], [0, 0, 1, 1], [], []>} : vector<16x8xf32>, vector<8x32xf32>, vector<16x32xf32> -> vector<16x32xf32>
    %61 = vector.extract_strided_slice %38 {offsets = [0, 16], sizes = [16, 16], strides = [1, 1]} : vector<16x64xf32> to vector<16x16xf32>
    %62 = vector.extract_strided_slice %43 {offsets = [0, 16], sizes = [16, 16], strides = [1, 1]} : vector<16x64xf32> to vector<16x16xf32>
    %cst_33 = arith.constant dense<0.000000e+00> : vector<16x16xf32>
    %63 = tpu.matmul %61, %62, %cst_33 {dimension_numbers = #tpu.dot_dimension_numbers<[1], [1], [0], [0], [0, 0, 1, 0], [], []>} : vector<16x16xf32>, vector<16x16xf32>, vector<16x16xf32> -> vector<16x16xf32>
    %64 = arith.mulf %63, %44 : vector<16x16xf32>
    %65 = vector.extract_strided_slice %9 {offsets = [0, 8], sizes = [16, 8], strides = [1, 1]} : vector<16x32xf32> to vector<16x8xf32>
    %cst_34 = arith.constant dense<0.000000e+00> : vector<16x8xf32>
    %66 = tpu.matmul %64, %65, %cst_34 {dimension_numbers = #tpu.dot_dimension_numbers<[1], [0], [0], [1], [0, 0, 1, 1], [], []>} : vector<16x16xf32>, vector<16x8xf32>, vector<16x8xf32> -> vector<16x8xf32>
    %cst_35 = arith.constant dense<0.000000e+00> : vector<16xf32>
    %67 = vector.multi_reduction <add>, %64, %cst_35 [1] : vector<16x16xf32> to vector<16xf32>
    %68 = vector.shape_cast %67 : vector<16xf32> to vector<16x1xf32>
    %cst_36 = arith.constant 9.99999997E-7 : f32
    %69 = vector.broadcast %cst_36 : f32 to vector<16x1xf32>
    %70 = arith.addf %68, %69 : vector<16x1xf32>
    %71 = tpu.reciprocal %70 {approx = true} : vector<16x1xf32> -> vector<16x1xf32>
    %72 = vector.broadcast %71 : vector<16x1xf32> to vector<16x8xf32>
    %73 = arith.mulf %66, %72 : vector<16x8xf32>
    %74 = vector.extract_strided_slice %45 {offsets = [8, 0], sizes = [8, 32], strides = [1, 1]} : vector<32x32xf32> to vector<8x32xf32>
    %cst_37 = arith.constant dense<0.000000e+00> : vector<16x32xf32>
    %75 = tpu.matmul %73, %74, %cst_37 {dimension_numbers = #tpu.dot_dimension_numbers<[1], [0], [0], [1], [0, 0, 1, 1], [], []>} : vector<16x8xf32>, vector<8x32xf32>, vector<16x32xf32> -> vector<16x32xf32>
    %76 = arith.addf %60, %75 : vector<16x32xf32>
    %77 = vector.extract_strided_slice %38 {offsets = [0, 32], sizes = [16, 16], strides = [1, 1]} : vector<16x64xf32> to vector<16x16xf32>
    %78 = vector.extract_strided_slice %43 {offsets = [0, 32], sizes = [16, 16], strides = [1, 1]} : vector<16x64xf32> to vector<16x16xf32>
    %cst_38 = arith.constant dense<0.000000e+00> : vector<16x16xf32>
    %79 = tpu.matmul %77, %78, %cst_38 {dimension_numbers = #tpu.dot_dimension_numbers<[1], [1], [0], [0], [0, 0, 1, 0], [], []>} : vector<16x16xf32>, vector<16x16xf32>, vector<16x16xf32> -> vector<16x16xf32>
    %80 = arith.mulf %79, %44 : vector<16x16xf32>
    %81 = vector.extract_strided_slice %9 {offsets = [0, 16], sizes = [16, 8], strides = [1, 1]} : vector<16x32xf32> to vector<16x8xf32>
    %cst_39 = arith.constant dense<0.000000e+00> : vector<16x8xf32>
    %82 = tpu.matmul %80, %81, %cst_39 {dimension_numbers = #tpu.dot_dimension_numbers<[1], [0], [0], [1], [0, 0, 1, 1], [], []>} : vector<16x16xf32>, vector<16x8xf32>, vector<16x8xf32> -> vector<16x8xf32>
    %cst_40 = arith.constant dense<0.000000e+00> : vector<16xf32>
    %83 = vector.multi_reduction <add>, %80, %cst_40 [1] : vector<16x16xf32> to vector<16xf32>
    %84 = vector.shape_cast %83 : vector<16xf32> to vector<16x1xf32>
    %cst_41 = arith.constant 9.99999997E-7 : f32
    %85 = vector.broadcast %cst_41 : f32 to vector<16x1xf32>
    %86 = arith.addf %84, %85 : vector<16x1xf32>
    %87 = tpu.reciprocal %86 {approx = true} : vector<16x1xf32> -> vector<16x1xf32>
    %88 = vector.broadcast %87 : vector<16x1xf32> to vector<16x8xf32>
    %89 = arith.mulf %82, %88 : vector<16x8xf32>
    %90 = vector.extract_strided_slice %45 {offsets = [16, 0], sizes = [8, 32], strides = [1, 1]} : vector<32x32xf32> to vector<8x32xf32>
    %cst_42 = arith.constant dense<0.000000e+00> : vector<16x32xf32>
    %91 = tpu.matmul %89, %90, %cst_42 {dimension_numbers = #tpu.dot_dimension_numbers<[1], [0], [0], [1], [0, 0, 1, 1], [], []>} : vector<16x8xf32>, vector<8x32xf32>, vector<16x32xf32> -> vector<16x32xf32>
    %92 = arith.addf %76, %91 : vector<16x32xf32>
    %93 = vector.extract_strided_slice %38 {offsets = [0, 48], sizes = [16, 16], strides = [1, 1]} : vector<16x64xf32> to vector<16x16xf32>
    %94 = vector.extract_strided_slice %43 {offsets = [0, 48], sizes = [16, 16], strides = [1, 1]} : vector<16x64xf32> to vector<16x16xf32>
    %cst_43 = arith.constant dense<0.000000e+00> : vector<16x16xf32>
    %95 = tpu.matmul %93, %94, %cst_43 {dimension_numbers = #tpu.dot_dimension_numbers<[1], [1], [0], [0], [0, 0, 1, 0], [], []>} : vector<16x16xf32>, vector<16x16xf32>, vector<16x16xf32> -> vector<16x16xf32>
    %96 = arith.mulf %95, %44 : vector<16x16xf32>
    %97 = vector.extract_strided_slice %9 {offsets = [0, 24], sizes = [16, 8], strides = [1, 1]} : vector<16x32xf32> to vector<16x8xf32>
    %cst_44 = arith.constant dense<0.000000e+00> : vector<16x8xf32>
    %98 = tpu.matmul %96, %97, %cst_44 {dimension_numbers = #tpu.dot_dimension_numbers<[1], [0], [0], [1], [0, 0, 1, 1], [], []>} : vector<16x16xf32>, vector<16x8xf32>, vector<16x8xf32> -> vector<16x8xf32>
    %cst_45 = arith.constant dense<0.000000e+00> : vector<16xf32>
    %99 = vector.multi_reduction <add>, %96, %cst_45 [1] : vector<16x16xf32> to vector<16xf32>
    %100 = vector.shape_cast %99 : vector<16xf32> to vector<16x1xf32>
    %cst_46 = arith.constant 9.99999997E-7 : f32
    %101 = vector.broadcast %cst_46 : f32 to vector<16x1xf32>
    %102 = arith.addf %100, %101 : vector<16x1xf32>
    %103 = tpu.reciprocal %102 {approx = true} : vector<16x1xf32> -> vector<16x1xf32>
    %104 = vector.broadcast %103 : vector<16x1xf32> to vector<16x8xf32>
    %105 = arith.mulf %98, %104 : vector<16x8xf32>
    %106 = vector.extract_strided_slice %45 {offsets = [24, 0], sizes = [8, 32], strides = [1, 1]} : vector<32x32xf32> to vector<8x32xf32>
    %cst_47 = arith.constant dense<0.000000e+00> : vector<16x32xf32>
    %107 = tpu.matmul %105, %106, %cst_47 {dimension_numbers = #tpu.dot_dimension_numbers<[1], [0], [0], [1], [0, 0, 1, 1], [], []>} : vector<16x8xf32>, vector<8x32xf32>, vector<16x32xf32> -> vector<16x32xf32>
    %108 = arith.addf %92, %107 : vector<16x32xf32>
    %c0_48 = arith.constant 0 : index
    %c0_49 = arith.constant 0 : index
    %109 = vector.load %arg5[%c0_48, %c0_49] : memref<1x32xf32, #tpu.memory_space<vmem>>, vector<1x32xf32>
    %110 = vector.broadcast %109 : vector<1x32xf32> to vector<16x32xf32>
    %111 = arith.addf %108, %110 : vector<16x32xf32>
    %112 = arith.addf %0, %111 : vector<16x32xf32>
    %c0_50 = arith.constant 0 : index
    %c0_51 = arith.constant 0 : index
    %113 = vector.load %arg9[%c0_50, %c0_51] : memref<1x32xf32, #tpu.memory_space<vmem>>, vector<1x32xf32>
    %c0_52 = arith.constant 0 : index
    %c0_53 = arith.constant 0 : index
    %114 = vector.load %arg10[%c0_52, %c0_53] : memref<1x32xf32, #tpu.memory_space<vmem>>, vector<1x32xf32>
    %cst_54 = arith.constant dense<0.000000e+00> : vector<16xf32>
    %115 = vector.multi_reduction <add>, %112, %cst_54 [1] : vector<16x32xf32> to vector<16xf32>
    %116 = vector.shape_cast %115 : vector<16xf32> to vector<16x1xf32>
    %cst_55 = arith.constant 3.200000e+01 : f32
    %117 = vector.broadcast %cst_55 : f32 to vector<16x1xf32>
    %118 = arith.divf %116, %117 : vector<16x1xf32>
    %119 = vector.broadcast %118 : vector<16x1xf32> to vector<16x32xf32>
    %120 = arith.subf %112, %119 : vector<16x32xf32>
    %121 = arith.mulf %120, %120 : vector<16x32xf32>
    %cst_56 = arith.constant dense<0.000000e+00> : vector<16xf32>
    %122 = vector.multi_reduction <add>, %121, %cst_56 [1] : vector<16x32xf32> to vector<16xf32>
    %123 = vector.shape_cast %122 : vector<16xf32> to vector<16x1xf32>
    %cst_57 = arith.constant 3.200000e+01 : f32
    %124 = vector.broadcast %cst_57 : f32 to vector<16x1xf32>
    %125 = arith.divf %123, %124 : vector<16x1xf32>
    %cst_58 = arith.constant 9.99999974E-6 : f32
    %126 = vector.broadcast %cst_58 : f32 to vector<16x1xf32>
    %127 = arith.addf %125, %126 : vector<16x1xf32>
    %128 = math.rsqrt %127 : vector<16x1xf32>
    %129 = vector.broadcast %128 : vector<16x1xf32> to vector<16x32xf32>
    %130 = arith.mulf %120, %129 : vector<16x32xf32>
    %131 = vector.broadcast %113 : vector<1x32xf32> to vector<16x32xf32>
    %132 = arith.mulf %130, %131 : vector<16x32xf32>
    %133 = vector.broadcast %114 : vector<1x32xf32> to vector<16x32xf32>
    %134 = arith.addf %132, %133 : vector<16x32xf32>
    %c0_59 = arith.constant 0 : index
    %c0_60 = arith.constant 0 : index
    %135 = vector.load %arg11[%c0_59, %c0_60] : memref<32x32xf32, #tpu.memory_space<vmem>>, vector<32x32xf32>
    %cst_61 = arith.constant dense<0.000000e+00> : vector<16x32xf32>
    %136 = tpu.matmul %134, %135, %cst_61 {dimension_numbers = #tpu.dot_dimension_numbers<[1], [0], [0], [1], [0, 0, 1, 1], [], []>} : vector<16x32xf32>, vector<32x32xf32>, vector<16x32xf32> -> vector<16x32xf32>
    %c0_62 = arith.constant 0 : index
    %c0_63 = arith.constant 0 : index
    %137 = vector.load %arg12[%c0_62, %c0_63] : memref<1x32xf32, #tpu.memory_space<vmem>>, vector<1x32xf32>
    %138 = vector.broadcast %137 : vector<1x32xf32> to vector<16x32xf32>
    %139 = arith.addf %136, %138 : vector<16x32xf32>
    %c0_64 = arith.constant 0 : index
    %c0_65 = arith.constant 0 : index
    %140 = vector.load %arg13[%c0_64, %c0_65] : memref<32x64xf32, #tpu.memory_space<vmem>>, vector<32x64xf32>
    %cst_66 = arith.constant dense<0.000000e+00> : vector<8x64xf32>
    %141 = tpu.matmul %1, %140, %cst_66 {dimension_numbers = #tpu.dot_dimension_numbers<[1], [0], [0], [1], [0, 0, 1, 1], [], []>} : vector<8x32xf32>, vector<32x64xf32>, vector<8x64xf32> -> vector<8x64xf32>
    %c0_67 = arith.constant 0 : index
    %c0_68 = arith.constant 0 : index
    %142 = vector.load %arg14[%c0_67, %c0_68] : memref<1x64xf32, #tpu.memory_space<vmem>>, vector<1x64xf32>
    %143 = vector.broadcast %142 : vector<1x64xf32> to vector<8x64xf32>
    %144 = arith.addf %141, %143 : vector<8x64xf32>
    %145 = vector.extract_strided_slice %144 {offsets = [0, 0], sizes = [8, 32], strides = [1, 1]} : vector<8x64xf32> to vector<8x32xf32>
    %146 = vector.extract_strided_slice %144 {offsets = [0, 32], sizes = [8, 32], strides = [1, 1]} : vector<8x64xf32> to vector<8x32xf32>
    %c0_69 = arith.constant 0 : index
    %c0_70 = arith.constant 0 : index
    %147 = vector.load %arg17[%c0_69, %c0_70] : memref<16x8xf32, #tpu.memory_space<vmem>>, vector<16x8xf32>
    %c0_71 = arith.constant 0 : index
    %c0_72 = arith.constant 0 : index
    %148 = vector.load %arg15[%c0_71, %c0_72] : memref<32x32xf32, #tpu.memory_space<vmem>>, vector<32x32xf32>
    %149 = vector.extract_strided_slice %139 {offsets = [0, 0], sizes = [16, 8], strides = [1, 1]} : vector<16x32xf32> to vector<16x8xf32>
    %150 = vector.extract_strided_slice %145 {offsets = [0, 0], sizes = [8, 8], strides = [1, 1]} : vector<8x32xf32> to vector<8x8xf32>
    %cst_73 = arith.constant dense<0.000000e+00> : vector<16x8xf32>
    %151 = tpu.matmul %149, %150, %cst_73 {dimension_numbers = #tpu.dot_dimension_numbers<[1], [1], [0], [0], [0, 0, 1, 0], [], []>} : vector<16x8xf32>, vector<8x8xf32>, vector<16x8xf32> -> vector<16x8xf32>
    %cst_74 = arith.constant 0.353553385 : f32
    %152 = vector.broadcast %cst_74 : f32 to vector<16x8xf32>
    %153 = arith.mulf %151, %152 : vector<16x8xf32>
    %154 = arith.addf %153, %147 : vector<16x8xf32>
    %cst_75 = arith.constant dense<0xFF800000> : vector<16xf32>
    %155 = vector.multi_reduction <maximumf>, %154, %cst_75 [1] : vector<16x8xf32> to vector<16xf32>
    %156 = vector.shape_cast %155 : vector<16xf32> to vector<16x1xf32>
    %157 = vector.broadcast %156 : vector<16x1xf32> to vector<16x8xf32>
    %158 = arith.subf %154, %157 : vector<16x8xf32>
    %159 = math.exp %158 : vector<16x8xf32>
    %cst_76 = arith.constant dense<0.000000e+00> : vector<16xf32>
    %160 = vector.multi_reduction <add>, %159, %cst_76 [1] : vector<16x8xf32> to vector<16xf32>
    %161 = vector.shape_cast %160 : vector<16xf32> to vector<16x1xf32>
    %162 = tpu.reciprocal %161 {approx = true} : vector<16x1xf32> -> vector<16x1xf32>
    %163 = vector.broadcast %162 : vector<16x1xf32> to vector<16x8xf32>
    %164 = arith.mulf %159, %163 : vector<16x8xf32>
    %165 = vector.extract_strided_slice %146 {offsets = [0, 0], sizes = [8, 8], strides = [1, 1]} : vector<8x32xf32> to vector<8x8xf32>
    %cst_77 = arith.constant dense<0.000000e+00> : vector<16x8xf32>
    %166 = tpu.matmul %164, %165, %cst_77 {dimension_numbers = #tpu.dot_dimension_numbers<[1], [0], [0], [1], [0, 0, 1, 1], [], []>} : vector<16x8xf32>, vector<8x8xf32>, vector<16x8xf32> -> vector<16x8xf32>
    %167 = vector.extract_strided_slice %148 {offsets = [0, 0], sizes = [8, 32], strides = [1, 1]} : vector<32x32xf32> to vector<8x32xf32>
    %cst_78 = arith.constant dense<0.000000e+00> : vector<16x32xf32>
    %168 = tpu.matmul %166, %167, %cst_78 {dimension_numbers = #tpu.dot_dimension_numbers<[1], [0], [0], [1], [0, 0, 1, 1], [], []>} : vector<16x8xf32>, vector<8x32xf32>, vector<16x32xf32> -> vector<16x32xf32>
    %169 = vector.extract_strided_slice %139 {offsets = [0, 8], sizes = [16, 8], strides = [1, 1]} : vector<16x32xf32> to vector<16x8xf32>
    %170 = vector.extract_strided_slice %145 {offsets = [0, 8], sizes = [8, 8], strides = [1, 1]} : vector<8x32xf32> to vector<8x8xf32>
    %cst_79 = arith.constant dense<0.000000e+00> : vector<16x8xf32>
    %171 = tpu.matmul %169, %170, %cst_79 {dimension_numbers = #tpu.dot_dimension_numbers<[1], [1], [0], [0], [0, 0, 1, 0], [], []>} : vector<16x8xf32>, vector<8x8xf32>, vector<16x8xf32> -> vector<16x8xf32>
    %cst_80 = arith.constant 0.353553385 : f32
    %172 = vector.broadcast %cst_80 : f32 to vector<16x8xf32>
    %173 = arith.mulf %171, %172 : vector<16x8xf32>
    %174 = arith.addf %173, %147 : vector<16x8xf32>
    %cst_81 = arith.constant dense<0xFF800000> : vector<16xf32>
    %175 = vector.multi_reduction <maximumf>, %174, %cst_81 [1] : vector<16x8xf32> to vector<16xf32>
    %176 = vector.shape_cast %175 : vector<16xf32> to vector<16x1xf32>
    %177 = vector.broadcast %176 : vector<16x1xf32> to vector<16x8xf32>
    %178 = arith.subf %174, %177 : vector<16x8xf32>
    %179 = math.exp %178 : vector<16x8xf32>
    %cst_82 = arith.constant dense<0.000000e+00> : vector<16xf32>
    %180 = vector.multi_reduction <add>, %179, %cst_82 [1] : vector<16x8xf32> to vector<16xf32>
    %181 = vector.shape_cast %180 : vector<16xf32> to vector<16x1xf32>
    %182 = tpu.reciprocal %181 {approx = true} : vector<16x1xf32> -> vector<16x1xf32>
    %183 = vector.broadcast %182 : vector<16x1xf32> to vector<16x8xf32>
    %184 = arith.mulf %179, %183 : vector<16x8xf32>
    %185 = vector.extract_strided_slice %146 {offsets = [0, 8], sizes = [8, 8], strides = [1, 1]} : vector<8x32xf32> to vector<8x8xf32>
    %cst_83 = arith.constant dense<0.000000e+00> : vector<16x8xf32>
    %186 = tpu.matmul %184, %185, %cst_83 {dimension_numbers = #tpu.dot_dimension_numbers<[1], [0], [0], [1], [0, 0, 1, 1], [], []>} : vector<16x8xf32>, vector<8x8xf32>, vector<16x8xf32> -> vector<16x8xf32>
    %187 = vector.extract_strided_slice %148 {offsets = [8, 0], sizes = [8, 32], strides = [1, 1]} : vector<32x32xf32> to vector<8x32xf32>
    %cst_84 = arith.constant dense<0.000000e+00> : vector<16x32xf32>
    %188 = tpu.matmul %186, %187, %cst_84 {dimension_numbers = #tpu.dot_dimension_numbers<[1], [0], [0], [1], [0, 0, 1, 1], [], []>} : vector<16x8xf32>, vector<8x32xf32>, vector<16x32xf32> -> vector<16x32xf32>
    %189 = arith.addf %168, %188 : vector<16x32xf32>
    %190 = vector.extract_strided_slice %139 {offsets = [0, 16], sizes = [16, 8], strides = [1, 1]} : vector<16x32xf32> to vector<16x8xf32>
    %191 = vector.extract_strided_slice %145 {offsets = [0, 16], sizes = [8, 8], strides = [1, 1]} : vector<8x32xf32> to vector<8x8xf32>
    %cst_85 = arith.constant dense<0.000000e+00> : vector<16x8xf32>
    %192 = tpu.matmul %190, %191, %cst_85 {dimension_numbers = #tpu.dot_dimension_numbers<[1], [1], [0], [0], [0, 0, 1, 0], [], []>} : vector<16x8xf32>, vector<8x8xf32>, vector<16x8xf32> -> vector<16x8xf32>
    %cst_86 = arith.constant 0.353553385 : f32
    %193 = vector.broadcast %cst_86 : f32 to vector<16x8xf32>
    %194 = arith.mulf %192, %193 : vector<16x8xf32>
    %195 = arith.addf %194, %147 : vector<16x8xf32>
    %cst_87 = arith.constant dense<0xFF800000> : vector<16xf32>
    %196 = vector.multi_reduction <maximumf>, %195, %cst_87 [1] : vector<16x8xf32> to vector<16xf32>
    %197 = vector.shape_cast %196 : vector<16xf32> to vector<16x1xf32>
    %198 = vector.broadcast %197 : vector<16x1xf32> to vector<16x8xf32>
    %199 = arith.subf %195, %198 : vector<16x8xf32>
    %200 = math.exp %199 : vector<16x8xf32>
    %cst_88 = arith.constant dense<0.000000e+00> : vector<16xf32>
    %201 = vector.multi_reduction <add>, %200, %cst_88 [1] : vector<16x8xf32> to vector<16xf32>
    %202 = vector.shape_cast %201 : vector<16xf32> to vector<16x1xf32>
    %203 = tpu.reciprocal %202 {approx = true} : vector<16x1xf32> -> vector<16x1xf32>
    %204 = vector.broadcast %203 : vector<16x1xf32> to vector<16x8xf32>
    %205 = arith.mulf %200, %204 : vector<16x8xf32>
    %206 = vector.extract_strided_slice %146 {offsets = [0, 16], sizes = [8, 8], strides = [1, 1]} : vector<8x32xf32> to vector<8x8xf32>
    %cst_89 = arith.constant dense<0.000000e+00> : vector<16x8xf32>
    %207 = tpu.matmul %205, %206, %cst_89 {dimension_numbers = #tpu.dot_dimension_numbers<[1], [0], [0], [1], [0, 0, 1, 1], [], []>} : vector<16x8xf32>, vector<8x8xf32>, vector<16x8xf32> -> vector<16x8xf32>
    %208 = vector.extract_strided_slice %148 {offsets = [16, 0], sizes = [8, 32], strides = [1, 1]} : vector<32x32xf32> to vector<8x32xf32>
    %cst_90 = arith.constant dense<0.000000e+00> : vector<16x32xf32>
    %209 = tpu.matmul %207, %208, %cst_90 {dimension_numbers = #tpu.dot_dimension_numbers<[1], [0], [0], [1], [0, 0, 1, 1], [], []>} : vector<16x8xf32>, vector<8x32xf32>, vector<16x32xf32> -> vector<16x32xf32>
    %210 = arith.addf %189, %209 : vector<16x32xf32>
    %211 = vector.extract_strided_slice %139 {offsets = [0, 24], sizes = [16, 8], strides = [1, 1]} : vector<16x32xf32> to vector<16x8xf32>
    %212 = vector.extract_strided_slice %145 {offsets = [0, 24], sizes = [8, 8], strides = [1, 1]} : vector<8x32xf32> to vector<8x8xf32>
    %cst_91 = arith.constant dense<0.000000e+00> : vector<16x8xf32>
    %213 = tpu.matmul %211, %212, %cst_91 {dimension_numbers = #tpu.dot_dimension_numbers<[1], [1], [0], [0], [0, 0, 1, 0], [], []>} : vector<16x8xf32>, vector<8x8xf32>, vector<16x8xf32> -> vector<16x8xf32>
    %cst_92 = arith.constant 0.353553385 : f32
    %214 = vector.broadcast %cst_92 : f32 to vector<16x8xf32>
    %215 = arith.mulf %213, %214 : vector<16x8xf32>
    %216 = arith.addf %215, %147 : vector<16x8xf32>
    %cst_93 = arith.constant dense<0xFF800000> : vector<16xf32>
    %217 = vector.multi_reduction <maximumf>, %216, %cst_93 [1] : vector<16x8xf32> to vector<16xf32>
    %218 = vector.shape_cast %217 : vector<16xf32> to vector<16x1xf32>
    %219 = vector.broadcast %218 : vector<16x1xf32> to vector<16x8xf32>
    %220 = arith.subf %216, %219 : vector<16x8xf32>
    %221 = math.exp %220 : vector<16x8xf32>
    %cst_94 = arith.constant dense<0.000000e+00> : vector<16xf32>
    %222 = vector.multi_reduction <add>, %221, %cst_94 [1] : vector<16x8xf32> to vector<16xf32>
    %223 = vector.shape_cast %222 : vector<16xf32> to vector<16x1xf32>
    %224 = tpu.reciprocal %223 {approx = true} : vector<16x1xf32> -> vector<16x1xf32>
    %225 = vector.broadcast %224 : vector<16x1xf32> to vector<16x8xf32>
    %226 = arith.mulf %221, %225 : vector<16x8xf32>
    %227 = vector.extract_strided_slice %146 {offsets = [0, 24], sizes = [8, 8], strides = [1, 1]} : vector<8x32xf32> to vector<8x8xf32>
    %cst_95 = arith.constant dense<0.000000e+00> : vector<16x8xf32>
    %228 = tpu.matmul %226, %227, %cst_95 {dimension_numbers = #tpu.dot_dimension_numbers<[1], [0], [0], [1], [0, 0, 1, 1], [], []>} : vector<16x8xf32>, vector<8x8xf32>, vector<16x8xf32> -> vector<16x8xf32>
    %229 = vector.extract_strided_slice %148 {offsets = [24, 0], sizes = [8, 32], strides = [1, 1]} : vector<32x32xf32> to vector<8x32xf32>
    %cst_96 = arith.constant dense<0.000000e+00> : vector<16x32xf32>
    %230 = tpu.matmul %228, %229, %cst_96 {dimension_numbers = #tpu.dot_dimension_numbers<[1], [0], [0], [1], [0, 0, 1, 1], [], []>} : vector<16x8xf32>, vector<8x32xf32>, vector<16x32xf32> -> vector<16x32xf32>
    %231 = arith.addf %210, %230 : vector<16x32xf32>
    %c0_97 = arith.constant 0 : index
    %c0_98 = arith.constant 0 : index
    %232 = vector.load %arg16[%c0_97, %c0_98] : memref<1x32xf32, #tpu.memory_space<vmem>>, vector<1x32xf32>
    %233 = vector.broadcast %232 : vector<1x32xf32> to vector<16x32xf32>
    %234 = arith.addf %231, %233 : vector<16x32xf32>
    %235 = arith.addf %134, %234 : vector<16x32xf32>
    %c0_99 = arith.constant 0 : index
    %c0_100 = arith.constant 0 : index
    %236 = vector.load %arg18[%c0_99, %c0_100] : memref<1x32xf32, #tpu.memory_space<vmem>>, vector<1x32xf32>
    %c0_101 = arith.constant 0 : index
    %c0_102 = arith.constant 0 : index
    %237 = vector.load %arg19[%c0_101, %c0_102] : memref<1x32xf32, #tpu.memory_space<vmem>>, vector<1x32xf32>
    %cst_103 = arith.constant dense<0.000000e+00> : vector<16xf32>
    %238 = vector.multi_reduction <add>, %235, %cst_103 [1] : vector<16x32xf32> to vector<16xf32>
    %239 = vector.shape_cast %238 : vector<16xf32> to vector<16x1xf32>
    %cst_104 = arith.constant 3.200000e+01 : f32
    %240 = vector.broadcast %cst_104 : f32 to vector<16x1xf32>
    %241 = arith.divf %239, %240 : vector<16x1xf32>
    %242 = vector.broadcast %241 : vector<16x1xf32> to vector<16x32xf32>
    %243 = arith.subf %235, %242 : vector<16x32xf32>
    %244 = arith.mulf %243, %243 : vector<16x32xf32>
    %cst_105 = arith.constant dense<0.000000e+00> : vector<16xf32>
    %245 = vector.multi_reduction <add>, %244, %cst_105 [1] : vector<16x32xf32> to vector<16xf32>
    %246 = vector.shape_cast %245 : vector<16xf32> to vector<16x1xf32>
    %cst_106 = arith.constant 3.200000e+01 : f32
    %247 = vector.broadcast %cst_106 : f32 to vector<16x1xf32>
    %248 = arith.divf %246, %247 : vector<16x1xf32>
    %cst_107 = arith.constant 9.99999974E-6 : f32
    %249 = vector.broadcast %cst_107 : f32 to vector<16x1xf32>
    %250 = arith.addf %248, %249 : vector<16x1xf32>
    %251 = math.rsqrt %250 : vector<16x1xf32>
    %252 = vector.broadcast %251 : vector<16x1xf32> to vector<16x32xf32>
    %253 = arith.mulf %243, %252 : vector<16x32xf32>
    %254 = vector.broadcast %236 : vector<1x32xf32> to vector<16x32xf32>
    %255 = arith.mulf %253, %254 : vector<16x32xf32>
    %256 = vector.broadcast %237 : vector<1x32xf32> to vector<16x32xf32>
    %257 = arith.addf %255, %256 : vector<16x32xf32>
    %c0_108 = arith.constant 0 : index
    %c0_109 = arith.constant 0 : index
    %258 = vector.load %arg20[%c0_108, %c0_109] : memref<32x64xf32, #tpu.memory_space<vmem>>, vector<32x64xf32>
    %cst_110 = arith.constant dense<0.000000e+00> : vector<16x64xf32>
    %259 = tpu.matmul %257, %258, %cst_110 {dimension_numbers = #tpu.dot_dimension_numbers<[1], [0], [0], [1], [0, 0, 1, 1], [], []>} : vector<16x32xf32>, vector<32x64xf32>, vector<16x64xf32> -> vector<16x64xf32>
    %c0_111 = arith.constant 0 : index
    %c0_112 = arith.constant 0 : index
    %260 = vector.load %arg21[%c0_111, %c0_112] : memref<1x64xf32, #tpu.memory_space<vmem>>, vector<1x64xf32>
    %261 = vector.broadcast %260 : vector<1x64xf32> to vector<16x64xf32>
    %262 = arith.addf %259, %261 : vector<16x64xf32>
    %263 = arith.mulf %262, %262 : vector<16x64xf32>
    %264 = arith.mulf %262, %263 : vector<16x64xf32>
    %cst_113 = arith.constant 4.471500e-02 : f32
    %265 = vector.broadcast %cst_113 : f32 to vector<16x64xf32>
    %266 = arith.mulf %265, %264 : vector<16x64xf32>
    %267 = arith.addf %262, %266 : vector<16x64xf32>
    %cst_114 = arith.constant 0.797884583 : f32
    %268 = vector.broadcast %cst_114 : f32 to vector<16x64xf32>
    %269 = arith.mulf %268, %267 : vector<16x64xf32>
    %270 = math.tanh %269 : vector<16x64xf32>
    %cst_115 = arith.constant 1.000000e+00 : f32
    %271 = vector.broadcast %cst_115 : f32 to vector<16x64xf32>
    %272 = arith.addf %271, %270 : vector<16x64xf32>
    %cst_116 = arith.constant 5.000000e-01 : f32
    %273 = vector.broadcast %cst_116 : f32 to vector<16x64xf32>
    %274 = arith.mulf %273, %272 : vector<16x64xf32>
    %275 = arith.mulf %262, %274 : vector<16x64xf32>
    %c0_117 = arith.constant 0 : index
    %c0_118 = arith.constant 0 : index
    %276 = vector.load %arg22[%c0_117, %c0_118] : memref<64x32xf32, #tpu.memory_space<vmem>>, vector<64x32xf32>
    %cst_119 = arith.constant dense<0.000000e+00> : vector<16x32xf32>
    %277 = tpu.matmul %275, %276, %cst_119 {dimension_numbers = #tpu.dot_dimension_numbers<[1], [0], [0], [1], [0, 0, 1, 1], [], []>} : vector<16x64xf32>, vector<64x32xf32>, vector<16x32xf32> -> vector<16x32xf32>
    %c0_120 = arith.constant 0 : index
    %c0_121 = arith.constant 0 : index
    %278 = vector.load %arg23[%c0_120, %c0_121] : memref<1x32xf32, #tpu.memory_space<vmem>>, vector<1x32xf32>
    %279 = vector.broadcast %278 : vector<1x32xf32> to vector<16x32xf32>
    %280 = arith.addf %277, %279 : vector<16x32xf32>
    %281 = arith.addf %257, %280 : vector<16x32xf32>
    %c0_122 = arith.constant 0 : index
    %c0_123 = arith.constant 0 : index
    %282 = vector.load %arg24[%c0_122, %c0_123] : memref<1x32xf32, #tpu.memory_space<vmem>>, vector<1x32xf32>
    %c0_124 = arith.constant 0 : index
    %c0_125 = arith.constant 0 : index
    %283 = vector.load %arg25[%c0_124, %c0_125] : memref<1x32xf32, #tpu.memory_space<vmem>>, vector<1x32xf32>
    %cst_126 = arith.constant dense<0.000000e+00> : vector<16xf32>
    %284 = vector.multi_reduction <add>, %281, %cst_126 [1] : vector<16x32xf32> to vector<16xf32>
    %285 = vector.shape_cast %284 : vector<16xf32> to vector<16x1xf32>
    %cst_127 = arith.constant 3.200000e+01 : f32
    %286 = vector.broadcast %cst_127 : f32 to vector<16x1xf32>
    %287 = arith.divf %285, %286 : vector<16x1xf32>
    %288 = vector.broadcast %287 : vector<16x1xf32> to vector<16x32xf32>
    %289 = arith.subf %281, %288 : vector<16x32xf32>
    %290 = arith.mulf %289, %289 : vector<16x32xf32>
    %cst_128 = arith.constant dense<0.000000e+00> : vector<16xf32>
    %291 = vector.multi_reduction <add>, %290, %cst_128 [1] : vector<16x32xf32> to vector<16xf32>
    %292 = vector.shape_cast %291 : vector<16xf32> to vector<16x1xf32>
    %cst_129 = arith.constant 3.200000e+01 : f32
    %293 = vector.broadcast %cst_129 : f32 to vector<16x1xf32>
    %294 = arith.divf %292, %293 : vector<16x1xf32>
    %cst_130 = arith.constant 9.99999974E-6 : f32
    %295 = vector.broadcast %cst_130 : f32 to vector<16x1xf32>
    %296 = arith.addf %294, %295 : vector<16x1xf32>
    %297 = math.rsqrt %296 : vector<16x1xf32>
    %298 = vector.broadcast %297 : vector<16x1xf32> to vector<16x32xf32>
    %299 = arith.mulf %289, %298 : vector<16x32xf32>
    %300 = vector.broadcast %282 : vector<1x32xf32> to vector<16x32xf32>
    %301 = arith.mulf %299, %300 : vector<16x32xf32>
    %302 = vector.broadcast %283 : vector<1x32xf32> to vector<16x32xf32>
    %303 = arith.addf %301, %302 : vector<16x32xf32>
    %c0_131 = arith.constant 0 : index
    %c0_132 = arith.constant 0 : index
    %304 = vector.load %arg26[%c0_131, %c0_132] : memref<16x32xf32, #tpu.memory_space<vmem>>, vector<16x32xf32>
    tpu.vector_store %arg26[%c0_131, %c0_132], %303 {strides = array<i32>} : memref<16x32xf32, #tpu.memory_space<vmem>>, vector<16x32xf32>,
    return
  }
}

module attributes {stable_mosaic.version = 11 : i64} {
  func.func @_norm_proj_kernel(%arg0: memref<16x32xf32, #tpu.memory_space<vmem>>, %arg1: memref<1x32xf32, #tpu.memory_space<vmem>>, %arg2: memref<1x32xf32, #tpu.memory_space<vmem>>, %arg3: memref<32x4xf32, #tpu.memory_space<vmem>>, %arg4: memref<1x4xf32, #tpu.memory_space<vmem>>, %arg5: memref<16x4xf32, #tpu.memory_space<vmem>>) attributes {dimension_semantics = [], scalar_prefetch = 0 : i64, scratch_operands = 0 : i64, tpu.core_type = #tpu.core_type<tc>} {
    %c0 = arith.constant 0 : index
    %c0_0 = arith.constant 0 : index
    %0 = vector.load %arg0[%c0, %c0_0] : memref<16x32xf32, #tpu.memory_space<vmem>>, vector<16x32xf32>
    %c0_1 = arith.constant 0 : index
    %c0_2 = arith.constant 0 : index
    %1 = vector.load %arg1[%c0_1, %c0_2] : memref<1x32xf32, #tpu.memory_space<vmem>>, vector<1x32xf32>
    %c0_3 = arith.constant 0 : index
    %c0_4 = arith.constant 0 : index
    %2 = vector.load %arg2[%c0_3, %c0_4] : memref<1x32xf32, #tpu.memory_space<vmem>>, vector<1x32xf32>
    %cst = arith.constant dense<0.000000e+00> : vector<16xf32>
    %3 = vector.multi_reduction <add>, %0, %cst [1] : vector<16x32xf32> to vector<16xf32>
    %4 = vector.shape_cast %3 : vector<16xf32> to vector<16x1xf32>
    %cst_5 = arith.constant 3.200000e+01 : f32
    %5 = vector.broadcast %cst_5 : f32 to vector<16x1xf32>
    %6 = arith.divf %4, %5 : vector<16x1xf32>
    %7 = vector.broadcast %6 : vector<16x1xf32> to vector<16x32xf32>
    %8 = arith.subf %0, %7 : vector<16x32xf32>
    %9 = arith.mulf %8, %8 : vector<16x32xf32>
    %cst_6 = arith.constant dense<0.000000e+00> : vector<16xf32>
    %10 = vector.multi_reduction <add>, %9, %cst_6 [1] : vector<16x32xf32> to vector<16xf32>
    %11 = vector.shape_cast %10 : vector<16xf32> to vector<16x1xf32>
    %cst_7 = arith.constant 3.200000e+01 : f32
    %12 = vector.broadcast %cst_7 : f32 to vector<16x1xf32>
    %13 = arith.divf %11, %12 : vector<16x1xf32>
    %cst_8 = arith.constant 9.99999974E-6 : f32
    %14 = vector.broadcast %cst_8 : f32 to vector<16x1xf32>
    %15 = arith.addf %13, %14 : vector<16x1xf32>
    %16 = math.rsqrt %15 : vector<16x1xf32>
    %17 = vector.broadcast %16 : vector<16x1xf32> to vector<16x32xf32>
    %18 = arith.mulf %8, %17 : vector<16x32xf32>
    %19 = vector.broadcast %1 : vector<1x32xf32> to vector<16x32xf32>
    %20 = arith.mulf %18, %19 : vector<16x32xf32>
    %21 = vector.broadcast %2 : vector<1x32xf32> to vector<16x32xf32>
    %22 = arith.addf %20, %21 : vector<16x32xf32>
    %c0_9 = arith.constant 0 : index
    %c0_10 = arith.constant 0 : index
    %23 = vector.load %arg3[%c0_9, %c0_10] : memref<32x4xf32, #tpu.memory_space<vmem>>, vector<32x4xf32>
    %cst_11 = arith.constant dense<0.000000e+00> : vector<16x4xf32>
    %24 = tpu.matmul %22, %23, %cst_11 {dimension_numbers = #tpu.dot_dimension_numbers<[1], [0], [0], [1], [0, 0, 1, 1], [], []>} : vector<16x32xf32>, vector<32x4xf32>, vector<16x4xf32> -> vector<16x4xf32>
    %c0_12 = arith.constant 0 : index
    %c0_13 = arith.constant 0 : index
    %25 = vector.load %arg4[%c0_12, %c0_13] : memref<1x4xf32, #tpu.memory_space<vmem>>, vector<1x4xf32>
    %26 = vector.broadcast %25 : vector<1x4xf32> to vector<16x4xf32>
    %27 = arith.addf %24, %26 : vector<16x4xf32>
    %c0_14 = arith.constant 0 : index
    %c0_15 = arith.constant 0 : index
    %28 = vector.load %arg5[%c0_14, %c0_15] : memref<16x4xf32, #tpu.memory_space<vmem>>, vector<16x4xf32>
    tpu.vector_store %arg5[%c0_14, %c0_15], %27 {strides = array<i32>} : memref<16x4xf32, #tpu.memory_space<vmem>>, vector<16x4xf32>,
    return
  }
}

</mosaic_0001>

<llo_original>
// kernel: _lambda_.13
$region0: #{_lambda_.13}
  #allocation0 [shape = 'u32[]', space=smem, size = 0x4, offset = 0x4, fixed_abs, tag = 'smem constant byte address 0x4 - core index']
  #allocation1 [shape = 'u32[144,128]{1,0:T(1,128)}', space=vmem, size = 0x12000, scoped, tag = 'internal scratch']
  %s0 = inlined_call_operand.vmem [shape: f32[16,4], index: 0, kind: input, shape index: {}]
  %s1 = inlined_call_operand.vmem [shape: f32[16,4], index: 1, kind: input, shape index: {}]
  %s2 = inlined_call_operand.vmem [shape: f32[16,16], index: 2, kind: input, shape index: {}]
  %s3 = inlined_call_operand.vmem [shape: f32[16,16], index: 3, kind: input, shape index: {}]
  %s4 = inlined_call_operand.vmem [shape: f32[4,32], index: 4, kind: input, shape index: {}]
  %s5 = inlined_call_operand.vmem [shape: f32[4,32], index: 5, kind: input, shape index: {}]
  %s6 = inlined_call_operand.vmem [shape: f32[4,32], index: 6, kind: input, shape index: {}]
  %s7 = inlined_call_operand.vmem [shape: f32[4,32], index: 7, kind: input, shape index: {}]
  %s8 = inlined_call_operand.vmem [shape: f32[16,32], index: 8, kind: input, shape index: {}]
  %s9 = inlined_call_operand.vmem [shape: f32[16,32], index: 9, kind: output, shape index: {}]
  %s10 = sld [smem:[#allocation0]]
  $region46: #{_lambda_.13} parent=0
    _
  %s12 = ssub.s32 1, %s10
  %s13 = scalar_select 0, %s12, %s10
  // Predicated region
  $region2: #{_lambda_.13} parent=0 // pred_check
    _
  $region3: #{_lambda_.13} parent=0 // pred_check_branch
    %15 = sbr.rel (0) target = $region5
  $region4: #{_lambda_.13} parent=0 // pred_region
    _
  $region5: #{_lambda_.13} parent=0 // pred_fallthru
    _
  // Predicated region
  $region6: #{_lambda_.13} parent=0 // pred_check
    _
  $region7: #{_lambda_.13} parent=0 // pred_check_branch
    %17 = sbr.rel (0) target = $region9
  $region8: #{_lambda_.13} parent=0 // pred_region
    _
  $region9: #{_lambda_.13} parent=0 // pred_fallthru
    _
  // Predicated region
  $region10: #{_lambda_.13} parent=0 // pred_check
    _
  $region11: #{_lambda_.13} parent=0 // pred_check_branch
    %19 = sbr.rel (0) target = $region13
  $region12: #{_lambda_.13} parent=0 // pred_region
    _
  $region13: #{_lambda_.13} parent=0 // pred_fallthru
    _
  // Predicated region
  $region14: #{_lambda_.13} parent=0 // pred_check
    _
  $region15: #{_lambda_.13} parent=0 // pred_check_branch
    %21 = sbr.rel (0) target = $region17
  $region16: #{_lambda_.13} parent=0 // pred_region
    _
  $region17: #{_lambda_.13} parent=0 // pred_fallthru
    _
  // Predicated region
  $region18: #{_lambda_.13} parent=0 // pred_check
    _
  $region19: #{_lambda_.13} parent=0 // pred_check_branch
    %23 = sbr.rel (0) target = $region21
  $region20: #{_lambda_.13} parent=0 // pred_region
    _
  $region21: #{_lambda_.13} parent=0 // pred_fallthru
    _
  // Predicated region
  $region22: #{_lambda_.13} parent=0 // pred_check
    _
  $region23: #{_lambda_.13} parent=0 // pred_check_branch
    %25 = sbr.rel (0) target = $region25
  $region24: #{_lambda_.13} parent=0 // pred_region
    _
  $region25: #{_lambda_.13} parent=0 // pred_fallthru
    _
  // Predicated region
  $region26: #{_lambda_.13} parent=0 // pred_check
    _
  $region27: #{_lambda_.13} parent=0 // pred_check_branch
    %27 = sbr.rel (0) target = $region29
  $region28: #{_lambda_.13} parent=0 // pred_region
    _
  $region29: #{_lambda_.13} parent=0 // pred_fallthru
    _
  // Predicated region
  $region30: #{_lambda_.13} parent=0 // pred_check
    _
  $region31: #{_lambda_.13} parent=0 // pred_check_branch
    %29 = sbr.rel (0) target = $region33
  $region32: #{_lambda_.13} parent=0 // pred_region
    _
  $region33: #{_lambda_.13} parent=0 // pred_fallthru
    _
  // Predicated region
  $region34: #{_lambda_.13} parent=0 // pred_check
    _
  $region35: #{_lambda_.13} parent=0 // pred_check_branch
    %31 = sbr.rel (0) target = $region37
  $region36: #{_lambda_.13} parent=0 // pred_region
    _
  $region37: #{_lambda_.13} parent=0 // pred_fallthru
    _
  %v32 = vld [vmem:[%s0] sm:$0xff]
  %v33 = vld [vmem:[%s0 + $0x8] sm:$0xff]
  %v34 = vld [vmem:[%s2] sm:$0xff]
  %v35 = vld [vmem:[%s2 + $0x8] sm:$0xff]
  %vm36 = vcmask 130048
  %v38 = vsel %vm36, %v34, 0
  %v41 = vsel %vm36, %v35, 0
  %43 = vmatprep.subr.mxu0 0.0
  %44 = vmatpush1.msra.mxu0 %v32
  %45 = vmatprep.subr.mxu0 0.0
  %46 = vmatpush1.msra.mxu0 %v33
  %47 = vmatprep.subr.mxu0 0.0
  %48 = vmatpush1.msra.mxu0 0.0
  %49 = vmatprep.subr.mxu0 0.0
  %50 = vmatpush1.msra.mxu0 0.0
  %51 = vmatprep.subr.mxu0 0.0
  %52 = vmatpush1.msra.mxu0 0.0
  %53 = vmatprep.subr.mxu0 0.0
  %54 = vmatpush1.msra.mxu0 0.0
  %55 = vmatprep.subr.mxu0 0.0
  %56 = vmatpush1.msra.mxu0 0.0
  %57 = vmatprep.subr.mxu0 0.0
  %58 = vmatpush1.msra.mxu0 0.0
  %59 = vmatprep.subr.mxu0 0.0
  %60 = vmatpush1.msra.mxu0 0.0
  %61 = vmatprep.subr.mxu0 0.0
  %62 = vmatpush1.msra.mxu0 0.0
  %63 = vmatprep.subr.mxu0 0.0
  %64 = vmatpush1.msra.mxu0 0.0
  %65 = vmatprep.subr.mxu0 0.0
  %66 = vmatpush1.msra.mxu0 0.0
  %67 = vmatprep.subr.mxu0 0.0
  %68 = vmatpush1.msra.mxu0 0.0
  %69 = vmatprep.subr.mxu0 0.0
  %70 = vmatpush1.msra.mxu0 0.0
  %71 = vmatprep.subr.mxu0 0.0
  %72 = vmatpush1.msra.mxu0 0.0
  %73 = vmatprep.subr.mxu0 0.0
  %74 = vmatpush1.msra.mxu0 0.0
  %75 = vmatprep.subr.mxu0 0.0
  %76 = vmatpush1.msra.mxu0 0.0
  %77 = vmatprep.subr.mxu0 0.0
  %78 = vmatpush1.msra.mxu0 0.0
  %79 = vmatprep.subr.mxu0 0.0
  %80 = vmatpush1.msra.mxu0 0.0
  %81 = vmatprep.subr.mxu0 0.0
  %82 = vmatpush1.msra.mxu0 0.0
  %83 = vmatprep.subr.mxu0 0.0
  %84 = vmatpush1.msra.mxu0 0.0
  %85 = vmatprep.subr.mxu0 0.0
  %86 = vmatpush1.msra.mxu0 0.0
  %87 = vmatprep.subr.mxu0 0.0
  %88 = vmatpush1.msra.mxu0 0.0
  %89 = vmatprep.subr.mxu0 0.0
  %90 = vmatpush1.msra.mxu0 0.0
  %91 = vmatprep.subr.mxu0 0.0
  %92 = vmatpush1.msra.mxu0 0.0
  %93 = vmatprep.subr.mxu0 0.0
  %94 = vmatpush1.msra.mxu0 0.0
  %95 = vmatprep.subr.mxu0 0.0
  %96 = vmatpush1.msra.mxu0 0.0
  %97 = vmatprep.subr.mxu0 0.0
  %98 = vmatpush1.msra.mxu0 0.0
  %99 = vmatprep.subr.mxu0 0.0
  %100 = vmatpush1.msra.mxu0 0.0
  %101 = vmatprep.subr.mxu0 0.0
  %102 = vmatpush1.msra.mxu0 0.0
  %103 = vmatprep.subr.mxu0 0.0
  %104 = vmatpush1.msra.mxu0 0.0
  %105 = vmatprep.subr.mxu0 0.0
  %106 = vmatpush1.msra.mxu0 0.0
  %107 = vmatprep.mubr.f32.mxu0 0.0
  %108 = vmatmul.mubr.f32.gmra.mrb[0].mxu0 %v38
  %v109 = vpop.f32.mrb[0].mxu0
  %v110 = vadd.f32 0.0, %v109
  %v111 = vpop.f32.mrb[0].mxu0
  %112 = vmatprep.mubr.f32.mxu0 0.0
  %113 = vmatmul.mubr.f32.gmra.mrb[0].mxu0 %v41
  %v114 = vpop.f32.mrb[0].mxu0
  %v115 = vadd.f32 0.0, %v114
  %v116 = vpop.f32.mrb[0].mxu0
  %117 = vdwg.mxu0
  %v118 = vld [vmem:[%s3] sm:$0xff]
  %v119 = vld [vmem:[%s3 + $0x8] sm:$0xff]
  %v121 = vsel %vm36, %v118, 0
  %v124 = vsel %vm36, %v119, 0
  %126 = vmatprep.subr.mxu0 0.0
  %127 = vmatpush1.msra.mxu0 %v32
  %128 = vmatprep.subr.mxu0 0.0
  %129 = vmatpush1.msra.mxu0 %v33
  %130 = vmatprep.subr.mxu0 0.0
  %131 = vmatpush1.msra.mxu0 0.0
  %132 = vmatprep.subr.mxu0 0.0
  %133 = vmatpush1.msra.mxu0 0.0
  %134 = vmatprep.subr.mxu0 0.0
  %135 = vmatpush1.msra.mxu0 0.0
  %136 = vmatprep.subr.mxu0 0.0
  %137 = vmatpush1.msra.mxu0 0.0
  %138 = vmatprep.subr.mxu0 0.0
  %139 = vmatpush1.msra.mxu0 0.0
  %140 = vmatprep.subr.mxu0 0.0
  %141 = vmatpush1.msra.mxu0 0.0
  %142 = vmatprep.subr.mxu0 0.0
  %143 = vmatpush1.msra.mxu0 0.0
  %144 = vmatprep.subr.mxu0 0.0
  %145 = vmatpush1.msra.mxu0 0.0
  %146 = vmatprep.subr.mxu0 0.0
  %147 = vmatpush1.msra.mxu0 0.0
  %148 = vmatprep.subr.mxu0 0.0
  %149 = vmatpush1.msra.mxu0 0.0
  %150 = vmatprep.subr.mxu0 0.0
  %151 = vmatpush1.msra.mxu0 0.0
  %152 = vmatprep.subr.mxu0 0.0
  %153 = vmatpush1.msra.mxu0 0.0
  %154 = vmatprep.subr.mxu0 0.0
  %155 = vmatpush1.msra.mxu0 0.0
  %156 = vmatprep.subr.mxu0 0.0
  %157 = vmatpush1.msra.mxu0 0.0
  %158 = vmatprep.subr.mxu0 0.0
  %159 = vmatpush1.msra.mxu0 0.0
  %160 = vmatprep.subr.mxu0 0.0
  %161 = vmatpush1.msra.mxu0 0.0
  %162 = vmatprep.subr.mxu0 0.0
  %163 = vmatpush1.msra.mxu0 0.0
  %164 = vmatprep.subr.mxu0 0.0
  %165 = vmatpush1.msra.mxu0 0.0
  %166 = vmatprep.subr.mxu0 0.0
  %167 = vmatpush1.msra.mxu0 0.0
  %168 = vmatprep.subr.mxu0 0.0
  %169 = vmatpush1.msra.mxu0 0.0
  %170 = vmatprep.subr.mxu0 0.0
  %171 = vmatpush1.msra.mxu0 0.0
  %172 = vmatprep.subr.mxu0 0.0
  %173 = vmatpush1.msra.mxu0 0.0
  %174 = vmatprep.subr.mxu0 0.0
  %175 = vmatpush1.msra.mxu0 0.0
  %176 = vmatprep.subr.mxu0 0.0
  %177 = vmatpush1.msra.mxu0 0.0
  %178 = vmatprep.subr.mxu0 0.0
  %179 = vmatpush1.msra.mxu0 0.0
  %180 = vmatprep.subr.mxu0 0.0
  %181 = vmatpush1.msra.mxu0 0.0
  %182 = vmatprep.subr.mxu0 0.0
  %183 = vmatpush1.msra.mxu0 0.0
  %184 = vmatprep.subr.mxu0 0.0
  %185 = vmatpush1.msra.mxu0 0.0
  %186 = vmatprep.subr.mxu0 0.0
  %187 = vmatpush1.msra.mxu0 0.0
  %188 = vmatprep.subr.mxu0 0.0
  %189 = vmatpush1.msra.mxu0 0.0
  %190 = vmatprep.mubr.f32.mxu0 0.0
  %191 = vmatmul.mubr.f32.gmra.mrb[0].mxu0 %v121
  %v192 = vpop.f32.mrb[0].mxu0
  %v193 = vadd.f32 0.0, %v192
  %v194 = vpop.f32.mrb[0].mxu0
  %195 = vmatprep.mubr.f32.mxu0 0.0
  %196 = vmatmul.mubr.f32.gmra.mrb[0].mxu0 %v124
  %v197 = vpop.f32.mrb[0].mxu0
  %v198 = vadd.f32 0.0, %v197
  %v199 = vpop.f32.mrb[0].mxu0
  %200 = vdwg.mxu0
  %v201 = vld [vmem:[%s4] sm:$0xf]
  %v202 = vld [vmem:[%s5] sm:$0xf]
  %vm203 = vcmask 31744
  %v205 = vsel %vm203, %v32, 0
  %v208 = vsel %vm203, %v33, 0
  %vm210 = vcmask 1043456
  %v212 = vsel %vm210, %v202, 0
  %214 = vmatprep.subr.mxu0 0.0
  %215 = vmatpush1.msra.mxu0 %v212
  %216 = vmatprep.subr.mxu0 0.0
  %217 = vmatpush1.msra.mxu0 0.0
  %218 = vmatprep.subr.mxu0 0.0
  %219 = vmatpush1.msra.mxu0 0.0
  %220 = vmatprep.subr.mxu0 0.0
  %221 = vmatpush1.msra.mxu0 0.0
  %222 = vmatprep.subr.mxu0 0.0
  %223 = vmatpush1.msra.mxu0 0.0
  %224 = vmatprep.subr.mxu0 0.0
  %225 = vmatpush1.msra.mxu0 0.0
  %226 = vmatprep.subr.mxu0 0.0
  %227 = vmatpush1.msra.mxu0 0.0
  %228 = vmatprep.subr.mxu0 0.0
  %229 = vmatpush1.msra.mxu0 0.0
  %230 = vmatprep.subr.mxu0 0.0
  %231 = vmatpush1.msra.mxu0 0.0
  %232 = vmatprep.subr.mxu0 0.0
  %233 = vmatpush1.msra.mxu0 0.0
  %234 = vmatprep.subr.mxu0 0.0
  %235 = vmatpush1.msra.mxu0 0.0
  %236 = vmatprep.subr.mxu0 0.0
  %237 = vmatpush1.msra.mxu0 0.0
  %238 = vmatprep.subr.mxu0 0.0
  %239 = vmatpush1.msra.mxu0 0.0
  %240 = vmatprep.subr.mxu0 0.0
  %241 = vmatpush1.msra.mxu0 0.0
  %242 = vmatprep.subr.mxu0 0.0
  %243 = vmatpush1.msra.mxu0 0.0
  %244 = vmatprep.subr.mxu0 0.0
  %245 = vmatpush1.msra.mxu0 0.0
  %246 = vmatprep.subr.mxu0 0.0
  %247 = vmatpush1.msra.mxu0 0.0
  %248 = vmatprep.subr.mxu0 0.0
  %249 = vmatpush1.msra.mxu0 0.0
  %250 = vmatprep.subr.mxu0 0.0
  %251 = vmatpush1.msra.mxu0 0.0
  %252 = vmatprep.subr.mxu0 0.0
  %253 = vmatpush1.msra.mxu0 0.0
  %254 = vmatprep.subr.mxu0 0.0
  %255 = vmatpush1.msra.mxu0 0.0
  %256 = vmatprep.subr.mxu0 0.0
  %257 = vmatpush1.msra.mxu0 0.0
  %258 = vmatprep.subr.mxu0 0.0
  %259 = vmatpush1.msra.mxu0 0.0
  %260 = vmatprep.subr.mxu0 0.0
  %261 = vmatpush1.msra.mxu0 0.0
  %262 = vmatprep.subr.mxu0 0.0
  %263 = vmatpush1.msra.mxu0 0.0
  %264 = vmatprep.subr.mxu0 0.0
  %265 = vmatpush1.msra.mxu0 0.0
  %266 = vmatprep.subr.mxu0 0.0
  %267 = vmatpush1.msra.mxu0 0.0
  %268 = vmatprep.subr.mxu0 0.0
  %269 = vmatpush1.msra.mxu0 0.0
  %270 = vmatprep.subr.mxu0 0.0
  %271 = vmatpush1.msra.mxu0 0.0
  %272 = vmatprep.subr.mxu0 0.0
  %273 = vmatpush1.msra.mxu0 0.0
  %274 = vmatprep.subr.mxu0 0.0
  %275 = vmatpush1.msra.mxu0 0.0
  %276 = vmatprep.subr.mxu0 0.0
  %277 = vmatpush1.msra.mxu0 0.0
  %278 = vmatprep.mubr.f32.mxu0 0.0
  %279 = vmatmul.mubr.f32.gmra.mrb[0].mxu0 %v205
  %v280 = vpop.f32.mrb[0].mxu0
  %v281 = vadd.f32 0.0, %v280
  %v282 = vpop.f32.mrb[0].mxu0
  %283 = vmatprep.mubr.f32.mxu0 0.0
  %284 = vmatmul.mubr.f32.gmra.mrb[0].mxu0 %v208
  %v285 = vpop.f32.mrb[0].mxu0
  %v286 = vadd.f32 0.0, %v285
  %v287 = vpop.f32.mrb[0].mxu0
  %288 = vdwg.mxu0
  %v290 = vsel %vm203, %v110, 0
  %v293 = vsel %vm203, %v115, 0
  %v296 = vsel %vm210, %v201, 0
  %298 = vmatprep.subr.mxu0 0.0
  %299 = vmatpush1.msra.mxu0 %v296
  %300 = vmatprep.subr.mxu0 0.0
  %301 = vmatpush1.msra.mxu0 0.0
  %302 = vmatprep.subr.mxu0 0.0
  %303 = vmatpush1.msra.mxu0 0.0
  %304 = vmatprep.subr.mxu0 0.0
  %305 = vmatpush1.msra.mxu0 0.0
  %306 = vmatprep.subr.mxu0 0.0
  %307 = vmatpush1.msra.mxu0 0.0
  %308 = vmatprep.subr.mxu0 0.0
  %309 = vmatpush1.msra.mxu0 0.0
  %310 = vmatprep.subr.mxu0 0.0
  %311 = vmatpush1.msra.mxu0 0.0
  %312 = vmatprep.subr.mxu0 0.0
  %313 = vmatpush1.msra.mxu0 0.0
  %314 = vmatprep.subr.mxu0 0.0
  %315 = vmatpush1.msra.mxu0 0.0
  %316 = vmatprep.subr.mxu0 0.0
  %317 = vmatpush1.msra.mxu0 0.0
  %318 = vmatprep.subr.mxu0 0.0
  %319 = vmatpush1.msra.mxu0 0.0
  %320 = vmatprep.subr.mxu0 0.0
  %321 = vmatpush1.msra.mxu0 0.0
  %322 = vmatprep.subr.mxu0 0.0
  %323 = vmatpush1.msra.mxu0 0.0
  %324 = vmatprep.subr.mxu0 0.0
  %325 = vmatpush1.msra.mxu0 0.0
  %326 = vmatprep.subr.mxu0 0.0
  %327 = vmatpush1.msra.mxu0 0.0
  %328 = vmatprep.subr.mxu0 0.0
  %329 = vmatpush1.msra.mxu0 0.0
  %330 = vmatprep.subr.mxu0 0.0
  %331 = vmatpush1.msra.mxu0 0.0
  %332 = vmatprep.subr.mxu0 0.0
  %333 = vmatpush1.msra.mxu0 0.0
  %334 = vmatprep.subr.mxu0 0.0
  %335 = vmatpush1.msra.mxu0 0.0
  %336 = vmatprep.subr.mxu0 0.0
  %337 = vmatpush1.msra.mxu0 0.0
  %338 = vmatprep.subr.mxu0 0.0
  %339 = vmatpush1.msra.mxu0 0.0
  %340 = vmatprep.subr.mxu0 0.0
  %341 = vmatpush1.msra.mxu0 0.0
  %342 = vmatprep.subr.mxu0 0.0
  %343 = vmatpush1.msra.mxu0 0.0
  %344 = vmatprep.subr.mxu0 0.0
  %345 = vmatpush1.msra.mxu0 0.0
  %346 = vmatprep.subr.mxu0 0.0
  %347 = vmatpush1.msra.mxu0 0.0
  %348 = vmatprep.subr.mxu0 0.0
  %349 = vmatpush1.msra.mxu0 0.0
  %350 = vmatprep.subr.mxu0 0.0
  %351 = vmatpush1.msra.mxu0 0.0
  %352 = vmatprep.subr.mxu0 0.0
  %353 = vmatpush1.msra.mxu0 0.0
  %354 = vmatprep.subr.mxu0 0.0
  %355 = vmatpush1.msra.mxu0 0.0
  %356 = vmatprep.subr.mxu0 0.0
  %357 = vmatpush1.msra.mxu0 0.0
  %358 = vmatprep.subr.mxu0 0.0
  %359 = vmatpush1.msra.mxu0 0.0
  %360 = vmatprep.subr.mxu0 0.0
  %361 = vmatpush1.msra.mxu0 0.0
  %362 = vmatprep.mubr.f32.mxu0 0.0
  %363 = vmatmul.mubr.f32.gmra.mrb[0].mxu0 %v290
  %v364 = vpop.f32.mrb[0].mxu0
  %v365 = vadd.f32 %v281, %v364
  %v366 = vpop.f32.mrb[0].mxu0
  %367 = vmatprep.mubr.f32.mxu0 0.0
  %368 = vmatmul.mubr.f32.gmra.mrb[0].mxu0 %v293
  %v369 = vpop.f32.mrb[0].mxu0
  %v370 = vadd.f32 %v286, %v369
  %v371 = vpop.f32.mrb[0].mxu0
  %372 = vdwg.mxu0
  %v373 = vld [vmem:[%s6] sm:$0xf]
  %v375 = vsel %vm203, %v193, 0
  %v378 = vsel %vm203, %v198, 0
  %v381 = vsel %vm210, %v373, 0
  %383 = vmatprep.subr.mxu0 0.0
  %384 = vmatpush1.msra.mxu0 %v381
  %385 = vmatprep.subr.mxu0 0.0
  %386 = vmatpush1.msra.mxu0 0.0
  %387 = vmatprep.subr.mxu0 0.0
  %388 = vmatpush1.msra.mxu0 0.0
  %389 = vmatprep.subr.mxu0 0.0
  %390 = vmatpush1.msra.mxu0 0.0
  %391 = vmatprep.subr.mxu0 0.0
  %392 = vmatpush1.msra.mxu0 0.0
  %393 = vmatprep.subr.mxu0 0.0
  %394 = vmatpush1.msra.mxu0 0.0
  %395 = vmatprep.subr.mxu0 0.0
  %396 = vmatpush1.msra.mxu0 0.0
  %397 = vmatprep.subr.mxu0 0.0
  %398 = vmatpush1.msra.mxu0 0.0
  %399 = vmatprep.subr.mxu0 0.0
  %400 = vmatpush1.msra.mxu0 0.0
  %401 = vmatprep.subr.mxu0 0.0
  %402 = vmatpush1.msra.mxu0 0.0
  %403 = vmatprep.subr.mxu0 0.0
  %404 = vmatpush1.msra.mxu0 0.0
  %405 = vmatprep.subr.mxu0 0.0
  %406 = vmatpush1.msra.mxu0 0.0
  %407 = vmatprep.subr.mxu0 0.0
  %408 = vmatpush1.msra.mxu0 0.0
  %409 = vmatprep.subr.mxu0 0.0
  %410 = vmatpush1.msra.mxu0 0.0
  %411 = vmatprep.subr.mxu0 0.0
  %412 = vmatpush1.msra.mxu0 0.0
  %413 = vmatprep.subr.mxu0 0.0
  %414 = vmatpush1.msra.mxu0 0.0
  %415 = vmatprep.subr.mxu0 0.0
  %416 = vmatpush1.msra.mxu0 0.0
  %417 = vmatprep.subr.mxu0 0.0
  %418 = vmatpush1.msra.mxu0 0.0
  %419 = vmatprep.subr.mxu0 0.0
  %420 = vmatpush1.msra.mxu0 0.0
  %421 = vmatprep.subr.mxu0 0.0
  %422 = vmatpush1.msra.mxu0 0.0
  %423 = vmatprep.subr.mxu0 0.0
  %424 = vmatpush1.msra.mxu0 0.0
  %425 = vmatprep.subr.mxu0 0.0
  %426 = vmatpush1.msra.mxu0 0.0
  %427 = vmatprep.subr.mxu0 0.0
  %428 = vmatpush1.msra.mxu0 0.0
  %429 = vmatprep.subr.mxu0 0.0
  %430 = vmatpush1.msra.mxu0 0.0
  %431 = vmatprep.subr.mxu0 0.0
  %432 = vmatpush1.msra.mxu0 0.0
  %433 = vmatprep.subr.mxu0 0.0
  %434 = vmatpush1.msra.mxu0 0.0
  %435 = vmatprep.subr.mxu0 0.0
  %436 = vmatpush1.msra.mxu0 0.0
  %437 = vmatprep.subr.mxu0 0.0
  %438 = vmatpush1.msra.mxu0 0.0
  %439 = vmatprep.subr.mxu0 0.0
  %440 = vmatpush1.msra.mxu0 0.0
  %441 = vmatprep.subr.mxu0 0.0
  %442 = vmatpush1.msra.mxu0 0.0
  %443 = vmatprep.subr.mxu0 0.0
  %444 = vmatpush1.msra.mxu0 0.0
  %445 = vmatprep.subr.mxu0 0.0
  %446 = vmatpush1.msra.mxu0 0.0
  %447 = vmatprep.mubr.f32.mxu0 0.0
  %448 = vmatmul.mubr.f32.gmra.mrb[0].mxu0 %v375
  %v449 = vpop.f32.mrb[0].mxu0
  %v450 = vadd.f32 0.0, %v449
  %v451 = vpop.f32.mrb[0].mxu0
  %452 = vmatprep.mubr.f32.mxu0 0.0
  %453 = vmatmul.mubr.f32.gmra.mrb[0].mxu0 %v378
  %v454 = vpop.f32.mrb[0].mxu0
  %v455 = vadd.f32 0.0, %v454
  %v456 = vpop.f32.mrb[0].mxu0
  %457 = vdwg.mxu0
  %v458 = vadd.f32 %v365, %v450
  %v459 = vadd.f32 %v370, %v455
  %v460 = vld [vmem:[%s1] sm:$0xff]
  %v461 = vld [vmem:[%s1 + $0x8] sm:$0xff]
  %v462 = vld [vmem:[%s7] sm:$0xf]
  %v464 = vsel %vm203, %v460, 0
  %v467 = vsel %vm203, %v461, 0
  %v470 = vsel %vm210, %v462, 0
  %472 = vmatprep.subr.mxu0 0.0
  %473 = vmatpush1.msra.mxu0 %v470
  %474 = vmatprep.subr.mxu0 0.0
  %475 = vmatpush1.msra.mxu0 0.0
  %476 = vmatprep.subr.mxu0 0.0
  %477 = vmatpush1.msra.mxu0 0.0
  %478 = vmatprep.subr.mxu0 0.0
  %479 = vmatpush1.msra.mxu0 0.0
  %480 = vmatprep.subr.mxu0 0.0
  %481 = vmatpush1.msra.mxu0 0.0
  %482 = vmatprep.subr.mxu0 0.0
  %483 = vmatpush1.msra.mxu0 0.0
  %484 = vmatprep.subr.mxu0 0.0
  %485 = vmatpush1.msra.mxu0 0.0
  %486 = vmatprep.subr.mxu0 0.0
  %487 = vmatpush1.msra.mxu0 0.0
  %488 = vmatprep.subr.mxu0 0.0
  %489 = vmatpush1.msra.mxu0 0.0
  %490 = vmatprep.subr.mxu0 0.0
  %491 = vmatpush1.msra.mxu0 0.0
  %492 = vmatprep.subr.mxu0 0.0
  %493 = vmatpush1.msra.mxu0 0.0
  %494 = vmatprep.subr.mxu0 0.0
  %495 = vmatpush1.msra.mxu0 0.0
  %496 = vmatprep.subr.mxu0 0.0
  %497 = vmatpush1.msra.mxu0 0.0
  %498 = vmatprep.subr.mxu0 0.0
  %499 = vmatpush1.msra.mxu0 0.0
  %500 = vmatprep.subr.mxu0 0.0
  %501 = vmatpush1.msra.mxu0 0.0
  %502 = vmatprep.subr.mxu0 0.0
  %503 = vmatpush1.msra.mxu0 0.0
  %504 = vmatprep.subr.mxu0 0.0
  %505 = vmatpush1.msra.mxu0 0.0
  %506 = vmatprep.subr.mxu0 0.0
  %507 = vmatpush1.msra.mxu0 0.0
  %508 = vmatprep.subr.mxu0 0.0
  %509 = vmatpush1.msra.mxu0 0.0
  %510 = vmatprep.subr.mxu0 0.0
  %511 = vmatpush1.msra.mxu0 0.0
  %512 = vmatprep.subr.mxu0 0.0
  %513 = vmatpush1.msra.mxu0 0.0
  %514 = vmatprep.subr.mxu0 0.0
  %515 = vmatpush1.msra.mxu0 0.0
  %516 = vmatprep.subr.mxu0 0.0
  %517 = vmatpush1.msra.mxu0 0.0
  %518 = vmatprep.subr.mxu0 0.0
  %519 = vmatpush1.msra.mxu0 0.0
  %520 = vmatprep.subr.mxu0 0.0
  %521 = vmatpush1.msra.mxu0 0.0
  %522 = vmatprep.subr.mxu0 0.0
  %523 = vmatpush1.msra.mxu0 0.0
  %524 = vmatprep.subr.mxu0 0.0
  %525 = vmatpush1.msra.mxu0 0.0
  %526 = vmatprep.subr.mxu0 0.0
  %527 = vmatpush1.msra.mxu0 0.0
  %528 = vmatprep.subr.mxu0 0.0
  %529 = vmatpush1.msra.mxu0 0.0
  %530 = vmatprep.subr.mxu0 0.0
  %531 = vmatpush1.msra.mxu0 0.0
  %532 = vmatprep.subr.mxu0 0.0
  %533 = vmatpush1.msra.mxu0 0.0
  %534 = vmatprep.subr.mxu0 0.0
  %535 = vmatpush1.msra.mxu0 0.0
  %536 = vmatprep.mubr.f32.mxu0 0.0
  %537 = vmatmul.mubr.f32.gmra.mrb[0].mxu0 %v464
  %v538 = vpop.f32.mrb[0].mxu0
  %v539 = vadd.f32 0.0, %v538
  %v540 = vpop.f32.mrb[0].mxu0
  %541 = vmatprep.mubr.f32.mxu0 0.0
  %542 = vmatmul.mubr.f32.gmra.mrb[0].mxu0 %v467
  %v543 = vpop.f32.mrb[0].mxu0
  %v544 = vadd.f32 0.0, %v543
  %v545 = vpop.f32.mrb[0].mxu0
  %546 = vdwg.mxu0
  %v547 = vadd.f32 %v458, %v539
  %v548 = vadd.f32 %v459, %v544
  %v549 = vld [vmem:[%s8] sm:$0xff]
  %v550 = vld [vmem:[%s8 + $0x8] sm:$0xff]
  %v551 = vadd.f32 %v547, %v549
  %v552 = vadd.f32 %v548, %v550
  %vm553 = vcmask 261120
  %554 = vst.msk [vmem:[%s9] sm:$0xff] %vm553, %v551
  %555 = vst.msk [vmem:[%s9 + $0x8] sm:$0xff] %vm553, %v552
  // Predicated region
  $region38: #{_lambda_.13} parent=0 // pred_check
    _
  $region39: #{_lambda_.13} parent=0 // pred_check_branch
    %557 = sbr.rel (0) target = $region41
  $region40: #{_lambda_.13} parent=0 // pred_region
    _
  $region41: #{_lambda_.13} parent=0 // pred_fallthru
    _
  // Predicated region
  $region42: #{_lambda_.13} parent=0 // pred_check
    _
  $region43: #{_lambda_.13} parent=0 // pred_check_branch
    %559 = sbr.rel (0) target = $region45
  $region44: #{_lambda_.13} parent=0 // pred_region
    _
  $region45: #{_lambda_.13} parent=0 // pred_fallthru
    _

// kernel: _lambda_.10
$region0: #{_lambda_.10}
  #allocation0 [shape = 'u32[]', space=smem, size = 0x4, offset = 0x4, fixed_abs, tag = 'smem constant byte address 0x4 - core index']
  #allocation1 [shape = 'u32[144,128]{1,0:T(1,128)}', space=vmem, size = 0x12000, scoped, tag = 'internal scratch']
  %s0 = inlined_call_operand.vmem [shape: f32[16,32], index: 0, kind: input, shape index: {}]
  %s1 = inlined_call_operand.vmem [shape: f32[16,16], index: 1, kind: input, shape index: {}]
  %s2 = inlined_call_operand.vmem [shape: f32[16,16], index: 2, kind: input, shape index: {}]
  %s3 = inlined_call_operand.vmem [shape: f32[32,32], index: 3, kind: input, shape index: {}]
  %s4 = inlined_call_operand.vmem [shape: f32[32,32], index: 4, kind: input, shape index: {}]
  %s5 = inlined_call_operand.vmem [shape: f32[32,32], index: 5, kind: input, shape index: {}]
  %s6 = inlined_call_operand.vmem [shape: f32[1,32], index: 6, kind: input, shape index: {}]
  %s7 = inlined_call_operand.vmem [shape: f32[16,16], index: 7, kind: input, shape index: {}]
  %s8 = inlined_call_operand.vmem [shape: f32[16,16], index: 8, kind: input, shape index: {}]
  %s9 = inlined_call_operand.vmem [shape: f32[16,1], index: 9, kind: input, shape index: {}]
  %s10 = inlined_call_operand.vmem [shape: f32[16,1], index: 10, kind: input, shape index: {}]
  %s11 = inlined_call_operand.vmem [shape: f32[8,16], index: 11, kind: input, shape index: {}]
  %s12 = inlined_call_operand.vmem [shape: f32[8,32], index: 12, kind: output, shape index: {}]
  %s13 = sld [smem:[#allocation0]]
  $region58: #{_lambda_.10} parent=0
    _
  %s15 = ssub.s32 1, %s13
  %s16 = scalar_select 0, %s15, %s13
  // Predicated region
  $region2: #{_lambda_.10} parent=0 // pred_check
    _
  $region3: #{_lambda_.10} parent=0 // pred_check_branch
    %18 = sbr.rel (0) target = $region5
  $region4: #{_lambda_.10} parent=0 // pred_region
    _
  $region5: #{_lambda_.10} parent=0 // pred_fallthru
    _
  // Predicated region
  $region6: #{_lambda_.10} parent=0 // pred_check
    _
  $region7: #{_lambda_.10} parent=0 // pred_check_branch
    %20 = sbr.rel (0) target = $region9
  $region8: #{_lambda_.10} parent=0 // pred_region
    _
  $region9: #{_lambda_.10} parent=0 // pred_fallthru
    _
  // Predicated region
  $region10: #{_lambda_.10} parent=0 // pred_check
    _
  $region11: #{_lambda_.10} parent=0 // pred_check_branch
    %22 = sbr.rel (0) target = $region13
  $region12: #{_lambda_.10} parent=0 // pred_region
    _
  $region13: #{_lambda_.10} parent=0 // pred_fallthru
    _
  // Predicated region
  $region14: #{_lambda_.10} parent=0 // pred_check
    _
  $region15: #{_lambda_.10} parent=0 // pred_check_branch
    %24 = sbr.rel (0) target = $region17
  $region16: #{_lambda_.10} parent=0 // pred_region
    _
  $region17: #{_lambda_.10} parent=0 // pred_fallthru
    _
  // Predicated region
  $region18: #{_lambda_.10} parent=0 // pred_check
    _
  $region19: #{_lambda_.10} parent=0 // pred_check_branch
    %26 = sbr.rel (0) target = $region21
  $region20: #{_lambda_.10} parent=0 // pred_region
    _
  $region21: #{_lambda_.10} parent=0 // pred_fallthru
    _
  // Predicated region
  $region22: #{_lambda_.10} parent=0 // pred_check
    _
  $region23: #{_lambda_.10} parent=0 // pred_check_branch
    %28 = sbr.rel (0) target = $region25
  $region24: #{_lambda_.10} parent=0 // pred_region
    _
  $region25: #{_lambda_.10} parent=0 // pred_fallthru
    _
  // Predicated region
  $region26: #{_lambda_.10} parent=0 // pred_check
    _
  $region27: #{_lambda_.10} parent=0 // pred_check_branch
    %30 = sbr.rel (0) target = $region29
  $region28: #{_lambda_.10} parent=0 // pred_region
    _
  $region29: #{_lambda_.10} parent=0 // pred_fallthru
    _
  // Predicated region
  $region30: #{_lambda_.10} parent=0 // pred_check
    _
  $region31: #{_lambda_.10} parent=0 // pred_check_branch
    %32 = sbr.rel (0) target = $region33
  $region32: #{_lambda_.10} parent=0 // pred_region
    _
  $region33: #{_lambda_.10} parent=0 // pred_fallthru
    _
  // Predicated region
  $region34: #{_lambda_.10} parent=0 // pred_check
    _
  $region35: #{_lambda_.10} parent=0 // pred_check_branch
    %34 = sbr.rel (0) target = $region37
  $region36: #{_lambda_.10} parent=0 // pred_region
    _
  $region37: #{_lambda_.10} parent=0 // pred_fallthru
    _
  // Predicated region
  $region38: #{_lambda_.10} parent=0 // pred_check
    _
  $region39: #{_lambda_.10} parent=0 // pred_check_branch
    %36 = sbr.rel (0) target = $region41
  $region40: #{_lambda_.10} parent=0 // pred_region
    _
  $region41: #{_lambda_.10} parent=0 // pred_fallthru
    _
  // Predicated region
  $region42: #{_lambda_.10} parent=0 // pred_check
    _
  $region43: #{_lambda_.10} parent=0 // pred_check_branch
    %38 = sbr.rel (0) target = $region45
  $region44: #{_lambda_.10} parent=0 // pred_region
    _
  $region45: #{_lambda_.10} parent=0 // pred_fallthru
    _
  // Predicated region
  $region46: #{_lambda_.10} parent=0 // pred_check
    _
  $region47: #{_lambda_.10} parent=0 // pred_check_branch
    %40 = sbr.rel (0) target = $region49
  $region48: #{_lambda_.10} parent=0 // pred_region
    _
  $region49: #{_lambda_.10} parent=0 // pred_fallthru
    _
  %v41 = vld [vmem:[%s0] sm:$0xff]
  %v42 = vld [vmem:[%s0 + $0x8] sm:$0xff]
  %v43 = vld [vmem:[%s1] sm:$0xff]
  %v44 = vld [vmem:[%s1 + $0x8] sm:$0xff]
  %vm45 = vcmask 130048
  %v47 = vsel %vm45, %v43, 0
  %v50 = vsel %vm45, %v44, 0
  %52 = vmatprep.subr.mxu0 0.0
  %53 = vmatpush1.msra.mxu0 %v41
  %54 = vmatprep.subr.mxu0 0.0
  %55 = vmatpush1.msra.mxu0 %v42
  %56 = vmatprep.subr.mxu0 0.0
  %57 = vmatpush1.msra.mxu0 0.0
  %58 = vmatprep.subr.mxu0 0.0
  %59 = vmatpush1.msra.mxu0 0.0
  %60 = vmatprep.subr.mxu0 0.0
  %61 = vmatpush1.msra.mxu0 0.0
  %62 = vmatprep.subr.mxu0 0.0
  %63 = vmatpush1.msra.mxu0 0.0
  %64 = vmatprep.subr.mxu0 0.0
  %65 = vmatpush1.msra.mxu0 0.0
  %66 = vmatprep.subr.mxu0 0.0
  %67 = vmatpush1.msra.mxu0 0.0
  %68 = vmatprep.subr.mxu0 0.0
  %69 = vmatpush1.msra.mxu0 0.0
  %70 = vmatprep.subr.mxu0 0.0
  %71 = vmatpush1.msra.mxu0 0.0
  %72 = vmatprep.subr.mxu0 0.0
  %73 = vmatpush1.msra.mxu0 0.0
  %74 = vmatprep.subr.mxu0 0.0
  %75 = vmatpush1.msra.mxu0 0.0
  %76 = vmatprep.subr.mxu0 0.0
  %77 = vmatpush1.msra.mxu0 0.0
  %78 = vmatprep.subr.mxu0 0.0
  %79 = vmatpush1.msra.mxu0 0.0
  %80 = vmatprep.subr.mxu0 0.0
  %81 = vmatpush1.msra.mxu0 0.0
  %82 = vmatprep.subr.mxu0 0.0
  %83 = vmatpush1.msra.mxu0 0.0
  %84 = vmatprep.subr.mxu0 0.0
  %85 = vmatpush1.msra.mxu0 0.0
  %86 = vmatprep.subr.mxu0 0.0
  %87 = vmatpush1.msra.mxu0 0.0
  %88 = vmatprep.subr.mxu0 0.0
  %89 = vmatpush1.msra.mxu0 0.0
  %90 = vmatprep.subr.mxu0 0.0
  %91 = vmatpush1.msra.mxu0 0.0
  %92 = vmatprep.subr.mxu0 0.0
  %93 = vmatpush1.msra.mxu0 0.0
  %94 = vmatprep.subr.mxu0 0.0
  %95 = vmatpush1.msra.mxu0 0.0
  %96 = vmatprep.subr.mxu0 0.0
  %97 = vmatpush1.msra.mxu0 0.0
  %98 = vmatprep.subr.mxu0 0.0
  %99 = vmatpush1.msra.mxu0 0.0
  %100 = vmatprep.subr.mxu0 0.0
  %101 = vmatpush1.msra.mxu0 0.0
  %102 = vmatprep.subr.mxu0 0.0
  %103 = vmatpush1.msra.mxu0 0.0
  %104 = vmatprep.subr.mxu0 0.0
  %105 = vmatpush1.msra.mxu0 0.0
  %106 = vmatprep.subr.mxu0 0.0
  %107 = vmatpush1.msra.mxu0 0.0
  %108 = vmatprep.subr.mxu0 0.0
  %109 = vmatpush1.msra.mxu0 0.0
  %110 = vmatprep.subr.mxu0 0.0
  %111 = vmatpush1.msra.mxu0 0.0
  %112 = vmatprep.subr.mxu0 0.0
  %113 = vmatpush1.msra.mxu0 0.0
  %114 = vmatprep.subr.mxu0 0.0
  %115 = vmatpush1.msra.mxu0 0.0
  %116 = vmatprep.mubr.f32.mxu0 0.0
  %117 = vmatmul.mubr.f32.gmra.mrb[0].mxu0 %v47
  %v118 = vpop.f32.mrb[0].mxu0
  %v119 = vadd.f32 0.0, %v118
  %v120 = vpop.f32.mrb[0].mxu0
  %121 = vmatprep.mubr.f32.mxu0 0.0
  %122 = vmatmul.mubr.f32.gmra.mrb[0].mxu0 %v50
  %v123 = vpop.f32.mrb[0].mxu0
  %v124 = vadd.f32 0.0, %v123
  %v125 = vpop.f32.mrb[0].mxu0
  %126 = vdwg.mxu0
  %v127 = vld [vmem:[%s2] sm:$0xff]
  %v128 = vld [vmem:[%s2 + $0x8] sm:$0xff]
  %v130 = vsel %vm45, %v127, 0
  %v133 = vsel %vm45, %v128, 0
  %135 = vmatprep.subr.mxu0 0.0
  %136 = vmatpush1.msra.mxu0 %v41
  %137 = vmatprep.subr.mxu0 0.0
  %138 = vmatpush1.msra.mxu0 %v42
  %139 = vmatprep.subr.mxu0 0.0
  %140 = vmatpush1.msra.mxu0 0.0
  %141 = vmatprep.subr.mxu0 0.0
  %142 = vmatpush1.msra.mxu0 0.0
  %143 = vmatprep.subr.mxu0 0.0
  %144 = vmatpush1.msra.mxu0 0.0
  %145 = vmatprep.subr.mxu0 0.0
  %146 = vmatpush1.msra.mxu0 0.0
  %147 = vmatprep.subr.mxu0 0.0
  %148 = vmatpush1.msra.mxu0 0.0
  %149 = vmatprep.subr.mxu0 0.0
  %150 = vmatpush1.msra.mxu0 0.0
  %151 = vmatprep.subr.mxu0 0.0
  %152 = vmatpush1.msra.mxu0 0.0
  %153 = vmatprep.subr.mxu0 0.0
  %154 = vmatpush1.msra.mxu0 0.0
  %155 = vmatprep.subr.mxu0 0.0
  %156 = vmatpush1.msra.mxu0 0.0
  %157 = vmatprep.subr.mxu0 0.0
  %158 = vmatpush1.msra.mxu0 0.0
  %159 = vmatprep.subr.mxu0 0.0
  %160 = vmatpush1.msra.mxu0 0.0
  %161 = vmatprep.subr.mxu0 0.0
  %162 = vmatpush1.msra.mxu0 0.0
  %163 = vmatprep.subr.mxu0 0.0
  %164 = vmatpush1.msra.mxu0 0.0
  %165 = vmatprep.subr.mxu0 0.0
  %166 = vmatpush1.msra.mxu0 0.0
  %167 = vmatprep.subr.mxu0 0.0
  %168 = vmatpush1.msra.mxu0 0.0
  %169 = vmatprep.subr.mxu0 0.0
  %170 = vmatpush1.msra.mxu0 0.0
  %171 = vmatprep.subr.mxu0 0.0
  %172 = vmatpush1.msra.mxu0 0.0
  %173 = vmatprep.subr.mxu0 0.0
  %174 = vmatpush1.msra.mxu0 0.0
  %175 = vmatprep.subr.mxu0 0.0
  %176 = vmatpush1.msra.mxu0 0.0
  %177 = vmatprep.subr.mxu0 0.0
  %178 = vmatpush1.msra.mxu0 0.0
  %179 = vmatprep.subr.mxu0 0.0
  %180 = vmatpush1.msra.mxu0 0.0
  %181 = vmatprep.subr.mxu0 0.0
  %182 = vmatpush1.msra.mxu0 0.0
  %183 = vmatprep.subr.mxu0 0.0
  %184 = vmatpush1.msra.mxu0 0.0
  %185 = vmatprep.subr.mxu0 0.0
  %186 = vmatpush1.msra.mxu0 0.0
  %187 = vmatprep.subr.mxu0 0.0
  %188 = vmatpush1.msra.mxu0 0.0
  %189 = vmatprep.subr.mxu0 0.0
  %190 = vmatpush1.msra.mxu0 0.0
  %191 = vmatprep.subr.mxu0 0.0
  %192 = vmatpush1.msra.mxu0 0.0
  %193 = vmatprep.subr.mxu0 0.0
  %194 = vmatpush1.msra.mxu0 0.0
  %195 = vmatprep.subr.mxu0 0.0
  %196 = vmatpush1.msra.mxu0 0.0
  %197 = vmatprep.subr.mxu0 0.0
  %198 = vmatpush1.msra.mxu0 0.0
  %199 = vmatprep.mubr.f32.mxu0 0.0
  %200 = vmatmul.mubr.f32.gmra.mrb[0].mxu0 %v130
  %v201 = vpop.f32.mrb[0].mxu0
  %v202 = vadd.f32 0.0, %v201
  %v203 = vpop.f32.mrb[0].mxu0
  %204 = vmatprep.mubr.f32.mxu0 0.0
  %205 = vmatmul.mubr.f32.gmra.mrb[0].mxu0 %v133
  %v206 = vpop.f32.mrb[0].mxu0
  %v207 = vadd.f32 0.0, %v206
  %v208 = vpop.f32.mrb[0].mxu0
  %209 = vdwg.mxu0
  %v210 = vld [vmem:[%s3] sm:$0xff]
  %v211 = vld [vmem:[%s3 + $0x8] sm:$0xff]
  %v212 = vld [vmem:[%s3 + $0x10] sm:$0xff]
  %v213 = vld [vmem:[%s3 + $0x18] sm:$0xff]
  %v214 = vld [vmem:[%s4] sm:$0xff]
  %v215 = vld [vmem:[%s4 + $0x8] sm:$0xff]
  %v216 = vld [vmem:[%s4 + $0x10] sm:$0xff]
  %v217 = vld [vmem:[%s4 + $0x18] sm:$0xff]
  %vm218 = vcmask 261120
  %v220 = vsel %vm218, %v41, 0
  %v223 = vsel %vm218, %v42, 0
  %225 = vmatprep.subr.mxu0 0.0
  %226 = vmatpush1.msra.mxu0 %v214
  %227 = vmatprep.subr.mxu0 0.0
  %228 = vmatpush1.msra.mxu0 %v215
  %229 = vmatprep.subr.mxu0 0.0
  %230 = vmatpush1.msra.mxu0 %v216
  %231 = vmatprep.subr.mxu0 0.0
  %232 = vmatpush1.msra.mxu0 %v217
  %233 = vmatprep.subr.mxu0 0.0
  %234 = vmatpush1.msra.mxu0 0.0
  %235 = vmatprep.subr.mxu0 0.0
  %236 = vmatpush1.msra.mxu0 0.0
  %237 = vmatprep.subr.mxu0 0.0
  %238 = vmatpush1.msra.mxu0 0.0
  %239 = vmatprep.subr.mxu0 0.0
  %240 = vmatpush1.msra.mxu0 0.0
  %241 = vmatprep.subr.mxu0 0.0
  %242 = vmatpush1.msra.mxu0 0.0
  %243 = vmatprep.subr.mxu0 0.0
  %244 = vmatpush1.msra.mxu0 0.0
  %245 = vmatprep.subr.mxu0 0.0
  %246 = vmatpush1.msra.mxu0 0.0
  %247 = vmatprep.subr.mxu0 0.0
  %248 = vmatpush1.msra.mxu0 0.0
  %249 = vmatprep.subr.mxu0 0.0
  %250 = vmatpush1.msra.mxu0 0.0
  %251 = vmatprep.subr.mxu0 0.0
  %252 = vmatpush1.msra.mxu0 0.0
  %253 = vmatprep.subr.mxu0 0.0
  %254 = vmatpush1.msra.mxu0 0.0
  %255 = vmatprep.subr.mxu0 0.0
  %256 = vmatpush1.msra.mxu0 0.0
  %257 = vmatprep.subr.mxu0 0.0
  %258 = vmatpush1.msra.mxu0 0.0
  %259 = vmatprep.subr.mxu0 0.0
  %260 = vmatpush1.msra.mxu0 0.0
  %261 = vmatprep.subr.mxu0 0.0
  %262 = vmatpush1.msra.mxu0 0.0
  %263 = vmatprep.subr.mxu0 0.0
  %264 = vmatpush1.msra.mxu0 0.0
  %265 = vmatprep.subr.mxu0 0.0
  %266 = vmatpush1.msra.mxu0 0.0
  %267 = vmatprep.subr.mxu0 0.0
  %268 = vmatpush1.msra.mxu0 0.0
  %269 = vmatprep.subr.mxu0 0.0
  %270 = vmatpush1.msra.mxu0 0.0
  %271 = vmatprep.subr.mxu0 0.0
  %272 = vmatpush1.msra.mxu0 0.0
  %273 = vmatprep.subr.mxu0 0.0
  %274 = vmatpush1.msra.mxu0 0.0
  %275 = vmatprep.subr.mxu0 0.0
  %276 = vmatpush1.msra.mxu0 0.0
  %277 = vmatprep.subr.mxu0 0.0
  %278 = vmatpush1.msra.mxu0 0.0
  %279 = vmatprep.subr.mxu0 0.0
  %280 = vmatpush1.msra.mxu0 0.0
  %281 = vmatprep.subr.mxu0 0.0
  %282 = vmatpush1.msra.mxu0 0.0
  %283 = vmatprep.subr.mxu0 0.0
  %284 = vmatpush1.msra.mxu0 0.0
  %285 = vmatprep.subr.mxu0 0.0
  %286 = vmatpush1.msra.mxu0 0.0
  %287 = vmatprep.subr.mxu0 0.0
  %288 = vmatpush1.msra.mxu0 0.0
  %289 = vmatprep.mubr.f32.mxu0 0.0
  %290 = vmatmul.mubr.f32.gmra.mrb[0].mxu0 %v220
  %v291 = vpop.f32.mrb[0].mxu0
  %v292 = vadd.f32 0.0, %v291
  %v293 = vpop.f32.mrb[0].mxu0
  %294 = vmatprep.mubr.f32.mxu0 0.0
  %295 = vmatmul.mubr.f32.gmra.mrb[0].mxu0 %v223
  %v296 = vpop.f32.mrb[0].mxu0
  %v297 = vadd.f32 0.0, %v296
  %v298 = vpop.f32.mrb[0].mxu0
  %299 = vdwg.mxu0
  %v301 = vsel %vm218, %v119, 0
  %v304 = vsel %vm218, %v124, 0
  %306 = vmatprep.subr.mxu0 0.0
  %307 = vmatpush1.msra.mxu0 %v210
  %308 = vmatprep.subr.mxu0 0.0
  %309 = vmatpush1.msra.mxu0 %v211
  %310 = vmatprep.subr.mxu0 0.0
  %311 = vmatpush1.msra.mxu0 %v212
  %312 = vmatprep.subr.mxu0 0.0
  %313 = vmatpush1.msra.mxu0 %v213
  %314 = vmatprep.subr.mxu0 0.0
  %315 = vmatpush1.msra.mxu0 0.0
  %316 = vmatprep.subr.mxu0 0.0
  %317 = vmatpush1.msra.mxu0 0.0
  %318 = vmatprep.subr.mxu0 0.0
  %319 = vmatpush1.msra.mxu0 0.0
  %320 = vmatprep.subr.mxu0 0.0
  %321 = vmatpush1.msra.mxu0 0.0
  %322 = vmatprep.subr.mxu0 0.0
  %323 = vmatpush1.msra.mxu0 0.0
  %324 = vmatprep.subr.mxu0 0.0
  %325 = vmatpush1.msra.mxu0 0.0
  %326 = vmatprep.subr.mxu0 0.0
  %327 = vmatpush1.msra.mxu0 0.0
  %328 = vmatprep.subr.mxu0 0.0
  %329 = vmatpush1.msra.mxu0 0.0
  %330 = vmatprep.subr.mxu0 0.0
  %331 = vmatpush1.msra.mxu0 0.0
  %332 = vmatprep.subr.mxu0 0.0
  %333 = vmatpush1.msra.mxu0 0.0
  %334 = vmatprep.subr.mxu0 0.0
  %335 = vmatpush1.msra.mxu0 0.0
  %336 = vmatprep.subr.mxu0 0.0
  %337 = vmatpush1.msra.mxu0 0.0
  %338 = vmatprep.subr.mxu0 0.0
  %339 = vmatpush1.msra.mxu0 0.0
  %340 = vmatprep.subr.mxu0 0.0
  %341 = vmatpush1.msra.mxu0 0.0
  %342 = vmatprep.subr.mxu0 0.0
  %343 = vmatpush1.msra.mxu0 0.0
  %344 = vmatprep.subr.mxu0 0.0
  %345 = vmatpush1.msra.mxu0 0.0
  %346 = vmatprep.subr.mxu0 0.0
  %347 = vmatpush1.msra.mxu0 0.0
  %348 = vmatprep.subr.mxu0 0.0
  %349 = vmatpush1.msra.mxu0 0.0
  %350 = vmatprep.subr.mxu0 0.0
  %351 = vmatpush1.msra.mxu0 0.0
  %352 = vmatprep.subr.mxu0 0.0
  %353 = vmatpush1.msra.mxu0 0.0
  %354 = vmatprep.subr.mxu0 0.0
  %355 = vmatpush1.msra.mxu0 0.0
  %356 = vmatprep.subr.mxu0 0.0
  %357 = vmatpush1.msra.mxu0 0.0
  %358 = vmatprep.subr.mxu0 0.0
  %359 = vmatpush1.msra.mxu0 0.0
  %360 = vmatprep.subr.mxu0 0.0
  %361 = vmatpush1.msra.mxu0 0.0
  %362 = vmatprep.subr.mxu0 0.0
  %363 = vmatpush1.msra.mxu0 0.0
  %364 = vmatprep.subr.mxu0 0.0
  %365 = vmatpush1.msra.mxu0 0.0
  %366 = vmatprep.subr.mxu0 0.0
  %367 = vmatpush1.msra.mxu0 0.0
  %368 = vmatprep.subr.mxu0 0.0
  %369 = vmatpush1.msra.mxu0 0.0
  %370 = vmatprep.mubr.f32.mxu0 0.0
  %371 = vmatmul.mubr.f32.gmra.mrb[0].mxu0 %v301
  %v372 = vpop.f32.mrb[0].mxu0
  %v373 = vadd.f32 %v292, %v372
  %v374 = vpop.f32.mrb[0].mxu0
  %375 = vmatprep.mubr.f32.mxu0 0.0
  %376 = vmatmul.mubr.f32.gmra.mrb[0].mxu0 %v304
  %v377 = vpop.f32.mrb[0].mxu0
  %v378 = vadd.f32 %v297, %v377
  %v379 = vpop.f32.mrb[0].mxu0
  %380 = vdwg.mxu0
  %v381 = vld [vmem:[%s5] sm:$0xff]
  %v382 = vld [vmem:[%s5 + $0x8] sm:$0xff]
  %v383 = vld [vmem:[%s5 + $0x10] sm:$0xff]
  %v384 = vld [vmem:[%s5 + $0x18] sm:$0xff]
  %v386 = vsel %vm218, %v202, 0
  %v389 = vsel %vm218, %v207, 0
  %391 = vmatprep.subr.mxu0 0.0
  %392 = vmatpush1.msra.mxu0 %v381
  %393 = vmatprep.subr.mxu0 0.0
  %394 = vmatpush1.msra.mxu0 %v382
  %395 = vmatprep.subr.mxu0 0.0
  %396 = vmatpush1.msra.mxu0 %v383
  %397 = vmatprep.subr.mxu0 0.0
  %398 = vmatpush1.msra.mxu0 %v384
  %399 = vmatprep.subr.mxu0 0.0
  %400 = vmatpush1.msra.mxu0 0.0
  %401 = vmatprep.subr.mxu0 0.0
  %402 = vmatpush1.msra.mxu0 0.0
  %403 = vmatprep.subr.mxu0 0.0
  %404 = vmatpush1.msra.mxu0 0.0
  %405 = vmatprep.subr.mxu0 0.0
  %406 = vmatpush1.msra.mxu0 0.0
  %407 = vmatprep.subr.mxu0 0.0
  %408 = vmatpush1.msra.mxu0 0.0
  %409 = vmatprep.subr.mxu0 0.0
  %410 = vmatpush1.msra.mxu0 0.0
  %411 = vmatprep.subr.mxu0 0.0
  %412 = vmatpush1.msra.mxu0 0.0
  %413 = vmatprep.subr.mxu0 0.0
  %414 = vmatpush1.msra.mxu0 0.0
  %415 = vmatprep.subr.mxu0 0.0
  %416 = vmatpush1.msra.mxu0 0.0
  %417 = vmatprep.subr.mxu0 0.0
  %418 = vmatpush1.msra.mxu0 0.0
  %419 = vmatprep.subr.mxu0 0.0
  %420 = vmatpush1.msra.mxu0 0.0
  %421 = vmatprep.subr.mxu0 0.0
  %422 = vmatpush1.msra.mxu0 0.0
  %423 = vmatprep.subr.mxu0 0.0
  %424 = vmatpush1.msra.mxu0 0.0
  %425 = vmatprep.subr.mxu0 0.0
  %426 = vmatpush1.msra.mxu0 0.0
  %427 = vmatprep.subr.mxu0 0.0
  %428 = vmatpush1.msra.mxu0 0.0
  %429 = vmatprep.subr.mxu0 0.0
  %430 = vmatpush1.msra.mxu0 0.0
  %431 = vmatprep.subr.mxu0 0.0
  %432 = vmatpush1.msra.mxu0 0.0
  %433 = vmatprep.subr.mxu0 0.0
  %434 = vmatpush1.msra.mxu0 0.0
  %435 = vmatprep.subr.mxu0 0.0
  %436 = vmatpush1.msra.mxu0 0.0
  %437 = vmatprep.subr.mxu0 0.0
  %438 = vmatpush1.msra.mxu0 0.0
  %439 = vmatprep.subr.mxu0 0.0
  %440 = vmatpush1.msra.mxu0 0.0
  %441 = vmatprep.subr.mxu0 0.0
  %442 = vmatpush1.msra.mxu0 0.0
  %443 = vmatprep.subr.mxu0 0.0
  %444 = vmatpush1.msra.mxu0 0.0
  %445 = vmatprep.subr.mxu0 0.0
  %446 = vmatpush1.msra.mxu0 0.0
  %447 = vmatprep.subr.mxu0 0.0
  %448 = vmatpush1.msra.mxu0 0.0
  %449 = vmatprep.subr.mxu0 0.0
  %450 = vmatpush1.msra.mxu0 0.0
  %451 = vmatprep.subr.mxu0 0.0
  %452 = vmatpush1.msra.mxu0 0.0
  %453 = vmatprep.subr.mxu0 0.0
  %454 = vmatpush1.msra.mxu0 0.0
  %455 = vmatprep.mubr.f32.mxu0 0.0
  %456 = vmatmul.mubr.f32.gmra.mrb[0].mxu0 %v386
  %v457 = vpop.f32.mrb[0].mxu0
  %v458 = vadd.f32 0.0, %v457
  %v459 = vpop.f32.mrb[0].mxu0
  %460 = vmatprep.mubr.f32.mxu0 0.0
  %461 = vmatmul.mubr.f32.gmra.mrb[0].mxu0 %v389
  %v462 = vpop.f32.mrb[0].mxu0
  %v463 = vadd.f32 0.0, %v462
  %v464 = vpop.f32.mrb[0].mxu0
  %465 = vdwg.mxu0
  %v466 = vadd.f32 %v373, %v458
  %v467 = vadd.f32 %v378, %v463
  %v468 = vld [vmem:[%s6] sm:$0x1]
  %v470 = vlaneseq
  %v471 = vshrl.u32 %v470, 7
  %v472 = vsub.s32 0, %v471
  %v473 = vrot.slane %v468, %v472
  %v475 = vadd.f32 %v466, %v473
  %v476 = vadd.f32 %v467, %v473
  %vm477 = vcmp.gt.f32.partialorder %v475, 0.0
  %vm478 = vcmp.gt.f32.partialorder %v476, 0.0
  %v479 = vmin.f32 %v475, 0.0
  %v480 = vmin.f32 %v476, 0.0
  %v481 = vmul.f32 %v479, 1.442695
  %v482 = vpow.pop %v481
  %v483 = vmul.f32 %v480, 1.442695
  %v484 = vpow.pop %v483
  %v485 = vsub.f32 %v482, 1.0
  %v486 = vsub.f32 %v484, 1.0
  %v487 = vsel %vm477, %v475, %v485
  %v488 = vsel %vm478, %v476, %v486
  %v489 = vld [vmem:[%s7] sm:$0xff]
  %v490 = vld [vmem:[%s7 + $0x8] sm:$0xff]
  %v491 = vld [vmem:[%s9] sm:$0xff]
  %v492 = vld [vmem:[%s9 + $0x8] sm:$0xff]
  %494 = vset.pattern.permute.xlu0 0
  %495 = vperm.xlu0 %494, %v491
  %v496 = vpop.permute.xlu0 %495
  %499 = vset.pattern.permute.xlu0 0
  %500 = vperm.xlu0 %499, %v492
  %v501 = vpop.permute.xlu0 %500
  %v504 = vsel %vm45, %v489, 0
  %v507 = vsel %vm45, %v490, 0
  %509 = vmatprep.subr.mxu0 0.0
  %510 = vmatpush1.msra.mxu0 %v487
  %511 = vmatprep.subr.mxu0 0.0
  %512 = vmatpush1.msra.mxu0 %v488
  %513 = vmatprep.subr.mxu0 0.0
  %514 = vmatpush1.msra.mxu0 0.0
  %515 = vmatprep.subr.mxu0 0.0
  %516 = vmatpush1.msra.mxu0 0.0
  %517 = vmatprep.subr.mxu0 0.0
  %518 = vmatpush1.msra.mxu0 0.0
  %519 = vmatprep.subr.mxu0 0.0
  %520 = vmatpush1.msra.mxu0 0.0
  %521 = vmatprep.subr.mxu0 0.0
  %522 = vmatpush1.msra.mxu0 0.0
  %523 = vmatprep.subr.mxu0 0.0
  %524 = vmatpush1.msra.mxu0 0.0
  %525 = vmatprep.subr.mxu0 0.0
  %526 = vmatpush1.msra.mxu0 0.0
  %527 = vmatprep.subr.mxu0 0.0
  %528 = vmatpush1.msra.mxu0 0.0
  %529 = vmatprep.subr.mxu0 0.0
  %530 = vmatpush1.msra.mxu0 0.0
  %531 = vmatprep.subr.mxu0 0.0
  %532 = vmatpush1.msra.mxu0 0.0
  %533 = vmatprep.subr.mxu0 0.0
  %534 = vmatpush1.msra.mxu0 0.0
  %535 = vmatprep.subr.mxu0 0.0
  %536 = vmatpush1.msra.mxu0 0.0
  %537 = vmatprep.subr.mxu0 0.0
  %538 = vmatpush1.msra.mxu0 0.0
  %539 = vmatprep.subr.mxu0 0.0
  %540 = vmatpush1.msra.mxu0 0.0
  %541 = vmatprep.subr.mxu0 0.0
  %542 = vmatpush1.msra.mxu0 0.0
  %543 = vmatprep.subr.mxu0 0.0
  %544 = vmatpush1.msra.mxu0 0.0
  %545 = vmatprep.subr.mxu0 0.0
  %546 = vmatpush1.msra.mxu0 0.0
  %547 = vmatprep.subr.mxu0 0.0
  %548 = vmatpush1.msra.mxu0 0.0
  %549 = vmatprep.subr.mxu0 0.0
  %550 = vmatpush1.msra.mxu0 0.0
  %551 = vmatprep.subr.mxu0 0.0
  %552 = vmatpush1.msra.mxu0 0.0
  %553 = vmatprep.subr.mxu0 0.0
  %554 = vmatpush1.msra.mxu0 0.0
  %555 = vmatprep.subr.mxu0 0.0
  %556 = vmatpush1.msra.mxu0 0.0
  %557 = vmatprep.subr.mxu0 0.0
  %558 = vmatpush1.msra.mxu0 0.0
  %559 = vmatprep.subr.mxu0 0.0
  %560 = vmatpush1.msra.mxu0 0.0
  %561 = vmatprep.subr.mxu0 0.0
  %562 = vmatpush1.msra.mxu0 0.0
  %563 = vmatprep.subr.mxu0 0.0
  %564 = vmatpush1.msra.mxu0 0.0
  %565 = vmatprep.subr.mxu0 0.0
  %566 = vmatpush1.msra.mxu0 0.0
  %567 = vmatprep.subr.mxu0 0.0
  %568 = vmatpush1.msra.mxu0 0.0
  %569 = vmatprep.subr.mxu0 0.0
  %570 = vmatpush1.msra.mxu0 0.0
  %571 = vmatprep.subr.mxu0 0.0
  %572 = vmatpush1.msra.mxu0 0.0
  %573 = vmatprep.mubr.f32.mxu0 0.0
  %574 = vmatmul.mubr.f32.gmra.mrb[0].mxu0 %v504
  %v575 = vpop.f32.mrb[0].mxu0
  %v576 = vadd.f32 %v496, %v575
  %v577 = vpop.f32.mrb[0].mxu0
  %578 = vmatprep.mubr.f32.mxu0 0.0
  %579 = vmatmul.mubr.f32.gmra.mrb[0].mxu0 %v507
  %v580 = vpop.f32.mrb[0].mxu0
  %v581 = vadd.f32 %v501, %v580
  %v582 = vpop.f32.mrb[0].mxu0
  %583 = vdwg.mxu0
  %v584 = vld [vmem:[%s8] sm:$0xff]
  %v585 = vld [vmem:[%s8 + $0x8] sm:$0xff]
  %v586 = vld [vmem:[%s10] sm:$0xff]
  %v587 = vld [vmem:[%s10 + $0x8] sm:$0xff]
  %589 = vset.pattern.permute.xlu0 0
  %590 = vperm.xlu0 %589, %v586
  %v591 = vpop.permute.xlu0 %590
  %594 = vset.pattern.permute.xlu0 0
  %595 = vperm.xlu0 %594, %v587
  %v596 = vpop.permute.xlu0 %595
  %v599 = vsel %vm45, %v584, 0
  %v602 = vsel %vm45, %v585, 0
  %604 = vmatprep.subr.mxu0 0.0
  %605 = vmatpush1.msra.mxu0 %v487
  %606 = vmatprep.subr.mxu0 0.0
  %607 = vmatpush1.msra.mxu0 %v488
  %608 = vmatprep.subr.mxu0 0.0
  %609 = vmatpush1.msra.mxu0 0.0
  %610 = vmatprep.subr.mxu0 0.0
  %611 = vmatpush1.msra.mxu0 0.0
  %612 = vmatprep.subr.mxu0 0.0
  %613 = vmatpush1.msra.mxu0 0.0
  %614 = vmatprep.subr.mxu0 0.0
  %615 = vmatpush1.msra.mxu0 0.0
  %616 = vmatprep.subr.mxu0 0.0
  %617 = vmatpush1.msra.mxu0 0.0
  %618 = vmatprep.subr.mxu0 0.0
  %619 = vmatpush1.msra.mxu0 0.0
  %620 = vmatprep.subr.mxu0 0.0
  %621 = vmatpush1.msra.mxu0 0.0
  %622 = vmatprep.subr.mxu0 0.0
  %623 = vmatpush1.msra.mxu0 0.0
  %624 = vmatprep.subr.mxu0 0.0
  %625 = vmatpush1.msra.mxu0 0.0
  %626 = vmatprep.subr.mxu0 0.0
  %627 = vmatpush1.msra.mxu0 0.0
  %628 = vmatprep.subr.mxu0 0.0
  %629 = vmatpush1.msra.mxu0 0.0
  %630 = vmatprep.subr.mxu0 0.0
  %631 = vmatpush1.msra.mxu0 0.0
  %632 = vmatprep.subr.mxu0 0.0
  %633 = vmatpush1.msra.mxu0 0.0
  %634 = vmatprep.subr.mxu0 0.0
  %635 = vmatpush1.msra.mxu0 0.0
  %636 = vmatprep.subr.mxu0 0.0
  %637 = vmatpush1.msra.mxu0 0.0
  %638 = vmatprep.subr.mxu0 0.0
  %639 = vmatpush1.msra.mxu0 0.0
  %640 = vmatprep.subr.mxu0 0.0
  %641 = vmatpush1.msra.mxu0 0.0
  %642 = vmatprep.subr.mxu0 0.0
  %643 = vmatpush1.msra.mxu0 0.0
  %644 = vmatprep.subr.mxu0 0.0
  %645 = vmatpush1.msra.mxu0 0.0
  %646 = vmatprep.subr.mxu0 0.0
  %647 = vmatpush1.msra.mxu0 0.0
  %648 = vmatprep.subr.mxu0 0.0
  %649 = vmatpush1.msra.mxu0 0.0
  %650 = vmatprep.subr.mxu0 0.0
  %651 = vmatpush1.msra.mxu0 0.0
  %652 = vmatprep.subr.mxu0 0.0
  %653 = vmatpush1.msra.mxu0 0.0
  %654 = vmatprep.subr.mxu0 0.0
  %655 = vmatpush1.msra.mxu0 0.0
  %656 = vmatprep.subr.mxu0 0.0
  %657 = vmatpush1.msra.mxu0 0.0
  %658 = vmatprep.subr.mxu0 0.0
  %659 = vmatpush1.msra.mxu0 0.0
  %660 = vmatprep.subr.mxu0 0.0
  %661 = vmatpush1.msra.mxu0 0.0
  %662 = vmatprep.subr.mxu0 0.0
  %663 = vmatpush1.msra.mxu0 0.0
  %664 = vmatprep.subr.mxu0 0.0
  %665 = vmatpush1.msra.mxu0 0.0
  %666 = vmatprep.subr.mxu0 0.0
  %667 = vmatpush1.msra.mxu0 0.0
  %668 = vmatprep.mubr.f32.mxu0 0.0
  %669 = vmatmul.mubr.f32.gmra.mrb[0].mxu0 %v599
  %v670 = vpop.f32.mrb[0].mxu0
  %v671 = vadd.f32 %v591, %v670
  %v672 = vpop.f32.mrb[0].mxu0
  %673 = vmatprep.mubr.f32.mxu0 0.0
  %674 = vmatmul.mubr.f32.gmra.mrb[0].mxu0 %v602
  %v675 = vpop.f32.mrb[0].mxu0
  %v676 = vadd.f32 %v596, %v675
  %v677 = vpop.f32.mrb[0].mxu0
  %678 = vdwg.mxu0
  %v679 = vmax.f32 %v576, %v487
  %v680 = vmax.f32 %v581, %v488
  %v681 = vmax.f32 %v679, %v671
  %v682 = vmax.f32 %v680, %v676
  %v683 = vld [vmem:[%s11] sm:$0xff]
  %v685 = vsel %vm45, %v683, 0
  %687 = vmatprep.subr.mxu0 0.0
  %688 = vmatpush1.msra.mxu0 %v681
  %689 = vmatprep.subr.mxu0 0.0
  %690 = vmatpush1.msra.mxu0 %v682
  %691 = vmatprep.subr.mxu0 0.0
  %692 = vmatpush1.msra.mxu0 0.0
  %693 = vmatprep.subr.mxu0 0.0
  %694 = vmatpush1.msra.mxu0 0.0
  %695 = vmatprep.subr.mxu0 0.0
  %696 = vmatpush1.msra.mxu0 0.0
  %697 = vmatprep.subr.mxu0 0.0
  %698 = vmatpush1.msra.mxu0 0.0
  %699 = vmatprep.subr.mxu0 0.0
  %700 = vmatpush1.msra.mxu0 0.0
  %701 = vmatprep.subr.mxu0 0.0
  %702 = vmatpush1.msra.mxu0 0.0
  %703 = vmatprep.subr.mxu0 0.0
  %704 = vmatpush1.msra.mxu0 0.0
  %705 = vmatprep.subr.mxu0 0.0
  %706 = vmatpush1.msra.mxu0 0.0
  %707 = vmatprep.subr.mxu0 0.0
  %708 = vmatpush1.msra.mxu0 0.0
  %709 = vmatprep.subr.mxu0 0.0
  %710 = vmatpush1.msra.mxu0 0.0
  %711 = vmatprep.subr.mxu0 0.0
  %712 = vmatpush1.msra.mxu0 0.0
  %713 = vmatprep.subr.mxu0 0.0
  %714 = vmatpush1.msra.mxu0 0.0
  %715 = vmatprep.subr.mxu0 0.0
  %716 = vmatpush1.msra.mxu0 0.0
  %717 = vmatprep.subr.mxu0 0.0
  %718 = vmatpush1.msra.mxu0 0.0
  %719 = vmatprep.subr.mxu0 0.0
  %720 = vmatpush1.msra.mxu0 0.0
  %721 = vmatprep.subr.mxu0 0.0
  %722 = vmatpush1.msra.mxu0 0.0
  %723 = vmatprep.subr.mxu0 0.0
  %724 = vmatpush1.msra.mxu0 0.0
  %725 = vmatprep.subr.mxu0 0.0
  %726 = vmatpush1.msra.mxu0 0.0
  %727 = vmatprep.subr.mxu0 0.0
  %728 = vmatpush1.msra.mxu0 0.0
  %729 = vmatprep.subr.mxu0 0.0
  %730 = vmatpush1.msra.mxu0 0.0
  %731 = vmatprep.subr.mxu0 0.0
  %732 = vmatpush1.msra.mxu0 0.0
  %733 = vmatprep.subr.mxu0 0.0
  %734 = vmatpush1.msra.mxu0 0.0
  %735 = vmatprep.subr.mxu0 0.0
  %736 = vmatpush1.msra.mxu0 0.0
  %737 = vmatprep.subr.mxu0 0.0
  %738 = vmatpush1.msra.mxu0 0.0
  %739 = vmatprep.subr.mxu0 0.0
  %740 = vmatpush1.msra.mxu0 0.0
  %741 = vmatprep.subr.mxu0 0.0
  %742 = vmatpush1.msra.mxu0 0.0
  %743 = vmatprep.subr.mxu0 0.0
  %744 = vmatpush1.msra.mxu0 0.0
  %745 = vmatprep.subr.mxu0 0.0
  %746 = vmatpush1.msra.mxu0 0.0
  %747 = vmatprep.subr.mxu0 0.0
  %748 = vmatpush1.msra.mxu0 0.0
  %749 = vmatprep.subr.mxu0 0.0
  %750 = vmatpush1.msra.mxu0 0.0
  %751 = vmatprep.mubr.f32.mxu0 0.0
  %752 = vmatmul.mubr.f32.gmra.mrb[0].mxu0 %v685
  %v753 = vpop.f32.mrb[0].mxu0
  %v754 = vadd.f32 0.0, %v753
  %v755 = vpop.f32.mrb[0].mxu0
  %756 = vdwg.mxu0
  %757 = vst.msk [vmem:[%s12] sm:$0xff] %vm218, %v754
  // Predicated region
  $region50: #{_lambda_.10} parent=0 // pred_check
    _
  $region51: #{_lambda_.10} parent=0 // pred_check_branch
    %759 = sbr.rel (0) target = $region53
  $region52: #{_lambda_.10} parent=0 // pred_region
    _
  $region53: #{_lambda_.10} parent=0 // pred_fallthru
    _
  // Predicated region
  $region54: #{_lambda_.10} parent=0 // pred_check
    _
  $region55: #{_lambda_.10} parent=0 // pred_check_branch
    %761 = sbr.rel (0) target = $region57
  $region56: #{_lambda_.10} parent=0 // pred_region
    _
  $region57: #{_lambda_.10} parent=0 // pred_fallthru
    _

// kernel: _lambda_.12
$region0: #{_lambda_.12}
  #allocation0 [shape = 'u32[]', space=smem, size = 0x4, offset = 0x4, fixed_abs, tag = 'smem constant byte address 0x4 - core index']
  #allocation1 [shape = 'u32[144,128]{1,0:T(1,128)}', space=vmem, size = 0x12000, scoped, tag = 'internal scratch']
  %s0 = inlined_call_operand.vmem [shape: f32[8,32], index: 0, kind: input, shape index: {}]
  %s1 = inlined_call_operand.vmem [shape: f32[1,32], index: 1, kind: input, shape index: {}]
  %s2 = inlined_call_operand.vmem [shape: f32[1,32], index: 2, kind: input, shape index: {}]
  %s3 = inlined_call_operand.vmem [shape: f32[8,32], index: 3, kind: output, shape index: {}]
  %s4 = sld [smem:[#allocation0]]
  $region22: #{_lambda_.12} parent=0
    _
  %s6 = ssub.s32 1, %s4
  %s7 = scalar_select 0, %s6, %s4
  // Predicated region
  $region2: #{_lambda_.12} parent=0 // pred_check
    _
  $region3: #{_lambda_.12} parent=0 // pred_check_branch
    %9 = sbr.rel (0) target = $region5
  $region4: #{_lambda_.12} parent=0 // pred_region
    _
  $region5: #{_lambda_.12} parent=0 // pred_fallthru
    _
  // Predicated region
  $region6: #{_lambda_.12} parent=0 // pred_check
    _
  $region7: #{_lambda_.12} parent=0 // pred_check_branch
    %11 = sbr.rel (0) target = $region9
  $region8: #{_lambda_.12} parent=0 // pred_region
    _
  $region9: #{_lambda_.12} parent=0 // pred_fallthru
    _
  // Predicated region
  $region10: #{_lambda_.12} parent=0 // pred_check
    _
  $region11: #{_lambda_.12} parent=0 // pred_check_branch
    %13 = sbr.rel (0) target = $region13
  $region12: #{_lambda_.12} parent=0 // pred_region
    _
  $region13: #{_lambda_.12} parent=0 // pred_fallthru
    _
  %v14 = vld [vmem:[%s0] sm:$0xff]
  %v15 = vld [vmem:[%s1] sm:$0x1]
  %v16 = vld [vmem:[%s2] sm:$0x1]
  %vm17 = vcmask 261120
  %v18 = vsel %vm17, %v14, 0.0
  %19 = vadd.xlane.f32.xlu0 %v18
  %v20 = vpop.xlane.xlu0 %19
  %v21 = vrcp.pop 32.0
  %v22 = vmul.f32 %v20, %v21
  %v23 = vsub.f32 %v14, %v22
  %v24 = vmul.f32 %v23, %v23
  %v25 = vsel %vm17, %v24, 0.0
  %26 = vadd.xlane.f32.xlu0 %v25
  %v27 = vpop.xlane.xlu0 %26
  %v28 = vmul.f32 %v27, %v21
  %v29 = vadd.f32 %v28, 1e-05
  %v30 = vrsqrt.pop %v29
  %v31 = vmul.f32 %v23, %v30
  %v33 = vlaneseq
  %v34 = vshrl.u32 %v33, 7
  %v35 = vsub.s32 0, %v34
  %v36 = vrot.slane %v15, %v35
  %v38 = vmul.f32 %v31, %v36
  %v40 = vlaneseq
  %v41 = vshrl.u32 %v40, 7
  %v42 = vsub.s32 0, %v41
  %v43 = vrot.slane %v16, %v42
  %v45 = vadd.f32 %v38, %v43
  %46 = vst.msk [vmem:[%s3] sm:$0xff] %vm17, %v45
  // Predicated region
  $region14: #{_lambda_.12} parent=0 // pred_check
    _
  $region15: #{_lambda_.12} parent=0 // pred_check_branch
    %48 = sbr.rel (0) target = $region17
  $region16: #{_lambda_.12} parent=0 // pred_region
    _
  $region17: #{_lambda_.12} parent=0 // pred_fallthru
    _
  // Predicated region
  $region18: #{_lambda_.12} parent=0 // pred_check
    _
  $region19: #{_lambda_.12} parent=0 // pred_check_branch
    %50 = sbr.rel (0) target = $region21
  $region20: #{_lambda_.12} parent=0 // pred_region
    _
  $region21: #{_lambda_.12} parent=0 // pred_fallthru
    _

// kernel: _lambda_.11
$region0: #{_lambda_.11}
  #allocation0 [shape = 'u32[]', space=smem, size = 0x4, offset = 0x4, fixed_abs, tag = 'smem constant byte address 0x4 - core index']
  #allocation1 [shape = 'u32[144,128]{1,0:T(1,128)}', space=vmem, size = 0x12000, scoped, tag = 'internal scratch']
  %s0 = inlined_call_operand.vmem [shape: f32[8,32], index: 0, kind: input, shape index: {}]
  %s1 = inlined_call_operand.vmem [shape: f32[32,96], index: 1, kind: input, shape index: {}]
  %s2 = inlined_call_operand.vmem [shape: f32[1,96], index: 2, kind: input, shape index: {}]
  %s3 = inlined_call_operand.vmem [shape: f32[32,32], index: 3, kind: input, shape index: {}]
  %s4 = inlined_call_operand.vmem [shape: f32[1,32], index: 4, kind: input, shape index: {}, may-alias: {4,9,13,15}]
  %s5 = inlined_call_operand.vmem [shape: f32[32,64], index: 5, kind: input, shape index: {}]
  %s6 = inlined_call_operand.vmem [shape: f32[32,64], index: 6, kind: input, shape index: {}]
  %s7 = inlined_call_operand.vmem [shape: f32[8,8], index: 7, kind: input, shape index: {}]
  %s8 = inlined_call_operand.vmem [shape: f32[1,32], index: 8, kind: input, shape index: {}, may-alias: {8,14}]
  %s9 = inlined_call_operand.vmem [shape: f32[1,32], index: 9, kind: input, shape index: {}, may-alias: {4,9,13,15}]
  %s10 = inlined_call_operand.vmem [shape: f32[32,64], index: 10, kind: input, shape index: {}]
  %s11 = inlined_call_operand.vmem [shape: f32[1,64], index: 11, kind: input, shape index: {}]
  %s12 = inlined_call_operand.vmem [shape: f32[64,32], index: 12, kind: input, shape index: {}]
  %s13 = inlined_call_operand.vmem [shape: f32[1,32], index: 13, kind: input, shape index: {}, may-alias: {4,9,13,15}]
  %s14 = inlined_call_operand.vmem [shape: f32[1,32], index: 14, kind: input, shape index: {}, may-alias: {8,14}]
  %s15 = inlined_call_operand.vmem [shape: f32[1,32], index: 15, kind: input, shape index: {}, may-alias: {4,9,13,15}]
  %s16 = inlined_call_operand.vmem [shape: f32[8,32], index: 16, kind: output, shape index: {}]
  %s17 = sld [smem:[#allocation0]]
  $region74: #{_lambda_.11} parent=0
    _
  %s19 = ssub.s32 1, %s17
  %s20 = scalar_select 0, %s19, %s17
  // Predicated region
  $region2: #{_lambda_.11} parent=0 // pred_check
    _
  $region3: #{_lambda_.11} parent=0 // pred_check_branch
    %22 = sbr.rel (0) target = $region5
  $region4: #{_lambda_.11} parent=0 // pred_region
    _
  $region5: #{_lambda_.11} parent=0 // pred_fallthru
    _
  // Predicated region
  $region6: #{_lambda_.11} parent=0 // pred_check
    _
  $region7: #{_lambda_.11} parent=0 // pred_check_branch
    %24 = sbr.rel (0) target = $region9
  $region8: #{_lambda_.11} parent=0 // pred_region
    _
  $region9: #{_lambda_.11} parent=0 // pred_fallthru
    _
  // Predicated region
  $region10: #{_lambda_.11} parent=0 // pred_check
    _
  $region11: #{_lambda_.11} parent=0 // pred_check_branch
    %26 = sbr.rel (0) target = $region13
  $region12: #{_lambda_.11} parent=0 // pred_region
    _
  $region13: #{_lambda_.11} parent=0 // pred_fallthru
    _
  // Predicated region
  $region14: #{_lambda_.11} parent=0 // pred_check
    _
  $region15: #{_lambda_.11} parent=0 // pred_check_branch
    %28 = sbr.rel (0) target = $region17
  $region16: #{_lambda_.11} parent=0 // pred_region
    _
  $region17: #{_lambda_.11} parent=0 // pred_fallthru
    _
  // Predicated region
  $region18: #{_lambda_.11} parent=0 // pred_check
    _
  $region19: #{_lambda_.11} parent=0 // pred_check_branch
    %30 = sbr.rel (0) target = $region21
  $region20: #{_lambda_.11} parent=0 // pred_region
    _
  $region21: #{_lambda_.11} parent=0 // pred_fallthru
    _
  // Predicated region
  $region22: #{_lambda_.11} parent=0 // pred_check
    _
  $region23: #{_lambda_.11} parent=0 // pred_check_branch
    %32 = sbr.rel (0) target = $region25
  $region24: #{_lambda_.11} parent=0 // pred_region
    _
  $region25: #{_lambda_.11} parent=0 // pred_fallthru
    _
  // Predicated region
  $region26: #{_lambda_.11} parent=0 // pred_check
    _
  $region27: #{_lambda_.11} parent=0 // pred_check_branch
    %34 = sbr.rel (0) target = $region29
  $region28: #{_lambda_.11} parent=0 // pred_region
    _
  $region29: #{_lambda_.11} parent=0 // pred_fallthru
    _
  // Predicated region
  $region30: #{_lambda_.11} parent=0 // pred_check
    _
  $region31: #{_lambda_.11} parent=0 // pred_check_branch
    %36 = sbr.rel (0) target = $region33
  $region32: #{_lambda_.11} parent=0 // pred_region
    _
  $region33: #{_lambda_.11} parent=0 // pred_fallthru
    _
  // Predicated region
  $region34: #{_lambda_.11} parent=0 // pred_check
    _
  $region35: #{_lambda_.11} parent=0 // pred_check_branch
    %38 = sbr.rel (0) target = $region37
  $region36: #{_lambda_.11} parent=0 // pred_region
    _
  $region37: #{_lambda_.11} parent=0 // pred_fallthru
    _
  // Predicated region
  $region38: #{_lambda_.11} parent=0 // pred_check
    _
  $region39: #{_lambda_.11} parent=0 // pred_check_branch
    %40 = sbr.rel (0) target = $region41
  $region40: #{_lambda_.11} parent=0 // pred_region
    _
  $region41: #{_lambda_.11} parent=0 // pred_fallthru
    _
  // Predicated region
  $region42: #{_lambda_.11} parent=0 // pred_check
    _
  $region43: #{_lambda_.11} parent=0 // pred_check_branch
    %42 = sbr.rel (0) target = $region45
  $region44: #{_lambda_.11} parent=0 // pred_region
    _
  $region45: #{_lambda_.11} parent=0 // pred_fallthru
    _
  // Predicated region
  $region46: #{_lambda_.11} parent=0 // pred_check
    _
  $region47: #{_lambda_.11} parent=0 // pred_check_branch
    %44 = sbr.rel (0) target = $region49
  $region48: #{_lambda_.11} parent=0 // pred_region
    _
  $region49: #{_lambda_.11} parent=0 // pred_fallthru
    _
  // Predicated region
  $region50: #{_lambda_.11} parent=0 // pred_check
    _
  $region51: #{_lambda_.11} parent=0 // pred_check_branch
    %46 = sbr.rel (0) target = $region53
  $region52: #{_lambda_.11} parent=0 // pred_region
    _
  $region53: #{_lambda_.11} parent=0 // pred_fallthru
    _
  // Predicated region
  $region54: #{_lambda_.11} parent=0 // pred_check
    _
  $region55: #{_lambda_.11} parent=0 // pred_check_branch
    %48 = sbr.rel (0) target = $region57
  $region56: #{_lambda_.11} parent=0 // pred_region
    _
  $region57: #{_lambda_.11} parent=0 // pred_fallthru
    _
  // Predicated region
  $region58: #{_lambda_.11} parent=0 // pred_check
    _
  $region59: #{_lambda_.11} parent=0 // pred_check_branch
    %50 = sbr.rel (0) target = $region61
  $region60: #{_lambda_.11} parent=0 // pred_region
    _
  $region61: #{_lambda_.11} parent=0 // pred_fallthru
    _
  // Predicated region
  $region62: #{_lambda_.11} parent=0 // pred_check
    _
  $region63: #{_lambda_.11} parent=0 // pred_check_branch
    %52 = sbr.rel (0) target = $region65
  $region64: #{_lambda_.11} parent=0 // pred_region
    _
  $region65: #{_lambda_.11} parent=0 // pred_fallthru
    _
  %v53 = vld [vmem:[%s0] sm:$0xff]
  %v54 = vld [vmem:[%s1] sm:$0xff]
  %v55 = vld [vmem:[%s1 + $0x8] sm:$0xff]
  %v56 = vld [vmem:[%s1 + $0x10] sm:$0xff]
  %v57 = vld [vmem:[%s1 + $0x18] sm:$0xff]
  %v58 = vld [vmem:[%s2] sm:$0x1]
  %v60 = vlaneseq
  %v61 = vshrl.u32 %v60, 7
  %v62 = vsub.s32 0, %v61
  %v63 = vrot.slane %v58, %v62
  %vm65 = vcmask 261120
  %v67 = vsel %vm65, %v53, 0
  %69 = vmatprep.subr.mxu0 0.0
  %70 = vmatpush1.msra.mxu0 %v54
  %71 = vmatprep.subr.mxu0 0.0
  %72 = vmatpush1.msra.mxu0 %v55
  %73 = vmatprep.subr.mxu0 0.0
  %74 = vmatpush1.msra.mxu0 %v56
  %75 = vmatprep.subr.mxu0 0.0
  %76 = vmatpush1.msra.mxu0 %v57
  %77 = vmatprep.subr.mxu0 0.0
  %78 = vmatpush1.msra.mxu0 0.0
  %79 = vmatprep.subr.mxu0 0.0
  %80 = vmatpush1.msra.mxu0 0.0
  %81 = vmatprep.subr.mxu0 0.0
  %82 = vmatpush1.msra.mxu0 0.0
  %83 = vmatprep.subr.mxu0 0.0
  %84 = vmatpush1.msra.mxu0 0.0
  %85 = vmatprep.subr.mxu0 0.0
  %86 = vmatpush1.msra.mxu0 0.0
  %87 = vmatprep.subr.mxu0 0.0
  %88 = vmatpush1.msra.mxu0 0.0
  %89 = vmatprep.subr.mxu0 0.0
  %90 = vmatpush1.msra.mxu0 0.0
  %91 = vmatprep.subr.mxu0 0.0
  %92 = vmatpush1.msra.mxu0 0.0
  %93 = vmatprep.subr.mxu0 0.0
  %94 = vmatpush1.msra.mxu0 0.0
  %95 = vmatprep.subr.mxu0 0.0
  %96 = vmatpush1.msra.mxu0 0.0
  %97 = vmatprep.subr.mxu0 0.0
  %98 = vmatpush1.msra.mxu0 0.0
  %99 = vmatprep.subr.mxu0 0.0
  %100 = vmatpush1.msra.mxu0 0.0
  %101 = vmatprep.subr.mxu0 0.0
  %102 = vmatpush1.msra.mxu0 0.0
  %103 = vmatprep.subr.mxu0 0.0
  %104 = vmatpush1.msra.mxu0 0.0
  %105 = vmatprep.subr.mxu0 0.0
  %106 = vmatpush1.msra.mxu0 0.0
  %107 = vmatprep.subr.mxu0 0.0
  %108 = vmatpush1.msra.mxu0 0.0
  %109 = vmatprep.subr.mxu0 0.0
  %110 = vmatpush1.msra.mxu0 0.0
  %111 = vmatprep.subr.mxu0 0.0
  %112 = vmatpush1.msra.mxu0 0.0
  %113 = vmatprep.subr.mxu0 0.0
  %114 = vmatpush1.msra.mxu0 0.0
  %115 = vmatprep.subr.mxu0 0.0
  %116 = vmatpush1.msra.mxu0 0.0
  %117 = vmatprep.subr.mxu0 0.0
  %118 = vmatpush1.msra.mxu0 0.0
  %119 = vmatprep.subr.mxu0 0.0
  %120 = vmatpush1.msra.mxu0 0.0
  %121 = vmatprep.subr.mxu0 0.0
  %122 = vmatpush1.msra.mxu0 0.0
  %123 = vmatprep.subr.mxu0 0.0
  %124 = vmatpush1.msra.mxu0 0.0
  %125 = vmatprep.subr.mxu0 0.0
  %126 = vmatpush1.msra.mxu0 0.0
  %127 = vmatprep.subr.mxu0 0.0
  %128 = vmatpush1.msra.mxu0 0.0
  %129 = vmatprep.subr.mxu0 0.0
  %130 = vmatpush1.msra.mxu0 0.0
  %131 = vmatprep.subr.mxu0 0.0
  %132 = vmatpush1.msra.mxu0 0.0
  %133 = vmatprep.mubr.f32.mxu0 0.0
  %134 = vmatmul.mubr.f32.gmra.mrb[0].mxu0 %v67
  %v135 = vpop.f32.mrb[0].mxu0
  %v136 = vadd.f32 %v63, %v135
  %v137 = vpop.f32.mrb[0].mxu0
  %138 = vdwg.mxu0
  %v139 = vld [vmem:[%s5] sm:$0xff]
  %v140 = vld [vmem:[%s5 + $0x8] sm:$0xff]
  %v141 = vld [vmem:[%s5 + $0x10] sm:$0xff]
  %v142 = vld [vmem:[%s5 + $0x18] sm:$0xff]
  %v143 = vld [vmem:[%s6] sm:$0xff]
  %v144 = vld [vmem:[%s6 + $0x8] sm:$0xff]
  %v145 = vld [vmem:[%s6 + $0x10] sm:$0xff]
  %v146 = vld [vmem:[%s6 + $0x18] sm:$0xff]
  %v147 = vmul.f32 %v136, 0.59460354
  %v149 = vsel %vm65, %v147, 0
  %151 = vmatprep.subr.mxu0 0.0
  %152 = vmatpush1.msra.mxu0 %v139
  %153 = vmatprep.subr.mxu0 0.0
  %154 = vmatpush1.msra.mxu0 %v140
  %155 = vmatprep.subr.mxu0 0.0
  %156 = vmatpush1.msra.mxu0 %v141
  %157 = vmatprep.subr.mxu0 0.0
  %158 = vmatpush1.msra.mxu0 %v142
  %159 = vmatprep.subr.mxu0 0.0
  %160 = vmatpush1.msra.mxu0 0.0
  %161 = vmatprep.subr.mxu0 0.0
  %162 = vmatpush1.msra.mxu0 0.0
  %163 = vmatprep.subr.mxu0 0.0
  %164 = vmatpush1.msra.mxu0 0.0
  %165 = vmatprep.subr.mxu0 0.0
  %166 = vmatpush1.msra.mxu0 0.0
  %167 = vmatprep.subr.mxu0 0.0
  %168 = vmatpush1.msra.mxu0 0.0
  %169 = vmatprep.subr.mxu0 0.0
  %170 = vmatpush1.msra.mxu0 0.0
  %171 = vmatprep.subr.mxu0 0.0
  %172 = vmatpush1.msra.mxu0 0.0
  %173 = vmatprep.subr.mxu0 0.0
  %174 = vmatpush1.msra.mxu0 0.0
  %175 = vmatprep.subr.mxu0 0.0
  %176 = vmatpush1.msra.mxu0 0.0
  %177 = vmatprep.subr.mxu0 0.0
  %178 = vmatpush1.msra.mxu0 0.0
  %179 = vmatprep.subr.mxu0 0.0
  %180 = vmatpush1.msra.mxu0 0.0
  %181 = vmatprep.subr.mxu0 0.0
  %182 = vmatpush1.msra.mxu0 0.0
  %183 = vmatprep.subr.mxu0 0.0
  %184 = vmatpush1.msra.mxu0 0.0
  %185 = vmatprep.subr.mxu0 0.0
  %186 = vmatpush1.msra.mxu0 0.0
  %187 = vmatprep.subr.mxu0 0.0
  %188 = vmatpush1.msra.mxu0 0.0
  %189 = vmatprep.subr.mxu0 0.0
  %190 = vmatpush1.msra.mxu0 0.0
  %191 = vmatprep.subr.mxu0 0.0
  %192 = vmatpush1.msra.mxu0 0.0
  %193 = vmatprep.subr.mxu0 0.0
  %194 = vmatpush1.msra.mxu0 0.0
  %195 = vmatprep.subr.mxu0 0.0
  %196 = vmatpush1.msra.mxu0 0.0
  %197 = vmatprep.subr.mxu0 0.0
  %198 = vmatpush1.msra.mxu0 0.0
  %199 = vmatprep.subr.mxu0 0.0
  %200 = vmatpush1.msra.mxu0 0.0
  %201 = vmatprep.subr.mxu0 0.0
  %202 = vmatpush1.msra.mxu0 0.0
  %203 = vmatprep.subr.mxu0 0.0
  %204 = vmatpush1.msra.mxu0 0.0
  %205 = vmatprep.subr.mxu0 0.0
  %206 = vmatpush1.msra.mxu0 0.0
  %207 = vmatprep.subr.mxu0 0.0
  %208 = vmatpush1.msra.mxu0 0.0
  %209 = vmatprep.subr.mxu0 0.0
  %210 = vmatpush1.msra.mxu0 0.0
  %211 = vmatprep.subr.mxu0 0.0
  %212 = vmatpush1.msra.mxu0 0.0
  %213 = vmatprep.subr.mxu0 0.0
  %214 = vmatpush1.msra.mxu0 0.0
  %215 = vmatprep.mubr.f32.mxu0 0.0
  %216 = vmatmul.mubr.f32.gmra.mrb[0].mxu0 %v149
  %v217 = vpop.f32.mrb[0].mxu0
  %v218 = vadd.f32 0.0, %v217
  %v219 = vpop.f32.mrb[0].mxu0
  %220 = vdwg.mxu0
  %v221 = vmul.f32 %v147, %v147
  %v223 = vsel %vm65, %v221, 0
  %225 = vmatprep.subr.mxu0 0.0
  %226 = vmatpush1.msra.mxu0 %v143
  %227 = vmatprep.subr.mxu0 0.0
  %228 = vmatpush1.msra.mxu0 %v144
  %229 = vmatprep.subr.mxu0 0.0
  %230 = vmatpush1.msra.mxu0 %v145
  %231 = vmatprep.subr.mxu0 0.0
  %232 = vmatpush1.msra.mxu0 %v146
  %233 = vmatprep.subr.mxu0 0.0
  %234 = vmatpush1.msra.mxu0 0.0
  %235 = vmatprep.subr.mxu0 0.0
  %236 = vmatpush1.msra.mxu0 0.0
  %237 = vmatprep.subr.mxu0 0.0
  %238 = vmatpush1.msra.mxu0 0.0
  %239 = vmatprep.subr.mxu0 0.0
  %240 = vmatpush1.msra.mxu0 0.0
  %241 = vmatprep.subr.mxu0 0.0
  %242 = vmatpush1.msra.mxu0 0.0
  %243 = vmatprep.subr.mxu0 0.0
  %244 = vmatpush1.msra.mxu0 0.0
  %245 = vmatprep.subr.mxu0 0.0
  %246 = vmatpush1.msra.mxu0 0.0
  %247 = vmatprep.subr.mxu0 0.0
  %248 = vmatpush1.msra.mxu0 0.0
  %249 = vmatprep.subr.mxu0 0.0
  %250 = vmatpush1.msra.mxu0 0.0
  %251 = vmatprep.subr.mxu0 0.0
  %252 = vmatpush1.msra.mxu0 0.0
  %253 = vmatprep.subr.mxu0 0.0
  %254 = vmatpush1.msra.mxu0 0.0
  %255 = vmatprep.subr.mxu0 0.0
  %256 = vmatpush1.msra.mxu0 0.0
  %257 = vmatprep.subr.mxu0 0.0
  %258 = vmatpush1.msra.mxu0 0.0
  %259 = vmatprep.subr.mxu0 0.0
  %260 = vmatpush1.msra.mxu0 0.0
  %261 = vmatprep.subr.mxu0 0.0
  %262 = vmatpush1.msra.mxu0 0.0
  %263 = vmatprep.subr.mxu0 0.0
  %264 = vmatpush1.msra.mxu0 0.0
  %265 = vmatprep.subr.mxu0 0.0
  %266 = vmatpush1.msra.mxu0 0.0
  %267 = vmatprep.subr.mxu0 0.0
  %268 = vmatpush1.msra.mxu0 0.0
  %269 = vmatprep.subr.mxu0 0.0
  %270 = vmatpush1.msra.mxu0 0.0
  %271 = vmatprep.subr.mxu0 0.0
  %272 = vmatpush1.msra.mxu0 0.0
  %273 = vmatprep.subr.mxu0 0.0
  %274 = vmatpush1.msra.mxu0 0.0
  %275 = vmatprep.subr.mxu0 0.0
  %276 = vmatpush1.msra.mxu0 0.0
  %277 = vmatprep.subr.mxu0 0.0
  %278 = vmatpush1.msra.mxu0 0.0
  %279 = vmatprep.subr.mxu0 0.0
  %280 = vmatpush1.msra.mxu0 0.0
  %281 = vmatprep.subr.mxu0 0.0
  %282 = vmatpush1.msra.mxu0 0.0
  %283 = vmatprep.subr.mxu0 0.0
  %284 = vmatpush1.msra.mxu0 0.0
  %285 = vmatprep.subr.mxu0 0.0
  %286 = vmatpush1.msra.mxu0 0.0
  %287 = vmatprep.subr.mxu0 0.0
  %288 = vmatpush1.msra.mxu0 0.0
  %289 = vmatprep.mubr.f32.mxu0 0.0
  %290 = vmatmul.mubr.f32.gmra.mrb[0].mxu0 %v223
  %v291 = vpop.f32.mrb[0].mxu0
  %v292 = vadd.f32 0.0, %v291
  %v293 = vpop.f32.mrb[0].mxu0
  %294 = vdwg.mxu0
  %v295 = vmul.f32 %v292, 0.5
  %v296 = vsub.f32 %v218, %v295
  %297 = vrot.lane.b32.xlu0 %v147, 96
  %v298 = vpop.permute.xlu0 %297
  %v299 = vsel %vm65, %v298, 0
  %301 = vmatprep.subr.mxu0 0.0
  %302 = vmatpush1.msra.mxu0 %v139
  %303 = vmatprep.subr.mxu0 0.0
  %304 = vmatpush1.msra.mxu0 %v140
  %305 = vmatprep.subr.mxu0 0.0
  %306 = vmatpush1.msra.mxu0 %v141
  %307 = vmatprep.subr.mxu0 0.0
  %308 = vmatpush1.msra.mxu0 %v142
  %309 = vmatprep.subr.mxu0 0.0
  %310 = vmatpush1.msra.mxu0 0.0
  %311 = vmatprep.subr.mxu0 0.0
  %312 = vmatpush1.msra.mxu0 0.0
  %313 = vmatprep.subr.mxu0 0.0
  %314 = vmatpush1.msra.mxu0 0.0
  %315 = vmatprep.subr.mxu0 0.0
  %316 = vmatpush1.msra.mxu0 0.0
  %317 = vmatprep.subr.mxu0 0.0
  %318 = vmatpush1.msra.mxu0 0.0
  %319 = vmatprep.subr.mxu0 0.0
  %320 = vmatpush1.msra.mxu0 0.0
  %321 = vmatprep.subr.mxu0 0.0
  %322 = vmatpush1.msra.mxu0 0.0
  %323 = vmatprep.subr.mxu0 0.0
  %324 = vmatpush1.msra.mxu0 0.0
  %325 = vmatprep.subr.mxu0 0.0
  %326 = vmatpush1.msra.mxu0 0.0
  %327 = vmatprep.subr.mxu0 0.0
  %328 = vmatpush1.msra.mxu0 0.0
  %329 = vmatprep.subr.mxu0 0.0
  %330 = vmatpush1.msra.mxu0 0.0
  %331 = vmatprep.subr.mxu0 0.0
  %332 = vmatpush1.msra.mxu0 0.0
  %333 = vmatprep.subr.mxu0 0.0
  %334 = vmatpush1.msra.mxu0 0.0
  %335 = vmatprep.subr.mxu0 0.0
  %336 = vmatpush1.msra.mxu0 0.0
  %337 = vmatprep.subr.mxu0 0.0
  %338 = vmatpush1.msra.mxu0 0.0
  %339 = vmatprep.subr.mxu0 0.0
  %340 = vmatpush1.msra.mxu0 0.0
  %341 = vmatprep.subr.mxu0 0.0
  %342 = vmatpush1.msra.mxu0 0.0
  %343 = vmatprep.subr.mxu0 0.0
  %344 = vmatpush1.msra.mxu0 0.0
  %345 = vmatprep.subr.mxu0 0.0
  %346 = vmatpush1.msra.mxu0 0.0
  %347 = vmatprep.subr.mxu0 0.0
  %348 = vmatpush1.msra.mxu0 0.0
  %349 = vmatprep.subr.mxu0 0.0
  %350 = vmatpush1.msra.mxu0 0.0
  %351 = vmatprep.subr.mxu0 0.0
  %352 = vmatpush1.msra.mxu0 0.0
  %353 = vmatprep.subr.mxu0 0.0
  %354 = vmatpush1.msra.mxu0 0.0
  %355 = vmatprep.subr.mxu0 0.0
  %356 = vmatpush1.msra.mxu0 0.0
  %357 = vmatprep.subr.mxu0 0.0
  %358 = vmatpush1.msra.mxu0 0.0
  %359 = vmatprep.subr.mxu0 0.0
  %360 = vmatpush1.msra.mxu0 0.0
  %361 = vmatprep.subr.mxu0 0.0
  %362 = vmatpush1.msra.mxu0 0.0
  %363 = vmatprep.subr.mxu0 0.0
  %364 = vmatpush1.msra.mxu0 0.0
  %365 = vmatprep.mubr.f32.mxu0 0.0
  %366 = vmatmul.mubr.f32.gmra.mrb[0].mxu0 %v299
  %v367 = vpop.f32.mrb[0].mxu0
  %v368 = vadd.f32 0.0, %v367
  %v369 = vpop.f32.mrb[0].mxu0
  %370 = vdwg.mxu0
  %371 = vrot.lane.b32.xlu0 %v221, 96
  %v372 = vpop.permute.xlu0 %371
  %v373 = vsel %vm65, %v372, 0
  %375 = vmatprep.subr.mxu0 0.0
  %376 = vmatpush1.msra.mxu0 %v143
  %377 = vmatprep.subr.mxu0 0.0
  %378 = vmatpush1.msra.mxu0 %v144
  %379 = vmatprep.subr.mxu0 0.0
  %380 = vmatpush1.msra.mxu0 %v145
  %381 = vmatprep.subr.mxu0 0.0
  %382 = vmatpush1.msra.mxu0 %v146
  %383 = vmatprep.subr.mxu0 0.0
  %384 = vmatpush1.msra.mxu0 0.0
  %385 = vmatprep.subr.mxu0 0.0
  %386 = vmatpush1.msra.mxu0 0.0
  %387 = vmatprep.subr.mxu0 0.0
  %388 = vmatpush1.msra.mxu0 0.0
  %389 = vmatprep.subr.mxu0 0.0
  %390 = vmatpush1.msra.mxu0 0.0
  %391 = vmatprep.subr.mxu0 0.0
  %392 = vmatpush1.msra.mxu0 0.0
  %393 = vmatprep.subr.mxu0 0.0
  %394 = vmatpush1.msra.mxu0 0.0
  %395 = vmatprep.subr.mxu0 0.0
  %396 = vmatpush1.msra.mxu0 0.0
  %397 = vmatprep.subr.mxu0 0.0
  %398 = vmatpush1.msra.mxu0 0.0
  %399 = vmatprep.subr.mxu0 0.0
  %400 = vmatpush1.msra.mxu0 0.0
  %401 = vmatprep.subr.mxu0 0.0
  %402 = vmatpush1.msra.mxu0 0.0
  %403 = vmatprep.subr.mxu0 0.0
  %404 = vmatpush1.msra.mxu0 0.0
  %405 = vmatprep.subr.mxu0 0.0
  %406 = vmatpush1.msra.mxu0 0.0
  %407 = vmatprep.subr.mxu0 0.0
  %408 = vmatpush1.msra.mxu0 0.0
  %409 = vmatprep.subr.mxu0 0.0
  %410 = vmatpush1.msra.mxu0 0.0
  %411 = vmatprep.subr.mxu0 0.0
  %412 = vmatpush1.msra.mxu0 0.0
  %413 = vmatprep.subr.mxu0 0.0
  %414 = vmatpush1.msra.mxu0 0.0
  %415 = vmatprep.subr.mxu0 0.0
  %416 = vmatpush1.msra.mxu0 0.0
  %417 = vmatprep.subr.mxu0 0.0
  %418 = vmatpush1.msra.mxu0 0.0
  %419 = vmatprep.subr.mxu0 0.0
  %420 = vmatpush1.msra.mxu0 0.0
  %421 = vmatprep.subr.mxu0 0.0
  %422 = vmatpush1.msra.mxu0 0.0
  %423 = vmatprep.subr.mxu0 0.0
  %424 = vmatpush1.msra.mxu0 0.0
  %425 = vmatprep.subr.mxu0 0.0
  %426 = vmatpush1.msra.mxu0 0.0
  %427 = vmatprep.subr.mxu0 0.0
  %428 = vmatpush1.msra.mxu0 0.0
  %429 = vmatprep.subr.mxu0 0.0
  %430 = vmatpush1.msra.mxu0 0.0
  %431 = vmatprep.subr.mxu0 0.0
  %432 = vmatpush1.msra.mxu0 0.0
  %433 = vmatprep.subr.mxu0 0.0
  %434 = vmatpush1.msra.mxu0 0.0
  %435 = vmatprep.subr.mxu0 0.0
  %436 = vmatpush1.msra.mxu0 0.0
  %437 = vmatprep.subr.mxu0 0.0
  %438 = vmatpush1.msra.mxu0 0.0
  %439 = vmatprep.mubr.f32.mxu0 0.0
  %440 = vmatmul.mubr.f32.gmra.mrb[0].mxu0 %v373
  %v441 = vpop.f32.mrb[0].mxu0
  %v442 = vadd.f32 0.0, %v441
  %v443 = vpop.f32.mrb[0].mxu0
  %444 = vdwg.mxu0
  %v445 = vmul.f32 %v442, 0.5
  %v446 = vsub.f32 %v368, %v445
  %vm447 = vcmask 523264
  %v448 = vsel %vm447, %v296, -inf
  %449 = vmax.xlane.f32.xlu0 %v448
  %v450 = vpop.xlane.xlu0 %449
  %v451 = vsel %vm447, %v446, -inf
  %452 = vmax.xlane.f32.xlu0 %v451
  %v453 = vpop.xlane.xlu0 %452
  %v454 = vrot.slane %v453, 4
  %v455 = vmax.f32 %v453, %v454
  %v456 = vrot.slane %v455, 2
  %v457 = vmax.f32 %v455, %v456
  %v458 = vrot.slane %v457, 1
  %v459 = vmax.f32 %v457, %v458
  %v460 = vsub.f32 %v296, %v450
  %v461 = vmul.f32 %v460, 1.442695
  %v462 = vpow.pop %v461
  %v463 = vmul.f32 %v462, 0.25
  %v464 = vsub.f32 %v446, %v459
  %v465 = vmul.f32 %v464, 1.442695
  %v466 = vpow.pop %v465
  %v467 = vmul.f32 %v466, 0.25
  %v468 = vld [vmem:[%s7] sm:$0xff]
  %v469 = vld [vmem:[%s3] sm:$0xff]
  %v470 = vld [vmem:[%s3 + $0x8] sm:$0xff]
  %v471 = vld [vmem:[%s3 + $0x10] sm:$0xff]
  %v472 = vld [vmem:[%s3 + $0x18] sm:$0xff]
  %vm473 = vcmask 130048
  %v475 = vsel %vm473, %v463, 0
  %v478 = vsel %vm473, %v467, 0
  %480 = vmatprep.subr.mxu0 0.0
  %481 = vmatpush1.xpose.msra.mxu0 %v478
  %482 = vmatprep.subr.mxu0 0.0
  %483 = vmatpush1.xpose.msra.mxu0 0.0
  %484 = vmatprep.subr.mxu0 0.0
  %485 = vmatpush1.xpose.msra.mxu0 0.0
  %486 = vmatprep.subr.mxu0 0.0
  %487 = vmatpush1.xpose.msra.mxu0 0.0
  %488 = vmatprep.subr.mxu0 0.0
  %489 = vmatpush1.xpose.msra.mxu0 0.0
  %490 = vmatprep.subr.mxu0 0.0
  %491 = vmatpush1.xpose.msra.mxu0 0.0
  %492 = vmatprep.subr.mxu0 0.0
  %493 = vmatpush1.xpose.msra.mxu0 0.0
  %494 = vmatprep.subr.mxu0 0.0
  %495 = vmatpush1.xpose.msra.mxu0 0.0
  %496 = vmatprep.subr.mxu0 0.0
  %497 = vmatpush1.xpose.msra.mxu0 0.0
  %498 = vmatprep.subr.mxu0 0.0
  %499 = vmatpush1.xpose.msra.mxu0 0.0
  %500 = vmatprep.subr.mxu0 0.0
  %501 = vmatpush1.xpose.msra.mxu0 0.0
  %502 = vmatprep.subr.mxu0 0.0
  %503 = vmatpush1.xpose.msra.mxu0 0.0
  %504 = vmatprep.subr.mxu0 0.0
  %505 = vmatpush1.xpose.msra.mxu0 0.0
  %506 = vmatprep.subr.mxu0 0.0
  %507 = vmatpush1.xpose.msra.mxu0 0.0
  %508 = vmatprep.subr.mxu0 0.0
  %509 = vmatpush1.xpose.msra.mxu0 0.0
  %510 = vmatprep.subr.mxu0 0.0
  %511 = vmatpush1.xpose.msra.mxu0 0.0
  %512 = vmatprep.subr.mxu0 0.0
  %513 = vmatpush1.xpose.msra.mxu0 0.0
  %514 = vmatprep.subr.mxu0 0.0
  %515 = vmatpush1.xpose.msra.mxu0 0.0
  %516 = vmatprep.subr.mxu0 0.0
  %517 = vmatpush1.xpose.msra.mxu0 0.0
  %518 = vmatprep.subr.mxu0 0.0
  %519 = vmatpush1.xpose.msra.mxu0 0.0
  %520 = vmatprep.subr.mxu0 0.0
  %521 = vmatpush1.xpose.msra.mxu0 0.0
  %522 = vmatprep.subr.mxu0 0.0
  %523 = vmatpush1.xpose.msra.mxu0 0.0
  %524 = vmatprep.subr.mxu0 0.0
  %525 = vmatpush1.xpose.msra.mxu0 0.0
  %526 = vmatprep.subr.mxu0 0.0
  %527 = vmatpush1.xpose.msra.mxu0 0.0
  %528 = vmatprep.subr.mxu0 0.0
  %529 = vmatpush1.xpose.msra.mxu0 0.0
  %530 = vmatprep.subr.mxu0 0.0
  %531 = vmatpush1.xpose.msra.mxu0 0.0
  %532 = vmatprep.subr.mxu0 0.0
  %533 = vmatpush1.xpose.msra.mxu0 0.0
  %534 = vmatprep.subr.mxu0 0.0
  %535 = vmatpush1.xpose.msra.mxu0 0.0
  %536 = vmatprep.subr.mxu0 0.0
  %537 = vmatpush1.xpose.msra.mxu0 0.0
  %538 = vmatprep.subr.mxu0 0.0
  %539 = vmatpush1.xpose.msra.mxu0 0.0
  %540 = vmatprep.subr.mxu0 0.0
  %541 = vmatpush1.xpose.msra.mxu0 0.0
  %542 = vmatprep.subr.mxu0 0.0
  %543 = vmatpush1.xpose.msra.mxu0 0.0
  %544 = vmatprep.mubr.f32.mxu0 0.0
  %545 = vmatmul.mubr.f32.gmra.mrb[0].mxu0 %v475
  %v546 = vpop.f32.mrb[0].mxu0
  %v547 = vadd.f32 0.0, %v546
  %v548 = vpop.f32.mrb[0].mxu0
  %549 = vdwg.mxu0
  %v550 = vmul.f32 %v547, %v468
  %552 = vrot.lane.b32.xlu0 %v136, 64
  %v553 = vpop.permute.xlu0 %552
  %vm555 = vcmask 64512
  %v557 = vsel %vm555, %v550, 0
  %559 = vmatprep.subr.mxu0 0.0
  %560 = vmatpush1.msra.mxu0 %v553
  %561 = vmatprep.subr.mxu0 0.0
  %562 = vmatpush1.msra.mxu0 0.0
  %563 = vmatprep.subr.mxu0 0.0
  %564 = vmatpush1.msra.mxu0 0.0
  %565 = vmatprep.subr.mxu0 0.0
  %566 = vmatpush1.msra.mxu0 0.0
  %567 = vmatprep.subr.mxu0 0.0
  %568 = vmatpush1.msra.mxu0 0.0
  %569 = vmatprep.subr.mxu0 0.0
  %570 = vmatpush1.msra.mxu0 0.0
  %571 = vmatprep.subr.mxu0 0.0
  %572 = vmatpush1.msra.mxu0 0.0
  %573 = vmatprep.subr.mxu0 0.0
  %574 = vmatpush1.msra.mxu0 0.0
  %575 = vmatprep.subr.mxu0 0.0
  %576 = vmatpush1.msra.mxu0 0.0
  %577 = vmatprep.subr.mxu0 0.0
  %578 = vmatpush1.msra.mxu0 0.0
  %579 = vmatprep.subr.mxu0 0.0
  %580 = vmatpush1.msra.mxu0 0.0
  %581 = vmatprep.subr.mxu0 0.0
  %582 = vmatpush1.msra.mxu0 0.0
  %583 = vmatprep.subr.mxu0 0.0
  %584 = vmatpush1.msra.mxu0 0.0
  %585 = vmatprep.subr.mxu0 0.0
  %586 = vmatpush1.msra.mxu0 0.0
  %587 = vmatprep.subr.mxu0 0.0
  %588 = vmatpush1.msra.mxu0 0.0
  %589 = vmatprep.subr.mxu0 0.0
  %590 = vmatpush1.msra.mxu0 0.0
  %591 = vmatprep.subr.mxu0 0.0
  %592 = vmatpush1.msra.mxu0 0.0
  %593 = vmatprep.subr.mxu0 0.0
  %594 = vmatpush1.msra.mxu0 0.0
  %595 = vmatprep.subr.mxu0 0.0
  %596 = vmatpush1.msra.mxu0 0.0
  %597 = vmatprep.subr.mxu0 0.0
  %598 = vmatpush1.msra.mxu0 0.0
  %599 = vmatprep.subr.mxu0 0.0
  %600 = vmatpush1.msra.mxu0 0.0
  %601 = vmatprep.subr.mxu0 0.0
  %602 = vmatpush1.msra.mxu0 0.0
  %603 = vmatprep.subr.mxu0 0.0
  %604 = vmatpush1.msra.mxu0 0.0
  %605 = vmatprep.subr.mxu0 0.0
  %606 = vmatpush1.msra.mxu0 0.0
  %607 = vmatprep.subr.mxu0 0.0
  %608 = vmatpush1.msra.mxu0 0.0
  %609 = vmatprep.subr.mxu0 0.0
  %610 = vmatpush1.msra.mxu0 0.0
  %611 = vmatprep.subr.mxu0 0.0
  %612 = vmatpush1.msra.mxu0 0.0
  %613 = vmatprep.subr.mxu0 0.0
  %614 = vmatpush1.msra.mxu0 0.0
  %615 = vmatprep.subr.mxu0 0.0
  %616 = vmatpush1.msra.mxu0 0.0
  %617 = vmatprep.subr.mxu0 0.0
  %618 = vmatpush1.msra.mxu0 0.0
  %619 = vmatprep.subr.mxu0 0.0
  %620 = vmatpush1.msra.mxu0 0.0
  %621 = vmatprep.subr.mxu0 0.0
  %622 = vmatpush1.msra.mxu0 0.0
  %623 = vmatprep.mubr.f32.mxu0 0.0
  %624 = vmatmul.mubr.f32.gmra.mrb[0].mxu0 %v557
  %v625 = vpop.f32.mrb[0].mxu0
  %v626 = vadd.f32 0.0, %v625
  %v627 = vpop.f32.mrb[0].mxu0
  %628 = vdwg.mxu0
  %v629 = vsel %vm555, %v550, 0.0
  %630 = vadd.xlane.f32.xlu0 %v629
  %v631 = vpop.xlane.xlu0 %630
  %v632 = vadd.f32 %v631, 1e-06
  %v633 = vrcp.pop %v632
  %v634 = vmul.f32 %v626, %v633
  %635 = vrot.lane.b32.xlu0 %v463, 112
  %v636 = vpop.permute.xlu0 %635
  %637 = vrot.lane.b32.xlu0 %v467, 112
  %v638 = vpop.permute.xlu0 %637
  %v639 = vsel %vm473, %v636, 0
  %v641 = vsel %vm473, %v638, 0
  %643 = vmatprep.subr.mxu0 0.0
  %644 = vmatpush1.xpose.msra.mxu0 %v641
  %645 = vmatprep.subr.mxu0 0.0
  %646 = vmatpush1.xpose.msra.mxu0 0.0
  %647 = vmatprep.subr.mxu0 0.0
  %648 = vmatpush1.xpose.msra.mxu0 0.0
  %649 = vmatprep.subr.mxu0 0.0
  %650 = vmatpush1.xpose.msra.mxu0 0.0
  %651 = vmatprep.subr.mxu0 0.0
  %652 = vmatpush1.xpose.msra.mxu0 0.0
  %653 = vmatprep.subr.mxu0 0.0
  %654 = vmatpush1.xpose.msra.mxu0 0.0
  %655 = vmatprep.subr.mxu0 0.0
  %656 = vmatpush1.xpose.msra.mxu0 0.0
  %657 = vmatprep.subr.mxu0 0.0
  %658 = vmatpush1.xpose.msra.mxu0 0.0
  %659 = vmatprep.subr.mxu0 0.0
  %660 = vmatpush1.xpose.msra.mxu0 0.0
  %661 = vmatprep.subr.mxu0 0.0
  %662 = vmatpush1.xpose.msra.mxu0 0.0
  %663 = vmatprep.subr.mxu0 0.0
  %664 = vmatpush1.xpose.msra.mxu0 0.0
  %665 = vmatprep.subr.mxu0 0.0
  %666 = vmatpush1.xpose.msra.mxu0 0.0
  %667 = vmatprep.subr.mxu0 0.0
  %668 = vmatpush1.xpose.msra.mxu0 0.0
  %669 = vmatprep.subr.mxu0 0.0
  %670 = vmatpush1.xpose.msra.mxu0 0.0
  %671 = vmatprep.subr.mxu0 0.0
  %672 = vmatpush1.xpose.msra.mxu0 0.0
  %673 = vmatprep.subr.mxu0 0.0
  %674 = vmatpush1.xpose.msra.mxu0 0.0
  %675 = vmatprep.subr.mxu0 0.0
  %676 = vmatpush1.xpose.msra.mxu0 0.0
  %677 = vmatprep.subr.mxu0 0.0
  %678 = vmatpush1.xpose.msra.mxu0 0.0
  %679 = vmatprep.subr.mxu0 0.0
  %680 = vmatpush1.xpose.msra.mxu0 0.0
  %681 = vmatprep.subr.mxu0 0.0
  %682 = vmatpush1.xpose.msra.mxu0 0.0
  %683 = vmatprep.subr.mxu0 0.0
  %684 = vmatpush1.xpose.msra.mxu0 0.0
  %685 = vmatprep.subr.mxu0 0.0
  %686 = vmatpush1.xpose.msra.mxu0 0.0
  %687 = vmatprep.subr.mxu0 0.0
  %688 = vmatpush1.xpose.msra.mxu0 0.0
  %689 = vmatprep.subr.mxu0 0.0
  %690 = vmatpush1.xpose.msra.mxu0 0.0
  %691 = vmatprep.subr.mxu0 0.0
  %692 = vmatpush1.xpose.msra.mxu0 0.0
  %693 = vmatprep.subr.mxu0 0.0
  %694 = vmatpush1.xpose.msra.mxu0 0.0
  %695 = vmatprep.subr.mxu0 0.0
  %696 = vmatpush1.xpose.msra.mxu0 0.0
  %697 = vmatprep.subr.mxu0 0.0
  %698 = vmatpush1.xpose.msra.mxu0 0.0
  %699 = vmatprep.subr.mxu0 0.0
  %700 = vmatpush1.xpose.msra.mxu0 0.0
  %701 = vmatprep.subr.mxu0 0.0
  %702 = vmatpush1.xpose.msra.mxu0 0.0
  %703 = vmatprep.subr.mxu0 0.0
  %704 = vmatpush1.xpose.msra.mxu0 0.0
  %705 = vmatprep.subr.mxu0 0.0
  %706 = vmatpush1.xpose.msra.mxu0 0.0
  %707 = vmatprep.mubr.f32.mxu0 0.0
  %708 = vmatmul.mubr.f32.gmra.mrb[0].mxu0 %v639
  %v709 = vpop.f32.mrb[0].mxu0
  %v710 = vadd.f32 0.0, %v709
  %v711 = vpop.f32.mrb[0].mxu0
  %712 = vdwg.mxu0
  %v713 = vmul.f32 %v710, %v468
  %714 = vrot.lane.b32.xlu0 %v136, 56
  %v715 = vpop.permute.xlu0 %714
  %v718 = vsel %vm555, %v713, 0
  %720 = vmatprep.subr.mxu0 0.0
  %721 = vmatpush1.msra.mxu0 %v715
  %722 = vmatprep.subr.mxu0 0.0
  %723 = vmatpush1.msra.mxu0 0.0
  %724 = vmatprep.subr.mxu0 0.0
  %725 = vmatpush1.msra.mxu0 0.0
  %726 = vmatprep.subr.mxu0 0.0
  %727 = vmatpush1.msra.mxu0 0.0
  %728 = vmatprep.subr.mxu0 0.0
  %729 = vmatpush1.msra.mxu0 0.0
  %730 = vmatprep.subr.mxu0 0.0
  %731 = vmatpush1.msra.mxu0 0.0
  %732 = vmatprep.subr.mxu0 0.0
  %733 = vmatpush1.msra.mxu0 0.0
  %734 = vmatprep.subr.mxu0 0.0
  %735 = vmatpush1.msra.mxu0 0.0
  %736 = vmatprep.subr.mxu0 0.0
  %737 = vmatpush1.msra.mxu0 0.0
  %738 = vmatprep.subr.mxu0 0.0
  %739 = vmatpush1.msra.mxu0 0.0
  %740 = vmatprep.subr.mxu0 0.0
  %741 = vmatpush1.msra.mxu0 0.0
  %742 = vmatprep.subr.mxu0 0.0
  %743 = vmatpush1.msra.mxu0 0.0
  %744 = vmatprep.subr.mxu0 0.0
  %745 = vmatpush1.msra.mxu0 0.0
  %746 = vmatprep.subr.mxu0 0.0
  %747 = vmatpush1.msra.mxu0 0.0
  %748 = vmatprep.subr.mxu0 0.0
  %749 = vmatpush1.msra.mxu0 0.0
  %750 = vmatprep.subr.mxu0 0.0
  %751 = vmatpush1.msra.mxu0 0.0
  %752 = vmatprep.subr.mxu0 0.0
  %753 = vmatpush1.msra.mxu0 0.0
  %754 = vmatprep.subr.mxu0 0.0
  %755 = vmatpush1.msra.mxu0 0.0
  %756 = vmatprep.subr.mxu0 0.0
  %757 = vmatpush1.msra.mxu0 0.0
  %758 = vmatprep.subr.mxu0 0.0
  %759 = vmatpush1.msra.mxu0 0.0
  %760 = vmatprep.subr.mxu0 0.0
  %761 = vmatpush1.msra.mxu0 0.0
  %762 = vmatprep.subr.mxu0 0.0
  %763 = vmatpush1.msra.mxu0 0.0
  %764 = vmatprep.subr.mxu0 0.0
  %765 = vmatpush1.msra.mxu0 0.0
  %766 = vmatprep.subr.mxu0 0.0
  %767 = vmatpush1.msra.mxu0 0.0
  %768 = vmatprep.subr.mxu0 0.0
  %769 = vmatpush1.msra.mxu0 0.0
  %770 = vmatprep.subr.mxu0 0.0
  %771 = vmatpush1.msra.mxu0 0.0
  %772 = vmatprep.subr.mxu0 0.0
  %773 = vmatpush1.msra.mxu0 0.0
  %774 = vmatprep.subr.mxu0 0.0
  %775 = vmatpush1.msra.mxu0 0.0
  %776 = vmatprep.subr.mxu0 0.0
  %777 = vmatpush1.msra.mxu0 0.0
  %778 = vmatprep.subr.mxu0 0.0
  %779 = vmatpush1.msra.mxu0 0.0
  %780 = vmatprep.subr.mxu0 0.0
  %781 = vmatpush1.msra.mxu0 0.0
  %782 = vmatprep.subr.mxu0 0.0
  %783 = vmatpush1.msra.mxu0 0.0
  %784 = vmatprep.mubr.f32.mxu0 0.0
  %785 = vmatmul.mubr.f32.gmra.mrb[0].mxu0 %v718
  %v786 = vpop.f32.mrb[0].mxu0
  %v787 = vadd.f32 0.0, %v786
  %v788 = vpop.f32.mrb[0].mxu0
  %789 = vdwg.mxu0
  %v790 = vsel %vm555, %v713, 0.0
  %791 = vadd.xlane.f32.xlu0 %v790
  %v792 = vpop.xlane.xlu0 %791
  %v793 = vadd.f32 %v792, 1e-06
  %v794 = vrcp.pop %v793
  %v795 = vmul.f32 %v787, %v794
  %v797 = vsel %vm555, %v795, 0
  %799 = vmatprep.subr.mxu0 0.0
  %800 = vmatpush1.msra.mxu0 %v470
  %801 = vmatprep.subr.mxu0 0.0
  %802 = vmatpush1.msra.mxu0 0.0
  %803 = vmatprep.subr.mxu0 0.0
  %804 = vmatpush1.msra.mxu0 0.0
  %805 = vmatprep.subr.mxu0 0.0
  %806 = vmatpush1.msra.mxu0 0.0
  %807 = vmatprep.subr.mxu0 0.0
  %808 = vmatpush1.msra.mxu0 0.0
  %809 = vmatprep.subr.mxu0 0.0
  %810 = vmatpush1.msra.mxu0 0.0
  %811 = vmatprep.subr.mxu0 0.0
  %812 = vmatpush1.msra.mxu0 0.0
  %813 = vmatprep.subr.mxu0 0.0
  %814 = vmatpush1.msra.mxu0 0.0
  %815 = vmatprep.subr.mxu0 0.0
  %816 = vmatpush1.msra.mxu0 0.0
  %817 = vmatprep.subr.mxu0 0.0
  %818 = vmatpush1.msra.mxu0 0.0
  %819 = vmatprep.subr.mxu0 0.0
  %820 = vmatpush1.msra.mxu0 0.0
  %821 = vmatprep.subr.mxu0 0.0
  %822 = vmatpush1.msra.mxu0 0.0
  %823 = vmatprep.subr.mxu0 0.0
  %824 = vmatpush1.msra.mxu0 0.0
  %825 = vmatprep.subr.mxu0 0.0
  %826 = vmatpush1.msra.mxu0 0.0
  %827 = vmatprep.subr.mxu0 0.0
  %828 = vmatpush1.msra.mxu0 0.0
  %829 = vmatprep.subr.mxu0 0.0
  %830 = vmatpush1.msra.mxu0 0.0
  %831 = vmatprep.subr.mxu0 0.0
  %832 = vmatpush1.msra.mxu0 0.0
  %833 = vmatprep.subr.mxu0 0.0
  %834 = vmatpush1.msra.mxu0 0.0
  %835 = vmatprep.subr.mxu0 0.0
  %836 = vmatpush1.msra.mxu0 0.0
  %837 = vmatprep.subr.mxu0 0.0
  %838 = vmatpush1.msra.mxu0 0.0
  %839 = vmatprep.subr.mxu0 0.0
  %840 = vmatpush1.msra.mxu0 0.0
  %841 = vmatprep.subr.mxu0 0.0
  %842 = vmatpush1.msra.mxu0 0.0
  %843 = vmatprep.subr.mxu0 0.0
  %844 = vmatpush1.msra.mxu0 0.0
  %845 = vmatprep.subr.mxu0 0.0
  %846 = vmatpush1.msra.mxu0 0.0
  %847 = vmatprep.subr.mxu0 0.0
  %848 = vmatpush1.msra.mxu0 0.0
  %849 = vmatprep.subr.mxu0 0.0
  %850 = vmatpush1.msra.mxu0 0.0
  %851 = vmatprep.subr.mxu0 0.0
  %852 = vmatpush1.msra.mxu0 0.0
  %853 = vmatprep.subr.mxu0 0.0
  %854 = vmatpush1.msra.mxu0 0.0
  %855 = vmatprep.subr.mxu0 0.0
  %856 = vmatpush1.msra.mxu0 0.0
  %857 = vmatprep.subr.mxu0 0.0
  %858 = vmatpush1.msra.mxu0 0.0
  %859 = vmatprep.subr.mxu0 0.0
  %860 = vmatpush1.msra.mxu0 0.0
  %861 = vmatprep.subr.mxu0 0.0
  %862 = vmatpush1.msra.mxu0 0.0
  %863 = vmatprep.mubr.f32.mxu0 0.0
  %864 = vmatmul.mubr.f32.gmra.mrb[0].mxu0 %v797
  %v865 = vpop.f32.mrb[0].mxu0
  %v866 = vadd.f32 0.0, %v865
  %v867 = vpop.f32.mrb[0].mxu0
  %868 = vdwg.mxu0
  %v870 = vsel %vm555, %v634, 0
  %872 = vmatprep.subr.mxu0 0.0
  %873 = vmatpush1.msra.mxu0 %v469
  %874 = vmatprep.subr.mxu0 0.0
  %875 = vmatpush1.msra.mxu0 0.0
  %876 = vmatprep.subr.mxu0 0.0
  %877 = vmatpush1.msra.mxu0 0.0
  %878 = vmatprep.subr.mxu0 0.0
  %879 = vmatpush1.msra.mxu0 0.0
  %880 = vmatprep.subr.mxu0 0.0
  %881 = vmatpush1.msra.mxu0 0.0
  %882 = vmatprep.subr.mxu0 0.0
  %883 = vmatpush1.msra.mxu0 0.0
  %884 = vmatprep.subr.mxu0 0.0
  %885 = vmatpush1.msra.mxu0 0.0
  %886 = vmatprep.subr.mxu0 0.0
  %887 = vmatpush1.msra.mxu0 0.0
  %888 = vmatprep.subr.mxu0 0.0
  %889 = vmatpush1.msra.mxu0 0.0
  %890 = vmatprep.subr.mxu0 0.0
  %891 = vmatpush1.msra.mxu0 0.0
  %892 = vmatprep.subr.mxu0 0.0
  %893 = vmatpush1.msra.mxu0 0.0
  %894 = vmatprep.subr.mxu0 0.0
  %895 = vmatpush1.msra.mxu0 0.0
  %896 = vmatprep.subr.mxu0 0.0
  %897 = vmatpush1.msra.mxu0 0.0
  %898 = vmatprep.subr.mxu0 0.0
  %899 = vmatpush1.msra.mxu0 0.0
  %900 = vmatprep.subr.mxu0 0.0
  %901 = vmatpush1.msra.mxu0 0.0
  %902 = vmatprep.subr.mxu0 0.0
  %903 = vmatpush1.msra.mxu0 0.0
  %904 = vmatprep.subr.mxu0 0.0
  %905 = vmatpush1.msra.mxu0 0.0
  %906 = vmatprep.subr.mxu0 0.0
  %907 = vmatpush1.msra.mxu0 0.0
  %908 = vmatprep.subr.mxu0 0.0
  %909 = vmatpush1.msra.mxu0 0.0
  %910 = vmatprep.subr.mxu0 0.0
  %911 = vmatpush1.msra.mxu0 0.0
  %912 = vmatprep.subr.mxu0 0.0
  %913 = vmatpush1.msra.mxu0 0.0
  %914 = vmatprep.subr.mxu0 0.0
  %915 = vmatpush1.msra.mxu0 0.0
  %916 = vmatprep.subr.mxu0 0.0
  %917 = vmatpush1.msra.mxu0 0.0
  %918 = vmatprep.subr.mxu0 0.0
  %919 = vmatpush1.msra.mxu0 0.0
  %920 = vmatprep.subr.mxu0 0.0
  %921 = vmatpush1.msra.mxu0 0.0
  %922 = vmatprep.subr.mxu0 0.0
  %923 = vmatpush1.msra.mxu0 0.0
  %924 = vmatprep.subr.mxu0 0.0
  %925 = vmatpush1.msra.mxu0 0.0
  %926 = vmatprep.subr.mxu0 0.0
  %927 = vmatpush1.msra.mxu0 0.0
  %928 = vmatprep.subr.mxu0 0.0
  %929 = vmatpush1.msra.mxu0 0.0
  %930 = vmatprep.subr.mxu0 0.0
  %931 = vmatpush1.msra.mxu0 0.0
  %932 = vmatprep.subr.mxu0 0.0
  %933 = vmatpush1.msra.mxu0 0.0
  %934 = vmatprep.subr.mxu0 0.0
  %935 = vmatpush1.msra.mxu0 0.0
  %936 = vmatprep.mubr.f32.mxu0 0.0
  %937 = vmatmul.mubr.f32.gmra.mrb[0].mxu0 %v870
  %v938 = vpop.f32.mrb[0].mxu0
  %v939 = vadd.f32 %v866, %v938
  %v940 = vpop.f32.mrb[0].mxu0
  %941 = vdwg.mxu0
  %942 = vrot.lane.b32.xlu0 %v463, 96
  %v943 = vpop.permute.xlu0 %942
  %944 = vrot.lane.b32.xlu0 %v467, 96
  %v945 = vpop.permute.xlu0 %944
  %v946 = vsel %vm473, %v943, 0
  %v948 = vsel %vm473, %v945, 0
  %950 = vmatprep.subr.mxu0 0.0
  %951 = vmatpush1.xpose.msra.mxu0 %v948
  %952 = vmatprep.subr.mxu0 0.0
  %953 = vmatpush1.xpose.msra.mxu0 0.0
  %954 = vmatprep.subr.mxu0 0.0
  %955 = vmatpush1.xpose.msra.mxu0 0.0
  %956 = vmatprep.subr.mxu0 0.0
  %957 = vmatpush1.xpose.msra.mxu0 0.0
  %958 = vmatprep.subr.mxu0 0.0
  %959 = vmatpush1.xpose.msra.mxu0 0.0
  %960 = vmatprep.subr.mxu0 0.0
  %961 = vmatpush1.xpose.msra.mxu0 0.0
  %962 = vmatprep.subr.mxu0 0.0
  %963 = vmatpush1.xpose.msra.mxu0 0.0
  %964 = vmatprep.subr.mxu0 0.0
  %965 = vmatpush1.xpose.msra.mxu0 0.0
  %966 = vmatprep.subr.mxu0 0.0
  %967 = vmatpush1.xpose.msra.mxu0 0.0
  %968 = vmatprep.subr.mxu0 0.0
  %969 = vmatpush1.xpose.msra.mxu0 0.0
  %970 = vmatprep.subr.mxu0 0.0
  %971 = vmatpush1.xpose.msra.mxu0 0.0
  %972 = vmatprep.subr.mxu0 0.0
  %973 = vmatpush1.xpose.msra.mxu0 0.0
  %974 = vmatprep.subr.mxu0 0.0
  %975 = vmatpush1.xpose.msra.mxu0 0.0
  %976 = vmatprep.subr.mxu0 0.0
  %977 = vmatpush1.xpose.msra.mxu0 0.0
  %978 = vmatprep.subr.mxu0 0.0
  %979 = vmatpush1.xpose.msra.mxu0 0.0
  %980 = vmatprep.subr.mxu0 0.0
  %981 = vmatpush1.xpose.msra.mxu0 0.0
  %982 = vmatprep.subr.mxu0 0.0
  %983 = vmatpush1.xpose.msra.mxu0 0.0
  %984 = vmatprep.subr.mxu0 0.0
  %985 = vmatpush1.xpose.msra.mxu0 0.0
  %986 = vmatprep.subr.mxu0 0.0
  %987 = vmatpush1.xpose.msra.mxu0 0.0
  %988 = vmatprep.subr.mxu0 0.0
  %989 = vmatpush1.xpose.msra.mxu0 0.0
  %990 = vmatprep.subr.mxu0 0.0
  %991 = vmatpush1.xpose.msra.mxu0 0.0
  %992 = vmatprep.subr.mxu0 0.0
  %993 = vmatpush1.xpose.msra.mxu0 0.0
  %994 = vmatprep.subr.mxu0 0.0
  %995 = vmatpush1.xpose.msra.mxu0 0.0
  %996 = vmatprep.subr.mxu0 0.0
  %997 = vmatpush1.xpose.msra.mxu0 0.0
  %998 = vmatprep.subr.mxu0 0.0
  %999 = vmatpush1.xpose.msra.mxu0 0.0
  %1000 = vmatprep.subr.mxu0 0.0
  %1001 = vmatpush1.xpose.msra.mxu0 0.0
  %1002 = vmatprep.subr.mxu0 0.0
  %1003 = vmatpush1.xpose.msra.mxu0 0.0
  %1004 = vmatprep.subr.mxu0 0.0
  %1005 = vmatpush1.xpose.msra.mxu0 0.0
  %1006 = vmatprep.subr.mxu0 0.0
  %1007 = vmatpush1.xpose.msra.mxu0 0.0
  %1008 = vmatprep.subr.mxu0 0.0
  %1009 = vmatpush1.xpose.msra.mxu0 0.0
  %1010 = vmatprep.subr.mxu0 0.0
  %1011 = vmatpush1.xpose.msra.mxu0 0.0
  %1012 = vmatprep.subr.mxu0 0.0
  %1013 = vmatpush1.xpose.msra.mxu0 0.0
  %1014 = vmatprep.mubr.f32.mxu0 0.0
  %1015 = vmatmul.mubr.f32.gmra.mrb[0].mxu0 %v946
  %v1016 = vpop.f32.mrb[0].mxu0
  %v1017 = vadd.f32 0.0, %v1016
  %v1018 = vpop.f32.mrb[0].mxu0
  %1019 = vdwg.mxu0
  %v1020 = vmul.f32 %v1017, %v468
  %1021 = vrot.lane.b32.xlu0 %v136, 48
  %v1022 = vpop.permute.xlu0 %1021
  %v1025 = vsel %vm555, %v1020, 0
  %1027 = vmatprep.subr.mxu0 0.0
  %1028 = vmatpush1.msra.mxu0 %v1022
  %1029 = vmatprep.subr.mxu0 0.0
  %1030 = vmatpush1.msra.mxu0 0.0
  %1031 = vmatprep.subr.mxu0 0.0
  %1032 = vmatpush1.msra.mxu0 0.0
  %1033 = vmatprep.subr.mxu0 0.0
  %1034 = vmatpush1.msra.mxu0 0.0
  %1035 = vmatprep.subr.mxu0 0.0
  %1036 = vmatpush1.msra.mxu0 0.0
  %1037 = vmatprep.subr.mxu0 0.0
  %1038 = vmatpush1.msra.mxu0 0.0
  %1039 = vmatprep.subr.mxu0 0.0
  %1040 = vmatpush1.msra.mxu0 0.0
  %1041 = vmatprep.subr.mxu0 0.0
  %1042 = vmatpush1.msra.mxu0 0.0
  %1043 = vmatprep.subr.mxu0 0.0
  %1044 = vmatpush1.msra.mxu0 0.0
  %1045 = vmatprep.subr.mxu0 0.0
  %1046 = vmatpush1.msra.mxu0 0.0
  %1047 = vmatprep.subr.mxu0 0.0
  %1048 = vmatpush1.msra.mxu0 0.0
  %1049 = vmatprep.subr.mxu0 0.0
  %1050 = vmatpush1.msra.mxu0 0.0
  %1051 = vmatprep.subr.mxu0 0.0
  %1052 = vmatpush1.msra.mxu0 0.0
  %1053 = vmatprep.subr.mxu0 0.0
  %1054 = vmatpush1.msra.mxu0 0.0
  %1055 = vmatprep.subr.mxu0 0.0
  %1056 = vmatpush1.msra.mxu0 0.0
  %1057 = vmatprep.subr.mxu0 0.0
  %1058 = vmatpush1.msra.mxu0 0.0
  %1059 = vmatprep.subr.mxu0 0.0
  %1060 = vmatpush1.msra.mxu0 0.0
  %1061 = vmatprep.subr.mxu0 0.0
  %1062 = vmatpush1.msra.mxu0 0.0
  %1063 = vmatprep.subr.mxu0 0.0
  %1064 = vmatpush1.msra.mxu0 0.0
  %1065 = vmatprep.subr.mxu0 0.0
  %1066 = vmatpush1.msra.mxu0 0.0
  %1067 = vmatprep.subr.mxu0 0.0
  %1068 = vmatpush1.msra.mxu0 0.0
  %1069 = vmatprep.subr.mxu0 0.0
  %1070 = vmatpush1.msra.mxu0 0.0
  %1071 = vmatprep.subr.mxu0 0.0
  %1072 = vmatpush1.msra.mxu0 0.0
  %1073 = vmatprep.subr.mxu0 0.0
  %1074 = vmatpush1.msra.mxu0 0.0
  %1075 = vmatprep.subr.mxu0 0.0
  %1076 = vmatpush1.msra.mxu0 0.0
  %1077 = vmatprep.subr.mxu0 0.0
  %1078 = vmatpush1.msra.mxu0 0.0
  %1079 = vmatprep.subr.mxu0 0.0
  %1080 = vmatpush1.msra.mxu0 0.0
  %1081 = vmatprep.subr.mxu0 0.0
  %1082 = vmatpush1.msra.mxu0 0.0
  %1083 = vmatprep.subr.mxu0 0.0
  %1084 = vmatpush1.msra.mxu0 0.0
  %1085 = vmatprep.subr.mxu0 0.0
  %1086 = vmatpush1.msra.mxu0 0.0
  %1087 = vmatprep.subr.mxu0 0.0
  %1088 = vmatpush1.msra.mxu0 0.0
  %1089 = vmatprep.subr.mxu0 0.0
  %1090 = vmatpush1.msra.mxu0 0.0
  %1091 = vmatprep.mubr.f32.mxu0 0.0
  %1092 = vmatmul.mubr.f32.gmra.mrb[0].mxu0 %v1025
  %v1093 = vpop.f32.mrb[0].mxu0
  %v1094 = vadd.f32 0.0, %v1093
  %v1095 = vpop.f32.mrb[0].mxu0
  %1096 = vdwg.mxu0
  %v1097 = vsel %vm555, %v1020, 0.0
  %1098 = vadd.xlane.f32.xlu0 %v1097
  %v1099 = vpop.xlane.xlu0 %1098
  %v1100 = vadd.f32 %v1099, 1e-06
  %v1101 = vrcp.pop %v1100
  %v1102 = vmul.f32 %v1094, %v1101
  %v1104 = vsel %vm555, %v1102, 0
  %1106 = vmatprep.subr.mxu0 0.0
  %1107 = vmatpush1.msra.mxu0 %v471
  %1108 = vmatprep.subr.mxu0 0.0
  %1109 = vmatpush1.msra.mxu0 0.0
  %1110 = vmatprep.subr.mxu0 0.0
  %1111 = vmatpush1.msra.mxu0 0.0
  %1112 = vmatprep.subr.mxu0 0.0
  %1113 = vmatpush1.msra.mxu0 0.0
  %1114 = vmatprep.subr.mxu0 0.0
  %1115 = vmatpush1.msra.mxu0 0.0
  %1116 = vmatprep.subr.mxu0 0.0
  %1117 = vmatpush1.msra.mxu0 0.0
  %1118 = vmatprep.subr.mxu0 0.0
  %1119 = vmatpush1.msra.mxu0 0.0
  %1120 = vmatprep.subr.mxu0 0.0
  %1121 = vmatpush1.msra.mxu0 0.0
  %1122 = vmatprep.subr.mxu0 0.0
  %1123 = vmatpush1.msra.mxu0 0.0
  %1124 = vmatprep.subr.mxu0 0.0
  %1125 = vmatpush1.msra.mxu0 0.0
  %1126 = vmatprep.subr.mxu0 0.0
  %1127 = vmatpush1.msra.mxu0 0.0
  %1128 = vmatprep.subr.mxu0 0.0
  %1129 = vmatpush1.msra.mxu0 0.0
  %1130 = vmatprep.subr.mxu0 0.0
  %1131 = vmatpush1.msra.mxu0 0.0
  %1132 = vmatprep.subr.mxu0 0.0
  %1133 = vmatpush1.msra.mxu0 0.0
  %1134 = vmatprep.subr.mxu0 0.0
  %1135 = vmatpush1.msra.mxu0 0.0
  %1136 = vmatprep.subr.mxu0 0.0
  %1137 = vmatpush1.msra.mxu0 0.0
  %1138 = vmatprep.subr.mxu0 0.0
  %1139 = vmatpush1.msra.mxu0 0.0
  %1140 = vmatprep.subr.mxu0 0.0
  %1141 = vmatpush1.msra.mxu0 0.0
  %1142 = vmatprep.subr.mxu0 0.0
  %1143 = vmatpush1.msra.mxu0 0.0
  %1144 = vmatprep.subr.mxu0 0.0
  %1145 = vmatpush1.msra.mxu0 0.0
  %1146 = vmatprep.subr.mxu0 0.0
  %1147 = vmatpush1.msra.mxu0 0.0
  %1148 = vmatprep.subr.mxu0 0.0
  %1149 = vmatpush1.msra.mxu0 0.0
  %1150 = vmatprep.subr.mxu0 0.0
  %1151 = vmatpush1.msra.mxu0 0.0
  %1152 = vmatprep.subr.mxu0 0.0
  %1153 = vmatpush1.msra.mxu0 0.0
  %1154 = vmatprep.subr.mxu0 0.0
  %1155 = vmatpush1.msra.mxu0 0.0
  %1156 = vmatprep.subr.mxu0 0.0
  %1157 = vmatpush1.msra.mxu0 0.0
  %1158 = vmatprep.subr.mxu0 0.0
  %1159 = vmatpush1.msra.mxu0 0.0
  %1160 = vmatprep.subr.mxu0 0.0
  %1161 = vmatpush1.msra.mxu0 0.0
  %1162 = vmatprep.subr.mxu0 0.0
  %1163 = vmatpush1.msra.mxu0 0.0
  %1164 = vmatprep.subr.mxu0 0.0
  %1165 = vmatpush1.msra.mxu0 0.0
  %1166 = vmatprep.subr.mxu0 0.0
  %1167 = vmatpush1.msra.mxu0 0.0
  %1168 = vmatprep.subr.mxu0 0.0
  %1169 = vmatpush1.msra.mxu0 0.0
  %1170 = vmatprep.mubr.f32.mxu0 0.0
  %1171 = vmatmul.mubr.f32.gmra.mrb[0].mxu0 %v1104
  %v1172 = vpop.f32.mrb[0].mxu0
  %v1173 = vadd.f32 0.0, %v1172
  %v1174 = vpop.f32.mrb[0].mxu0
  %1175 = vdwg.mxu0
  %v1176 = vadd.f32 %v939, %v1173
  %1177 = vrot.lane.b32.xlu0 %v463, 80
  %v1178 = vpop.permute.xlu0 %1177
  %1179 = vrot.lane.b32.xlu0 %v467, 80
  %v1180 = vpop.permute.xlu0 %1179
  %v1181 = vsel %vm473, %v1178, 0
  %v1183 = vsel %vm473, %v1180, 0
  %1185 = vmatprep.subr.mxu0 0.0
  %1186 = vmatpush1.xpose.msra.mxu0 %v1183
  %1187 = vmatprep.subr.mxu0 0.0
  %1188 = vmatpush1.xpose.msra.mxu0 0.0
  %1189 = vmatprep.subr.mxu0 0.0
  %1190 = vmatpush1.xpose.msra.mxu0 0.0
  %1191 = vmatprep.subr.mxu0 0.0
  %1192 = vmatpush1.xpose.msra.mxu0 0.0
  %1193 = vmatprep.subr.mxu0 0.0
  %1194 = vmatpush1.xpose.msra.mxu0 0.0
  %1195 = vmatprep.subr.mxu0 0.0
  %1196 = vmatpush1.xpose.msra.mxu0 0.0
  %1197 = vmatprep.subr.mxu0 0.0
  %1198 = vmatpush1.xpose.msra.mxu0 0.0
  %1199 = vmatprep.subr.mxu0 0.0
  %1200 = vmatpush1.xpose.msra.mxu0 0.0
  %1201 = vmatprep.subr.mxu0 0.0
  %1202 = vmatpush1.xpose.msra.mxu0 0.0
  %1203 = vmatprep.subr.mxu0 0.0
  %1204 = vmatpush1.xpose.msra.mxu0 0.0
  %1205 = vmatprep.subr.mxu0 0.0
  %1206 = vmatpush1.xpose.msra.mxu0 0.0
  %1207 = vmatprep.subr.mxu0 0.0
  %1208 = vmatpush1.xpose.msra.mxu0 0.0
  %1209 = vmatprep.subr.mxu0 0.0
  %1210 = vmatpush1.xpose.msra.mxu0 0.0
  %1211 = vmatprep.subr.mxu0 0.0
  %1212 = vmatpush1.xpose.msra.mxu0 0.0
  %1213 = vmatprep.subr.mxu0 0.0
  %1214 = vmatpush1.xpose.msra.mxu0 0.0
  %1215 = vmatprep.subr.mxu0 0.0
  %1216 = vmatpush1.xpose.msra.mxu0 0.0
  %1217 = vmatprep.subr.mxu0 0.0
  %1218 = vmatpush1.xpose.msra.mxu0 0.0
  %1219 = vmatprep.subr.mxu0 0.0
  %1220 = vmatpush1.xpose.msra.mxu0 0.0
  %1221 = vmatprep.subr.mxu0 0.0
  %1222 = vmatpush1.xpose.msra.mxu0 0.0
  %1223 = vmatprep.subr.mxu0 0.0
  %1224 = vmatpush1.xpose.msra.mxu0 0.0
  %1225 = vmatprep.subr.mxu0 0.0
  %1226 = vmatpush1.xpose.msra.mxu0 0.0
  %1227 = vmatprep.subr.mxu0 0.0
  %1228 = vmatpush1.xpose.msra.mxu0 0.0
  %1229 = vmatprep.subr.mxu0 0.0
  %1230 = vmatpush1.xpose.msra.mxu0 0.0
  %1231 = vmatprep.subr.mxu0 0.0
  %1232 = vmatpush1.xpose.msra.mxu0 0.0
  %1233 = vmatprep.subr.mxu0 0.0
  %1234 = vmatpush1.xpose.msra.mxu0 0.0
  %1235 = vmatprep.subr.mxu0 0.0
  %1236 = vmatpush1.xpose.msra.mxu0 0.0
  %1237 = vmatprep.subr.mxu0 0.0
  %1238 = vmatpush1.xpose.msra.mxu0 0.0
  %1239 = vmatprep.subr.mxu0 0.0
  %1240 = vmatpush1.xpose.msra.mxu0 0.0
  %1241 = vmatprep.subr.mxu0 0.0
  %1242 = vmatpush1.xpose.msra.mxu0 0.0
  %1243 = vmatprep.subr.mxu0 0.0
  %1244 = vmatpush1.xpose.msra.mxu0 0.0
  %1245 = vmatprep.subr.mxu0 0.0
  %1246 = vmatpush1.xpose.msra.mxu0 0.0
  %1247 = vmatprep.subr.mxu0 0.0
  %1248 = vmatpush1.xpose.msra.mxu0 0.0
  %1249 = vmatprep.mubr.f32.mxu0 0.0
  %1250 = vmatmul.mubr.f32.gmra.mrb[0].mxu0 %v1181
  %v1251 = vpop.f32.mrb[0].mxu0
  %v1252 = vadd.f32 0.0, %v1251
  %v1253 = vpop.f32.mrb[0].mxu0
  %1254 = vdwg.mxu0
  %v1255 = vmul.f32 %v1252, %v468
  %1256 = vrot.lane.b32.xlu0 %v136, 40
  %v1257 = vpop.permute.xlu0 %1256
  %v1260 = vsel %vm555, %v1255, 0
  %1262 = vmatprep.subr.mxu0 0.0
  %1263 = vmatpush1.msra.mxu0 %v1257
  %1264 = vmatprep.subr.mxu0 0.0
  %1265 = vmatpush1.msra.mxu0 0.0
  %1266 = vmatprep.subr.mxu0 0.0
  %1267 = vmatpush1.msra.mxu0 0.0
  %1268 = vmatprep.subr.mxu0 0.0
  %1269 = vmatpush1.msra.mxu0 0.0
  %1270 = vmatprep.subr.mxu0 0.0
  %1271 = vmatpush1.msra.mxu0 0.0
  %1272 = vmatprep.subr.mxu0 0.0
  %1273 = vmatpush1.msra.mxu0 0.0
  %1274 = vmatprep.subr.mxu0 0.0
  %1275 = vmatpush1.msra.mxu0 0.0
  %1276 = vmatprep.subr.mxu0 0.0
  %1277 = vmatpush1.msra.mxu0 0.0
  %1278 = vmatprep.subr.mxu0 0.0
  %1279 = vmatpush1.msra.mxu0 0.0
  %1280 = vmatprep.subr.mxu0 0.0
  %1281 = vmatpush1.msra.mxu0 0.0
  %1282 = vmatprep.subr.mxu0 0.0
  %1283 = vmatpush1.msra.mxu0 0.0
  %1284 = vmatprep.subr.mxu0 0.0
  %1285 = vmatpush1.msra.mxu0 0.0
  %1286 = vmatprep.subr.mxu0 0.0
  %1287 = vmatpush1.msra.mxu0 0.0
  %1288 = vmatprep.subr.mxu0 0.0
  %1289 = vmatpush1.msra.mxu0 0.0
  %1290 = vmatprep.subr.mxu0 0.0
  %1291 = vmatpush1.msra.mxu0 0.0
  %1292 = vmatprep.subr.mxu0 0.0
  %1293 = vmatpush1.msra.mxu0 0.0
  %1294 = vmatprep.subr.mxu0 0.0
  %1295 = vmatpush1.msra.mxu0 0.0
  %1296 = vmatprep.subr.mxu0 0.0
  %1297 = vmatpush1.msra.mxu0 0.0
  %1298 = vmatprep.subr.mxu0 0.0
  %1299 = vmatpush1.msra.mxu0 0.0
  %1300 = vmatprep.subr.mxu0 0.0
  %1301 = vmatpush1.msra.mxu0 0.0
  %1302 = vmatprep.subr.mxu0 0.0
  %1303 = vmatpush1.msra.mxu0 0.0
  %1304 = vmatprep.subr.mxu0 0.0
  %1305 = vmatpush1.msra.mxu0 0.0
  %1306 = vmatprep.subr.mxu0 0.0
  %1307 = vmatpush1.msra.mxu0 0.0
  %1308 = vmatprep.subr.mxu0 0.0
  %1309 = vmatpush1.msra.mxu0 0.0
  %1310 = vmatprep.subr.mxu0 0.0
  %1311 = vmatpush1.msra.mxu0 0.0
  %1312 = vmatprep.subr.mxu0 0.0
  %1313 = vmatpush1.msra.mxu0 0.0
  %1314 = vmatprep.subr.mxu0 0.0
  %1315 = vmatpush1.msra.mxu0 0.0
  %1316 = vmatprep.subr.mxu0 0.0
  %1317 = vmatpush1.msra.mxu0 0.0
  %1318 = vmatprep.subr.mxu0 0.0
  %1319 = vmatpush1.msra.mxu0 0.0
  %1320 = vmatprep.subr.mxu0 0.0
  %1321 = vmatpush1.msra.mxu0 0.0
  %1322 = vmatprep.subr.mxu0 0.0
  %1323 = vmatpush1.msra.mxu0 0.0
  %1324 = vmatprep.subr.mxu0 0.0
  %1325 = vmatpush1.msra.mxu0 0.0
  %1326 = vmatprep.mubr.f32.mxu0 0.0
  %1327 = vmatmul.mubr.f32.gmra.mrb[0].mxu0 %v1260
  %v1328 = vpop.f32.mrb[0].mxu0
  %v1329 = vadd.f32 0.0, %v1328
  %v1330 = vpop.f32.mrb[0].mxu0
  %1331 = vdwg.mxu0
  %v1332 = vsel %vm555, %v1255, 0.0
  %1333 = vadd.xlane.f32.xlu0 %v1332
  %v1334 = vpop.xlane.xlu0 %1333
  %v1335 = vadd.f32 %v1334, 1e-06
  %v1336 = vrcp.pop %v1335
  %v1337 = vmul.f32 %v1329, %v1336
  %v1339 = vsel %vm555, %v1337, 0
  %1341 = vmatprep.subr.mxu0 0.0
  %1342 = vmatpush1.msra.mxu0 %v472
  %1343 = vmatprep.subr.mxu0 0.0
  %1344 = vmatpush1.msra.mxu0 0.0
  %1345 = vmatprep.subr.mxu0 0.0
  %1346 = vmatpush1.msra.mxu0 0.0
  %1347 = vmatprep.subr.mxu0 0.0
  %1348 = vmatpush1.msra.mxu0 0.0
  %1349 = vmatprep.subr.mxu0 0.0
  %1350 = vmatpush1.msra.mxu0 0.0
  %1351 = vmatprep.subr.mxu0 0.0
  %1352 = vmatpush1.msra.mxu0 0.0
  %1353 = vmatprep.subr.mxu0 0.0
  %1354 = vmatpush1.msra.mxu0 0.0
  %1355 = vmatprep.subr.mxu0 0.0
  %1356 = vmatpush1.msra.mxu0 0.0
  %1357 = vmatprep.subr.mxu0 0.0
  %1358 = vmatpush1.msra.mxu0 0.0
  %1359 = vmatprep.subr.mxu0 0.0
  %1360 = vmatpush1.msra.mxu0 0.0
  %1361 = vmatprep.subr.mxu0 0.0
  %1362 = vmatpush1.msra.mxu0 0.0
  %1363 = vmatprep.subr.mxu0 0.0
  %1364 = vmatpush1.msra.mxu0 0.0
  %1365 = vmatprep.subr.mxu0 0.0
  %1366 = vmatpush1.msra.mxu0 0.0
  %1367 = vmatprep.subr.mxu0 0.0
  %1368 = vmatpush1.msra.mxu0 0.0
  %1369 = vmatprep.subr.mxu0 0.0
  %1370 = vmatpush1.msra.mxu0 0.0
  %1371 = vmatprep.subr.mxu0 0.0
  %1372 = vmatpush1.msra.mxu0 0.0
  %1373 = vmatprep.subr.mxu0 0.0
  %1374 = vmatpush1.msra.mxu0 0.0
  %1375 = vmatprep.subr.mxu0 0.0
  %1376 = vmatpush1.msra.mxu0 0.0
  %1377 = vmatprep.subr.mxu0 0.0
  %1378 = vmatpush1.msra.mxu0 0.0
  %1379 = vmatprep.subr.mxu0 0.0
  %1380 = vmatpush1.msra.mxu0 0.0
  %1381 = vmatprep.subr.mxu0 0.0
  %1382 = vmatpush1.msra.mxu0 0.0
  %1383 = vmatprep.subr.mxu0 0.0
  %1384 = vmatpush1.msra.mxu0 0.0
  %1385 = vmatprep.subr.mxu0 0.0
  %1386 = vmatpush1.msra.mxu0 0.0
  %1387 = vmatprep.subr.mxu0 0.0
  %1388 = vmatpush1.msra.mxu0 0.0
  %1389 = vmatprep.subr.mxu0 0.0
  %1390 = vmatpush1.msra.mxu0 0.0
  %1391 = vmatprep.subr.mxu0 0.0
  %1392 = vmatpush1.msra.mxu0 0.0
  %1393 = vmatprep.subr.mxu0 0.0
  %1394 = vmatpush1.msra.mxu0 0.0
  %1395 = vmatprep.subr.mxu0 0.0
  %1396 = vmatpush1.msra.mxu0 0.0
  %1397 = vmatprep.subr.mxu0 0.0
  %1398 = vmatpush1.msra.mxu0 0.0
  %1399 = vmatprep.subr.mxu0 0.0
  %1400 = vmatpush1.msra.mxu0 0.0
  %1401 = vmatprep.subr.mxu0 0.0
  %1402 = vmatpush1.msra.mxu0 0.0
  %1403 = vmatprep.subr.mxu0 0.0
  %1404 = vmatpush1.msra.mxu0 0.0
  %1405 = vmatprep.mubr.f32.mxu0 0.0
  %1406 = vmatmul.mubr.f32.gmra.mrb[0].mxu0 %v1339
  %v1407 = vpop.f32.mrb[0].mxu0
  %v1408 = vadd.f32 0.0, %v1407
  %v1409 = vpop.f32.mrb[0].mxu0
  %1410 = vdwg.mxu0
  %v1411 = vadd.f32 %v1176, %v1408
  %v1412 = vld [vmem:[%s4] sm:$0x1]
  %v1414 = vlaneseq
  %v1415 = vshrl.u32 %v1414, 7
  %v1416 = vsub.s32 0, %v1415
  %v1417 = vrot.slane %v1412, %v1416
  %v1419 = vadd.f32 %v1411, %v1417
  %v1420 = vadd.f32 %v53, %v1419
  %v1421 = vld [vmem:[%s8] sm:$0x1]
  %v1422 = vld [vmem:[%s9] sm:$0x1]
  %v1423 = vsel %vm65, %v1420, 0.0
  %1424 = vadd.xlane.f32.xlu0 %v1423
  %v1425 = vpop.xlane.xlu0 %1424
  %v1426 = vrcp.pop 32.0
  %v1427 = vmul.f32 %v1425, %v1426
  %v1428 = vsub.f32 %v1420, %v1427
  %v1429 = vmul.f32 %v1428, %v1428
  %v1430 = vsel %vm65, %v1429, 0.0
  %1431 = vadd.xlane.f32.xlu0 %v1430
  %v1432 = vpop.xlane.xlu0 %1431
  %v1433 = vmul.f32 %v1432, %v1426
  %v1434 = vadd.f32 %v1433, 1e-05
  %v1435 = vrsqrt.pop %v1434
  %v1436 = vmul.f32 %v1428, %v1435
  %v1438 = vlaneseq
  %v1439 = vshrl.u32 %v1438, 7
  %v1440 = vsub.s32 0, %v1439
  %v1441 = vrot.slane %v1421, %v1440
  %v1443 = vmul.f32 %v1436, %v1441
  %v1445 = vlaneseq
  %v1446 = vshrl.u32 %v1445, 7
  %v1447 = vsub.s32 0, %v1446
  %v1448 = vrot.slane %v1422, %v1447
  %v1450 = vadd.f32 %v1443, %v1448
  %v1451 = vld [vmem:[%s10] sm:$0xff]
  %v1452 = vld [vmem:[%s10 + $0x8] sm:$0xff]
  %v1453 = vld [vmem:[%s10 + $0x10] sm:$0xff]
  %v1454 = vld [vmem:[%s10 + $0x18] sm:$0xff]
  %v1455 = vld [vmem:[%s11] sm:$0x1]
  %v1457 = vlaneseq
  %v1458 = vshrl.u32 %v1457, 7
  %v1459 = vsub.s32 0, %v1458
  %v1460 = vrot.slane %v1455, %v1459
  %v1463 = vsel %vm65, %v1450, 0
  %1465 = vmatprep.subr.mxu0 0.0
  %1466 = vmatpush1.msra.mxu0 %v1451
  %1467 = vmatprep.subr.mxu0 0.0
  %1468 = vmatpush1.msra.mxu0 %v1452
  %1469 = vmatprep.subr.mxu0 0.0
  %1470 = vmatpush1.msra.mxu0 %v1453
  %1471 = vmatprep.subr.mxu0 0.0
  %1472 = vmatpush1.msra.mxu0 %v1454
  %1473 = vmatprep.subr.mxu0 0.0
  %1474 = vmatpush1.msra.mxu0 0.0
  %1475 = vmatprep.subr.mxu0 0.0
  %1476 = vmatpush1.msra.mxu0 0.0
  %1477 = vmatprep.subr.mxu0 0.0
  %1478 = vmatpush1.msra.mxu0 0.0
  %1479 = vmatprep.subr.mxu0 0.0
  %1480 = vmatpush1.msra.mxu0 0.0
  %1481 = vmatprep.subr.mxu0 0.0
  %1482 = vmatpush1.msra.mxu0 0.0
  %1483 = vmatprep.subr.mxu0 0.0
  %1484 = vmatpush1.msra.mxu0 0.0
  %1485 = vmatprep.subr.mxu0 0.0
  %1486 = vmatpush1.msra.mxu0 0.0
  %1487 = vmatprep.subr.mxu0 0.0
  %1488 = vmatpush1.msra.mxu0 0.0
  %1489 = vmatprep.subr.mxu0 0.0
  %1490 = vmatpush1.msra.mxu0 0.0
  %1491 = vmatprep.subr.mxu0 0.0
  %1492 = vmatpush1.msra.mxu0 0.0
  %1493 = vmatprep.subr.mxu0 0.0
  %1494 = vmatpush1.msra.mxu0 0.0
  %1495 = vmatprep.subr.mxu0 0.0
  %1496 = vmatpush1.msra.mxu0 0.0
  %1497 = vmatprep.subr.mxu0 0.0
  %1498 = vmatpush1.msra.mxu0 0.0
  %1499 = vmatprep.subr.mxu0 0.0
  %1500 = vmatpush1.msra.mxu0 0.0
  %1501 = vmatprep.subr.mxu0 0.0
  %1502 = vmatpush1.msra.mxu0 0.0
  %1503 = vmatprep.subr.mxu0 0.0
  %1504 = vmatpush1.msra.mxu0 0.0
  %1505 = vmatprep.subr.mxu0 0.0
  %1506 = vmatpush1.msra.mxu0 0.0
  %1507 = vmatprep.subr.mxu0 0.0
  %1508 = vmatpush1.msra.mxu0 0.0
  %1509 = vmatprep.subr.mxu0 0.0
  %1510 = vmatpush1.msra.mxu0 0.0
  %1511 = vmatprep.subr.mxu0 0.0
  %1512 = vmatpush1.msra.mxu0 0.0
  %1513 = vmatprep.subr.mxu0 0.0
  %1514 = vmatpush1.msra.mxu0 0.0
  %1515 = vmatprep.subr.mxu0 0.0
  %1516 = vmatpush1.msra.mxu0 0.0
  %1517 = vmatprep.subr.mxu0 0.0
  %1518 = vmatpush1.msra.mxu0 0.0
  %1519 = vmatprep.subr.mxu0 0.0
  %1520 = vmatpush1.msra.mxu0 0.0
  %1521 = vmatprep.subr.mxu0 0.0
  %1522 = vmatpush1.msra.mxu0 0.0
  %1523 = vmatprep.subr.mxu0 0.0
  %1524 = vmatpush1.msra.mxu0 0.0
  %1525 = vmatprep.subr.mxu0 0.0
  %1526 = vmatpush1.msra.mxu0 0.0
  %1527 = vmatprep.subr.mxu0 0.0
  %1528 = vmatpush1.msra.mxu0 0.0
  %1529 = vmatprep.mubr.f32.mxu0 0.0
  %1530 = vmatmul.mubr.f32.gmra.mrb[0].mxu0 %v1463
  %v1531 = vpop.f32.mrb[0].mxu0
  %v1532 = vadd.f32 %v1460, %v1531
  %v1533 = vpop.f32.mrb[0].mxu0
  %1534 = vdwg.mxu0
  %v1535 = vmul.f32 %v1532, %v1532
  %v1536 = vmul.f32 %v1532, %v1535
  %v1537 = vmul.f32 %v1536, 0.044715
  %v1538 = vadd.f32 %v1532, %v1537
  %v1539 = vmul.f32 %v1538, 0.7978846
  %v1540 = vtanh.pop %v1539
  %v1541 = vadd.f32 %v1540, 1.0
  %v1542 = vmul.f32 %v1541, 0.5
  %v1543 = vmul.f32 %v1532, %v1542
  %v1544 = vld [vmem:[%s12] sm:$0xff]
  %v1545 = vld [vmem:[%s12 + $0x8] sm:$0xff]
  %v1546 = vld [vmem:[%s12 + $0x10] sm:$0xff]
  %v1547 = vld [vmem:[%s12 + $0x18] sm:$0xff]
  %v1548 = vld [vmem:[%s12 + $0x20] sm:$0xff]
  %v1549 = vld [vmem:[%s12 + $0x28] sm:$0xff]
  %v1550 = vld [vmem:[%s12 + $0x30] sm:$0xff]
  %v1551 = vld [vmem:[%s12 + $0x38] sm:$0xff]
  %v1552 = vld [vmem:[%s13] sm:$0x1]
  %v1554 = vlaneseq
  %v1555 = vshrl.u32 %v1554, 7
  %v1556 = vsub.s32 0, %v1555
  %v1557 = vrot.slane %v1552, %v1556
  %v1560 = vsel %vm447, %v1543, 0
  %1562 = vmatprep.subr.mxu0 0.0
  %1563 = vmatpush1.msra.mxu0 %v1544
  %1564 = vmatprep.subr.mxu0 0.0
  %1565 = vmatpush1.msra.mxu0 %v1545
  %1566 = vmatprep.subr.mxu0 0.0
  %1567 = vmatpush1.msra.mxu0 %v1546
  %1568 = vmatprep.subr.mxu0 0.0
  %1569 = vmatpush1.msra.mxu0 %v1547
  %1570 = vmatprep.subr.mxu0 0.0
  %1571 = vmatpush1.msra.mxu0 %v1548
  %1572 = vmatprep.subr.mxu0 0.0
  %1573 = vmatpush1.msra.mxu0 %v1549
  %1574 = vmatprep.subr.mxu0 0.0
  %1575 = vmatpush1.msra.mxu0 %v1550
  %1576 = vmatprep.subr.mxu0 0.0
  %1577 = vmatpush1.msra.mxu0 %v1551
  %1578 = vmatprep.subr.mxu0 0.0
  %1579 = vmatpush1.msra.mxu0 0.0
  %1580 = vmatprep.subr.mxu0 0.0
  %1581 = vmatpush1.msra.mxu0 0.0
  %1582 = vmatprep.subr.mxu0 0.0
  %1583 = vmatpush1.msra.mxu0 0.0
  %1584 = vmatprep.subr.mxu0 0.0
  %1585 = vmatpush1.msra.mxu0 0.0
  %1586 = vmatprep.subr.mxu0 0.0
  %1587 = vmatpush1.msra.mxu0 0.0
  %1588 = vmatprep.subr.mxu0 0.0
  %1589 = vmatpush1.msra.mxu0 0.0
  %1590 = vmatprep.subr.mxu0 0.0
  %1591 = vmatpush1.msra.mxu0 0.0
  %1592 = vmatprep.subr.mxu0 0.0
  %1593 = vmatpush1.msra.mxu0 0.0
  %1594 = vmatprep.subr.mxu0 0.0
  %1595 = vmatpush1.msra.mxu0 0.0
  %1596 = vmatprep.subr.mxu0 0.0
  %1597 = vmatpush1.msra.mxu0 0.0
  %1598 = vmatprep.subr.mxu0 0.0
  %1599 = vmatpush1.msra.mxu0 0.0
  %1600 = vmatprep.subr.mxu0 0.0
  %1601 = vmatpush1.msra.mxu0 0.0
  %1602 = vmatprep.subr.mxu0 0.0
  %1603 = vmatpush1.msra.mxu0 0.0
  %1604 = vmatprep.subr.mxu0 0.0
  %1605 = vmatpush1.msra.mxu0 0.0
  %1606 = vmatprep.subr.mxu0 0.0
  %1607 = vmatpush1.msra.mxu0 0.0
  %1608 = vmatprep.subr.mxu0 0.0
  %1609 = vmatpush1.msra.mxu0 0.0
  %1610 = vmatprep.subr.mxu0 0.0
  %1611 = vmatpush1.msra.mxu0 0.0
  %1612 = vmatprep.subr.mxu0 0.0
  %1613 = vmatpush1.msra.mxu0 0.0
  %1614 = vmatprep.subr.mxu0 0.0
  %1615 = vmatpush1.msra.mxu0 0.0
  %1616 = vmatprep.subr.mxu0 0.0
  %1617 = vmatpush1.msra.mxu0 0.0
  %1618 = vmatprep.subr.mxu0 0.0
  %1619 = vmatpush1.msra.mxu0 0.0
  %1620 = vmatprep.subr.mxu0 0.0
  %1621 = vmatpush1.msra.mxu0 0.0
  %1622 = vmatprep.subr.mxu0 0.0
  %1623 = vmatpush1.msra.mxu0 0.0
  %1624 = vmatprep.subr.mxu0 0.0
  %1625 = vmatpush1.msra.mxu0 0.0
  %1626 = vmatprep.mubr.f32.mxu0 0.0
  %1627 = vmatmul.mubr.f32.gmra.mrb[0].mxu0 %v1560
  %v1628 = vpop.f32.mrb[0].mxu0
  %v1629 = vadd.f32 %v1557, %v1628
  %v1630 = vpop.f32.mrb[0].mxu0
  %1631 = vdwg.mxu0
  %v1632 = vadd.f32 %v1450, %v1629
  %v1633 = vld [vmem:[%s14] sm:$0x1]
  %v1634 = vld [vmem:[%s15] sm:$0x1]
  %v1635 = vsel %vm65, %v1632, 0.0
  %1636 = vadd.xlane.f32.xlu0 %v1635
  %v1637 = vpop.xlane.xlu0 %1636
  %v1638 = vmul.f32 %v1637, %v1426
  %v1639 = vsub.f32 %v1632, %v1638
  %v1640 = vmul.f32 %v1639, %v1639
  %v1641 = vsel %vm65, %v1640, 0.0
  %1642 = vadd.xlane.f32.xlu0 %v1641
  %v1643 = vpop.xlane.xlu0 %1642
  %v1644 = vmul.f32 %v1643, %v1426
  %v1645 = vadd.f32 %v1644, 1e-05
  %v1646 = vrsqrt.pop %v1645
  %v1647 = vmul.f32 %v1639, %v1646
  %v1649 = vlaneseq
  %v1650 = vshrl.u32 %v1649, 7
  %v1651 = vsub.s32 0, %v1650
  %v1652 = vrot.slane %v1633, %v1651
  %v1654 = vmul.f32 %v1647, %v1652
  %v1656 = vlaneseq
  %v1657 = vshrl.u32 %v1656, 7
  %v1658 = vsub.s32 0, %v1657
  %v1659 = vrot.slane %v1634, %v1658
  %v1661 = vadd.f32 %v1654, %v1659
  %1662 = vst.msk [vmem:[%s16] sm:$0xff] %vm65, %v1661
  // Predicated region
  $region66: #{_lambda_.11} parent=0 // pred_check
    _
  $region67: #{_lambda_.11} parent=0 // pred_check_branch
    %1664 = sbr.rel (0) target = $region69
  $region68: #{_lambda_.11} parent=0 // pred_region
    _
  $region69: #{_lambda_.11} parent=0 // pred_fallthru
    _
  // Predicated region
  $region70: #{_lambda_.11} parent=0 // pred_check
    _
  $region71: #{_lambda_.11} parent=0 // pred_check_branch
    %1666 = sbr.rel (0) target = $region73
  $region72: #{_lambda_.11} parent=0 // pred_region
    _
  $region73: #{_lambda_.11} parent=0 // pred_fallthru
    _

// kernel: _lambda_.9
$region0: #{_lambda_.9}
  #allocation0 [shape = 'u32[]', space=smem, size = 0x4, offset = 0x4, fixed_abs, tag = 'smem constant byte address 0x4 - core index']
  #allocation1 [shape = 'u32[144,128]{1,0:T(1,128)}', space=vmem, size = 0x12000, scoped, tag = 'internal scratch']
  %s0 = inlined_call_operand.vmem [shape: f32[16,32], index: 0, kind: input, shape index: {}]
  %s1 = inlined_call_operand.vmem [shape: f32[32,96], index: 1, kind: input, shape index: {}]
  %s2 = inlined_call_operand.vmem [shape: f32[1,96], index: 2, kind: input, shape index: {}]
  %s3 = inlined_call_operand.vmem [shape: f32[32,32], index: 3, kind: input, shape index: {}]
  %s4 = inlined_call_operand.vmem [shape: f32[1,32], index: 4, kind: input, shape index: {}, may-alias: {4,9,13,15}]
  %s5 = inlined_call_operand.vmem [shape: f32[32,64], index: 5, kind: input, shape index: {}]
  %s6 = inlined_call_operand.vmem [shape: f32[32,64], index: 6, kind: input, shape index: {}]
  %s7 = inlined_call_operand.vmem [shape: f32[16,16], index: 7, kind: input, shape index: {}]
  %s8 = inlined_call_operand.vmem [shape: f32[1,32], index: 8, kind: input, shape index: {}, may-alias: {8,14}]
  %s9 = inlined_call_operand.vmem [shape: f32[1,32], index: 9, kind: input, shape index: {}, may-alias: {4,9,13,15}]
  %s10 = inlined_call_operand.vmem [shape: f32[32,64], index: 10, kind: input, shape index: {}]
  %s11 = inlined_call_operand.vmem [shape: f32[1,64], index: 11, kind: input, shape index: {}]
  %s12 = inlined_call_operand.vmem [shape: f32[64,32], index: 12, kind: input, shape index: {}]
  %s13 = inlined_call_operand.vmem [shape: f32[1,32], index: 13, kind: input, shape index: {}, may-alias: {4,9,13,15}]
  %s14 = inlined_call_operand.vmem [shape: f32[1,32], index: 14, kind: input, shape index: {}, may-alias: {8,14}]
  %s15 = inlined_call_operand.vmem [shape: f32[1,32], index: 15, kind: input, shape index: {}, may-alias: {4,9,13,15}]
  %s16 = inlined_call_operand.vmem [shape: f32[16,32], index: 16, kind: output, shape index: {}]
  %s17 = sld [smem:[#allocation0]]
  $region74: #{_lambda_.9} parent=0
    _
  %s19 = ssub.s32 1, %s17
  %s20 = scalar_select 0, %s19, %s17
  // Predicated region
  $region2: #{_lambda_.9} parent=0 // pred_check
    _
  $region3: #{_lambda_.9} parent=0 // pred_check_branch
    %22 = sbr.rel (0) target = $region5
  $region4: #{_lambda_.9} parent=0 // pred_region
    _
  $region5: #{_lambda_.9} parent=0 // pred_fallthru
    _
  // Predicated region
  $region6: #{_lambda_.9} parent=0 // pred_check
    _
  $region7: #{_lambda_.9} parent=0 // pred_check_branch
    %24 = sbr.rel (0) target = $region9
  $region8: #{_lambda_.9} parent=0 // pred_region
    _
  $region9: #{_lambda_.9} parent=0 // pred_fallthru
    _
  // Predicated region
  $region10: #{_lambda_.9} parent=0 // pred_check
    _
  $region11: #{_lambda_.9} parent=0 // pred_check_branch
    %26 = sbr.rel (0) target = $region13
  $region12: #{_lambda_.9} parent=0 // pred_region
    _
  $region13: #{_lambda_.9} parent=0 // pred_fallthru
    _
  // Predicated region
  $region14: #{_lambda_.9} parent=0 // pred_check
    _
  $region15: #{_lambda_.9} parent=0 // pred_check_branch
    %28 = sbr.rel (0) target = $region17
  $region16: #{_lambda_.9} parent=0 // pred_region
    _
  $region17: #{_lambda_.9} parent=0 // pred_fallthru
    _
  // Predicated region
  $region18: #{_lambda_.9} parent=0 // pred_check
    _
  $region19: #{_lambda_.9} parent=0 // pred_check_branch
    %30 = sbr.rel (0) target = $region21
  $region20: #{_lambda_.9} parent=0 // pred_region
    _
  $region21: #{_lambda_.9} parent=0 // pred_fallthru
    _
  // Predicated region
  $region22: #{_lambda_.9} parent=0 // pred_check
    _
  $region23: #{_lambda_.9} parent=0 // pred_check_branch
    %32 = sbr.rel (0) target = $region25
  $region24: #{_lambda_.9} parent=0 // pred_region
    _
  $region25: #{_lambda_.9} parent=0 // pred_fallthru
    _
  // Predicated region
  $region26: #{_lambda_.9} parent=0 // pred_check
    _
  $region27: #{_lambda_.9} parent=0 // pred_check_branch
    %34 = sbr.rel (0) target = $region29
  $region28: #{_lambda_.9} parent=0 // pred_region
    _
  $region29: #{_lambda_.9} parent=0 // pred_fallthru
    _
  // Predicated region
  $region30: #{_lambda_.9} parent=0 // pred_check
    _
  $region31: #{_lambda_.9} parent=0 // pred_check_branch
    %36 = sbr.rel (0) target = $region33
  $region32: #{_lambda_.9} parent=0 // pred_region
    _
  $region33: #{_lambda_.9} parent=0 // pred_fallthru
    _
  // Predicated region
  $region34: #{_lambda_.9} parent=0 // pred_check
    _
  $region35: #{_lambda_.9} parent=0 // pred_check_branch
    %38 = sbr.rel (0) target = $region37
  $region36: #{_lambda_.9} parent=0 // pred_region
    _
  $region37: #{_lambda_.9} parent=0 // pred_fallthru
    _
  // Predicated region
  $region38: #{_lambda_.9} parent=0 // pred_check
    _
  $region39: #{_lambda_.9} parent=0 // pred_check_branch
    %40 = sbr.rel (0) target = $region41
  $region40: #{_lambda_.9} parent=0 // pred_region
    _
  $region41: #{_lambda_.9} parent=0 // pred_fallthru
    _
  // Predicated region
  $region42: #{_lambda_.9} parent=0 // pred_check
    _
  $region43: #{_lambda_.9} parent=0 // pred_check_branch
    %42 = sbr.rel (0) target = $region45
  $region44: #{_lambda_.9} parent=0 // pred_region
    _
  $region45: #{_lambda_.9} parent=0 // pred_fallthru
    _
  // Predicated region
  $region46: #{_lambda_.9} parent=0 // pred_check
    _
  $region47: #{_lambda_.9} parent=0 // pred_check_branch
    %44 = sbr.rel (0) target = $region49
  $region48: #{_lambda_.9} parent=0 // pred_region
    _
  $region49: #{_lambda_.9} parent=0 // pred_fallthru
    _
  // Predicated region
  $region50: #{_lambda_.9} parent=0 // pred_check
    _
  $region51: #{_lambda_.9} parent=0 // pred_check_branch
    %46 = sbr.rel (0) target = $region53
  $region52: #{_lambda_.9} parent=0 // pred_region
    _
  $region53: #{_lambda_.9} parent=0 // pred_fallthru
    _
  // Predicated region
  $region54: #{_lambda_.9} parent=0 // pred_check
    _
  $region55: #{_lambda_.9} parent=0 // pred_check_branch
    %48 = sbr.rel (0) target = $region57
  $region56: #{_lambda_.9} parent=0 // pred_region
    _
  $region57: #{_lambda_.9} parent=0 // pred_fallthru
    _
  // Predicated region
  $region58: #{_lambda_.9} parent=0 // pred_check
    _
  $region59: #{_lambda_.9} parent=0 // pred_check_branch
    %50 = sbr.rel (0) target = $region61
  $region60: #{_lambda_.9} parent=0 // pred_region
    _
  $region61: #{_lambda_.9} parent=0 // pred_fallthru
    _
  // Predicated region
  $region62: #{_lambda_.9} parent=0 // pred_check
    _
  $region63: #{_lambda_.9} parent=0 // pred_check_branch
    %52 = sbr.rel (0) target = $region65
  $region64: #{_lambda_.9} parent=0 // pred_region
    _
  $region65: #{_lambda_.9} parent=0 // pred_fallthru
    _
  %v53 = vld [vmem:[%s0] sm:$0xff]
  %v54 = vld [vmem:[%s0 + $0x8] sm:$0xff]
  %v55 = vld [vmem:[%s1] sm:$0xff]
  %v56 = vld [vmem:[%s1 + $0x8] sm:$0xff]
  %v57 = vld [vmem:[%s1 + $0x10] sm:$0xff]
  %v58 = vld [vmem:[%s1 + $0x18] sm:$0xff]
  %v59 = vld [vmem:[%s2] sm:$0x1]
  %v61 = vlaneseq
  %v62 = vshrl.u32 %v61, 7
  %v63 = vsub.s32 0, %v62
  %v64 = vrot.slane %v59, %v63
  %vm66 = vcmask 261120
  %v68 = vsel %vm66, %v53, 0
  %v71 = vsel %vm66, %v54, 0
  %73 = vmatprep.subr.mxu0 0.0
  %74 = vmatpush1.msra.mxu0 %v55
  %75 = vmatprep.subr.mxu0 0.0
  %76 = vmatpush1.msra.mxu0 %v56
  %77 = vmatprep.subr.mxu0 0.0
  %78 = vmatpush1.msra.mxu0 %v57
  %79 = vmatprep.subr.mxu0 0.0
  %80 = vmatpush1.msra.mxu0 %v58
  %81 = vmatprep.subr.mxu0 0.0
  %82 = vmatpush1.msra.mxu0 0.0
  %83 = vmatprep.subr.mxu0 0.0
  %84 = vmatpush1.msra.mxu0 0.0
  %85 = vmatprep.subr.mxu0 0.0
  %86 = vmatpush1.msra.mxu0 0.0
  %87 = vmatprep.subr.mxu0 0.0
  %88 = vmatpush1.msra.mxu0 0.0
  %89 = vmatprep.subr.mxu0 0.0
  %90 = vmatpush1.msra.mxu0 0.0
  %91 = vmatprep.subr.mxu0 0.0
  %92 = vmatpush1.msra.mxu0 0.0
  %93 = vmatprep.subr.mxu0 0.0
  %94 = vmatpush1.msra.mxu0 0.0
  %95 = vmatprep.subr.mxu0 0.0
  %96 = vmatpush1.msra.mxu0 0.0
  %97 = vmatprep.subr.mxu0 0.0
  %98 = vmatpush1.msra.mxu0 0.0
  %99 = vmatprep.subr.mxu0 0.0
  %100 = vmatpush1.msra.mxu0 0.0
  %101 = vmatprep.subr.mxu0 0.0
  %102 = vmatpush1.msra.mxu0 0.0
  %103 = vmatprep.subr.mxu0 0.0
  %104 = vmatpush1.msra.mxu0 0.0
  %105 = vmatprep.subr.mxu0 0.0
  %106 = vmatpush1.msra.mxu0 0.0
  %107 = vmatprep.subr.mxu0 0.0
  %108 = vmatpush1.msra.mxu0 0.0
  %109 = vmatprep.subr.mxu0 0.0
  %110 = vmatpush1.msra.mxu0 0.0
  %111 = vmatprep.subr.mxu0 0.0
  %112 = vmatpush1.msra.mxu0 0.0
  %113 = vmatprep.subr.mxu0 0.0
  %114 = vmatpush1.msra.mxu0 0.0
  %115 = vmatprep.subr.mxu0 0.0
  %116 = vmatpush1.msra.mxu0 0.0
  %117 = vmatprep.subr.mxu0 0.0
  %118 = vmatpush1.msra.mxu0 0.0
  %119 = vmatprep.subr.mxu0 0.0
  %120 = vmatpush1.msra.mxu0 0.0
  %121 = vmatprep.subr.mxu0 0.0
  %122 = vmatpush1.msra.mxu0 0.0
  %123 = vmatprep.subr.mxu0 0.0
  %124 = vmatpush1.msra.mxu0 0.0
  %125 = vmatprep.subr.mxu0 0.0
  %126 = vmatpush1.msra.mxu0 0.0
  %127 = vmatprep.subr.mxu0 0.0
  %128 = vmatpush1.msra.mxu0 0.0
  %129 = vmatprep.subr.mxu0 0.0
  %130 = vmatpush1.msra.mxu0 0.0
  %131 = vmatprep.subr.mxu0 0.0
  %132 = vmatpush1.msra.mxu0 0.0
  %133 = vmatprep.subr.mxu0 0.0
  %134 = vmatpush1.msra.mxu0 0.0
  %135 = vmatprep.subr.mxu0 0.0
  %136 = vmatpush1.msra.mxu0 0.0
  %137 = vmatprep.mubr.f32.mxu0 0.0
  %138 = vmatmul.mubr.f32.gmra.mrb[0].mxu0 %v68
  %v139 = vpop.f32.mrb[0].mxu0
  %v140 = vadd.f32 %v64, %v139
  %v141 = vpop.f32.mrb[0].mxu0
  %142 = vmatprep.mubr.f32.mxu0 0.0
  %143 = vmatmul.mubr.f32.gmra.mrb[0].mxu0 %v71
  %v144 = vpop.f32.mrb[0].mxu0
  %v145 = vadd.f32 %v64, %v144
  %v146 = vpop.f32.mrb[0].mxu0
  %147 = vdwg.mxu0
  %v148 = vld [vmem:[%s5] sm:$0xff]
  %v149 = vld [vmem:[%s5 + $0x8] sm:$0xff]
  %v150 = vld [vmem:[%s5 + $0x10] sm:$0xff]
  %v151 = vld [vmem:[%s5 + $0x18] sm:$0xff]
  %v152 = vld [vmem:[%s6] sm:$0xff]
  %v153 = vld [vmem:[%s6 + $0x8] sm:$0xff]
  %v154 = vld [vmem:[%s6 + $0x10] sm:$0xff]
  %v155 = vld [vmem:[%s6 + $0x18] sm:$0xff]
  %v156 = vmul.f32 %v140, 0.59460354
  %v157 = vmul.f32 %v145, 0.59460354
  %v159 = vsel %vm66, %v156, 0
  %v162 = vsel %vm66, %v157, 0
  %164 = vmatprep.subr.mxu0 0.0
  %165 = vmatpush1.msra.mxu0 %v148
  %166 = vmatprep.subr.mxu0 0.0
  %167 = vmatpush1.msra.mxu0 %v149
  %168 = vmatprep.subr.mxu0 0.0
  %169 = vmatpush1.msra.mxu0 %v150
  %170 = vmatprep.subr.mxu0 0.0
  %171 = vmatpush1.msra.mxu0 %v151
  %172 = vmatprep.subr.mxu0 0.0
  %173 = vmatpush1.msra.mxu0 0.0
  %174 = vmatprep.subr.mxu0 0.0
  %175 = vmatpush1.msra.mxu0 0.0
  %176 = vmatprep.subr.mxu0 0.0
  %177 = vmatpush1.msra.mxu0 0.0
  %178 = vmatprep.subr.mxu0 0.0
  %179 = vmatpush1.msra.mxu0 0.0
  %180 = vmatprep.subr.mxu0 0.0
  %181 = vmatpush1.msra.mxu0 0.0
  %182 = vmatprep.subr.mxu0 0.0
  %183 = vmatpush1.msra.mxu0 0.0
  %184 = vmatprep.subr.mxu0 0.0
  %185 = vmatpush1.msra.mxu0 0.0
  %186 = vmatprep.subr.mxu0 0.0
  %187 = vmatpush1.msra.mxu0 0.0
  %188 = vmatprep.subr.mxu0 0.0
  %189 = vmatpush1.msra.mxu0 0.0
  %190 = vmatprep.subr.mxu0 0.0
  %191 = vmatpush1.msra.mxu0 0.0
  %192 = vmatprep.subr.mxu0 0.0
  %193 = vmatpush1.msra.mxu0 0.0
  %194 = vmatprep.subr.mxu0 0.0
  %195 = vmatpush1.msra.mxu0 0.0
  %196 = vmatprep.subr.mxu0 0.0
  %197 = vmatpush1.msra.mxu0 0.0
  %198 = vmatprep.subr.mxu0 0.0
  %199 = vmatpush1.msra.mxu0 0.0
  %200 = vmatprep.subr.mxu0 0.0
  %201 = vmatpush1.msra.mxu0 0.0
  %202 = vmatprep.subr.mxu0 0.0
  %203 = vmatpush1.msra.mxu0 0.0
  %204 = vmatprep.subr.mxu0 0.0
  %205 = vmatpush1.msra.mxu0 0.0
  %206 = vmatprep.subr.mxu0 0.0
  %207 = vmatpush1.msra.mxu0 0.0
  %208 = vmatprep.subr.mxu0 0.0
  %209 = vmatpush1.msra.mxu0 0.0
  %210 = vmatprep.subr.mxu0 0.0
  %211 = vmatpush1.msra.mxu0 0.0
  %212 = vmatprep.subr.mxu0 0.0
  %213 = vmatpush1.msra.mxu0 0.0
  %214 = vmatprep.subr.mxu0 0.0
  %215 = vmatpush1.msra.mxu0 0.0
  %216 = vmatprep.subr.mxu0 0.0
  %217 = vmatpush1.msra.mxu0 0.0
  %218 = vmatprep.subr.mxu0 0.0
  %219 = vmatpush1.msra.mxu0 0.0
  %220 = vmatprep.subr.mxu0 0.0
  %221 = vmatpush1.msra.mxu0 0.0
  %222 = vmatprep.subr.mxu0 0.0
  %223 = vmatpush1.msra.mxu0 0.0
  %224 = vmatprep.subr.mxu0 0.0
  %225 = vmatpush1.msra.mxu0 0.0
  %226 = vmatprep.subr.mxu0 0.0
  %227 = vmatpush1.msra.mxu0 0.0
  %228 = vmatprep.mubr.f32.mxu0 0.0
  %229 = vmatmul.mubr.f32.gmra.mrb[0].mxu0 %v159
  %v230 = vpop.f32.mrb[0].mxu0
  %v231 = vadd.f32 0.0, %v230
  %v232 = vpop.f32.mrb[0].mxu0
  %233 = vmatprep.mubr.f32.mxu0 0.0
  %234 = vmatmul.mubr.f32.gmra.mrb[0].mxu0 %v162
  %v235 = vpop.f32.mrb[0].mxu0
  %v236 = vadd.f32 0.0, %v235
  %v237 = vpop.f32.mrb[0].mxu0
  %238 = vdwg.mxu0
  %v239 = vmul.f32 %v156, %v156
  %v240 = vmul.f32 %v157, %v157
  %v242 = vsel %vm66, %v239, 0
  %v245 = vsel %vm66, %v240, 0
  %247 = vmatprep.subr.mxu0 0.0
  %248 = vmatpush1.msra.mxu0 %v152
  %249 = vmatprep.subr.mxu0 0.0
  %250 = vmatpush1.msra.mxu0 %v153
  %251 = vmatprep.subr.mxu0 0.0
  %252 = vmatpush1.msra.mxu0 %v154
  %253 = vmatprep.subr.mxu0 0.0
  %254 = vmatpush1.msra.mxu0 %v155
  %255 = vmatprep.subr.mxu0 0.0
  %256 = vmatpush1.msra.mxu0 0.0
  %257 = vmatprep.subr.mxu0 0.0
  %258 = vmatpush1.msra.mxu0 0.0
  %259 = vmatprep.subr.mxu0 0.0
  %260 = vmatpush1.msra.mxu0 0.0
  %261 = vmatprep.subr.mxu0 0.0
  %262 = vmatpush1.msra.mxu0 0.0
  %263 = vmatprep.subr.mxu0 0.0
  %264 = vmatpush1.msra.mxu0 0.0
  %265 = vmatprep.subr.mxu0 0.0
  %266 = vmatpush1.msra.mxu0 0.0
  %267 = vmatprep.subr.mxu0 0.0
  %268 = vmatpush1.msra.mxu0 0.0
  %269 = vmatprep.subr.mxu0 0.0
  %270 = vmatpush1.msra.mxu0 0.0
  %271 = vmatprep.subr.mxu0 0.0
  %272 = vmatpush1.msra.mxu0 0.0
  %273 = vmatprep.subr.mxu0 0.0
  %274 = vmatpush1.msra.mxu0 0.0
  %275 = vmatprep.subr.mxu0 0.0
  %276 = vmatpush1.msra.mxu0 0.0
  %277 = vmatprep.subr.mxu0 0.0
  %278 = vmatpush1.msra.mxu0 0.0
  %279 = vmatprep.subr.mxu0 0.0
  %280 = vmatpush1.msra.mxu0 0.0
  %281 = vmatprep.subr.mxu0 0.0
  %282 = vmatpush1.msra.mxu0 0.0
  %283 = vmatprep.subr.mxu0 0.0
  %284 = vmatpush1.msra.mxu0 0.0
  %285 = vmatprep.subr.mxu0 0.0
  %286 = vmatpush1.msra.mxu0 0.0
  %287 = vmatprep.subr.mxu0 0.0
  %288 = vmatpush1.msra.mxu0 0.0
  %289 = vmatprep.subr.mxu0 0.0
  %290 = vmatpush1.msra.mxu0 0.0
  %291 = vmatprep.subr.mxu0 0.0
  %292 = vmatpush1.msra.mxu0 0.0
  %293 = vmatprep.subr.mxu0 0.0
  %294 = vmatpush1.msra.mxu0 0.0
  %295 = vmatprep.subr.mxu0 0.0
  %296 = vmatpush1.msra.mxu0 0.0
  %297 = vmatprep.subr.mxu0 0.0
  %298 = vmatpush1.msra.mxu0 0.0
  %299 = vmatprep.subr.mxu0 0.0
  %300 = vmatpush1.msra.mxu0 0.0
  %301 = vmatprep.subr.mxu0 0.0
  %302 = vmatpush1.msra.mxu0 0.0
  %303 = vmatprep.subr.mxu0 0.0
  %304 = vmatpush1.msra.mxu0 0.0
  %305 = vmatprep.subr.mxu0 0.0
  %306 = vmatpush1.msra.mxu0 0.0
  %307 = vmatprep.subr.mxu0 0.0
  %308 = vmatpush1.msra.mxu0 0.0
  %309 = vmatprep.subr.mxu0 0.0
  %310 = vmatpush1.msra.mxu0 0.0
  %311 = vmatprep.mubr.f32.mxu0 0.0
  %312 = vmatmul.mubr.f32.gmra.mrb[0].mxu0 %v242
  %v313 = vpop.f32.mrb[0].mxu0
  %v314 = vadd.f32 0.0, %v313
  %v315 = vpop.f32.mrb[0].mxu0
  %316 = vmatprep.mubr.f32.mxu0 0.0
  %317 = vmatmul.mubr.f32.gmra.mrb[0].mxu0 %v245
  %v318 = vpop.f32.mrb[0].mxu0
  %v319 = vadd.f32 0.0, %v318
  %v320 = vpop.f32.mrb[0].mxu0
  %321 = vdwg.mxu0
  %v322 = vmul.f32 %v314, 0.5
  %v323 = vmul.f32 %v319, 0.5
  %v324 = vsub.f32 %v231, %v322
  %v325 = vsub.f32 %v236, %v323
  %326 = vrot.lane.b32.xlu0 %v156, 96
  %v327 = vpop.permute.xlu0 %326
  %328 = vrot.lane.b32.xlu0 %v157, 96
  %v329 = vpop.permute.xlu0 %328
  %v330 = vsel %vm66, %v327, 0
  %v332 = vsel %vm66, %v329, 0
  %334 = vmatprep.subr.mxu0 0.0
  %335 = vmatpush1.msra.mxu0 %v148
  %336 = vmatprep.subr.mxu0 0.0
  %337 = vmatpush1.msra.mxu0 %v149
  %338 = vmatprep.subr.mxu0 0.0
  %339 = vmatpush1.msra.mxu0 %v150
  %340 = vmatprep.subr.mxu0 0.0
  %341 = vmatpush1.msra.mxu0 %v151
  %342 = vmatprep.subr.mxu0 0.0
  %343 = vmatpush1.msra.mxu0 0.0
  %344 = vmatprep.subr.mxu0 0.0
  %345 = vmatpush1.msra.mxu0 0.0
  %346 = vmatprep.subr.mxu0 0.0
  %347 = vmatpush1.msra.mxu0 0.0
  %348 = vmatprep.subr.mxu0 0.0
  %349 = vmatpush1.msra.mxu0 0.0
  %350 = vmatprep.subr.mxu0 0.0
  %351 = vmatpush1.msra.mxu0 0.0
  %352 = vmatprep.subr.mxu0 0.0
  %353 = vmatpush1.msra.mxu0 0.0
  %354 = vmatprep.subr.mxu0 0.0
  %355 = vmatpush1.msra.mxu0 0.0
  %356 = vmatprep.subr.mxu0 0.0
  %357 = vmatpush1.msra.mxu0 0.0
  %358 = vmatprep.subr.mxu0 0.0
  %359 = vmatpush1.msra.mxu0 0.0
  %360 = vmatprep.subr.mxu0 0.0
  %361 = vmatpush1.msra.mxu0 0.0
  %362 = vmatprep.subr.mxu0 0.0
  %363 = vmatpush1.msra.mxu0 0.0
  %364 = vmatprep.subr.mxu0 0.0
  %365 = vmatpush1.msra.mxu0 0.0
  %366 = vmatprep.subr.mxu0 0.0
  %367 = vmatpush1.msra.mxu0 0.0
  %368 = vmatprep.subr.mxu0 0.0
  %369 = vmatpush1.msra.mxu0 0.0
  %370 = vmatprep.subr.mxu0 0.0
  %371 = vmatpush1.msra.mxu0 0.0
  %372 = vmatprep.subr.mxu0 0.0
  %373 = vmatpush1.msra.mxu0 0.0
  %374 = vmatprep.subr.mxu0 0.0
  %375 = vmatpush1.msra.mxu0 0.0
  %376 = vmatprep.subr.mxu0 0.0
  %377 = vmatpush1.msra.mxu0 0.0
  %378 = vmatprep.subr.mxu0 0.0
  %379 = vmatpush1.msra.mxu0 0.0
  %380 = vmatprep.subr.mxu0 0.0
  %381 = vmatpush1.msra.mxu0 0.0
  %382 = vmatprep.subr.mxu0 0.0
  %383 = vmatpush1.msra.mxu0 0.0
  %384 = vmatprep.subr.mxu0 0.0
  %385 = vmatpush1.msra.mxu0 0.0
  %386 = vmatprep.subr.mxu0 0.0
  %387 = vmatpush1.msra.mxu0 0.0
  %388 = vmatprep.subr.mxu0 0.0
  %389 = vmatpush1.msra.mxu0 0.0
  %390 = vmatprep.subr.mxu0 0.0
  %391 = vmatpush1.msra.mxu0 0.0
  %392 = vmatprep.subr.mxu0 0.0
  %393 = vmatpush1.msra.mxu0 0.0
  %394 = vmatprep.subr.mxu0 0.0
  %395 = vmatpush1.msra.mxu0 0.0
  %396 = vmatprep.subr.mxu0 0.0
  %397 = vmatpush1.msra.mxu0 0.0
  %398 = vmatprep.mubr.f32.mxu0 0.0
  %399 = vmatmul.mubr.f32.gmra.mrb[0].mxu0 %v330
  %v400 = vpop.f32.mrb[0].mxu0
  %v401 = vadd.f32 0.0, %v400
  %v402 = vpop.f32.mrb[0].mxu0
  %403 = vmatprep.mubr.f32.mxu0 0.0
  %404 = vmatmul.mubr.f32.gmra.mrb[0].mxu0 %v332
  %v405 = vpop.f32.mrb[0].mxu0
  %v406 = vadd.f32 0.0, %v405
  %v407 = vpop.f32.mrb[0].mxu0
  %408 = vdwg.mxu0
  %409 = vrot.lane.b32.xlu0 %v239, 96
  %v410 = vpop.permute.xlu0 %409
  %411 = vrot.lane.b32.xlu0 %v240, 96
  %v412 = vpop.permute.xlu0 %411
  %v413 = vsel %vm66, %v410, 0
  %v415 = vsel %vm66, %v412, 0
  %417 = vmatprep.subr.mxu0 0.0
  %418 = vmatpush1.msra.mxu0 %v152
  %419 = vmatprep.subr.mxu0 0.0
  %420 = vmatpush1.msra.mxu0 %v153
  %421 = vmatprep.subr.mxu0 0.0
  %422 = vmatpush1.msra.mxu0 %v154
  %423 = vmatprep.subr.mxu0 0.0
  %424 = vmatpush1.msra.mxu0 %v155
  %425 = vmatprep.subr.mxu0 0.0
  %426 = vmatpush1.msra.mxu0 0.0
  %427 = vmatprep.subr.mxu0 0.0
  %428 = vmatpush1.msra.mxu0 0.0
  %429 = vmatprep.subr.mxu0 0.0
  %430 = vmatpush1.msra.mxu0 0.0
  %431 = vmatprep.subr.mxu0 0.0
  %432 = vmatpush1.msra.mxu0 0.0
  %433 = vmatprep.subr.mxu0 0.0
  %434 = vmatpush1.msra.mxu0 0.0
  %435 = vmatprep.subr.mxu0 0.0
  %436 = vmatpush1.msra.mxu0 0.0
  %437 = vmatprep.subr.mxu0 0.0
  %438 = vmatpush1.msra.mxu0 0.0
  %439 = vmatprep.subr.mxu0 0.0
  %440 = vmatpush1.msra.mxu0 0.0
  %441 = vmatprep.subr.mxu0 0.0
  %442 = vmatpush1.msra.mxu0 0.0
  %443 = vmatprep.subr.mxu0 0.0
  %444 = vmatpush1.msra.mxu0 0.0
  %445 = vmatprep.subr.mxu0 0.0
  %446 = vmatpush1.msra.mxu0 0.0
  %447 = vmatprep.subr.mxu0 0.0
  %448 = vmatpush1.msra.mxu0 0.0
  %449 = vmatprep.subr.mxu0 0.0
  %450 = vmatpush1.msra.mxu0 0.0
  %451 = vmatprep.subr.mxu0 0.0
  %452 = vmatpush1.msra.mxu0 0.0
  %453 = vmatprep.subr.mxu0 0.0
  %454 = vmatpush1.msra.mxu0 0.0
  %455 = vmatprep.subr.mxu0 0.0
  %456 = vmatpush1.msra.mxu0 0.0
  %457 = vmatprep.subr.mxu0 0.0
  %458 = vmatpush1.msra.mxu0 0.0
  %459 = vmatprep.subr.mxu0 0.0
  %460 = vmatpush1.msra.mxu0 0.0
  %461 = vmatprep.subr.mxu0 0.0
  %462 = vmatpush1.msra.mxu0 0.0
  %463 = vmatprep.subr.mxu0 0.0
  %464 = vmatpush1.msra.mxu0 0.0
  %465 = vmatprep.subr.mxu0 0.0
  %466 = vmatpush1.msra.mxu0 0.0
  %467 = vmatprep.subr.mxu0 0.0
  %468 = vmatpush1.msra.mxu0 0.0
  %469 = vmatprep.subr.mxu0 0.0
  %470 = vmatpush1.msra.mxu0 0.0
  %471 = vmatprep.subr.mxu0 0.0
  %472 = vmatpush1.msra.mxu0 0.0
  %473 = vmatprep.subr.mxu0 0.0
  %474 = vmatpush1.msra.mxu0 0.0
  %475 = vmatprep.subr.mxu0 0.0
  %476 = vmatpush1.msra.mxu0 0.0
  %477 = vmatprep.subr.mxu0 0.0
  %478 = vmatpush1.msra.mxu0 0.0
  %479 = vmatprep.subr.mxu0 0.0
  %480 = vmatpush1.msra.mxu0 0.0
  %481 = vmatprep.mubr.f32.mxu0 0.0
  %482 = vmatmul.mubr.f32.gmra.mrb[0].mxu0 %v413
  %v483 = vpop.f32.mrb[0].mxu0
  %v484 = vadd.f32 0.0, %v483
  %v485 = vpop.f32.mrb[0].mxu0
  %486 = vmatprep.mubr.f32.mxu0 0.0
  %487 = vmatmul.mubr.f32.gmra.mrb[0].mxu0 %v415
  %v488 = vpop.f32.mrb[0].mxu0
  %v489 = vadd.f32 0.0, %v488
  %v490 = vpop.f32.mrb[0].mxu0
  %491 = vdwg.mxu0
  %v492 = vmul.f32 %v484, 0.5
  %v493 = vmul.f32 %v489, 0.5
  %v494 = vsub.f32 %v401, %v492
  %v495 = vsub.f32 %v406, %v493
  %vm496 = vcmask 523264
  %v497 = vsel %vm496, %v324, -inf
  %498 = vmax.xlane.f32.xlu0 %v497
  %v499 = vpop.xlane.xlu0 %498
  %v500 = vsel %vm496, %v325, -inf
  %501 = vmax.xlane.f32.xlu0 %v500
  %v502 = vpop.xlane.xlu0 %501
  %v503 = vsel %vm496, %v494, -inf
  %504 = vmax.xlane.f32.xlu0 %v503
  %v505 = vpop.xlane.xlu0 %504
  %v506 = vsel %vm496, %v495, -inf
  %507 = vmax.xlane.f32.xlu0 %v506
  %v508 = vpop.xlane.xlu0 %507
  %v509 = vmax.f32 %v505, %v508
  %v510 = vrot.slane %v509, 4
  %v511 = vmax.f32 %v509, %v510
  %v512 = vrot.slane %v511, 2
  %v513 = vmax.f32 %v511, %v512
  %v514 = vrot.slane %v513, 1
  %v515 = vmax.f32 %v513, %v514
  %v516 = vsub.f32 %v324, %v499
  %v517 = vsub.f32 %v325, %v502
  %v518 = vmul.f32 %v516, 1.442695
  %v519 = vpow.pop %v518
  %v520 = vmul.f32 %v517, 1.442695
  %v521 = vpow.pop %v520
  %v522 = vmul.f32 %v519, 0.25
  %v523 = vmul.f32 %v521, 0.25
  %v524 = vsub.f32 %v494, %v515
  %v525 = vsub.f32 %v495, %v515
  %v526 = vmul.f32 %v524, 1.442695
  %v527 = vpow.pop %v526
  %v528 = vmul.f32 %v525, 1.442695
  %v529 = vpow.pop %v528
  %v530 = vmul.f32 %v527, 0.25
  %v531 = vmul.f32 %v529, 0.25
  %v532 = vld [vmem:[%s7] sm:$0xff]
  %v533 = vld [vmem:[%s7 + $0x8] sm:$0xff]
  %v534 = vld [vmem:[%s3] sm:$0xff]
  %v535 = vld [vmem:[%s3 + $0x8] sm:$0xff]
  %v536 = vld [vmem:[%s3 + $0x10] sm:$0xff]
  %v537 = vld [vmem:[%s3 + $0x18] sm:$0xff]
  %vm538 = vcmask 130048
  %v540 = vsel %vm538, %v522, 0
  %v543 = vsel %vm538, %v523, 0
  %v546 = vsel %vm538, %v530, 0
  %v549 = vsel %vm538, %v531, 0
  %551 = vmatprep.subr.mxu0 0.0
  %552 = vmatpush1.xpose.msra.mxu0 %v546
  %553 = vmatprep.subr.mxu0 0.0
  %554 = vmatpush1.xpose.msra.mxu0 %v549
  %555 = vmatprep.subr.mxu0 0.0
  %556 = vmatpush1.xpose.msra.mxu0 0.0
  %557 = vmatprep.subr.mxu0 0.0
  %558 = vmatpush1.xpose.msra.mxu0 0.0
  %559 = vmatprep.subr.mxu0 0.0
  %560 = vmatpush1.xpose.msra.mxu0 0.0
  %561 = vmatprep.subr.mxu0 0.0
  %562 = vmatpush1.xpose.msra.mxu0 0.0
  %563 = vmatprep.subr.mxu0 0.0
  %564 = vmatpush1.xpose.msra.mxu0 0.0
  %565 = vmatprep.subr.mxu0 0.0
  %566 = vmatpush1.xpose.msra.mxu0 0.0
  %567 = vmatprep.subr.mxu0 0.0
  %568 = vmatpush1.xpose.msra.mxu0 0.0
  %569 = vmatprep.subr.mxu0 0.0
  %570 = vmatpush1.xpose.msra.mxu0 0.0
  %571 = vmatprep.subr.mxu0 0.0
  %572 = vmatpush1.xpose.msra.mxu0 0.0
  %573 = vmatprep.subr.mxu0 0.0
  %574 = vmatpush1.xpose.msra.mxu0 0.0
  %575 = vmatprep.subr.mxu0 0.0
  %576 = vmatpush1.xpose.msra.mxu0 0.0
  %577 = vmatprep.subr.mxu0 0.0
  %578 = vmatpush1.xpose.msra.mxu0 0.0
  %579 = vmatprep.subr.mxu0 0.0
  %580 = vmatpush1.xpose.msra.mxu0 0.0
  %581 = vmatprep.subr.mxu0 0.0
  %582 = vmatpush1.xpose.msra.mxu0 0.0
  %583 = vmatprep.subr.mxu0 0.0
  %584 = vmatpush1.xpose.msra.mxu0 0.0
  %585 = vmatprep.subr.mxu0 0.0
  %586 = vmatpush1.xpose.msra.mxu0 0.0
  %587 = vmatprep.subr.mxu0 0.0
  %588 = vmatpush1.xpose.msra.mxu0 0.0
  %589 = vmatprep.subr.mxu0 0.0
  %590 = vmatpush1.xpose.msra.mxu0 0.0
  %591 = vmatprep.subr.mxu0 0.0
  %592 = vmatpush1.xpose.msra.mxu0 0.0
  %593 = vmatprep.subr.mxu0 0.0
  %594 = vmatpush1.xpose.msra.mxu0 0.0
  %595 = vmatprep.subr.mxu0 0.0
  %596 = vmatpush1.xpose.msra.mxu0 0.0
  %597 = vmatprep.subr.mxu0 0.0
  %598 = vmatpush1.xpose.msra.mxu0 0.0
  %599 = vmatprep.subr.mxu0 0.0
  %600 = vmatpush1.xpose.msra.mxu0 0.0
  %601 = vmatprep.subr.mxu0 0.0
  %602 = vmatpush1.xpose.msra.mxu0 0.0
  %603 = vmatprep.subr.mxu0 0.0
  %604 = vmatpush1.xpose.msra.mxu0 0.0
  %605 = vmatprep.subr.mxu0 0.0
  %606 = vmatpush1.xpose.msra.mxu0 0.0
  %607 = vmatprep.subr.mxu0 0.0
  %608 = vmatpush1.xpose.msra.mxu0 0.0
  %609 = vmatprep.subr.mxu0 0.0
  %610 = vmatpush1.xpose.msra.mxu0 0.0
  %611 = vmatprep.subr.mxu0 0.0
  %612 = vmatpush1.xpose.msra.mxu0 0.0
  %613 = vmatprep.subr.mxu0 0.0
  %614 = vmatpush1.xpose.msra.mxu0 0.0
  %615 = vmatprep.mubr.f32.mxu0 0.0
  %616 = vmatmul.mubr.f32.gmra.mrb[0].mxu0 %v540
  %v617 = vpop.f32.mrb[0].mxu0
  %v618 = vadd.f32 0.0, %v617
  %v619 = vpop.f32.mrb[0].mxu0
  %620 = vmatprep.mubr.f32.mxu0 0.0
  %621 = vmatmul.mubr.f32.gmra.mrb[0].mxu0 %v543
  %v622 = vpop.f32.mrb[0].mxu0
  %v623 = vadd.f32 0.0, %v622
  %v624 = vpop.f32.mrb[0].mxu0
  %625 = vdwg.mxu0
  %v626 = vmul.f32 %v618, %v532
  %v627 = vmul.f32 %v623, %v533
  %630 = vrot.lane.b32.xlu0 %v140, 64
  %v631 = vpop.permute.xlu0 %630
  %632 = vrot.lane.b32.xlu0 %v145, 64
  %v633 = vpop.permute.xlu0 %632
  %v637 = vsel %vm538, %v626, 0
  %v640 = vsel %vm538, %v627, 0
  %642 = vmatprep.subr.mxu0 0.0
  %643 = vmatpush1.msra.mxu0 %v631
  %644 = vmatprep.subr.mxu0 0.0
  %645 = vmatpush1.msra.mxu0 %v633
  %646 = vmatprep.subr.mxu0 0.0
  %647 = vmatpush1.msra.mxu0 0.0
  %648 = vmatprep.subr.mxu0 0.0
  %649 = vmatpush1.msra.mxu0 0.0
  %650 = vmatprep.subr.mxu0 0.0
  %651 = vmatpush1.msra.mxu0 0.0
  %652 = vmatprep.subr.mxu0 0.0
  %653 = vmatpush1.msra.mxu0 0.0
  %654 = vmatprep.subr.mxu0 0.0
  %655 = vmatpush1.msra.mxu0 0.0
  %656 = vmatprep.subr.mxu0 0.0
  %657 = vmatpush1.msra.mxu0 0.0
  %658 = vmatprep.subr.mxu0 0.0
  %659 = vmatpush1.msra.mxu0 0.0
  %660 = vmatprep.subr.mxu0 0.0
  %661 = vmatpush1.msra.mxu0 0.0
  %662 = vmatprep.subr.mxu0 0.0
  %663 = vmatpush1.msra.mxu0 0.0
  %664 = vmatprep.subr.mxu0 0.0
  %665 = vmatpush1.msra.mxu0 0.0
  %666 = vmatprep.subr.mxu0 0.0
  %667 = vmatpush1.msra.mxu0 0.0
  %668 = vmatprep.subr.mxu0 0.0
  %669 = vmatpush1.msra.mxu0 0.0
  %670 = vmatprep.subr.mxu0 0.0
  %671 = vmatpush1.msra.mxu0 0.0
  %672 = vmatprep.subr.mxu0 0.0
  %673 = vmatpush1.msra.mxu0 0.0
  %674 = vmatprep.subr.mxu0 0.0
  %675 = vmatpush1.msra.mxu0 0.0
  %676 = vmatprep.subr.mxu0 0.0
  %677 = vmatpush1.msra.mxu0 0.0
  %678 = vmatprep.subr.mxu0 0.0
  %679 = vmatpush1.msra.mxu0 0.0
  %680 = vmatprep.subr.mxu0 0.0
  %681 = vmatpush1.msra.mxu0 0.0
  %682 = vmatprep.subr.mxu0 0.0
  %683 = vmatpush1.msra.mxu0 0.0
  %684 = vmatprep.subr.mxu0 0.0
  %685 = vmatpush1.msra.mxu0 0.0
  %686 = vmatprep.subr.mxu0 0.0
  %687 = vmatpush1.msra.mxu0 0.0
  %688 = vmatprep.subr.mxu0 0.0
  %689 = vmatpush1.msra.mxu0 0.0
  %690 = vmatprep.subr.mxu0 0.0
  %691 = vmatpush1.msra.mxu0 0.0
  %692 = vmatprep.subr.mxu0 0.0
  %693 = vmatpush1.msra.mxu0 0.0
  %694 = vmatprep.subr.mxu0 0.0
  %695 = vmatpush1.msra.mxu0 0.0
  %696 = vmatprep.subr.mxu0 0.0
  %697 = vmatpush1.msra.mxu0 0.0
  %698 = vmatprep.subr.mxu0 0.0
  %699 = vmatpush1.msra.mxu0 0.0
  %700 = vmatprep.subr.mxu0 0.0
  %701 = vmatpush1.msra.mxu0 0.0
  %702 = vmatprep.subr.mxu0 0.0
  %703 = vmatpush1.msra.mxu0 0.0
  %704 = vmatprep.subr.mxu0 0.0
  %705 = vmatpush1.msra.mxu0 0.0
  %706 = vmatprep.mubr.f32.mxu0 0.0
  %707 = vmatmul.mubr.f32.gmra.mrb[0].mxu0 %v637
  %v708 = vpop.f32.mrb[0].mxu0
  %v709 = vadd.f32 0.0, %v708
  %v710 = vpop.f32.mrb[0].mxu0
  %711 = vmatprep.mubr.f32.mxu0 0.0
  %712 = vmatmul.mubr.f32.gmra.mrb[0].mxu0 %v640
  %v713 = vpop.f32.mrb[0].mxu0
  %v714 = vadd.f32 0.0, %v713
  %v715 = vpop.f32.mrb[0].mxu0
  %716 = vdwg.mxu0
  %v717 = vsel %vm538, %v626, 0.0
  %718 = vadd.xlane.f32.xlu0 %v717
  %v719 = vpop.xlane.xlu0 %718
  %v720 = vsel %vm538, %v627, 0.0
  %721 = vadd.xlane.f32.xlu0 %v720
  %v722 = vpop.xlane.xlu0 %721
  %v723 = vadd.f32 %v719, 1e-06
  %v724 = vadd.f32 %v722, 1e-06
  %v725 = vrcp.pop %v723
  %v726 = vrcp.pop %v724
  %v727 = vmul.f32 %v709, %v725
  %v728 = vmul.f32 %v714, %v726
  %729 = vrot.lane.b32.xlu0 %v522, 112
  %v730 = vpop.permute.xlu0 %729
  %731 = vrot.lane.b32.xlu0 %v523, 112
  %v732 = vpop.permute.xlu0 %731
  %733 = vrot.lane.b32.xlu0 %v530, 112
  %v734 = vpop.permute.xlu0 %733
  %735 = vrot.lane.b32.xlu0 %v531, 112
  %v736 = vpop.permute.xlu0 %735
  %v737 = vsel %vm538, %v730, 0
  %v739 = vsel %vm538, %v732, 0
  %v741 = vsel %vm538, %v734, 0
  %v743 = vsel %vm538, %v736, 0
  %745 = vmatprep.subr.mxu0 0.0
  %746 = vmatpush1.xpose.msra.mxu0 %v741
  %747 = vmatprep.subr.mxu0 0.0
  %748 = vmatpush1.xpose.msra.mxu0 %v743
  %749 = vmatprep.subr.mxu0 0.0
  %750 = vmatpush1.xpose.msra.mxu0 0.0
  %751 = vmatprep.subr.mxu0 0.0
  %752 = vmatpush1.xpose.msra.mxu0 0.0
  %753 = vmatprep.subr.mxu0 0.0
  %754 = vmatpush1.xpose.msra.mxu0 0.0
  %755 = vmatprep.subr.mxu0 0.0
  %756 = vmatpush1.xpose.msra.mxu0 0.0
  %757 = vmatprep.subr.mxu0 0.0
  %758 = vmatpush1.xpose.msra.mxu0 0.0
  %759 = vmatprep.subr.mxu0 0.0
  %760 = vmatpush1.xpose.msra.mxu0 0.0
  %761 = vmatprep.subr.mxu0 0.0
  %762 = vmatpush1.xpose.msra.mxu0 0.0
  %763 = vmatprep.subr.mxu0 0.0
  %764 = vmatpush1.xpose.msra.mxu0 0.0
  %765 = vmatprep.subr.mxu0 0.0
  %766 = vmatpush1.xpose.msra.mxu0 0.0
  %767 = vmatprep.subr.mxu0 0.0
  %768 = vmatpush1.xpose.msra.mxu0 0.0
  %769 = vmatprep.subr.mxu0 0.0
  %770 = vmatpush1.xpose.msra.mxu0 0.0
  %771 = vmatprep.subr.mxu0 0.0
  %772 = vmatpush1.xpose.msra.mxu0 0.0
  %773 = vmatprep.subr.mxu0 0.0
  %774 = vmatpush1.xpose.msra.mxu0 0.0
  %775 = vmatprep.subr.mxu0 0.0
  %776 = vmatpush1.xpose.msra.mxu0 0.0
  %777 = vmatprep.subr.mxu0 0.0
  %778 = vmatpush1.xpose.msra.mxu0 0.0
  %779 = vmatprep.subr.mxu0 0.0
  %780 = vmatpush1.xpose.msra.mxu0 0.0
  %781 = vmatprep.subr.mxu0 0.0
  %782 = vmatpush1.xpose.msra.mxu0 0.0
  %783 = vmatprep.subr.mxu0 0.0
  %784 = vmatpush1.xpose.msra.mxu0 0.0
  %785 = vmatprep.subr.mxu0 0.0
  %786 = vmatpush1.xpose.msra.mxu0 0.0
  %787 = vmatprep.subr.mxu0 0.0
  %788 = vmatpush1.xpose.msra.mxu0 0.0
  %789 = vmatprep.subr.mxu0 0.0
  %790 = vmatpush1.xpose.msra.mxu0 0.0
  %791 = vmatprep.subr.mxu0 0.0
  %792 = vmatpush1.xpose.msra.mxu0 0.0
  %793 = vmatprep.subr.mxu0 0.0
  %794 = vmatpush1.xpose.msra.mxu0 0.0
  %795 = vmatprep.subr.mxu0 0.0
  %796 = vmatpush1.xpose.msra.mxu0 0.0
  %797 = vmatprep.subr.mxu0 0.0
  %798 = vmatpush1.xpose.msra.mxu0 0.0
  %799 = vmatprep.subr.mxu0 0.0
  %800 = vmatpush1.xpose.msra.mxu0 0.0
  %801 = vmatprep.subr.mxu0 0.0
  %802 = vmatpush1.xpose.msra.mxu0 0.0
  %803 = vmatprep.subr.mxu0 0.0
  %804 = vmatpush1.xpose.msra.mxu0 0.0
  %805 = vmatprep.subr.mxu0 0.0
  %806 = vmatpush1.xpose.msra.mxu0 0.0
  %807 = vmatprep.subr.mxu0 0.0
  %808 = vmatpush1.xpose.msra.mxu0 0.0
  %809 = vmatprep.mubr.f32.mxu0 0.0
  %810 = vmatmul.mubr.f32.gmra.mrb[0].mxu0 %v737
  %v811 = vpop.f32.mrb[0].mxu0
  %v812 = vadd.f32 0.0, %v811
  %v813 = vpop.f32.mrb[0].mxu0
  %814 = vmatprep.mubr.f32.mxu0 0.0
  %815 = vmatmul.mubr.f32.gmra.mrb[0].mxu0 %v739
  %v816 = vpop.f32.mrb[0].mxu0
  %v817 = vadd.f32 0.0, %v816
  %v818 = vpop.f32.mrb[0].mxu0
  %819 = vdwg.mxu0
  %v820 = vmul.f32 %v812, %v532
  %v821 = vmul.f32 %v817, %v533
  %822 = vrot.lane.b32.xlu0 %v140, 56
  %v823 = vpop.permute.xlu0 %822
  %824 = vrot.lane.b32.xlu0 %v145, 56
  %v825 = vpop.permute.xlu0 %824
  %v829 = vsel %vm538, %v820, 0
  %v832 = vsel %vm538, %v821, 0
  %834 = vmatprep.subr.mxu0 0.0
  %835 = vmatpush1.msra.mxu0 %v823
  %836 = vmatprep.subr.mxu0 0.0
  %837 = vmatpush1.msra.mxu0 %v825
  %838 = vmatprep.subr.mxu0 0.0
  %839 = vmatpush1.msra.mxu0 0.0
  %840 = vmatprep.subr.mxu0 0.0
  %841 = vmatpush1.msra.mxu0 0.0
  %842 = vmatprep.subr.mxu0 0.0
  %843 = vmatpush1.msra.mxu0 0.0
  %844 = vmatprep.subr.mxu0 0.0
  %845 = vmatpush1.msra.mxu0 0.0
  %846 = vmatprep.subr.mxu0 0.0
  %847 = vmatpush1.msra.mxu0 0.0
  %848 = vmatprep.subr.mxu0 0.0
  %849 = vmatpush1.msra.mxu0 0.0
  %850 = vmatprep.subr.mxu0 0.0
  %851 = vmatpush1.msra.mxu0 0.0
  %852 = vmatprep.subr.mxu0 0.0
  %853 = vmatpush1.msra.mxu0 0.0
  %854 = vmatprep.subr.mxu0 0.0
  %855 = vmatpush1.msra.mxu0 0.0
  %856 = vmatprep.subr.mxu0 0.0
  %857 = vmatpush1.msra.mxu0 0.0
  %858 = vmatprep.subr.mxu0 0.0
  %859 = vmatpush1.msra.mxu0 0.0
  %860 = vmatprep.subr.mxu0 0.0
  %861 = vmatpush1.msra.mxu0 0.0
  %862 = vmatprep.subr.mxu0 0.0
  %863 = vmatpush1.msra.mxu0 0.0
  %864 = vmatprep.subr.mxu0 0.0
  %865 = vmatpush1.msra.mxu0 0.0
  %866 = vmatprep.subr.mxu0 0.0
  %867 = vmatpush1.msra.mxu0 0.0
  %868 = vmatprep.subr.mxu0 0.0
  %869 = vmatpush1.msra.mxu0 0.0
  %870 = vmatprep.subr.mxu0 0.0
  %871 = vmatpush1.msra.mxu0 0.0
  %872 = vmatprep.subr.mxu0 0.0
  %873 = vmatpush1.msra.mxu0 0.0
  %874 = vmatprep.subr.mxu0 0.0
  %875 = vmatpush1.msra.mxu0 0.0
  %876 = vmatprep.subr.mxu0 0.0
  %877 = vmatpush1.msra.mxu0 0.0
  %878 = vmatprep.subr.mxu0 0.0
  %879 = vmatpush1.msra.mxu0 0.0
  %880 = vmatprep.subr.mxu0 0.0
  %881 = vmatpush1.msra.mxu0 0.0
  %882 = vmatprep.subr.mxu0 0.0
  %883 = vmatpush1.msra.mxu0 0.0
  %884 = vmatprep.subr.mxu0 0.0
  %885 = vmatpush1.msra.mxu0 0.0
  %886 = vmatprep.subr.mxu0 0.0
  %887 = vmatpush1.msra.mxu0 0.0
  %888 = vmatprep.subr.mxu0 0.0
  %889 = vmatpush1.msra.mxu0 0.0
  %890 = vmatprep.subr.mxu0 0.0
  %891 = vmatpush1.msra.mxu0 0.0
  %892 = vmatprep.subr.mxu0 0.0
  %893 = vmatpush1.msra.mxu0 0.0
  %894 = vmatprep.subr.mxu0 0.0
  %895 = vmatpush1.msra.mxu0 0.0
  %896 = vmatprep.subr.mxu0 0.0
  %897 = vmatpush1.msra.mxu0 0.0
  %898 = vmatprep.mubr.f32.mxu0 0.0
  %899 = vmatmul.mubr.f32.gmra.mrb[0].mxu0 %v829
  %v900 = vpop.f32.mrb[0].mxu0
  %v901 = vadd.f32 0.0, %v900
  %v902 = vpop.f32.mrb[0].mxu0
  %903 = vmatprep.mubr.f32.mxu0 0.0
  %904 = vmatmul.mubr.f32.gmra.mrb[0].mxu0 %v832
  %v905 = vpop.f32.mrb[0].mxu0
  %v906 = vadd.f32 0.0, %v905
  %v907 = vpop.f32.mrb[0].mxu0
  %908 = vdwg.mxu0
  %v909 = vsel %vm538, %v820, 0.0
  %910 = vadd.xlane.f32.xlu0 %v909
  %v911 = vpop.xlane.xlu0 %910
  %v912 = vsel %vm538, %v821, 0.0
  %913 = vadd.xlane.f32.xlu0 %v912
  %v914 = vpop.xlane.xlu0 %913
  %v915 = vadd.f32 %v911, 1e-06
  %v916 = vadd.f32 %v914, 1e-06
  %v917 = vrcp.pop %v915
  %v918 = vrcp.pop %v916
  %v919 = vmul.f32 %v901, %v917
  %v920 = vmul.f32 %v906, %v918
  %vm921 = vcmask 64512
  %v923 = vsel %vm921, %v919, 0
  %v926 = vsel %vm921, %v920, 0
  %928 = vmatprep.subr.mxu0 0.0
  %929 = vmatpush1.msra.mxu0 %v535
  %930 = vmatprep.subr.mxu0 0.0
  %931 = vmatpush1.msra.mxu0 0.0
  %932 = vmatprep.subr.mxu0 0.0
  %933 = vmatpush1.msra.mxu0 0.0
  %934 = vmatprep.subr.mxu0 0.0
  %935 = vmatpush1.msra.mxu0 0.0
  %936 = vmatprep.subr.mxu0 0.0
  %937 = vmatpush1.msra.mxu0 0.0
  %938 = vmatprep.subr.mxu0 0.0
  %939 = vmatpush1.msra.mxu0 0.0
  %940 = vmatprep.subr.mxu0 0.0
  %941 = vmatpush1.msra.mxu0 0.0
  %942 = vmatprep.subr.mxu0 0.0
  %943 = vmatpush1.msra.mxu0 0.0
  %944 = vmatprep.subr.mxu0 0.0
  %945 = vmatpush1.msra.mxu0 0.0
  %946 = vmatprep.subr.mxu0 0.0
  %947 = vmatpush1.msra.mxu0 0.0
  %948 = vmatprep.subr.mxu0 0.0
  %949 = vmatpush1.msra.mxu0 0.0
  %950 = vmatprep.subr.mxu0 0.0
  %951 = vmatpush1.msra.mxu0 0.0
  %952 = vmatprep.subr.mxu0 0.0
  %953 = vmatpush1.msra.mxu0 0.0
  %954 = vmatprep.subr.mxu0 0.0
  %955 = vmatpush1.msra.mxu0 0.0
  %956 = vmatprep.subr.mxu0 0.0
  %957 = vmatpush1.msra.mxu0 0.0
  %958 = vmatprep.subr.mxu0 0.0
  %959 = vmatpush1.msra.mxu0 0.0
  %960 = vmatprep.subr.mxu0 0.0
  %961 = vmatpush1.msra.mxu0 0.0
  %962 = vmatprep.subr.mxu0 0.0
  %963 = vmatpush1.msra.mxu0 0.0
  %964 = vmatprep.subr.mxu0 0.0
  %965 = vmatpush1.msra.mxu0 0.0
  %966 = vmatprep.subr.mxu0 0.0
  %967 = vmatpush1.msra.mxu0 0.0
  %968 = vmatprep.subr.mxu0 0.0
  %969 = vmatpush1.msra.mxu0 0.0
  %970 = vmatprep.subr.mxu0 0.0
  %971 = vmatpush1.msra.mxu0 0.0
  %972 = vmatprep.subr.mxu0 0.0
  %973 = vmatpush1.msra.mxu0 0.0
  %974 = vmatprep.subr.mxu0 0.0
  %975 = vmatpush1.msra.mxu0 0.0
  %976 = vmatprep.subr.mxu0 0.0
  %977 = vmatpush1.msra.mxu0 0.0
  %978 = vmatprep.subr.mxu0 0.0
  %979 = vmatpush1.msra.mxu0 0.0
  %980 = vmatprep.subr.mxu0 0.0
  %981 = vmatpush1.msra.mxu0 0.0
  %982 = vmatprep.subr.mxu0 0.0
  %983 = vmatpush1.msra.mxu0 0.0
  %984 = vmatprep.subr.mxu0 0.0
  %985 = vmatpush1.msra.mxu0 0.0
  %986 = vmatprep.subr.mxu0 0.0
  %987 = vmatpush1.msra.mxu0 0.0
  %988 = vmatprep.subr.mxu0 0.0
  %989 = vmatpush1.msra.mxu0 0.0
  %990 = vmatprep.subr.mxu0 0.0
  %991 = vmatpush1.msra.mxu0 0.0
  %992 = vmatprep.mubr.f32.mxu0 0.0
  %993 = vmatmul.mubr.f32.gmra.mrb[0].mxu0 %v923
  %v994 = vpop.f32.mrb[0].mxu0
  %v995 = vadd.f32 0.0, %v994
  %v996 = vpop.f32.mrb[0].mxu0
  %997 = vmatprep.mubr.f32.mxu0 0.0
  %998 = vmatmul.mubr.f32.gmra.mrb[0].mxu0 %v926
  %v999 = vpop.f32.mrb[0].mxu0
  %v1000 = vadd.f32 0.0, %v999
  %v1001 = vpop.f32.mrb[0].mxu0
  %1002 = vdwg.mxu0
  %v1004 = vsel %vm921, %v727, 0
  %v1007 = vsel %vm921, %v728, 0
  %1009 = vmatprep.subr.mxu0 0.0
  %1010 = vmatpush1.msra.mxu0 %v534
  %1011 = vmatprep.subr.mxu0 0.0
  %1012 = vmatpush1.msra.mxu0 0.0
  %1013 = vmatprep.subr.mxu0 0.0
  %1014 = vmatpush1.msra.mxu0 0.0
  %1015 = vmatprep.subr.mxu0 0.0
  %1016 = vmatpush1.msra.mxu0 0.0
  %1017 = vmatprep.subr.mxu0 0.0
  %1018 = vmatpush1.msra.mxu0 0.0
  %1019 = vmatprep.subr.mxu0 0.0
  %1020 = vmatpush1.msra.mxu0 0.0
  %1021 = vmatprep.subr.mxu0 0.0
  %1022 = vmatpush1.msra.mxu0 0.0
  %1023 = vmatprep.subr.mxu0 0.0
  %1024 = vmatpush1.msra.mxu0 0.0
  %1025 = vmatprep.subr.mxu0 0.0
  %1026 = vmatpush1.msra.mxu0 0.0
  %1027 = vmatprep.subr.mxu0 0.0
  %1028 = vmatpush1.msra.mxu0 0.0
  %1029 = vmatprep.subr.mxu0 0.0
  %1030 = vmatpush1.msra.mxu0 0.0
  %1031 = vmatprep.subr.mxu0 0.0
  %1032 = vmatpush1.msra.mxu0 0.0
  %1033 = vmatprep.subr.mxu0 0.0
  %1034 = vmatpush1.msra.mxu0 0.0
  %1035 = vmatprep.subr.mxu0 0.0
  %1036 = vmatpush1.msra.mxu0 0.0
  %1037 = vmatprep.subr.mxu0 0.0
  %1038 = vmatpush1.msra.mxu0 0.0
  %1039 = vmatprep.subr.mxu0 0.0
  %1040 = vmatpush1.msra.mxu0 0.0
  %1041 = vmatprep.subr.mxu0 0.0
  %1042 = vmatpush1.msra.mxu0 0.0
  %1043 = vmatprep.subr.mxu0 0.0
  %1044 = vmatpush1.msra.mxu0 0.0
  %1045 = vmatprep.subr.mxu0 0.0
  %1046 = vmatpush1.msra.mxu0 0.0
  %1047 = vmatprep.subr.mxu0 0.0
  %1048 = vmatpush1.msra.mxu0 0.0
  %1049 = vmatprep.subr.mxu0 0.0
  %1050 = vmatpush1.msra.mxu0 0.0
  %1051 = vmatprep.subr.mxu0 0.0
  %1052 = vmatpush1.msra.mxu0 0.0
  %1053 = vmatprep.subr.mxu0 0.0
  %1054 = vmatpush1.msra.mxu0 0.0
  %1055 = vmatprep.subr.mxu0 0.0
  %1056 = vmatpush1.msra.mxu0 0.0
  %1057 = vmatprep.subr.mxu0 0.0
  %1058 = vmatpush1.msra.mxu0 0.0
  %1059 = vmatprep.subr.mxu0 0.0
  %1060 = vmatpush1.msra.mxu0 0.0
  %1061 = vmatprep.subr.mxu0 0.0
  %1062 = vmatpush1.msra.mxu0 0.0
  %1063 = vmatprep.subr.mxu0 0.0
  %1064 = vmatpush1.msra.mxu0 0.0
  %1065 = vmatprep.subr.mxu0 0.0
  %1066 = vmatpush1.msra.mxu0 0.0
  %1067 = vmatprep.subr.mxu0 0.0
  %1068 = vmatpush1.msra.mxu0 0.0
  %1069 = vmatprep.subr.mxu0 0.0
  %1070 = vmatpush1.msra.mxu0 0.0
  %1071 = vmatprep.subr.mxu0 0.0
  %1072 = vmatpush1.msra.mxu0 0.0
  %1073 = vmatprep.mubr.f32.mxu0 0.0
  %1074 = vmatmul.mubr.f32.gmra.mrb[0].mxu0 %v1004
  %v1075 = vpop.f32.mrb[0].mxu0
  %v1076 = vadd.f32 %v995, %v1075
  %v1077 = vpop.f32.mrb[0].mxu0
  %1078 = vmatprep.mubr.f32.mxu0 0.0
  %1079 = vmatmul.mubr.f32.gmra.mrb[0].mxu0 %v1007
  %v1080 = vpop.f32.mrb[0].mxu0
  %v1081 = vadd.f32 %v1000, %v1080
  %v1082 = vpop.f32.mrb[0].mxu0
  %1083 = vdwg.mxu0
  %1084 = vrot.lane.b32.xlu0 %v522, 96
  %v1085 = vpop.permute.xlu0 %1084
  %1086 = vrot.lane.b32.xlu0 %v523, 96
  %v1087 = vpop.permute.xlu0 %1086
  %1088 = vrot.lane.b32.xlu0 %v530, 96
  %v1089 = vpop.permute.xlu0 %1088
  %1090 = vrot.lane.b32.xlu0 %v531, 96
  %v1091 = vpop.permute.xlu0 %1090
  %v1092 = vsel %vm538, %v1085, 0
  %v1094 = vsel %vm538, %v1087, 0
  %v1096 = vsel %vm538, %v1089, 0
  %v1098 = vsel %vm538, %v1091, 0
  %1100 = vmatprep.subr.mxu0 0.0
  %1101 = vmatpush1.xpose.msra.mxu0 %v1096
  %1102 = vmatprep.subr.mxu0 0.0
  %1103 = vmatpush1.xpose.msra.mxu0 %v1098
  %1104 = vmatprep.subr.mxu0 0.0
  %1105 = vmatpush1.xpose.msra.mxu0 0.0
  %1106 = vmatprep.subr.mxu0 0.0
  %1107 = vmatpush1.xpose.msra.mxu0 0.0
  %1108 = vmatprep.subr.mxu0 0.0
  %1109 = vmatpush1.xpose.msra.mxu0 0.0
  %1110 = vmatprep.subr.mxu0 0.0
  %1111 = vmatpush1.xpose.msra.mxu0 0.0
  %1112 = vmatprep.subr.mxu0 0.0
  %1113 = vmatpush1.xpose.msra.mxu0 0.0
  %1114 = vmatprep.subr.mxu0 0.0
  %1115 = vmatpush1.xpose.msra.mxu0 0.0
  %1116 = vmatprep.subr.mxu0 0.0
  %1117 = vmatpush1.xpose.msra.mxu0 0.0
  %1118 = vmatprep.subr.mxu0 0.0
  %1119 = vmatpush1.xpose.msra.mxu0 0.0
  %1120 = vmatprep.subr.mxu0 0.0
  %1121 = vmatpush1.xpose.msra.mxu0 0.0
  %1122 = vmatprep.subr.mxu0 0.0
  %1123 = vmatpush1.xpose.msra.mxu0 0.0
  %1124 = vmatprep.subr.mxu0 0.0
  %1125 = vmatpush1.xpose.msra.mxu0 0.0
  %1126 = vmatprep.subr.mxu0 0.0
  %1127 = vmatpush1.xpose.msra.mxu0 0.0
  %1128 = vmatprep.subr.mxu0 0.0
  %1129 = vmatpush1.xpose.msra.mxu0 0.0
  %1130 = vmatprep.subr.mxu0 0.0
  %1131 = vmatpush1.xpose.msra.mxu0 0.0
  %1132 = vmatprep.subr.mxu0 0.0
  %1133 = vmatpush1.xpose.msra.mxu0 0.0
  %1134 = vmatprep.subr.mxu0 0.0
  %1135 = vmatpush1.xpose.msra.mxu0 0.0
  %1136 = vmatprep.subr.mxu0 0.0
  %1137 = vmatpush1.xpose.msra.mxu0 0.0
  %1138 = vmatprep.subr.mxu0 0.0
  %1139 = vmatpush1.xpose.msra.mxu0 0.0
  %1140 = vmatprep.subr.mxu0 0.0
  %1141 = vmatpush1.xpose.msra.mxu0 0.0
  %1142 = vmatprep.subr.mxu0 0.0
  %1143 = vmatpush1.xpose.msra.mxu0 0.0
  %1144 = vmatprep.subr.mxu0 0.0
  %1145 = vmatpush1.xpose.msra.mxu0 0.0
  %1146 = vmatprep.subr.mxu0 0.0
  %1147 = vmatpush1.xpose.msra.mxu0 0.0
  %1148 = vmatprep.subr.mxu0 0.0
  %1149 = vmatpush1.xpose.msra.mxu0 0.0
  %1150 = vmatprep.subr.mxu0 0.0
  %1151 = vmatpush1.xpose.msra.mxu0 0.0
  %1152 = vmatprep.subr.mxu0 0.0
  %1153 = vmatpush1.xpose.msra.mxu0 0.0
  %1154 = vmatprep.subr.mxu0 0.0
  %1155 = vmatpush1.xpose.msra.mxu0 0.0
  %1156 = vmatprep.subr.mxu0 0.0
  %1157 = vmatpush1.xpose.msra.mxu0 0.0
  %1158 = vmatprep.subr.mxu0 0.0
  %1159 = vmatpush1.xpose.msra.mxu0 0.0
  %1160 = vmatprep.subr.mxu0 0.0
  %1161 = vmatpush1.xpose.msra.mxu0 0.0
  %1162 = vmatprep.subr.mxu0 0.0
  %1163 = vmatpush1.xpose.msra.mxu0 0.0
  %1164 = vmatprep.mubr.f32.mxu0 0.0
  %1165 = vmatmul.mubr.f32.gmra.mrb[0].mxu0 %v1092
  %v1166 = vpop.f32.mrb[0].mxu0
  %v1167 = vadd.f32 0.0, %v1166
  %v1168 = vpop.f32.mrb[0].mxu0
  %1169 = vmatprep.mubr.f32.mxu0 0.0
  %1170 = vmatmul.mubr.f32.gmra.mrb[0].mxu0 %v1094
  %v1171 = vpop.f32.mrb[0].mxu0
  %v1172 = vadd.f32 0.0, %v1171
  %v1173 = vpop.f32.mrb[0].mxu0
  %1174 = vdwg.mxu0
  %v1175 = vmul.f32 %v1167, %v532
  %v1176 = vmul.f32 %v1172, %v533
  %1177 = vrot.lane.b32.xlu0 %v140, 48
  %v1178 = vpop.permute.xlu0 %1177
  %1179 = vrot.lane.b32.xlu0 %v145, 48
  %v1180 = vpop.permute.xlu0 %1179
  %v1184 = vsel %vm538, %v1175, 0
  %v1187 = vsel %vm538, %v1176, 0
  %1189 = vmatprep.subr.mxu0 0.0
  %1190 = vmatpush1.msra.mxu0 %v1178
  %1191 = vmatprep.subr.mxu0 0.0
  %1192 = vmatpush1.msra.mxu0 %v1180
  %1193 = vmatprep.subr.mxu0 0.0
  %1194 = vmatpush1.msra.mxu0 0.0
  %1195 = vmatprep.subr.mxu0 0.0
  %1196 = vmatpush1.msra.mxu0 0.0
  %1197 = vmatprep.subr.mxu0 0.0
  %1198 = vmatpush1.msra.mxu0 0.0
  %1199 = vmatprep.subr.mxu0 0.0
  %1200 = vmatpush1.msra.mxu0 0.0
  %1201 = vmatprep.subr.mxu0 0.0
  %1202 = vmatpush1.msra.mxu0 0.0
  %1203 = vmatprep.subr.mxu0 0.0
  %1204 = vmatpush1.msra.mxu0 0.0
  %1205 = vmatprep.subr.mxu0 0.0
  %1206 = vmatpush1.msra.mxu0 0.0
  %1207 = vmatprep.subr.mxu0 0.0
  %1208 = vmatpush1.msra.mxu0 0.0
  %1209 = vmatprep.subr.mxu0 0.0
  %1210 = vmatpush1.msra.mxu0 0.0
  %1211 = vmatprep.subr.mxu0 0.0
  %1212 = vmatpush1.msra.mxu0 0.0
  %1213 = vmatprep.subr.mxu0 0.0
  %1214 = vmatpush1.msra.mxu0 0.0
  %1215 = vmatprep.subr.mxu0 0.0
  %1216 = vmatpush1.msra.mxu0 0.0
  %1217 = vmatprep.subr.mxu0 0.0
  %1218 = vmatpush1.msra.mxu0 0.0
  %1219 = vmatprep.subr.mxu0 0.0
  %1220 = vmatpush1.msra.mxu0 0.0
  %1221 = vmatprep.subr.mxu0 0.0
  %1222 = vmatpush1.msra.mxu0 0.0
  %1223 = vmatprep.subr.mxu0 0.0
  %1224 = vmatpush1.msra.mxu0 0.0
  %1225 = vmatprep.subr.mxu0 0.0
  %1226 = vmatpush1.msra.mxu0 0.0
  %1227 = vmatprep.subr.mxu0 0.0
  %1228 = vmatpush1.msra.mxu0 0.0
  %1229 = vmatprep.subr.mxu0 0.0
  %1230 = vmatpush1.msra.mxu0 0.0
  %1231 = vmatprep.subr.mxu0 0.0
  %1232 = vmatpush1.msra.mxu0 0.0
  %1233 = vmatprep.subr.mxu0 0.0
  %1234 = vmatpush1.msra.mxu0 0.0
  %1235 = vmatprep.subr.mxu0 0.0
  %1236 = vmatpush1.msra.mxu0 0.0
  %1237 = vmatprep.subr.mxu0 0.0
  %1238 = vmatpush1.msra.mxu0 0.0
  %1239 = vmatprep.subr.mxu0 0.0
  %1240 = vmatpush1.msra.mxu0 0.0
  %1241 = vmatprep.subr.mxu0 0.0
  %1242 = vmatpush1.msra.mxu0 0.0
  %1243 = vmatprep.subr.mxu0 0.0
  %1244 = vmatpush1.msra.mxu0 0.0
  %1245 = vmatprep.subr.mxu0 0.0
  %1246 = vmatpush1.msra.mxu0 0.0
  %1247 = vmatprep.subr.mxu0 0.0
  %1248 = vmatpush1.msra.mxu0 0.0
  %1249 = vmatprep.subr.mxu0 0.0
  %1250 = vmatpush1.msra.mxu0 0.0
  %1251 = vmatprep.subr.mxu0 0.0
  %1252 = vmatpush1.msra.mxu0 0.0
  %1253 = vmatprep.mubr.f32.mxu0 0.0
  %1254 = vmatmul.mubr.f32.gmra.mrb[0].mxu0 %v1184
  %v1255 = vpop.f32.mrb[0].mxu0
  %v1256 = vadd.f32 0.0, %v1255
  %v1257 = vpop.f32.mrb[0].mxu0
  %1258 = vmatprep.mubr.f32.mxu0 0.0
  %1259 = vmatmul.mubr.f32.gmra.mrb[0].mxu0 %v1187
  %v1260 = vpop.f32.mrb[0].mxu0
  %v1261 = vadd.f32 0.0, %v1260
  %v1262 = vpop.f32.mrb[0].mxu0
  %1263 = vdwg.mxu0
  %v1264 = vsel %vm538, %v1175, 0.0
  %1265 = vadd.xlane.f32.xlu0 %v1264
  %v1266 = vpop.xlane.xlu0 %1265
  %v1267 = vsel %vm538, %v1176, 0.0
  %1268 = vadd.xlane.f32.xlu0 %v1267
  %v1269 = vpop.xlane.xlu0 %1268
  %v1270 = vadd.f32 %v1266, 1e-06
  %v1271 = vadd.f32 %v1269, 1e-06
  %v1272 = vrcp.pop %v1270
  %v1273 = vrcp.pop %v1271
  %v1274 = vmul.f32 %v1256, %v1272
  %v1275 = vmul.f32 %v1261, %v1273
  %v1277 = vsel %vm921, %v1274, 0
  %v1280 = vsel %vm921, %v1275, 0
  %1282 = vmatprep.subr.mxu0 0.0
  %1283 = vmatpush1.msra.mxu0 %v536
  %1284 = vmatprep.subr.mxu0 0.0
  %1285 = vmatpush1.msra.mxu0 0.0
  %1286 = vmatprep.subr.mxu0 0.0
  %1287 = vmatpush1.msra.mxu0 0.0
  %1288 = vmatprep.subr.mxu0 0.0
  %1289 = vmatpush1.msra.mxu0 0.0
  %1290 = vmatprep.subr.mxu0 0.0
  %1291 = vmatpush1.msra.mxu0 0.0
  %1292 = vmatprep.subr.mxu0 0.0
  %1293 = vmatpush1.msra.mxu0 0.0
  %1294 = vmatprep.subr.mxu0 0.0
  %1295 = vmatpush1.msra.mxu0 0.0
  %1296 = vmatprep.subr.mxu0 0.0
  %1297 = vmatpush1.msra.mxu0 0.0
  %1298 = vmatprep.subr.mxu0 0.0
  %1299 = vmatpush1.msra.mxu0 0.0
  %1300 = vmatprep.subr.mxu0 0.0
  %1301 = vmatpush1.msra.mxu0 0.0
  %1302 = vmatprep.subr.mxu0 0.0
  %1303 = vmatpush1.msra.mxu0 0.0
  %1304 = vmatprep.subr.mxu0 0.0
  %1305 = vmatpush1.msra.mxu0 0.0
  %1306 = vmatprep.subr.mxu0 0.0
  %1307 = vmatpush1.msra.mxu0 0.0
  %1308 = vmatprep.subr.mxu0 0.0
  %1309 = vmatpush1.msra.mxu0 0.0
  %1310 = vmatprep.subr.mxu0 0.0
  %1311 = vmatpush1.msra.mxu0 0.0
  %1312 = vmatprep.subr.mxu0 0.0
  %1313 = vmatpush1.msra.mxu0 0.0
  %1314 = vmatprep.subr.mxu0 0.0
  %1315 = vmatpush1.msra.mxu0 0.0
  %1316 = vmatprep.subr.mxu0 0.0
  %1317 = vmatpush1.msra.mxu0 0.0
  %1318 = vmatprep.subr.mxu0 0.0
  %1319 = vmatpush1.msra.mxu0 0.0
  %1320 = vmatprep.subr.mxu0 0.0
  %1321 = vmatpush1.msra.mxu0 0.0
  %1322 = vmatprep.subr.mxu0 0.0
  %1323 = vmatpush1.msra.mxu0 0.0
  %1324 = vmatprep.subr.mxu0 0.0
  %1325 = vmatpush1.msra.mxu0 0.0
  %1326 = vmatprep.subr.mxu0 0.0
  %1327 = vmatpush1.msra.mxu0 0.0
  %1328 = vmatprep.subr.mxu0 0.0
  %1329 = vmatpush1.msra.mxu0 0.0
  %1330 = vmatprep.subr.mxu0 0.0
  %1331 = vmatpush1.msra.mxu0 0.0
  %1332 = vmatprep.subr.mxu0 0.0
  %1333 = vmatpush1.msra.mxu0 0.0
  %1334 = vmatprep.subr.mxu0 0.0
  %1335 = vmatpush1.msra.mxu0 0.0
  %1336 = vmatprep.subr.mxu0 0.0
  %1337 = vmatpush1.msra.mxu0 0.0
  %1338 = vmatprep.subr.mxu0 0.0
  %1339 = vmatpush1.msra.mxu0 0.0
  %1340 = vmatprep.subr.mxu0 0.0
  %1341 = vmatpush1.msra.mxu0 0.0
  %1342 = vmatprep.subr.mxu0 0.0
  %1343 = vmatpush1.msra.mxu0 0.0
  %1344 = vmatprep.subr.mxu0 0.0
  %1345 = vmatpush1.msra.mxu0 0.0
  %1346 = vmatprep.mubr.f32.mxu0 0.0
  %1347 = vmatmul.mubr.f32.gmra.mrb[0].mxu0 %v1277
  %v1348 = vpop.f32.mrb[0].mxu0
  %v1349 = vadd.f32 0.0, %v1348
  %v1350 = vpop.f32.mrb[0].mxu0
  %1351 = vmatprep.mubr.f32.mxu0 0.0
  %1352 = vmatmul.mubr.f32.gmra.mrb[0].mxu0 %v1280
  %v1353 = vpop.f32.mrb[0].mxu0
  %v1354 = vadd.f32 0.0, %v1353
  %v1355 = vpop.f32.mrb[0].mxu0
  %1356 = vdwg.mxu0
  %v1357 = vadd.f32 %v1076, %v1349
  %v1358 = vadd.f32 %v1081, %v1354
  %1359 = vrot.lane.b32.xlu0 %v522, 80
  %v1360 = vpop.permute.xlu0 %1359
  %1361 = vrot.lane.b32.xlu0 %v523, 80
  %v1362 = vpop.permute.xlu0 %1361
  %1363 = vrot.lane.b32.xlu0 %v530, 80
  %v1364 = vpop.permute.xlu0 %1363
  %1365 = vrot.lane.b32.xlu0 %v531, 80
  %v1366 = vpop.permute.xlu0 %1365
  %v1367 = vsel %vm538, %v1360, 0
  %v1369 = vsel %vm538, %v1362, 0
  %v1371 = vsel %vm538, %v1364, 0
  %v1373 = vsel %vm538, %v1366, 0
  %1375 = vmatprep.subr.mxu0 0.0
  %1376 = vmatpush1.xpose.msra.mxu0 %v1371
  %1377 = vmatprep.subr.mxu0 0.0
  %1378 = vmatpush1.xpose.msra.mxu0 %v1373
  %1379 = vmatprep.subr.mxu0 0.0
  %1380 = vmatpush1.xpose.msra.mxu0 0.0
  %1381 = vmatprep.subr.mxu0 0.0
  %1382 = vmatpush1.xpose.msra.mxu0 0.0
  %1383 = vmatprep.subr.mxu0 0.0
  %1384 = vmatpush1.xpose.msra.mxu0 0.0
  %1385 = vmatprep.subr.mxu0 0.0
  %1386 = vmatpush1.xpose.msra.mxu0 0.0
  %1387 = vmatprep.subr.mxu0 0.0
  %1388 = vmatpush1.xpose.msra.mxu0 0.0
  %1389 = vmatprep.subr.mxu0 0.0
  %1390 = vmatpush1.xpose.msra.mxu0 0.0
  %1391 = vmatprep.subr.mxu0 0.0
  %1392 = vmatpush1.xpose.msra.mxu0 0.0
  %1393 = vmatprep.subr.mxu0 0.0
  %1394 = vmatpush1.xpose.msra.mxu0 0.0
  %1395 = vmatprep.subr.mxu0 0.0
  %1396 = vmatpush1.xpose.msra.mxu0 0.0
  %1397 = vmatprep.subr.mxu0 0.0
  %1398 = vmatpush1.xpose.msra.mxu0 0.0
  %1399 = vmatprep.subr.mxu0 0.0
  %1400 = vmatpush1.xpose.msra.mxu0 0.0
  %1401 = vmatprep.subr.mxu0 0.0
  %1402 = vmatpush1.xpose.msra.mxu0 0.0
  %1403 = vmatprep.subr.mxu0 0.0
  %1404 = vmatpush1.xpose.msra.mxu0 0.0
  %1405 = vmatprep.subr.mxu0 0.0
  %1406 = vmatpush1.xpose.msra.mxu0 0.0
  %1407 = vmatprep.subr.mxu0 0.0
  %1408 = vmatpush1.xpose.msra.mxu0 0.0
  %1409 = vmatprep.subr.mxu0 0.0
  %1410 = vmatpush1.xpose.msra.mxu0 0.0
  %1411 = vmatprep.subr.mxu0 0.0
  %1412 = vmatpush1.xpose.msra.mxu0 0.0
  %1413 = vmatprep.subr.mxu0 0.0
  %1414 = vmatpush1.xpose.msra.mxu0 0.0
  %1415 = vmatprep.subr.mxu0 0.0
  %1416 = vmatpush1.xpose.msra.mxu0 0.0
  %1417 = vmatprep.subr.mxu0 0.0
  %1418 = vmatpush1.xpose.msra.mxu0 0.0
  %1419 = vmatprep.subr.mxu0 0.0
  %1420 = vmatpush1.xpose.msra.mxu0 0.0
  %1421 = vmatprep.subr.mxu0 0.0
  %1422 = vmatpush1.xpose.msra.mxu0 0.0
  %1423 = vmatprep.subr.mxu0 0.0
  %1424 = vmatpush1.xpose.msra.mxu0 0.0
  %1425 = vmatprep.subr.mxu0 0.0
  %1426 = vmatpush1.xpose.msra.mxu0 0.0
  %1427 = vmatprep.subr.mxu0 0.0
  %1428 = vmatpush1.xpose.msra.mxu0 0.0
  %1429 = vmatprep.subr.mxu0 0.0
  %1430 = vmatpush1.xpose.msra.mxu0 0.0
  %1431 = vmatprep.subr.mxu0 0.0
  %1432 = vmatpush1.xpose.msra.mxu0 0.0
  %1433 = vmatprep.subr.mxu0 0.0
  %1434 = vmatpush1.xpose.msra.mxu0 0.0
  %1435 = vmatprep.subr.mxu0 0.0
  %1436 = vmatpush1.xpose.msra.mxu0 0.0
  %1437 = vmatprep.subr.mxu0 0.0
  %1438 = vmatpush1.xpose.msra.mxu0 0.0
  %1439 = vmatprep.mubr.f32.mxu0 0.0
  %1440 = vmatmul.mubr.f32.gmra.mrb[0].mxu0 %v1367
  %v1441 = vpop.f32.mrb[0].mxu0
  %v1442 = vadd.f32 0.0, %v1441
  %v1443 = vpop.f32.mrb[0].mxu0
  %1444 = vmatprep.mubr.f32.mxu0 0.0
  %1445 = vmatmul.mubr.f32.gmra.mrb[0].mxu0 %v1369
  %v1446 = vpop.f32.mrb[0].mxu0
  %v1447 = vadd.f32 0.0, %v1446
  %v1448 = vpop.f32.mrb[0].mxu0
  %1449 = vdwg.mxu0
  %v1450 = vmul.f32 %v1442, %v532
  %v1451 = vmul.f32 %v1447, %v533
  %1452 = vrot.lane.b32.xlu0 %v140, 40
  %v1453 = vpop.permute.xlu0 %1452
  %1454 = vrot.lane.b32.xlu0 %v145, 40
  %v1455 = vpop.permute.xlu0 %1454
  %v1459 = vsel %vm538, %v1450, 0
  %v1462 = vsel %vm538, %v1451, 0
  %1464 = vmatprep.subr.mxu0 0.0
  %1465 = vmatpush1.msra.mxu0 %v1453
  %1466 = vmatprep.subr.mxu0 0.0
  %1467 = vmatpush1.msra.mxu0 %v1455
  %1468 = vmatprep.subr.mxu0 0.0
  %1469 = vmatpush1.msra.mxu0 0.0
  %1470 = vmatprep.subr.mxu0 0.0
  %1471 = vmatpush1.msra.mxu0 0.0
  %1472 = vmatprep.subr.mxu0 0.0
  %1473 = vmatpush1.msra.mxu0 0.0
  %1474 = vmatprep.subr.mxu0 0.0
  %1475 = vmatpush1.msra.mxu0 0.0
  %1476 = vmatprep.subr.mxu0 0.0
  %1477 = vmatpush1.msra.mxu0 0.0
  %1478 = vmatprep.subr.mxu0 0.0
  %1479 = vmatpush1.msra.mxu0 0.0
  %1480 = vmatprep.subr.mxu0 0.0
  %1481 = vmatpush1.msra.mxu0 0.0
  %1482 = vmatprep.subr.mxu0 0.0
  %1483 = vmatpush1.msra.mxu0 0.0
  %1484 = vmatprep.subr.mxu0 0.0
  %1485 = vmatpush1.msra.mxu0 0.0
  %1486 = vmatprep.subr.mxu0 0.0
  %1487 = vmatpush1.msra.mxu0 0.0
  %1488 = vmatprep.subr.mxu0 0.0
  %1489 = vmatpush1.msra.mxu0 0.0
  %1490 = vmatprep.subr.mxu0 0.0
  %1491 = vmatpush1.msra.mxu0 0.0
  %1492 = vmatprep.subr.mxu0 0.0
  %1493 = vmatpush1.msra.mxu0 0.0
  %1494 = vmatprep.subr.mxu0 0.0
  %1495 = vmatpush1.msra.mxu0 0.0
  %1496 = vmatprep.subr.mxu0 0.0
  %1497 = vmatpush1.msra.mxu0 0.0
  %1498 = vmatprep.subr.mxu0 0.0
  %1499 = vmatpush1.msra.mxu0 0.0
  %1500 = vmatprep.subr.mxu0 0.0
  %1501 = vmatpush1.msra.mxu0 0.0
  %1502 = vmatprep.subr.mxu0 0.0
  %1503 = vmatpush1.msra.mxu0 0.0
  %1504 = vmatprep.subr.mxu0 0.0
  %1505 = vmatpush1.msra.mxu0 0.0
  %1506 = vmatprep.subr.mxu0 0.0
  %1507 = vmatpush1.msra.mxu0 0.0
  %1508 = vmatprep.subr.mxu0 0.0
  %1509 = vmatpush1.msra.mxu0 0.0
  %1510 = vmatprep.subr.mxu0 0.0
  %1511 = vmatpush1.msra.mxu0 0.0
  %1512 = vmatprep.subr.mxu0 0.0
  %1513 = vmatpush1.msra.mxu0 0.0
  %1514 = vmatprep.subr.mxu0 0.0
  %1515 = vmatpush1.msra.mxu0 0.0
  %1516 = vmatprep.subr.mxu0 0.0
  %1517 = vmatpush1.msra.mxu0 0.0
  %1518 = vmatprep.subr.mxu0 0.0
  %1519 = vmatpush1.msra.mxu0 0.0
  %1520 = vmatprep.subr.mxu0 0.0
  %1521 = vmatpush1.msra.mxu0 0.0
  %1522 = vmatprep.subr.mxu0 0.0
  %1523 = vmatpush1.msra.mxu0 0.0
  %1524 = vmatprep.subr.mxu0 0.0
  %1525 = vmatpush1.msra.mxu0 0.0
  %1526 = vmatprep.subr.mxu0 0.0
  %1527 = vmatpush1.msra.mxu0 0.0
  %1528 = vmatprep.mubr.f32.mxu0 0.0
  %1529 = vmatmul.mubr.f32.gmra.mrb[0].mxu0 %v1459
  %v1530 = vpop.f32.mrb[0].mxu0
  %v1531 = vadd.f32 0.0, %v1530
  %v1532 = vpop.f32.mrb[0].mxu0
  %1533 = vmatprep.mubr.f32.mxu0 0.0
  %1534 = vmatmul.mubr.f32.gmra.mrb[0].mxu0 %v1462
  %v1535 = vpop.f32.mrb[0].mxu0
  %v1536 = vadd.f32 0.0, %v1535
  %v1537 = vpop.f32.mrb[0].mxu0
  %1538 = vdwg.mxu0
  %v1539 = vsel %vm538, %v1450, 0.0
  %1540 = vadd.xlane.f32.xlu0 %v1539
  %v1541 = vpop.xlane.xlu0 %1540
  %v1542 = vsel %vm538, %v1451, 0.0
  %1543 = vadd.xlane.f32.xlu0 %v1542
  %v1544 = vpop.xlane.xlu0 %1543
  %v1545 = vadd.f32 %v1541, 1e-06
  %v1546 = vadd.f32 %v1544, 1e-06
  %v1547 = vrcp.pop %v1545
  %v1548 = vrcp.pop %v1546
  %v1549 = vmul.f32 %v1531, %v1547
  %v1550 = vmul.f32 %v1536, %v1548
  %v1552 = vsel %vm921, %v1549, 0
  %v1555 = vsel %vm921, %v1550, 0
  %1557 = vmatprep.subr.mxu0 0.0
  %1558 = vmatpush1.msra.mxu0 %v537
  %1559 = vmatprep.subr.mxu0 0.0
  %1560 = vmatpush1.msra.mxu0 0.0
  %1561 = vmatprep.subr.mxu0 0.0
  %1562 = vmatpush1.msra.mxu0 0.0
  %1563 = vmatprep.subr.mxu0 0.0
  %1564 = vmatpush1.msra.mxu0 0.0
  %1565 = vmatprep.subr.mxu0 0.0
  %1566 = vmatpush1.msra.mxu0 0.0
  %1567 = vmatprep.subr.mxu0 0.0
  %1568 = vmatpush1.msra.mxu0 0.0
  %1569 = vmatprep.subr.mxu0 0.0
  %1570 = vmatpush1.msra.mxu0 0.0
  %1571 = vmatprep.subr.mxu0 0.0
  %1572 = vmatpush1.msra.mxu0 0.0
  %1573 = vmatprep.subr.mxu0 0.0
  %1574 = vmatpush1.msra.mxu0 0.0
  %1575 = vmatprep.subr.mxu0 0.0
  %1576 = vmatpush1.msra.mxu0 0.0
  %1577 = vmatprep.subr.mxu0 0.0
  %1578 = vmatpush1.msra.mxu0 0.0
  %1579 = vmatprep.subr.mxu0 0.0
  %1580 = vmatpush1.msra.mxu0 0.0
  %1581 = vmatprep.subr.mxu0 0.0
  %1582 = vmatpush1.msra.mxu0 0.0
  %1583 = vmatprep.subr.mxu0 0.0
  %1584 = vmatpush1.msra.mxu0 0.0
  %1585 = vmatprep.subr.mxu0 0.0
  %1586 = vmatpush1.msra.mxu0 0.0
  %1587 = vmatprep.subr.mxu0 0.0
  %1588 = vmatpush1.msra.mxu0 0.0
  %1589 = vmatprep.subr.mxu0 0.0
  %1590 = vmatpush1.msra.mxu0 0.0
  %1591 = vmatprep.subr.mxu0 0.0
  %1592 = vmatpush1.msra.mxu0 0.0
  %1593 = vmatprep.subr.mxu0 0.0
  %1594 = vmatpush1.msra.mxu0 0.0
  %1595 = vmatprep.subr.mxu0 0.0
  %1596 = vmatpush1.msra.mxu0 0.0
  %1597 = vmatprep.subr.mxu0 0.0
  %1598 = vmatpush1.msra.mxu0 0.0
  %1599 = vmatprep.subr.mxu0 0.0
  %1600 = vmatpush1.msra.mxu0 0.0
  %1601 = vmatprep.subr.mxu0 0.0
  %1602 = vmatpush1.msra.mxu0 0.0
  %1603 = vmatprep.subr.mxu0 0.0
  %1604 = vmatpush1.msra.mxu0 0.0
  %1605 = vmatprep.subr.mxu0 0.0
  %1606 = vmatpush1.msra.mxu0 0.0
  %1607 = vmatprep.subr.mxu0 0.0
  %1608 = vmatpush1.msra.mxu0 0.0
  %1609 = vmatprep.subr.mxu0 0.0
  %1610 = vmatpush1.msra.mxu0 0.0
  %1611 = vmatprep.subr.mxu0 0.0
  %1612 = vmatpush1.msra.mxu0 0.0
  %1613 = vmatprep.subr.mxu0 0.0
  %1614 = vmatpush1.msra.mxu0 0.0
  %1615 = vmatprep.subr.mxu0 0.0
  %1616 = vmatpush1.msra.mxu0 0.0
  %1617 = vmatprep.subr.mxu0 0.0
  %1618 = vmatpush1.msra.mxu0 0.0
  %1619 = vmatprep.subr.mxu0 0.0
  %1620 = vmatpush1.msra.mxu0 0.0
  %1621 = vmatprep.mubr.f32.mxu0 0.0
  %1622 = vmatmul.mubr.f32.gmra.mrb[0].mxu0 %v1552
  %v1623 = vpop.f32.mrb[0].mxu0
  %v1624 = vadd.f32 0.0, %v1623
  %v1625 = vpop.f32.mrb[0].mxu0
  %1626 = vmatprep.mubr.f32.mxu0 0.0
  %1627 = vmatmul.mubr.f32.gmra.mrb[0].mxu0 %v1555
  %v1628 = vpop.f32.mrb[0].mxu0
  %v1629 = vadd.f32 0.0, %v1628
  %v1630 = vpop.f32.mrb[0].mxu0
  %1631 = vdwg.mxu0
  %v1632 = vadd.f32 %v1357, %v1624
  %v1633 = vadd.f32 %v1358, %v1629
  %v1634 = vld [vmem:[%s4] sm:$0x1]
  %v1636 = vlaneseq
  %v1637 = vshrl.u32 %v1636, 7
  %v1638 = vsub.s32 0, %v1637
  %v1639 = vrot.slane %v1634, %v1638
  %v1641 = vadd.f32 %v1632, %v1639
  %v1642 = vadd.f32 %v1633, %v1639
  %v1643 = vadd.f32 %v53, %v1641
  %v1644 = vadd.f32 %v54, %v1642
  %v1645 = vld [vmem:[%s8] sm:$0x1]
  %v1646 = vld [vmem:[%s9] sm:$0x1]
  %v1647 = vsel %vm66, %v1643, 0.0
  %1648 = vadd.xlane.f32.xlu0 %v1647
  %v1649 = vpop.xlane.xlu0 %1648
  %v1650 = vsel %vm66, %v1644, 0.0
  %1651 = vadd.xlane.f32.xlu0 %v1650
  %v1652 = vpop.xlane.xlu0 %1651
  %v1653 = vrcp.pop 32.0
  %v1654 = vmul.f32 %v1649, %v1653
  %v1655 = vmul.f32 %v1652, %v1653
  %v1656 = vsub.f32 %v1643, %v1654
  %v1657 = vsub.f32 %v1644, %v1655
  %v1658 = vmul.f32 %v1656, %v1656
  %v1659 = vmul.f32 %v1657, %v1657
  %v1660 = vsel %vm66, %v1658, 0.0
  %1661 = vadd.xlane.f32.xlu0 %v1660
  %v1662 = vpop.xlane.xlu0 %1661
  %v1663 = vsel %vm66, %v1659, 0.0
  %1664 = vadd.xlane.f32.xlu0 %v1663
  %v1665 = vpop.xlane.xlu0 %1664
  %v1666 = vmul.f32 %v1662, %v1653
  %v1667 = vmul.f32 %v1665, %v1653
  %v1668 = vadd.f32 %v1666, 1e-05
  %v1669 = vadd.f32 %v1667, 1e-05
  %v1670 = vrsqrt.pop %v1668
  %v1671 = vrsqrt.pop %v1669
  %v1672 = vmul.f32 %v1656, %v1670
  %v1673 = vmul.f32 %v1657, %v1671
  %v1675 = vlaneseq
  %v1676 = vshrl.u32 %v1675, 7
  %v1677 = vsub.s32 0, %v1676
  %v1678 = vrot.slane %v1645, %v1677
  %v1680 = vmul.f32 %v1672, %v1678
  %v1681 = vmul.f32 %v1673, %v1678
  %v1683 = vlaneseq
  %v1684 = vshrl.u32 %v1683, 7
  %v1685 = vsub.s32 0, %v1684
  %v1686 = vrot.slane %v1646, %v1685
  %v1688 = vadd.f32 %v1680, %v1686
  %v1689 = vadd.f32 %v1681, %v1686
  %v1690 = vld [vmem:[%s10] sm:$0xff]
  %v1691 = vld [vmem:[%s10 + $0x8] sm:$0xff]
  %v1692 = vld [vmem:[%s10 + $0x10] sm:$0xff]
  %v1693 = vld [vmem:[%s10 + $0x18] sm:$0xff]
  %v1694 = vld [vmem:[%s11] sm:$0x1]
  %v1696 = vlaneseq
  %v1697 = vshrl.u32 %v1696, 7
  %v1698 = vsub.s32 0, %v1697
  %v1699 = vrot.slane %v1694, %v1698
  %v1702 = vsel %vm66, %v1688, 0
  %v1705 = vsel %vm66, %v1689, 0
  %1707 = vmatprep.subr.mxu0 0.0
  %1708 = vmatpush1.msra.mxu0 %v1690
  %1709 = vmatprep.subr.mxu0 0.0
  %1710 = vmatpush1.msra.mxu0 %v1691
  %1711 = vmatprep.subr.mxu0 0.0
  %1712 = vmatpush1.msra.mxu0 %v1692
  %1713 = vmatprep.subr.mxu0 0.0
  %1714 = vmatpush1.msra.mxu0 %v1693
  %1715 = vmatprep.subr.mxu0 0.0
  %1716 = vmatpush1.msra.mxu0 0.0
  %1717 = vmatprep.subr.mxu0 0.0
  %1718 = vmatpush1.msra.mxu0 0.0
  %1719 = vmatprep.subr.mxu0 0.0
  %1720 = vmatpush1.msra.mxu0 0.0
  %1721 = vmatprep.subr.mxu0 0.0
  %1722 = vmatpush1.msra.mxu0 0.0
  %1723 = vmatprep.subr.mxu0 0.0
  %1724 = vmatpush1.msra.mxu0 0.0
  %1725 = vmatprep.subr.mxu0 0.0
  %1726 = vmatpush1.msra.mxu0 0.0
  %1727 = vmatprep.subr.mxu0 0.0
  %1728 = vmatpush1.msra.mxu0 0.0
  %1729 = vmatprep.subr.mxu0 0.0
  %1730 = vmatpush1.msra.mxu0 0.0
  %1731 = vmatprep.subr.mxu0 0.0
  %1732 = vmatpush1.msra.mxu0 0.0
  %1733 = vmatprep.subr.mxu0 0.0
  %1734 = vmatpush1.msra.mxu0 0.0
  %1735 = vmatprep.subr.mxu0 0.0
  %1736 = vmatpush1.msra.mxu0 0.0
  %1737 = vmatprep.subr.mxu0 0.0
  %1738 = vmatpush1.msra.mxu0 0.0
  %1739 = vmatprep.subr.mxu0 0.0
  %1740 = vmatpush1.msra.mxu0 0.0
  %1741 = vmatprep.subr.mxu0 0.0
  %1742 = vmatpush1.msra.mxu0 0.0
  %1743 = vmatprep.subr.mxu0 0.0
  %1744 = vmatpush1.msra.mxu0 0.0
  %1745 = vmatprep.subr.mxu0 0.0
  %1746 = vmatpush1.msra.mxu0 0.0
  %1747 = vmatprep.subr.mxu0 0.0
  %1748 = vmatpush1.msra.mxu0 0.0
  %1749 = vmatprep.subr.mxu0 0.0
  %1750 = vmatpush1.msra.mxu0 0.0
  %1751 = vmatprep.subr.mxu0 0.0
  %1752 = vmatpush1.msra.mxu0 0.0
  %1753 = vmatprep.subr.mxu0 0.0
  %1754 = vmatpush1.msra.mxu0 0.0
  %1755 = vmatprep.subr.mxu0 0.0
  %1756 = vmatpush1.msra.mxu0 0.0
  %1757 = vmatprep.subr.mxu0 0.0
  %1758 = vmatpush1.msra.mxu0 0.0
  %1759 = vmatprep.subr.mxu0 0.0
  %1760 = vmatpush1.msra.mxu0 0.0
  %1761 = vmatprep.subr.mxu0 0.0
  %1762 = vmatpush1.msra.mxu0 0.0
  %1763 = vmatprep.subr.mxu0 0.0
  %1764 = vmatpush1.msra.mxu0 0.0
  %1765 = vmatprep.subr.mxu0 0.0
  %1766 = vmatpush1.msra.mxu0 0.0
  %1767 = vmatprep.subr.mxu0 0.0
  %1768 = vmatpush1.msra.mxu0 0.0
  %1769 = vmatprep.subr.mxu0 0.0
  %1770 = vmatpush1.msra.mxu0 0.0
  %1771 = vmatprep.mubr.f32.mxu0 0.0
  %1772 = vmatmul.mubr.f32.gmra.mrb[0].mxu0 %v1702
  %v1773 = vpop.f32.mrb[0].mxu0
  %v1774 = vadd.f32 %v1699, %v1773
  %v1775 = vpop.f32.mrb[0].mxu0
  %1776 = vmatprep.mubr.f32.mxu0 0.0
  %1777 = vmatmul.mubr.f32.gmra.mrb[0].mxu0 %v1705
  %v1778 = vpop.f32.mrb[0].mxu0
  %v1779 = vadd.f32 %v1699, %v1778
  %v1780 = vpop.f32.mrb[0].mxu0
  %1781 = vdwg.mxu0
  %v1782 = vmul.f32 %v1774, %v1774
  %v1783 = vmul.f32 %v1779, %v1779
  %v1784 = vmul.f32 %v1774, %v1782
  %v1785 = vmul.f32 %v1779, %v1783
  %v1786 = vmul.f32 %v1784, 0.044715
  %v1787 = vmul.f32 %v1785, 0.044715
  %v1788 = vadd.f32 %v1774, %v1786
  %v1789 = vadd.f32 %v1779, %v1787
  %v1790 = vmul.f32 %v1788, 0.7978846
  %v1791 = vmul.f32 %v1789, 0.7978846
  %v1792 = vtanh.pop %v1790
  %v1793 = vtanh.pop %v1791
  %v1794 = vadd.f32 %v1792, 1.0
  %v1795 = vadd.f32 %v1793, 1.0
  %v1796 = vmul.f32 %v1794, 0.5
  %v1797 = vmul.f32 %v1795, 0.5
  %v1798 = vmul.f32 %v1774, %v1796
  %v1799 = vmul.f32 %v1779, %v1797
  %v1800 = vld [vmem:[%s12] sm:$0xff]
  %v1801 = vld [vmem:[%s12 + $0x8] sm:$0xff]
  %v1802 = vld [vmem:[%s12 + $0x10] sm:$0xff]
  %v1803 = vld [vmem:[%s12 + $0x18] sm:$0xff]
  %v1804 = vld [vmem:[%s12 + $0x20] sm:$0xff]
  %v1805 = vld [vmem:[%s12 + $0x28] sm:$0xff]
  %v1806 = vld [vmem:[%s12 + $0x30] sm:$0xff]
  %v1807 = vld [vmem:[%s12 + $0x38] sm:$0xff]
  %v1808 = vld [vmem:[%s13] sm:$0x1]
  %v1810 = vlaneseq
  %v1811 = vshrl.u32 %v1810, 7
  %v1812 = vsub.s32 0, %v1811
  %v1813 = vrot.slane %v1808, %v1812
  %v1816 = vsel %vm496, %v1798, 0
  %v1819 = vsel %vm496, %v1799, 0
  %1821 = vmatprep.subr.mxu0 0.0
  %1822 = vmatpush1.msra.mxu0 %v1800
  %1823 = vmatprep.subr.mxu0 0.0
  %1824 = vmatpush1.msra.mxu0 %v1801
  %1825 = vmatprep.subr.mxu0 0.0
  %1826 = vmatpush1.msra.mxu0 %v1802
  %1827 = vmatprep.subr.mxu0 0.0
  %1828 = vmatpush1.msra.mxu0 %v1803
  %1829 = vmatprep.subr.mxu0 0.0
  %1830 = vmatpush1.msra.mxu0 %v1804
  %1831 = vmatprep.subr.mxu0 0.0
  %1832 = vmatpush1.msra.mxu0 %v1805
  %1833 = vmatprep.subr.mxu0 0.0
  %1834 = vmatpush1.msra.mxu0 %v1806
  %1835 = vmatprep.subr.mxu0 0.0
  %1836 = vmatpush1.msra.mxu0 %v1807
  %1837 = vmatprep.subr.mxu0 0.0
  %1838 = vmatpush1.msra.mxu0 0.0
  %1839 = vmatprep.subr.mxu0 0.0
  %1840 = vmatpush1.msra.mxu0 0.0
  %1841 = vmatprep.subr.mxu0 0.0
  %1842 = vmatpush1.msra.mxu0 0.0
  %1843 = vmatprep.subr.mxu0 0.0
  %1844 = vmatpush1.msra.mxu0 0.0
  %1845 = vmatprep.subr.mxu0 0.0
  %1846 = vmatpush1.msra.mxu0 0.0
  %1847 = vmatprep.subr.mxu0 0.0
  %1848 = vmatpush1.msra.mxu0 0.0
  %1849 = vmatprep.subr.mxu0 0.0
  %1850 = vmatpush1.msra.mxu0 0.0
  %1851 = vmatprep.subr.mxu0 0.0
  %1852 = vmatpush1.msra.mxu0 0.0
  %1853 = vmatprep.subr.mxu0 0.0
  %1854 = vmatpush1.msra.mxu0 0.0
  %1855 = vmatprep.subr.mxu0 0.0
  %1856 = vmatpush1.msra.mxu0 0.0
  %1857 = vmatprep.subr.mxu0 0.0
  %1858 = vmatpush1.msra.mxu0 0.0
  %1859 = vmatprep.subr.mxu0 0.0
  %1860 = vmatpush1.msra.mxu0 0.0
  %1861 = vmatprep.subr.mxu0 0.0
  %1862 = vmatpush1.msra.mxu0 0.0
  %1863 = vmatprep.subr.mxu0 0.0
  %1864 = vmatpush1.msra.mxu0 0.0
  %1865 = vmatprep.subr.mxu0 0.0
  %1866 = vmatpush1.msra.mxu0 0.0
  %1867 = vmatprep.subr.mxu0 0.0
  %1868 = vmatpush1.msra.mxu0 0.0
  %1869 = vmatprep.subr.mxu0 0.0
  %1870 = vmatpush1.msra.mxu0 0.0
  %1871 = vmatprep.subr.mxu0 0.0
  %1872 = vmatpush1.msra.mxu0 0.0
  %1873 = vmatprep.subr.mxu0 0.0
  %1874 = vmatpush1.msra.mxu0 0.0
  %1875 = vmatprep.subr.mxu0 0.0
  %1876 = vmatpush1.msra.mxu0 0.0
  %1877 = vmatprep.subr.mxu0 0.0
  %1878 = vmatpush1.msra.mxu0 0.0
  %1879 = vmatprep.subr.mxu0 0.0
  %1880 = vmatpush1.msra.mxu0 0.0
  %1881 = vmatprep.subr.mxu0 0.0
  %1882 = vmatpush1.msra.mxu0 0.0
  %1883 = vmatprep.subr.mxu0 0.0
  %1884 = vmatpush1.msra.mxu0 0.0
  %1885 = vmatprep.mubr.f32.mxu0 0.0
  %1886 = vmatmul.mubr.f32.gmra.mrb[0].mxu0 %v1816
  %v1887 = vpop.f32.mrb[0].mxu0
  %v1888 = vadd.f32 %v1813, %v1887
  %v1889 = vpop.f32.mrb[0].mxu0
  %1890 = vmatprep.mubr.f32.mxu0 0.0
  %1891 = vmatmul.mubr.f32.gmra.mrb[0].mxu0 %v1819
  %v1892 = vpop.f32.mrb[0].mxu0
  %v1893 = vadd.f32 %v1813, %v1892
  %v1894 = vpop.f32.mrb[0].mxu0
  %1895 = vdwg.mxu0
  %v1896 = vadd.f32 %v1688, %v1888
  %v1897 = vadd.f32 %v1689, %v1893
  %v1898 = vld [vmem:[%s14] sm:$0x1]
  %v1899 = vld [vmem:[%s15] sm:$0x1]
  %v1900 = vsel %vm66, %v1896, 0.0
  %1901 = vadd.xlane.f32.xlu0 %v1900
  %v1902 = vpop.xlane.xlu0 %1901
  %v1903 = vsel %vm66, %v1897, 0.0
  %1904 = vadd.xlane.f32.xlu0 %v1903
  %v1905 = vpop.xlane.xlu0 %1904
  %v1906 = vmul.f32 %v1902, %v1653
  %v1907 = vmul.f32 %v1905, %v1653
  %v1908 = vsub.f32 %v1896, %v1906
  %v1909 = vsub.f32 %v1897, %v1907
  %v1910 = vmul.f32 %v1908, %v1908
  %v1911 = vmul.f32 %v1909, %v1909
  %v1912 = vsel %vm66, %v1910, 0.0
  %1913 = vadd.xlane.f32.xlu0 %v1912
  %v1914 = vpop.xlane.xlu0 %1913
  %v1915 = vsel %vm66, %v1911, 0.0
  %1916 = vadd.xlane.f32.xlu0 %v1915
  %v1917 = vpop.xlane.xlu0 %1916
  %v1918 = vmul.f32 %v1914, %v1653
  %v1919 = vmul.f32 %v1917, %v1653
  %v1920 = vadd.f32 %v1918, 1e-05
  %v1921 = vadd.f32 %v1919, 1e-05
  %v1922 = vrsqrt.pop %v1920
  %v1923 = vrsqrt.pop %v1921
  %v1924 = vmul.f32 %v1908, %v1922
  %v1925 = vmul.f32 %v1909, %v1923
  %v1927 = vlaneseq
  %v1928 = vshrl.u32 %v1927, 7
  %v1929 = vsub.s32 0, %v1928
  %v1930 = vrot.slane %v1898, %v1929
  %v1932 = vmul.f32 %v1924, %v1930
  %v1933 = vmul.f32 %v1925, %v1930
  %v1935 = vlaneseq
  %v1936 = vshrl.u32 %v1935, 7
  %v1937 = vsub.s32 0, %v1936
  %v1938 = vrot.slane %v1899, %v1937
  %v1940 = vadd.f32 %v1932, %v1938
  %v1941 = vadd.f32 %v1933, %v1938
  %1942 = vst.msk [vmem:[%s16] sm:$0xff] %vm66, %v1940
  %1943 = vst.msk [vmem:[%s16 + $0x8] sm:$0xff] %vm66, %v1941
  // Predicated region
  $region66: #{_lambda_.9} parent=0 // pred_check
    _
  $region67: #{_lambda_.9} parent=0 // pred_check_branch
    %1945 = sbr.rel (0) target = $region69
  $region68: #{_lambda_.9} parent=0 // pred_region
    _
  $region69: #{_lambda_.9} parent=0 // pred_fallthru
    _
  // Predicated region
  $region70: #{_lambda_.9} parent=0 // pred_check
    _
  $region71: #{_lambda_.9} parent=0 // pred_check_branch
    %1947 = sbr.rel (0) target = $region73
  $region72: #{_lambda_.9} parent=0 // pred_region
    _
  $region73: #{_lambda_.9} parent=0 // pred_fallthru
    _

// kernel: _lambda_.15
$region0: #{_lambda_.15}
  #allocation0 [shape = 'u32[]', space=smem, size = 0x4, offset = 0x4, fixed_abs, tag = 'smem constant byte address 0x4 - core index']
  #allocation1 [shape = 'u32[144,128]{1,0:T(1,128)}', space=vmem, size = 0x12000, scoped, tag = 'internal scratch']
  %s0 = inlined_call_operand.vmem [shape: f32[16,32], index: 0, kind: input, shape index: {}]
  %s1 = inlined_call_operand.vmem [shape: f32[1,32], index: 1, kind: input, shape index: {}]
  %s2 = inlined_call_operand.vmem [shape: f32[1,32], index: 2, kind: input, shape index: {}]
  %s3 = inlined_call_operand.vmem [shape: f32[32,4], index: 3, kind: input, shape index: {}]
  %s4 = inlined_call_operand.vmem [shape: f32[1,4], index: 4, kind: input, shape index: {}]
  %s5 = inlined_call_operand.vmem [shape: f32[16,4], index: 5, kind: output, shape index: {}]
  %s6 = sld [smem:[#allocation0]]
  $region30: #{_lambda_.15} parent=0
    _
  %s8 = ssub.s32 1, %s6
  %s9 = scalar_select 0, %s8, %s6
  // Predicated region
  $region2: #{_lambda_.15} parent=0 // pred_check
    _
  $region3: #{_lambda_.15} parent=0 // pred_check_branch
    %11 = sbr.rel (0) target = $region5
  $region4: #{_lambda_.15} parent=0 // pred_region
    _
  $region5: #{_lambda_.15} parent=0 // pred_fallthru
    _
  // Predicated region
  $region6: #{_lambda_.15} parent=0 // pred_check
    _
  $region7: #{_lambda_.15} parent=0 // pred_check_branch
    %13 = sbr.rel (0) target = $region9
  $region8: #{_lambda_.15} parent=0 // pred_region
    _
  $region9: #{_lambda_.15} parent=0 // pred_fallthru
    _
  // Predicated region
  $region10: #{_lambda_.15} parent=0 // pred_check
    _
  $region11: #{_lambda_.15} parent=0 // pred_check_branch
    %15 = sbr.rel (0) target = $region13
  $region12: #{_lambda_.15} parent=0 // pred_region
    _
  $region13: #{_lambda_.15} parent=0 // pred_fallthru
    _
  // Predicated region
  $region14: #{_lambda_.15} parent=0 // pred_check
    _
  $region15: #{_lambda_.15} parent=0 // pred_check_branch
    %17 = sbr.rel (0) target = $region17
  $region16: #{_lambda_.15} parent=0 // pred_region
    _
  $region17: #{_lambda_.15} parent=0 // pred_fallthru
    _
  // Predicated region
  $region18: #{_lambda_.15} parent=0 // pred_check
    _
  $region19: #{_lambda_.15} parent=0 // pred_check_branch
    %19 = sbr.rel (0) target = $region21
  $region20: #{_lambda_.15} parent=0 // pred_region
    _
  $region21: #{_lambda_.15} parent=0 // pred_fallthru
    _
  %v20 = vld [vmem:[%s0] sm:$0xff]
  %v21 = vld [vmem:[%s0 + $0x8] sm:$0xff]
  %v22 = vld [vmem:[%s1] sm:$0x1]
  %v23 = vld [vmem:[%s2] sm:$0x1]
  %vm24 = vcmask 261120
  %v25 = vsel %vm24, %v20, 0.0
  %26 = vadd.xlane.f32.xlu0 %v25
  %v27 = vpop.xlane.xlu0 %26
  %v28 = vsel %vm24, %v21, 0.0
  %29 = vadd.xlane.f32.xlu0 %v28
  %v30 = vpop.xlane.xlu0 %29
  %v31 = vrcp.pop 32.0
  %v32 = vmul.f32 %v27, %v31
  %v33 = vmul.f32 %v30, %v31
  %v34 = vsub.f32 %v20, %v32
  %v35 = vsub.f32 %v21, %v33
  %v36 = vmul.f32 %v34, %v34
  %v37 = vmul.f32 %v35, %v35
  %v38 = vsel %vm24, %v36, 0.0
  %39 = vadd.xlane.f32.xlu0 %v38
  %v40 = vpop.xlane.xlu0 %39
  %v41 = vsel %vm24, %v37, 0.0
  %42 = vadd.xlane.f32.xlu0 %v41
  %v43 = vpop.xlane.xlu0 %42
  %v44 = vmul.f32 %v40, %v31
  %v45 = vmul.f32 %v43, %v31
  %v46 = vadd.f32 %v44, 1e-05
  %v47 = vadd.f32 %v45, 1e-05
  %v48 = vrsqrt.pop %v46
  %v49 = vrsqrt.pop %v47
  %v50 = vmul.f32 %v34, %v48
  %v51 = vmul.f32 %v35, %v49
  %v53 = vlaneseq
  %v54 = vshrl.u32 %v53, 7
  %v55 = vsub.s32 0, %v54
  %v56 = vrot.slane %v22, %v55
  %v58 = vmul.f32 %v50, %v56
  %v59 = vmul.f32 %v51, %v56
  %v61 = vlaneseq
  %v62 = vshrl.u32 %v61, 7
  %v63 = vsub.s32 0, %v62
  %v64 = vrot.slane %v23, %v63
  %v66 = vadd.f32 %v58, %v64
  %v67 = vadd.f32 %v59, %v64
  %v68 = vld [vmem:[%s3] sm:$0xff]
  %v69 = vld [vmem:[%s3 + $0x8] sm:$0xff]
  %v70 = vld [vmem:[%s3 + $0x10] sm:$0xff]
  %v71 = vld [vmem:[%s3 + $0x18] sm:$0xff]
  %v72 = vld [vmem:[%s4] sm:$0x1]
  %v74 = vlaneseq
  %v75 = vshrl.u32 %v74, 7
  %v76 = vsub.s32 0, %v75
  %v77 = vrot.slane %v72, %v76
  %v80 = vsel %vm24, %v66, 0
  %v83 = vsel %vm24, %v67, 0
  %85 = vmatprep.subr.mxu0 0.0
  %86 = vmatpush1.msra.mxu0 %v68
  %87 = vmatprep.subr.mxu0 0.0
  %88 = vmatpush1.msra.mxu0 %v69
  %89 = vmatprep.subr.mxu0 0.0
  %90 = vmatpush1.msra.mxu0 %v70
  %91 = vmatprep.subr.mxu0 0.0
  %92 = vmatpush1.msra.mxu0 %v71
  %93 = vmatprep.subr.mxu0 0.0
  %94 = vmatpush1.msra.mxu0 0.0
  %95 = vmatprep.subr.mxu0 0.0
  %96 = vmatpush1.msra.mxu0 0.0
  %97 = vmatprep.subr.mxu0 0.0
  %98 = vmatpush1.msra.mxu0 0.0
  %99 = vmatprep.subr.mxu0 0.0
  %100 = vmatpush1.msra.mxu0 0.0
  %101 = vmatprep.subr.mxu0 0.0
  %102 = vmatpush1.msra.mxu0 0.0
  %103 = vmatprep.subr.mxu0 0.0
  %104 = vmatpush1.msra.mxu0 0.0
  %105 = vmatprep.subr.mxu0 0.0
  %106 = vmatpush1.msra.mxu0 0.0
  %107 = vmatprep.subr.mxu0 0.0
  %108 = vmatpush1.msra.mxu0 0.0
  %109 = vmatprep.subr.mxu0 0.0
  %110 = vmatpush1.msra.mxu0 0.0
  %111 = vmatprep.subr.mxu0 0.0
  %112 = vmatpush1.msra.mxu0 0.0
  %113 = vmatprep.subr.mxu0 0.0
  %114 = vmatpush1.msra.mxu0 0.0
  %115 = vmatprep.subr.mxu0 0.0
  %116 = vmatpush1.msra.mxu0 0.0
  %117 = vmatprep.subr.mxu0 0.0
  %118 = vmatpush1.msra.mxu0 0.0
  %119 = vmatprep.subr.mxu0 0.0
  %120 = vmatpush1.msra.mxu0 0.0
  %121 = vmatprep.subr.mxu0 0.0
  %122 = vmatpush1.msra.mxu0 0.0
  %123 = vmatprep.subr.mxu0 0.0
  %124 = vmatpush1.msra.mxu0 0.0
  %125 = vmatprep.subr.mxu0 0.0
  %126 = vmatpush1.msra.mxu0 0.0
  %127 = vmatprep.subr.mxu0 0.0
  %128 = vmatpush1.msra.mxu0 0.0
  %129 = vmatprep.subr.mxu0 0.0
  %130 = vmatpush1.msra.mxu0 0.0
  %131 = vmatprep.subr.mxu0 0.0
  %132 = vmatpush1.msra.mxu0 0.0
  %133 = vmatprep.subr.mxu0 0.0
  %134 = vmatpush1.msra.mxu0 0.0
  %135 = vmatprep.subr.mxu0 0.0
  %136 = vmatpush1.msra.mxu0 0.0
  %137 = vmatprep.subr.mxu0 0.0
  %138 = vmatpush1.msra.mxu0 0.0
  %139 = vmatprep.subr.mxu0 0.0
  %140 = vmatpush1.msra.mxu0 0.0
  %141 = vmatprep.subr.mxu0 0.0
  %142 = vmatpush1.msra.mxu0 0.0
  %143 = vmatprep.subr.mxu0 0.0
  %144 = vmatpush1.msra.mxu0 0.0
  %145 = vmatprep.subr.mxu0 0.0
  %146 = vmatpush1.msra.mxu0 0.0
  %147 = vmatprep.subr.mxu0 0.0
  %148 = vmatpush1.msra.mxu0 0.0
  %149 = vmatprep.mubr.f32.mxu0 0.0
  %150 = vmatmul.mubr.f32.gmra.mrb[0].mxu0 %v80
  %v151 = vpop.f32.mrb[0].mxu0
  %v152 = vadd.f32 %v77, %v151
  %v153 = vpop.f32.mrb[0].mxu0
  %154 = vmatprep.mubr.f32.mxu0 0.0
  %155 = vmatmul.mubr.f32.gmra.mrb[0].mxu0 %v83
  %v156 = vpop.f32.mrb[0].mxu0
  %v157 = vadd.f32 %v77, %v156
  %v158 = vpop.f32.mrb[0].mxu0
  %159 = vdwg.mxu0
  %vm160 = vcmask 31744
  %161 = vst.msk [vmem:[%s5] sm:$0xff] %vm160, %v152
  %162 = vst.msk [vmem:[%s5 + $0x8] sm:$0xff] %vm160, %v157
  // Predicated region
  $region22: #{_lambda_.15} parent=0 // pred_check
    _
  $region23: #{_lambda_.15} parent=0 // pred_check_branch
    %164 = sbr.rel (0) target = $region25
  $region24: #{_lambda_.15} parent=0 // pred_region
    _
  $region25: #{_lambda_.15} parent=0 // pred_fallthru
    _
  // Predicated region
  $region26: #{_lambda_.15} parent=0 // pred_check
    _
  $region27: #{_lambda_.15} parent=0 // pred_check_branch
    %166 = sbr.rel (0) target = $region29
  $region28: #{_lambda_.15} parent=0 // pred_region
    _
  $region29: #{_lambda_.15} parent=0 // pred_fallthru
    _

// kernel: _lambda_.14
$region0: #{_lambda_.14}
  #allocation0 [shape = 'u32[]', space=smem, size = 0x4, offset = 0x4, fixed_abs, tag = 'smem constant byte address 0x4 - core index']
  #allocation1 [shape = 'u32[144,128]{1,0:T(1,128)}', space=vmem, size = 0x12000, scoped, tag = 'internal scratch']
  %s0 = inlined_call_operand.vmem [shape: f32[16,32], index: 0, kind: input, shape index: {}]
  %s1 = inlined_call_operand.vmem [shape: f32[8,32], index: 1, kind: input, shape index: {}]
  %s2 = inlined_call_operand.vmem [shape: f32[32,96], index: 2, kind: input, shape index: {}]
  %s3 = inlined_call_operand.vmem [shape: f32[1,96], index: 3, kind: input, shape index: {}]
  %s4 = inlined_call_operand.vmem [shape: f32[32,32], index: 4, kind: input, shape index: {}]
  %s5 = inlined_call_operand.vmem [shape: f32[1,32], index: 5, kind: input, shape index: {}, may-alias: {5,10,12,16,19,23,25}]
  %s6 = inlined_call_operand.vmem [shape: f32[32,64], index: 6, kind: input, shape index: {}]
  %s7 = inlined_call_operand.vmem [shape: f32[32,64], index: 7, kind: input, shape index: {}]
  %s8 = inlined_call_operand.vmem [shape: f32[16,16], index: 8, kind: input, shape index: {}]
  %s9 = inlined_call_operand.vmem [shape: f32[1,32], index: 9, kind: input, shape index: {}, may-alias: {9,18,24}]
  %s10 = inlined_call_operand.vmem [shape: f32[1,32], index: 10, kind: input, shape index: {}, may-alias: {5,10,12,16,19,23,25}]
  %s11 = inlined_call_operand.vmem [shape: f32[32,32], index: 11, kind: input, shape index: {}]
  %s12 = inlined_call_operand.vmem [shape: f32[1,32], index: 12, kind: input, shape index: {}, may-alias: {5,10,12,16,19,23,25}]
  %s13 = inlined_call_operand.vmem [shape: f32[32,64], index: 13, kind: input, shape index: {}]
  %s14 = inlined_call_operand.vmem [shape: f32[1,64], index: 14, kind: input, shape index: {}, may-alias: {14,21}]
  %s15 = inlined_call_operand.vmem [shape: f32[32,32], index: 15, kind: input, shape index: {}]
  %s16 = inlined_call_operand.vmem [shape: f32[1,32], index: 16, kind: input, shape index: {}, may-alias: {5,10,12,16,19,23,25}]
  %s17 = inlined_call_operand.vmem [shape: f32[16,8], index: 17, kind: input, shape index: {}]
  %s18 = inlined_call_operand.vmem [shape: f32[1,32], index: 18, kind: input, shape index: {}, may-alias: {9,18,24}]
  %s19 = inlined_call_operand.vmem [shape: f32[1,32], index: 19, kind: input, shape index: {}, may-alias: {5,10,12,16,19,23,25}]
  %s20 = inlined_call_operand.vmem [shape: f32[32,64], index: 20, kind: input, shape index: {}]
  %s21 = inlined_call_operand.vmem [shape: f32[1,64], index: 21, kind: input, shape index: {}, may-alias: {14,21}]
  %s22 = inlined_call_operand.vmem [shape: f32[64,32], index: 22, kind: input, shape index: {}]
  %s23 = inlined_call_operand.vmem [shape: f32[1,32], index: 23, kind: input, shape index: {}, may-alias: {5,10,12,16,19,23,25}]
  %s24 = inlined_call_operand.vmem [shape: f32[1,32], index: 24, kind: input, shape index: {}, may-alias: {9,18,24}]
  %s25 = inlined_call_operand.vmem [shape: f32[1,32], index: 25, kind: input, shape index: {}, may-alias: {5,10,12,16,19,23,25}]
  %s26 = inlined_call_operand.vmem [shape: f32[16,32], index: 26, kind: output, shape index: {}]
  %s27 = sld [smem:[#allocation0]]
  $region114: #{_lambda_.14} parent=0
    _
  %s29 = ssub.s32 1, %s27
  %s30 = scalar_select 0, %s29, %s27
  // Predicated region
  $region2: #{_lambda_.14} parent=0 // pred_check
    _
  $region3: #{_lambda_.14} parent=0 // pred_check_branch
    %32 = sbr.rel (0) target = $region5
  $region4: #{_lambda_.14} parent=0 // pred_region
    _
  $region5: #{_lambda_.14} parent=0 // pred_fallthru
    _
  // Predicated region
  $region6: #{_lambda_.14} parent=0 // pred_check
    _
  $region7: #{_lambda_.14} parent=0 // pred_check_branch
    %34 = sbr.rel (0) target = $region9
  $region8: #{_lambda_.14} parent=0 // pred_region
    _
  $region9: #{_lambda_.14} parent=0 // pred_fallthru
    _
  // Predicated region
  $region10: #{_lambda_.14} parent=0 // pred_check
    _
  $region11: #{_lambda_.14} parent=0 // pred_check_branch
    %36 = sbr.rel (0) target = $region13
  $region12: #{_lambda_.14} parent=0 // pred_region
    _
  $region13: #{_lambda_.14} parent=0 // pred_fallthru
    _
  // Predicated region
  $region14: #{_lambda_.14} parent=0 // pred_check
    _
  $region15: #{_lambda_.14} parent=0 // pred_check_branch
    %38 = sbr.rel (0) target = $region17
  $region16: #{_lambda_.14} parent=0 // pred_region
    _
  $region17: #{_lambda_.14} parent=0 // pred_fallthru
    _
  // Predicated region
  $region18: #{_lambda_.14} parent=0 // pred_check
    _
  $region19: #{_lambda_.14} parent=0 // pred_check_branch
    %40 = sbr.rel (0) target = $region21
  $region20: #{_lambda_.14} parent=0 // pred_region
    _
  $region21: #{_lambda_.14} parent=0 // pred_fallthru
    _
  // Predicated region
  $region22: #{_lambda_.14} parent=0 // pred_check
    _
  $region23: #{_lambda_.14} parent=0 // pred_check_branch
    %42 = sbr.rel (0) target = $region25
  $region24: #{_lambda_.14} parent=0 // pred_region
    _
  $region25: #{_lambda_.14} parent=0 // pred_fallthru
    _
  // Predicated region
  $region26: #{_lambda_.14} parent=0 // pred_check
    _
  $region27: #{_lambda_.14} parent=0 // pred_check_branch
    %44 = sbr.rel (0) target = $region29
  $region28: #{_lambda_.14} parent=0 // pred_region
    _
  $region29: #{_lambda_.14} parent=0 // pred_fallthru
    _
  // Predicated region
  $region30: #{_lambda_.14} parent=0 // pred_check
    _
  $region31: #{_lambda_.14} parent=0 // pred_check_branch
    %46 = sbr.rel (0) target = $region33
  $region32: #{_lambda_.14} parent=0 // pred_region
    _
  $region33: #{_lambda_.14} parent=0 // pred_fallthru
    _
  // Predicated region
  $region34: #{_lambda_.14} parent=0 // pred_check
    _
  $region35: #{_lambda_.14} parent=0 // pred_check_branch
    %48 = sbr.rel (0) target = $region37
  $region36: #{_lambda_.14} parent=0 // pred_region
    _
  $region37: #{_lambda_.14} parent=0 // pred_fallthru
    _
  // Predicated region
  $region38: #{_lambda_.14} parent=0 // pred_check
    _
  $region39: #{_lambda_.14} parent=0 // pred_check_branch
    %50 = sbr.rel (0) target = $region41
  $region40: #{_lambda_.14} parent=0 // pred_region
    _
  $region41: #{_lambda_.14} parent=0 // pred_fallthru
    _
  // Predicated region
  $region42: #{_lambda_.14} parent=0 // pred_check
    _
  $region43: #{_lambda_.14} parent=0 // pred_check_branch
    %52 = sbr.rel (0) target = $region45
  $region44: #{_lambda_.14} parent=0 // pred_region
    _
  $region45: #{_lambda_.14} parent=0 // pred_fallthru
    _
  // Predicated region
  $region46: #{_lambda_.14} parent=0 // pred_check
    _
  $region47: #{_lambda_.14} parent=0 // pred_check_branch
    %54 = sbr.rel (0) target = $region49
  $region48: #{_lambda_.14} parent=0 // pred_region
    _
  $region49: #{_lambda_.14} parent=0 // pred_fallthru
    _
  // Predicated region
  $region50: #{_lambda_.14} parent=0 // pred_check
    _
  $region51: #{_lambda_.14} parent=0 // pred_check_branch
    %56 = sbr.rel (0) target = $region53
  $region52: #{_lambda_.14} parent=0 // pred_region
    _
  $region53: #{_lambda_.14} parent=0 // pred_fallthru
    _
  // Predicated region
  $region54: #{_lambda_.14} parent=0 // pred_check
    _
  $region55: #{_lambda_.14} parent=0 // pred_check_branch
    %58 = sbr.rel (0) target = $region57
  $region56: #{_lambda_.14} parent=0 // pred_region
    _
  $region57: #{_lambda_.14} parent=0 // pred_fallthru
    _
  // Predicated region
  $region58: #{_lambda_.14} parent=0 // pred_check
    _
  $region59: #{_lambda_.14} parent=0 // pred_check_branch
    %60 = sbr.rel (0) target = $region61
  $region60: #{_lambda_.14} parent=0 // pred_region
    _
  $region61: #{_lambda_.14} parent=0 // pred_fallthru
    _
  // Predicated region
  $region62: #{_lambda_.14} parent=0 // pred_check
    _
  $region63: #{_lambda_.14} parent=0 // pred_check_branch
    %62 = sbr.rel (0) target = $region65
  $region64: #{_lambda_.14} parent=0 // pred_region
    _
  $region65: #{_lambda_.14} parent=0 // pred_fallthru
    _
  // Predicated region
  $region66: #{_lambda_.14} parent=0 // pred_check
    _
  $region67: #{_lambda_.14} parent=0 // pred_check_branch
    %64 = sbr.rel (0) target = $region69
  $region68: #{_lambda_.14} parent=0 // pred_region
    _
  $region69: #{_lambda_.14} parent=0 // pred_fallthru
    _
  // Predicated region
  $region70: #{_lambda_.14} parent=0 // pred_check
    _
  $region71: #{_lambda_.14} parent=0 // pred_check_branch
    %66 = sbr.rel (0) target = $region73
  $region72: #{_lambda_.14} parent=0 // pred_region
    _
  $region73: #{_lambda_.14} parent=0 // pred_fallthru
    _
  // Predicated region
  $region74: #{_lambda_.14} parent=0 // pred_check
    _
  $region75: #{_lambda_.14} parent=0 // pred_check_branch
    %68 = sbr.rel (0) target = $region77
  $region76: #{_lambda_.14} parent=0 // pred_region
    _
  $region77: #{_lambda_.14} parent=0 // pred_fallthru
    _
  // Predicated region
  $region78: #{_lambda_.14} parent=0 // pred_check
    _
  $region79: #{_lambda_.14} parent=0 // pred_check_branch
    %70 = sbr.rel (0) target = $region81
  $region80: #{_lambda_.14} parent=0 // pred_region
    _
  $region81: #{_lambda_.14} parent=0 // pred_fallthru
    _
  // Predicated region
  $region82: #{_lambda_.14} parent=0 // pred_check
    _
  $region83: #{_lambda_.14} parent=0 // pred_check_branch
    %72 = sbr.rel (0) target = $region85
  $region84: #{_lambda_.14} parent=0 // pred_region
    _
  $region85: #{_lambda_.14} parent=0 // pred_fallthru
    _
  // Predicated region
  $region86: #{_lambda_.14} parent=0 // pred_check
    _
  $region87: #{_lambda_.14} parent=0 // pred_check_branch
    %74 = sbr.rel (0) target = $region89
  $region88: #{_lambda_.14} parent=0 // pred_region
    _
  $region89: #{_lambda_.14} parent=0 // pred_fallthru
    _
  // Predicated region
  $region90: #{_lambda_.14} parent=0 // pred_check
    _
  $region91: #{_lambda_.14} parent=0 // pred_check_branch
    %76 = sbr.rel (0) target = $region93
  $region92: #{_lambda_.14} parent=0 // pred_region
    _
  $region93: #{_lambda_.14} parent=0 // pred_fallthru
    _
  // Predicated region
  $region94: #{_lambda_.14} parent=0 // pred_check
    _
  $region95: #{_lambda_.14} parent=0 // pred_check_branch
    %78 = sbr.rel (0) target = $region97
  $region96: #{_lambda_.14} parent=0 // pred_region
    _
  $region97: #{_lambda_.14} parent=0 // pred_fallthru
    _
  // Predicated region
  $region98: #{_lambda_.14} parent=0 // pred_check
    _
  $region99: #{_lambda_.14} parent=0 // pred_check_branch
    %80 = sbr.rel (0) target = $region101
  $region100: #{_lambda_.14} parent=0 // pred_region
    _
  $region101: #{_lambda_.14} parent=0 // pred_fallthru
    _
  // Predicated region
  $region102: #{_lambda_.14} parent=0 // pred_check
    _
  $region103: #{_lambda_.14} parent=0 // pred_check_branch
    %82 = sbr.rel (0) target = $region105
  $region104: #{_lambda_.14} parent=0 // pred_region
    _
  $region105: #{_lambda_.14} parent=0 // pred_fallthru
    _
  %v83 = vld [vmem:[%s0] sm:$0xff]
  %v84 = vld [vmem:[%s0 + $0x8] sm:$0xff]
  %v85 = vld [vmem:[%s1] sm:$0xff]
  %v86 = vld [vmem:[%s2] sm:$0xff]
  %v87 = vld [vmem:[%s2 + $0x8] sm:$0xff]
  %v88 = vld [vmem:[%s2 + $0x10] sm:$0xff]
  %v89 = vld [vmem:[%s2 + $0x18] sm:$0xff]
  %v90 = vld [vmem:[%s3] sm:$0x1]
  %v92 = vlaneseq
  %v93 = vshrl.u32 %v92, 7
  %v94 = vsub.s32 0, %v93
  %v95 = vrot.slane %v90, %v94
  %vm97 = vcmask 261120
  %v99 = vsel %vm97, %v83, 0
  %v102 = vsel %vm97, %v84, 0
  %104 = vmatprep.subr.mxu0 0.0
  %105 = vmatpush1.msra.mxu0 %v86
  %106 = vmatprep.subr.mxu0 0.0
  %107 = vmatpush1.msra.mxu0 %v87
  %108 = vmatprep.subr.mxu0 0.0
  %109 = vmatpush1.msra.mxu0 %v88
  %110 = vmatprep.subr.mxu0 0.0
  %111 = vmatpush1.msra.mxu0 %v89
  %112 = vmatprep.subr.mxu0 0.0
  %113 = vmatpush1.msra.mxu0 0.0
  %114 = vmatprep.subr.mxu0 0.0
  %115 = vmatpush1.msra.mxu0 0.0
  %116 = vmatprep.subr.mxu0 0.0
  %117 = vmatpush1.msra.mxu0 0.0
  %118 = vmatprep.subr.mxu0 0.0
  %119 = vmatpush1.msra.mxu0 0.0
  %120 = vmatprep.subr.mxu0 0.0
  %121 = vmatpush1.msra.mxu0 0.0
  %122 = vmatprep.subr.mxu0 0.0
  %123 = vmatpush1.msra.mxu0 0.0
  %124 = vmatprep.subr.mxu0 0.0
  %125 = vmatpush1.msra.mxu0 0.0
  %126 = vmatprep.subr.mxu0 0.0
  %127 = vmatpush1.msra.mxu0 0.0
  %128 = vmatprep.subr.mxu0 0.0
  %129 = vmatpush1.msra.mxu0 0.0
  %130 = vmatprep.subr.mxu0 0.0
  %131 = vmatpush1.msra.mxu0 0.0
  %132 = vmatprep.subr.mxu0 0.0
  %133 = vmatpush1.msra.mxu0 0.0
  %134 = vmatprep.subr.mxu0 0.0
  %135 = vmatpush1.msra.mxu0 0.0
  %136 = vmatprep.subr.mxu0 0.0
  %137 = vmatpush1.msra.mxu0 0.0
  %138 = vmatprep.subr.mxu0 0.0
  %139 = vmatpush1.msra.mxu0 0.0
  %140 = vmatprep.subr.mxu0 0.0
  %141 = vmatpush1.msra.mxu0 0.0
  %142 = vmatprep.subr.mxu0 0.0
  %143 = vmatpush1.msra.mxu0 0.0
  %144 = vmatprep.subr.mxu0 0.0
  %145 = vmatpush1.msra.mxu0 0.0
  %146 = vmatprep.subr.mxu0 0.0
  %147 = vmatpush1.msra.mxu0 0.0
  %148 = vmatprep.subr.mxu0 0.0
  %149 = vmatpush1.msra.mxu0 0.0
  %150 = vmatprep.subr.mxu0 0.0
  %151 = vmatpush1.msra.mxu0 0.0
  %152 = vmatprep.subr.mxu0 0.0
  %153 = vmatpush1.msra.mxu0 0.0
  %154 = vmatprep.subr.mxu0 0.0
  %155 = vmatpush1.msra.mxu0 0.0
  %156 = vmatprep.subr.mxu0 0.0
  %157 = vmatpush1.msra.mxu0 0.0
  %158 = vmatprep.subr.mxu0 0.0
  %159 = vmatpush1.msra.mxu0 0.0
  %160 = vmatprep.subr.mxu0 0.0
  %161 = vmatpush1.msra.mxu0 0.0
  %162 = vmatprep.subr.mxu0 0.0
  %163 = vmatpush1.msra.mxu0 0.0
  %164 = vmatprep.subr.mxu0 0.0
  %165 = vmatpush1.msra.mxu0 0.0
  %166 = vmatprep.subr.mxu0 0.0
  %167 = vmatpush1.msra.mxu0 0.0
  %168 = vmatprep.mubr.f32.mxu0 0.0
  %169 = vmatmul.mubr.f32.gmra.mrb[0].mxu0 %v99
  %v170 = vpop.f32.mrb[0].mxu0
  %v171 = vadd.f32 %v95, %v170
  %v172 = vpop.f32.mrb[0].mxu0
  %173 = vmatprep.mubr.f32.mxu0 0.0
  %174 = vmatmul.mubr.f32.gmra.mrb[0].mxu0 %v102
  %v175 = vpop.f32.mrb[0].mxu0
  %v176 = vadd.f32 %v95, %v175
  %v177 = vpop.f32.mrb[0].mxu0
  %178 = vdwg.mxu0
  %v179 = vld [vmem:[%s6] sm:$0xff]
  %v180 = vld [vmem:[%s6 + $0x8] sm:$0xff]
  %v181 = vld [vmem:[%s6 + $0x10] sm:$0xff]
  %v182 = vld [vmem:[%s6 + $0x18] sm:$0xff]
  %v183 = vld [vmem:[%s7] sm:$0xff]
  %v184 = vld [vmem:[%s7 + $0x8] sm:$0xff]
  %v185 = vld [vmem:[%s7 + $0x10] sm:$0xff]
  %v186 = vld [vmem:[%s7 + $0x18] sm:$0xff]
  %v187 = vmul.f32 %v171, 0.59460354
  %v188 = vmul.f32 %v176, 0.59460354
  %v190 = vsel %vm97, %v187, 0
  %v193 = vsel %vm97, %v188, 0
  %195 = vmatprep.subr.mxu0 0.0
  %196 = vmatpush1.msra.mxu0 %v179
  %197 = vmatprep.subr.mxu0 0.0
  %198 = vmatpush1.msra.mxu0 %v180
  %199 = vmatprep.subr.mxu0 0.0
  %200 = vmatpush1.msra.mxu0 %v181
  %201 = vmatprep.subr.mxu0 0.0
  %202 = vmatpush1.msra.mxu0 %v182
  %203 = vmatprep.subr.mxu0 0.0
  %204 = vmatpush1.msra.mxu0 0.0
  %205 = vmatprep.subr.mxu0 0.0
  %206 = vmatpush1.msra.mxu0 0.0
  %207 = vmatprep.subr.mxu0 0.0
  %208 = vmatpush1.msra.mxu0 0.0
  %209 = vmatprep.subr.mxu0 0.0
  %210 = vmatpush1.msra.mxu0 0.0
  %211 = vmatprep.subr.mxu0 0.0
  %212 = vmatpush1.msra.mxu0 0.0
  %213 = vmatprep.subr.mxu0 0.0
  %214 = vmatpush1.msra.mxu0 0.0
  %215 = vmatprep.subr.mxu0 0.0
  %216 = vmatpush1.msra.mxu0 0.0
  %217 = vmatprep.subr.mxu0 0.0
  %218 = vmatpush1.msra.mxu0 0.0
  %219 = vmatprep.subr.mxu0 0.0
  %220 = vmatpush1.msra.mxu0 0.0
  %221 = vmatprep.subr.mxu0 0.0
  %222 = vmatpush1.msra.mxu0 0.0
  %223 = vmatprep.subr.mxu0 0.0
  %224 = vmatpush1.msra.mxu0 0.0
  %225 = vmatprep.subr.mxu0 0.0
  %226 = vmatpush1.msra.mxu0 0.0
  %227 = vmatprep.subr.mxu0 0.0
  %228 = vmatpush1.msra.mxu0 0.0
  %229 = vmatprep.subr.mxu0 0.0
  %230 = vmatpush1.msra.mxu0 0.0
  %231 = vmatprep.subr.mxu0 0.0
  %232 = vmatpush1.msra.mxu0 0.0
  %233 = vmatprep.subr.mxu0 0.0
  %234 = vmatpush1.msra.mxu0 0.0
  %235 = vmatprep.subr.mxu0 0.0
  %236 = vmatpush1.msra.mxu0 0.0
  %237 = vmatprep.subr.mxu0 0.0
  %238 = vmatpush1.msra.mxu0 0.0
  %239 = vmatprep.subr.mxu0 0.0
  %240 = vmatpush1.msra.mxu0 0.0
  %241 = vmatprep.subr.mxu0 0.0
  %242 = vmatpush1.msra.mxu0 0.0
  %243 = vmatprep.subr.mxu0 0.0
  %244 = vmatpush1.msra.mxu0 0.0
  %245 = vmatprep.subr.mxu0 0.0
  %246 = vmatpush1.msra.mxu0 0.0
  %247 = vmatprep.subr.mxu0 0.0
  %248 = vmatpush1.msra.mxu0 0.0
  %249 = vmatprep.subr.mxu0 0.0
  %250 = vmatpush1.msra.mxu0 0.0
  %251 = vmatprep.subr.mxu0 0.0
  %252 = vmatpush1.msra.mxu0 0.0
  %253 = vmatprep.subr.mxu0 0.0
  %254 = vmatpush1.msra.mxu0 0.0
  %255 = vmatprep.subr.mxu0 0.0
  %256 = vmatpush1.msra.mxu0 0.0
  %257 = vmatprep.subr.mxu0 0.0
  %258 = vmatpush1.msra.mxu0 0.0
  %259 = vmatprep.mubr.f32.mxu0 0.0
  %260 = vmatmul.mubr.f32.gmra.mrb[0].mxu0 %v190
  %v261 = vpop.f32.mrb[0].mxu0
  %v262 = vadd.f32 0.0, %v261
  %v263 = vpop.f32.mrb[0].mxu0
  %264 = vmatprep.mubr.f32.mxu0 0.0
  %265 = vmatmul.mubr.f32.gmra.mrb[0].mxu0 %v193
  %v266 = vpop.f32.mrb[0].mxu0
  %v267 = vadd.f32 0.0, %v266
  %v268 = vpop.f32.mrb[0].mxu0
  %269 = vdwg.mxu0
  %v270 = vmul.f32 %v187, %v187
  %v271 = vmul.f32 %v188, %v188
  %v273 = vsel %vm97, %v270, 0
  %v276 = vsel %vm97, %v271, 0
  %278 = vmatprep.subr.mxu0 0.0
  %279 = vmatpush1.msra.mxu0 %v183
  %280 = vmatprep.subr.mxu0 0.0
  %281 = vmatpush1.msra.mxu0 %v184
  %282 = vmatprep.subr.mxu0 0.0
  %283 = vmatpush1.msra.mxu0 %v185
  %284 = vmatprep.subr.mxu0 0.0
  %285 = vmatpush1.msra.mxu0 %v186
  %286 = vmatprep.subr.mxu0 0.0
  %287 = vmatpush1.msra.mxu0 0.0
  %288 = vmatprep.subr.mxu0 0.0
  %289 = vmatpush1.msra.mxu0 0.0
  %290 = vmatprep.subr.mxu0 0.0
  %291 = vmatpush1.msra.mxu0 0.0
  %292 = vmatprep.subr.mxu0 0.0
  %293 = vmatpush1.msra.mxu0 0.0
  %294 = vmatprep.subr.mxu0 0.0
  %295 = vmatpush1.msra.mxu0 0.0
  %296 = vmatprep.subr.mxu0 0.0
  %297 = vmatpush1.msra.mxu0 0.0
  %298 = vmatprep.subr.mxu0 0.0
  %299 = vmatpush1.msra.mxu0 0.0
  %300 = vmatprep.subr.mxu0 0.0
  %301 = vmatpush1.msra.mxu0 0.0
  %302 = vmatprep.subr.mxu0 0.0
  %303 = vmatpush1.msra.mxu0 0.0
  %304 = vmatprep.subr.mxu0 0.0
  %305 = vmatpush1.msra.mxu0 0.0
  %306 = vmatprep.subr.mxu0 0.0
  %307 = vmatpush1.msra.mxu0 0.0
  %308 = vmatprep.subr.mxu0 0.0
  %309 = vmatpush1.msra.mxu0 0.0
  %310 = vmatprep.subr.mxu0 0.0
  %311 = vmatpush1.msra.mxu0 0.0
  %312 = vmatprep.subr.mxu0 0.0
  %313 = vmatpush1.msra.mxu0 0.0
  %314 = vmatprep.subr.mxu0 0.0
  %315 = vmatpush1.msra.mxu0 0.0
  %316 = vmatprep.subr.mxu0 0.0
  %317 = vmatpush1.msra.mxu0 0.0
  %318 = vmatprep.subr.mxu0 0.0
  %319 = vmatpush1.msra.mxu0 0.0
  %320 = vmatprep.subr.mxu0 0.0
  %321 = vmatpush1.msra.mxu0 0.0
  %322 = vmatprep.subr.mxu0 0.0
  %323 = vmatpush1.msra.mxu0 0.0
  %324 = vmatprep.subr.mxu0 0.0
  %325 = vmatpush1.msra.mxu0 0.0
  %326 = vmatprep.subr.mxu0 0.0
  %327 = vmatpush1.msra.mxu0 0.0
  %328 = vmatprep.subr.mxu0 0.0
  %329 = vmatpush1.msra.mxu0 0.0
  %330 = vmatprep.subr.mxu0 0.0
  %331 = vmatpush1.msra.mxu0 0.0
  %332 = vmatprep.subr.mxu0 0.0
  %333 = vmatpush1.msra.mxu0 0.0
  %334 = vmatprep.subr.mxu0 0.0
  %335 = vmatpush1.msra.mxu0 0.0
  %336 = vmatprep.subr.mxu0 0.0
  %337 = vmatpush1.msra.mxu0 0.0
  %338 = vmatprep.subr.mxu0 0.0
  %339 = vmatpush1.msra.mxu0 0.0
  %340 = vmatprep.subr.mxu0 0.0
  %341 = vmatpush1.msra.mxu0 0.0
  %342 = vmatprep.mubr.f32.mxu0 0.0
  %343 = vmatmul.mubr.f32.gmra.mrb[0].mxu0 %v273
  %v344 = vpop.f32.mrb[0].mxu0
  %v345 = vadd.f32 0.0, %v344
  %v346 = vpop.f32.mrb[0].mxu0
  %347 = vmatprep.mubr.f32.mxu0 0.0
  %348 = vmatmul.mubr.f32.gmra.mrb[0].mxu0 %v276
  %v349 = vpop.f32.mrb[0].mxu0
  %v350 = vadd.f32 0.0, %v349
  %v351 = vpop.f32.mrb[0].mxu0
  %352 = vdwg.mxu0
  %v353 = vmul.f32 %v345, 0.5
  %v354 = vmul.f32 %v350, 0.5
  %v355 = vsub.f32 %v262, %v353
  %v356 = vsub.f32 %v267, %v354
  %357 = vrot.lane.b32.xlu0 %v187, 96
  %v358 = vpop.permute.xlu0 %357
  %359 = vrot.lane.b32.xlu0 %v188, 96
  %v360 = vpop.permute.xlu0 %359
  %v361 = vsel %vm97, %v358, 0
  %v363 = vsel %vm97, %v360, 0
  %365 = vmatprep.subr.mxu0 0.0
  %366 = vmatpush1.msra.mxu0 %v179
  %367 = vmatprep.subr.mxu0 0.0
  %368 = vmatpush1.msra.mxu0 %v180
  %369 = vmatprep.subr.mxu0 0.0
  %370 = vmatpush1.msra.mxu0 %v181
  %371 = vmatprep.subr.mxu0 0.0
  %372 = vmatpush1.msra.mxu0 %v182
  %373 = vmatprep.subr.mxu0 0.0
  %374 = vmatpush1.msra.mxu0 0.0
  %375 = vmatprep.subr.mxu0 0.0
  %376 = vmatpush1.msra.mxu0 0.0
  %377 = vmatprep.subr.mxu0 0.0
  %378 = vmatpush1.msra.mxu0 0.0
  %379 = vmatprep.subr.mxu0 0.0
  %380 = vmatpush1.msra.mxu0 0.0
  %381 = vmatprep.subr.mxu0 0.0
  %382 = vmatpush1.msra.mxu0 0.0
  %383 = vmatprep.subr.mxu0 0.0
  %384 = vmatpush1.msra.mxu0 0.0
  %385 = vmatprep.subr.mxu0 0.0
  %386 = vmatpush1.msra.mxu0 0.0
  %387 = vmatprep.subr.mxu0 0.0
  %388 = vmatpush1.msra.mxu0 0.0
  %389 = vmatprep.subr.mxu0 0.0
  %390 = vmatpush1.msra.mxu0 0.0
  %391 = vmatprep.subr.mxu0 0.0
  %392 = vmatpush1.msra.mxu0 0.0
  %393 = vmatprep.subr.mxu0 0.0
  %394 = vmatpush1.msra.mxu0 0.0
  %395 = vmatprep.subr.mxu0 0.0
  %396 = vmatpush1.msra.mxu0 0.0
  %397 = vmatprep.subr.mxu0 0.0
  %398 = vmatpush1.msra.mxu0 0.0
  %399 = vmatprep.subr.mxu0 0.0
  %400 = vmatpush1.msra.mxu0 0.0
  %401 = vmatprep.subr.mxu0 0.0
  %402 = vmatpush1.msra.mxu0 0.0
  %403 = vmatprep.subr.mxu0 0.0
  %404 = vmatpush1.msra.mxu0 0.0
  %405 = vmatprep.subr.mxu0 0.0
  %406 = vmatpush1.msra.mxu0 0.0
  %407 = vmatprep.subr.mxu0 0.0
  %408 = vmatpush1.msra.mxu0 0.0
  %409 = vmatprep.subr.mxu0 0.0
  %410 = vmatpush1.msra.mxu0 0.0
  %411 = vmatprep.subr.mxu0 0.0
  %412 = vmatpush1.msra.mxu0 0.0
  %413 = vmatprep.subr.mxu0 0.0
  %414 = vmatpush1.msra.mxu0 0.0
  %415 = vmatprep.subr.mxu0 0.0
  %416 = vmatpush1.msra.mxu0 0.0
  %417 = vmatprep.subr.mxu0 0.0
  %418 = vmatpush1.msra.mxu0 0.0
  %419 = vmatprep.subr.mxu0 0.0
  %420 = vmatpush1.msra.mxu0 0.0
  %421 = vmatprep.subr.mxu0 0.0
  %422 = vmatpush1.msra.mxu0 0.0
  %423 = vmatprep.subr.mxu0 0.0
  %424 = vmatpush1.msra.mxu0 0.0
  %425 = vmatprep.subr.mxu0 0.0
  %426 = vmatpush1.msra.mxu0 0.0
  %427 = vmatprep.subr.mxu0 0.0
  %428 = vmatpush1.msra.mxu0 0.0
  %429 = vmatprep.mubr.f32.mxu0 0.0
  %430 = vmatmul.mubr.f32.gmra.mrb[0].mxu0 %v361
  %v431 = vpop.f32.mrb[0].mxu0
  %v432 = vadd.f32 0.0, %v431
  %v433 = vpop.f32.mrb[0].mxu0
  %434 = vmatprep.mubr.f32.mxu0 0.0
  %435 = vmatmul.mubr.f32.gmra.mrb[0].mxu0 %v363
  %v436 = vpop.f32.mrb[0].mxu0
  %v437 = vadd.f32 0.0, %v436
  %v438 = vpop.f32.mrb[0].mxu0
  %439 = vdwg.mxu0
  %440 = vrot.lane.b32.xlu0 %v270, 96
  %v441 = vpop.permute.xlu0 %440
  %442 = vrot.lane.b32.xlu0 %v271, 96
  %v443 = vpop.permute.xlu0 %442
  %v444 = vsel %vm97, %v441, 0
  %v446 = vsel %vm97, %v443, 0
  %448 = vmatprep.subr.mxu0 0.0
  %449 = vmatpush1.msra.mxu0 %v183
  %450 = vmatprep.subr.mxu0 0.0
  %451 = vmatpush1.msra.mxu0 %v184
  %452 = vmatprep.subr.mxu0 0.0
  %453 = vmatpush1.msra.mxu0 %v185
  %454 = vmatprep.subr.mxu0 0.0
  %455 = vmatpush1.msra.mxu0 %v186
  %456 = vmatprep.subr.mxu0 0.0
  %457 = vmatpush1.msra.mxu0 0.0
  %458 = vmatprep.subr.mxu0 0.0
  %459 = vmatpush1.msra.mxu0 0.0
  %460 = vmatprep.subr.mxu0 0.0
  %461 = vmatpush1.msra.mxu0 0.0
  %462 = vmatprep.subr.mxu0 0.0
  %463 = vmatpush1.msra.mxu0 0.0
  %464 = vmatprep.subr.mxu0 0.0
  %465 = vmatpush1.msra.mxu0 0.0
  %466 = vmatprep.subr.mxu0 0.0
  %467 = vmatpush1.msra.mxu0 0.0
  %468 = vmatprep.subr.mxu0 0.0
  %469 = vmatpush1.msra.mxu0 0.0
  %470 = vmatprep.subr.mxu0 0.0
  %471 = vmatpush1.msra.mxu0 0.0
  %472 = vmatprep.subr.mxu0 0.0
  %473 = vmatpush1.msra.mxu0 0.0
  %474 = vmatprep.subr.mxu0 0.0
  %475 = vmatpush1.msra.mxu0 0.0
  %476 = vmatprep.subr.mxu0 0.0
  %477 = vmatpush1.msra.mxu0 0.0
  %478 = vmatprep.subr.mxu0 0.0
  %479 = vmatpush1.msra.mxu0 0.0
  %480 = vmatprep.subr.mxu0 0.0
  %481 = vmatpush1.msra.mxu0 0.0
  %482 = vmatprep.subr.mxu0 0.0
  %483 = vmatpush1.msra.mxu0 0.0
  %484 = vmatprep.subr.mxu0 0.0
  %485 = vmatpush1.msra.mxu0 0.0
  %486 = vmatprep.subr.mxu0 0.0
  %487 = vmatpush1.msra.mxu0 0.0
  %488 = vmatprep.subr.mxu0 0.0
  %489 = vmatpush1.msra.mxu0 0.0
  %490 = vmatprep.subr.mxu0 0.0
  %491 = vmatpush1.msra.mxu0 0.0
  %492 = vmatprep.subr.mxu0 0.0
  %493 = vmatpush1.msra.mxu0 0.0
  %494 = vmatprep.subr.mxu0 0.0
  %495 = vmatpush1.msra.mxu0 0.0
  %496 = vmatprep.subr.mxu0 0.0
  %497 = vmatpush1.msra.mxu0 0.0
  %498 = vmatprep.subr.mxu0 0.0
  %499 = vmatpush1.msra.mxu0 0.0
  %500 = vmatprep.subr.mxu0 0.0
  %501 = vmatpush1.msra.mxu0 0.0
  %502 = vmatprep.subr.mxu0 0.0
  %503 = vmatpush1.msra.mxu0 0.0
  %504 = vmatprep.subr.mxu0 0.0
  %505 = vmatpush1.msra.mxu0 0.0
  %506 = vmatprep.subr.mxu0 0.0
  %507 = vmatpush1.msra.mxu0 0.0
  %508 = vmatprep.subr.mxu0 0.0
  %509 = vmatpush1.msra.mxu0 0.0
  %510 = vmatprep.subr.mxu0 0.0
  %511 = vmatpush1.msra.mxu0 0.0
  %512 = vmatprep.mubr.f32.mxu0 0.0
  %513 = vmatmul.mubr.f32.gmra.mrb[0].mxu0 %v444
  %v514 = vpop.f32.mrb[0].mxu0
  %v515 = vadd.f32 0.0, %v514
  %v516 = vpop.f32.mrb[0].mxu0
  %517 = vmatprep.mubr.f32.mxu0 0.0
  %518 = vmatmul.mubr.f32.gmra.mrb[0].mxu0 %v446
  %v519 = vpop.f32.mrb[0].mxu0
  %v520 = vadd.f32 0.0, %v519
  %v521 = vpop.f32.mrb[0].mxu0
  %522 = vdwg.mxu0
  %v523 = vmul.f32 %v515, 0.5
  %v524 = vmul.f32 %v520, 0.5
  %v525 = vsub.f32 %v432, %v523
  %v526 = vsub.f32 %v437, %v524
  %vm527 = vcmask 523264
  %v528 = vsel %vm527, %v355, -inf
  %529 = vmax.xlane.f32.xlu0 %v528
  %v530 = vpop.xlane.xlu0 %529
  %v531 = vsel %vm527, %v356, -inf
  %532 = vmax.xlane.f32.xlu0 %v531
  %v533 = vpop.xlane.xlu0 %532
  %v534 = vsel %vm527, %v525, -inf
  %535 = vmax.xlane.f32.xlu0 %v534
  %v536 = vpop.xlane.xlu0 %535
  %v537 = vsel %vm527, %v526, -inf
  %538 = vmax.xlane.f32.xlu0 %v537
  %v539 = vpop.xlane.xlu0 %538
  %v540 = vmax.f32 %v536, %v539
  %v541 = vrot.slane %v540, 4
  %v542 = vmax.f32 %v540, %v541
  %v543 = vrot.slane %v542, 2
  %v544 = vmax.f32 %v542, %v543
  %v545 = vrot.slane %v544, 1
  %v546 = vmax.f32 %v544, %v545
  %v547 = vsub.f32 %v355, %v530
  %v548 = vsub.f32 %v356, %v533
  %v549 = vmul.f32 %v547, 1.442695
  %v550 = vpow.pop %v549
  %v551 = vmul.f32 %v548, 1.442695
  %v552 = vpow.pop %v551
  %v553 = vmul.f32 %v550, 0.25
  %v554 = vmul.f32 %v552, 0.25
  %v555 = vsub.f32 %v525, %v546
  %v556 = vsub.f32 %v526, %v546
  %v557 = vmul.f32 %v555, 1.442695
  %v558 = vpow.pop %v557
  %v559 = vmul.f32 %v556, 1.442695
  %v560 = vpow.pop %v559
  %v561 = vmul.f32 %v558, 0.25
  %v562 = vmul.f32 %v560, 0.25
  %v563 = vld [vmem:[%s8] sm:$0xff]
  %v564 = vld [vmem:[%s8 + $0x8] sm:$0xff]
  %v565 = vld [vmem:[%s4] sm:$0xff]
  %v566 = vld [vmem:[%s4 + $0x8] sm:$0xff]
  %v567 = vld [vmem:[%s4 + $0x10] sm:$0xff]
  %v568 = vld [vmem:[%s4 + $0x18] sm:$0xff]
  %vm569 = vcmask 130048
  %v571 = vsel %vm569, %v553, 0
  %v574 = vsel %vm569, %v554, 0
  %v577 = vsel %vm569, %v561, 0
  %v580 = vsel %vm569, %v562, 0
  %582 = vmatprep.subr.mxu0 0.0
  %583 = vmatpush1.xpose.msra.mxu0 %v577
  %584 = vmatprep.subr.mxu0 0.0
  %585 = vmatpush1.xpose.msra.mxu0 %v580
  %586 = vmatprep.subr.mxu0 0.0
  %587 = vmatpush1.xpose.msra.mxu0 0.0
  %588 = vmatprep.subr.mxu0 0.0
  %589 = vmatpush1.xpose.msra.mxu0 0.0
  %590 = vmatprep.subr.mxu0 0.0
  %591 = vmatpush1.xpose.msra.mxu0 0.0
  %592 = vmatprep.subr.mxu0 0.0
  %593 = vmatpush1.xpose.msra.mxu0 0.0
  %594 = vmatprep.subr.mxu0 0.0
  %595 = vmatpush1.xpose.msra.mxu0 0.0
  %596 = vmatprep.subr.mxu0 0.0
  %597 = vmatpush1.xpose.msra.mxu0 0.0
  %598 = vmatprep.subr.mxu0 0.0
  %599 = vmatpush1.xpose.msra.mxu0 0.0
  %600 = vmatprep.subr.mxu0 0.0
  %601 = vmatpush1.xpose.msra.mxu0 0.0
  %602 = vmatprep.subr.mxu0 0.0
  %603 = vmatpush1.xpose.msra.mxu0 0.0
  %604 = vmatprep.subr.mxu0 0.0
  %605 = vmatpush1.xpose.msra.mxu0 0.0
  %606 = vmatprep.subr.mxu0 0.0
  %607 = vmatpush1.xpose.msra.mxu0 0.0
  %608 = vmatprep.subr.mxu0 0.0
  %609 = vmatpush1.xpose.msra.mxu0 0.0
  %610 = vmatprep.subr.mxu0 0.0
  %611 = vmatpush1.xpose.msra.mxu0 0.0
  %612 = vmatprep.subr.mxu0 0.0
  %613 = vmatpush1.xpose.msra.mxu0 0.0
  %614 = vmatprep.subr.mxu0 0.0
  %615 = vmatpush1.xpose.msra.mxu0 0.0
  %616 = vmatprep.subr.mxu0 0.0
  %617 = vmatpush1.xpose.msra.mxu0 0.0
  %618 = vmatprep.subr.mxu0 0.0
  %619 = vmatpush1.xpose.msra.mxu0 0.0
  %620 = vmatprep.subr.mxu0 0.0
  %621 = vmatpush1.xpose.msra.mxu0 0.0
  %622 = vmatprep.subr.mxu0 0.0
  %623 = vmatpush1.xpose.msra.mxu0 0.0
  %624 = vmatprep.subr.mxu0 0.0
  %625 = vmatpush1.xpose.msra.mxu0 0.0
  %626 = vmatprep.subr.mxu0 0.0
  %627 = vmatpush1.xpose.msra.mxu0 0.0
  %628 = vmatprep.subr.mxu0 0.0
  %629 = vmatpush1.xpose.msra.mxu0 0.0
  %630 = vmatprep.subr.mxu0 0.0
  %631 = vmatpush1.xpose.msra.mxu0 0.0
  %632 = vmatprep.subr.mxu0 0.0
  %633 = vmatpush1.xpose.msra.mxu0 0.0
  %634 = vmatprep.subr.mxu0 0.0
  %635 = vmatpush1.xpose.msra.mxu0 0.0
  %636 = vmatprep.subr.mxu0 0.0
  %637 = vmatpush1.xpose.msra.mxu0 0.0
  %638 = vmatprep.subr.mxu0 0.0
  %639 = vmatpush1.xpose.msra.mxu0 0.0
  %640 = vmatprep.subr.mxu0 0.0
  %641 = vmatpush1.xpose.msra.mxu0 0.0
  %642 = vmatprep.subr.mxu0 0.0
  %643 = vmatpush1.xpose.msra.mxu0 0.0
  %644 = vmatprep.subr.mxu0 0.0
  %645 = vmatpush1.xpose.msra.mxu0 0.0
  %646 = vmatprep.mubr.f32.mxu0 0.0
  %647 = vmatmul.mubr.f32.gmra.mrb[0].mxu0 %v571
  %v648 = vpop.f32.mrb[0].mxu0
  %v649 = vadd.f32 0.0, %v648
  %v650 = vpop.f32.mrb[0].mxu0
  %651 = vmatprep.mubr.f32.mxu0 0.0
  %652 = vmatmul.mubr.f32.gmra.mrb[0].mxu0 %v574
  %v653 = vpop.f32.mrb[0].mxu0
  %v654 = vadd.f32 0.0, %v653
  %v655 = vpop.f32.mrb[0].mxu0
  %656 = vdwg.mxu0
  %v657 = vmul.f32 %v649, %v563
  %v658 = vmul.f32 %v654, %v564
  %661 = vrot.lane.b32.xlu0 %v171, 64
  %v662 = vpop.permute.xlu0 %661
  %663 = vrot.lane.b32.xlu0 %v176, 64
  %v664 = vpop.permute.xlu0 %663
  %v668 = vsel %vm569, %v657, 0
  %v671 = vsel %vm569, %v658, 0
  %673 = vmatprep.subr.mxu0 0.0
  %674 = vmatpush1.msra.mxu0 %v662
  %675 = vmatprep.subr.mxu0 0.0
  %676 = vmatpush1.msra.mxu0 %v664
  %677 = vmatprep.subr.mxu0 0.0
  %678 = vmatpush1.msra.mxu0 0.0
  %679 = vmatprep.subr.mxu0 0.0
  %680 = vmatpush1.msra.mxu0 0.0
  %681 = vmatprep.subr.mxu0 0.0
  %682 = vmatpush1.msra.mxu0 0.0
  %683 = vmatprep.subr.mxu0 0.0
  %684 = vmatpush1.msra.mxu0 0.0
  %685 = vmatprep.subr.mxu0 0.0
  %686 = vmatpush1.msra.mxu0 0.0
  %687 = vmatprep.subr.mxu0 0.0
  %688 = vmatpush1.msra.mxu0 0.0
  %689 = vmatprep.subr.mxu0 0.0
  %690 = vmatpush1.msra.mxu0 0.0
  %691 = vmatprep.subr.mxu0 0.0
  %692 = vmatpush1.msra.mxu0 0.0
  %693 = vmatprep.subr.mxu0 0.0
  %694 = vmatpush1.msra.mxu0 0.0
  %695 = vmatprep.subr.mxu0 0.0
  %696 = vmatpush1.msra.mxu0 0.0
  %697 = vmatprep.subr.mxu0 0.0
  %698 = vmatpush1.msra.mxu0 0.0
  %699 = vmatprep.subr.mxu0 0.0
  %700 = vmatpush1.msra.mxu0 0.0
  %701 = vmatprep.subr.mxu0 0.0
  %702 = vmatpush1.msra.mxu0 0.0
  %703 = vmatprep.subr.mxu0 0.0
  %704 = vmatpush1.msra.mxu0 0.0
  %705 = vmatprep.subr.mxu0 0.0
  %706 = vmatpush1.msra.mxu0 0.0
  %707 = vmatprep.subr.mxu0 0.0
  %708 = vmatpush1.msra.mxu0 0.0
  %709 = vmatprep.subr.mxu0 0.0
  %710 = vmatpush1.msra.mxu0 0.0
  %711 = vmatprep.subr.mxu0 0.0
  %712 = vmatpush1.msra.mxu0 0.0
  %713 = vmatprep.subr.mxu0 0.0
  %714 = vmatpush1.msra.mxu0 0.0
  %715 = vmatprep.subr.mxu0 0.0
  %716 = vmatpush1.msra.mxu0 0.0
  %717 = vmatprep.subr.mxu0 0.0
  %718 = vmatpush1.msra.mxu0 0.0
  %719 = vmatprep.subr.mxu0 0.0
  %720 = vmatpush1.msra.mxu0 0.0
  %721 = vmatprep.subr.mxu0 0.0
  %722 = vmatpush1.msra.mxu0 0.0
  %723 = vmatprep.subr.mxu0 0.0
  %724 = vmatpush1.msra.mxu0 0.0
  %725 = vmatprep.subr.mxu0 0.0
  %726 = vmatpush1.msra.mxu0 0.0
  %727 = vmatprep.subr.mxu0 0.0
  %728 = vmatpush1.msra.mxu0 0.0
  %729 = vmatprep.subr.mxu0 0.0
  %730 = vmatpush1.msra.mxu0 0.0
  %731 = vmatprep.subr.mxu0 0.0
  %732 = vmatpush1.msra.mxu0 0.0
  %733 = vmatprep.subr.mxu0 0.0
  %734 = vmatpush1.msra.mxu0 0.0
  %735 = vmatprep.subr.mxu0 0.0
  %736 = vmatpush1.msra.mxu0 0.0
  %737 = vmatprep.mubr.f32.mxu0 0.0
  %738 = vmatmul.mubr.f32.gmra.mrb[0].mxu0 %v668
  %v739 = vpop.f32.mrb[0].mxu0
  %v740 = vadd.f32 0.0, %v739
  %v741 = vpop.f32.mrb[0].mxu0
  %742 = vmatprep.mubr.f32.mxu0 0.0
  %743 = vmatmul.mubr.f32.gmra.mrb[0].mxu0 %v671
  %v744 = vpop.f32.mrb[0].mxu0
  %v745 = vadd.f32 0.0, %v744
  %v746 = vpop.f32.mrb[0].mxu0
  %747 = vdwg.mxu0
  %v748 = vsel %vm569, %v657, 0.0
  %749 = vadd.xlane.f32.xlu0 %v748
  %v750 = vpop.xlane.xlu0 %749
  %v751 = vsel %vm569, %v658, 0.0
  %752 = vadd.xlane.f32.xlu0 %v751
  %v753 = vpop.xlane.xlu0 %752
  %v754 = vadd.f32 %v750, 1e-06
  %v755 = vadd.f32 %v753, 1e-06
  %v756 = vrcp.pop %v754
  %v757 = vrcp.pop %v755
  %v758 = vmul.f32 %v740, %v756
  %v759 = vmul.f32 %v745, %v757
  %760 = vrot.lane.b32.xlu0 %v553, 112
  %v761 = vpop.permute.xlu0 %760
  %762 = vrot.lane.b32.xlu0 %v554, 112
  %v763 = vpop.permute.xlu0 %762
  %764 = vrot.lane.b32.xlu0 %v561, 112
  %v765 = vpop.permute.xlu0 %764
  %766 = vrot.lane.b32.xlu0 %v562, 112
  %v767 = vpop.permute.xlu0 %766
  %v768 = vsel %vm569, %v761, 0
  %v770 = vsel %vm569, %v763, 0
  %v772 = vsel %vm569, %v765, 0
  %v774 = vsel %vm569, %v767, 0
  %776 = vmatprep.subr.mxu0 0.0
  %777 = vmatpush1.xpose.msra.mxu0 %v772
  %778 = vmatprep.subr.mxu0 0.0
  %779 = vmatpush1.xpose.msra.mxu0 %v774
  %780 = vmatprep.subr.mxu0 0.0
  %781 = vmatpush1.xpose.msra.mxu0 0.0
  %782 = vmatprep.subr.mxu0 0.0
  %783 = vmatpush1.xpose.msra.mxu0 0.0
  %784 = vmatprep.subr.mxu0 0.0
  %785 = vmatpush1.xpose.msra.mxu0 0.0
  %786 = vmatprep.subr.mxu0 0.0
  %787 = vmatpush1.xpose.msra.mxu0 0.0
  %788 = vmatprep.subr.mxu0 0.0
  %789 = vmatpush1.xpose.msra.mxu0 0.0
  %790 = vmatprep.subr.mxu0 0.0
  %791 = vmatpush1.xpose.msra.mxu0 0.0
  %792 = vmatprep.subr.mxu0 0.0
  %793 = vmatpush1.xpose.msra.mxu0 0.0
  %794 = vmatprep.subr.mxu0 0.0
  %795 = vmatpush1.xpose.msra.mxu0 0.0
  %796 = vmatprep.subr.mxu0 0.0
  %797 = vmatpush1.xpose.msra.mxu0 0.0
  %798 = vmatprep.subr.mxu0 0.0
  %799 = vmatpush1.xpose.msra.mxu0 0.0
  %800 = vmatprep.subr.mxu0 0.0
  %801 = vmatpush1.xpose.msra.mxu0 0.0
  %802 = vmatprep.subr.mxu0 0.0
  %803 = vmatpush1.xpose.msra.mxu0 0.0
  %804 = vmatprep.subr.mxu0 0.0
  %805 = vmatpush1.xpose.msra.mxu0 0.0
  %806 = vmatprep.subr.mxu0 0.0
  %807 = vmatpush1.xpose.msra.mxu0 0.0
  %808 = vmatprep.subr.mxu0 0.0
  %809 = vmatpush1.xpose.msra.mxu0 0.0
  %810 = vmatprep.subr.mxu0 0.0
  %811 = vmatpush1.xpose.msra.mxu0 0.0
  %812 = vmatprep.subr.mxu0 0.0
  %813 = vmatpush1.xpose.msra.mxu0 0.0
  %814 = vmatprep.subr.mxu0 0.0
  %815 = vmatpush1.xpose.msra.mxu0 0.0
  %816 = vmatprep.subr.mxu0 0.0
  %817 = vmatpush1.xpose.msra.mxu0 0.0
  %818 = vmatprep.subr.mxu0 0.0
  %819 = vmatpush1.xpose.msra.mxu0 0.0
  %820 = vmatprep.subr.mxu0 0.0
  %821 = vmatpush1.xpose.msra.mxu0 0.0
  %822 = vmatprep.subr.mxu0 0.0
  %823 = vmatpush1.xpose.msra.mxu0 0.0
  %824 = vmatprep.subr.mxu0 0.0
  %825 = vmatpush1.xpose.msra.mxu0 0.0
  %826 = vmatprep.subr.mxu0 0.0
  %827 = vmatpush1.xpose.msra.mxu0 0.0
  %828 = vmatprep.subr.mxu0 0.0
  %829 = vmatpush1.xpose.msra.mxu0 0.0
  %830 = vmatprep.subr.mxu0 0.0
  %831 = vmatpush1.xpose.msra.mxu0 0.0
  %832 = vmatprep.subr.mxu0 0.0
  %833 = vmatpush1.xpose.msra.mxu0 0.0
  %834 = vmatprep.subr.mxu0 0.0
  %835 = vmatpush1.xpose.msra.mxu0 0.0
  %836 = vmatprep.subr.mxu0 0.0
  %837 = vmatpush1.xpose.msra.mxu0 0.0
  %838 = vmatprep.subr.mxu0 0.0
  %839 = vmatpush1.xpose.msra.mxu0 0.0
  %840 = vmatprep.mubr.f32.mxu0 0.0
  %841 = vmatmul.mubr.f32.gmra.mrb[0].mxu0 %v768
  %v842 = vpop.f32.mrb[0].mxu0
  %v843 = vadd.f32 0.0, %v842
  %v844 = vpop.f32.mrb[0].mxu0
  %845 = vmatprep.mubr.f32.mxu0 0.0
  %846 = vmatmul.mubr.f32.gmra.mrb[0].mxu0 %v770
  %v847 = vpop.f32.mrb[0].mxu0
  %v848 = vadd.f32 0.0, %v847
  %v849 = vpop.f32.mrb[0].mxu0
  %850 = vdwg.mxu0
  %v851 = vmul.f32 %v843, %v563
  %v852 = vmul.f32 %v848, %v564
  %853 = vrot.lane.b32.xlu0 %v171, 56
  %v854 = vpop.permute.xlu0 %853
  %855 = vrot.lane.b32.xlu0 %v176, 56
  %v856 = vpop.permute.xlu0 %855
  %v860 = vsel %vm569, %v851, 0
  %v863 = vsel %vm569, %v852, 0
  %865 = vmatprep.subr.mxu0 0.0
  %866 = vmatpush1.msra.mxu0 %v854
  %867 = vmatprep.subr.mxu0 0.0
  %868 = vmatpush1.msra.mxu0 %v856
  %869 = vmatprep.subr.mxu0 0.0
  %870 = vmatpush1.msra.mxu0 0.0
  %871 = vmatprep.subr.mxu0 0.0
  %872 = vmatpush1.msra.mxu0 0.0
  %873 = vmatprep.subr.mxu0 0.0
  %874 = vmatpush1.msra.mxu0 0.0
  %875 = vmatprep.subr.mxu0 0.0
  %876 = vmatpush1.msra.mxu0 0.0
  %877 = vmatprep.subr.mxu0 0.0
  %878 = vmatpush1.msra.mxu0 0.0
  %879 = vmatprep.subr.mxu0 0.0
  %880 = vmatpush1.msra.mxu0 0.0
  %881 = vmatprep.subr.mxu0 0.0
  %882 = vmatpush1.msra.mxu0 0.0
  %883 = vmatprep.subr.mxu0 0.0
  %884 = vmatpush1.msra.mxu0 0.0
  %885 = vmatprep.subr.mxu0 0.0
  %886 = vmatpush1.msra.mxu0 0.0
  %887 = vmatprep.subr.mxu0 0.0
  %888 = vmatpush1.msra.mxu0 0.0
  %889 = vmatprep.subr.mxu0 0.0
  %890 = vmatpush1.msra.mxu0 0.0
  %891 = vmatprep.subr.mxu0 0.0
  %892 = vmatpush1.msra.mxu0 0.0
  %893 = vmatprep.subr.mxu0 0.0
  %894 = vmatpush1.msra.mxu0 0.0
  %895 = vmatprep.subr.mxu0 0.0
  %896 = vmatpush1.msra.mxu0 0.0
  %897 = vmatprep.subr.mxu0 0.0
  %898 = vmatpush1.msra.mxu0 0.0
  %899 = vmatprep.subr.mxu0 0.0
  %900 = vmatpush1.msra.mxu0 0.0
  %901 = vmatprep.subr.mxu0 0.0
  %902 = vmatpush1.msra.mxu0 0.0
  %903 = vmatprep.subr.mxu0 0.0
  %904 = vmatpush1.msra.mxu0 0.0
  %905 = vmatprep.subr.mxu0 0.0
  %906 = vmatpush1.msra.mxu0 0.0
  %907 = vmatprep.subr.mxu0 0.0
  %908 = vmatpush1.msra.mxu0 0.0
  %909 = vmatprep.subr.mxu0 0.0
  %910 = vmatpush1.msra.mxu0 0.0
  %911 = vmatprep.subr.mxu0 0.0
  %912 = vmatpush1.msra.mxu0 0.0
  %913 = vmatprep.subr.mxu0 0.0
  %914 = vmatpush1.msra.mxu0 0.0
  %915 = vmatprep.subr.mxu0 0.0
  %916 = vmatpush1.msra.mxu0 0.0
  %917 = vmatprep.subr.mxu0 0.0
  %918 = vmatpush1.msra.mxu0 0.0
  %919 = vmatprep.subr.mxu0 0.0
  %920 = vmatpush1.msra.mxu0 0.0
  %921 = vmatprep.subr.mxu0 0.0
  %922 = vmatpush1.msra.mxu0 0.0
  %923 = vmatprep.subr.mxu0 0.0
  %924 = vmatpush1.msra.mxu0 0.0
  %925 = vmatprep.subr.mxu0 0.0
  %926 = vmatpush1.msra.mxu0 0.0
  %927 = vmatprep.subr.mxu0 0.0
  %928 = vmatpush1.msra.mxu0 0.0
  %929 = vmatprep.mubr.f32.mxu0 0.0
  %930 = vmatmul.mubr.f32.gmra.mrb[0].mxu0 %v860
  %v931 = vpop.f32.mrb[0].mxu0
  %v932 = vadd.f32 0.0, %v931
  %v933 = vpop.f32.mrb[0].mxu0
  %934 = vmatprep.mubr.f32.mxu0 0.0
  %935 = vmatmul.mubr.f32.gmra.mrb[0].mxu0 %v863
  %v936 = vpop.f32.mrb[0].mxu0
  %v937 = vadd.f32 0.0, %v936
  %v938 = vpop.f32.mrb[0].mxu0
  %939 = vdwg.mxu0
  %v940 = vsel %vm569, %v851, 0.0
  %941 = vadd.xlane.f32.xlu0 %v940
  %v942 = vpop.xlane.xlu0 %941
  %v943 = vsel %vm569, %v852, 0.0
  %944 = vadd.xlane.f32.xlu0 %v943
  %v945 = vpop.xlane.xlu0 %944
  %v946 = vadd.f32 %v942, 1e-06
  %v947 = vadd.f32 %v945, 1e-06
  %v948 = vrcp.pop %v946
  %v949 = vrcp.pop %v947
  %v950 = vmul.f32 %v932, %v948
  %v951 = vmul.f32 %v937, %v949
  %vm952 = vcmask 64512
  %v954 = vsel %vm952, %v950, 0
  %v957 = vsel %vm952, %v951, 0
  %959 = vmatprep.subr.mxu0 0.0
  %960 = vmatpush1.msra.mxu0 %v566
  %961 = vmatprep.subr.mxu0 0.0
  %962 = vmatpush1.msra.mxu0 0.0
  %963 = vmatprep.subr.mxu0 0.0
  %964 = vmatpush1.msra.mxu0 0.0
  %965 = vmatprep.subr.mxu0 0.0
  %966 = vmatpush1.msra.mxu0 0.0
  %967 = vmatprep.subr.mxu0 0.0
  %968 = vmatpush1.msra.mxu0 0.0
  %969 = vmatprep.subr.mxu0 0.0
  %970 = vmatpush1.msra.mxu0 0.0
  %971 = vmatprep.subr.mxu0 0.0
  %972 = vmatpush1.msra.mxu0 0.0
  %973 = vmatprep.subr.mxu0 0.0
  %974 = vmatpush1.msra.mxu0 0.0
  %975 = vmatprep.subr.mxu0 0.0
  %976 = vmatpush1.msra.mxu0 0.0
  %977 = vmatprep.subr.mxu0 0.0
  %978 = vmatpush1.msra.mxu0 0.0
  %979 = vmatprep.subr.mxu0 0.0
  %980 = vmatpush1.msra.mxu0 0.0
  %981 = vmatprep.subr.mxu0 0.0
  %982 = vmatpush1.msra.mxu0 0.0
  %983 = vmatprep.subr.mxu0 0.0
  %984 = vmatpush1.msra.mxu0 0.0
  %985 = vmatprep.subr.mxu0 0.0
  %986 = vmatpush1.msra.mxu0 0.0
  %987 = vmatprep.subr.mxu0 0.0
  %988 = vmatpush1.msra.mxu0 0.0
  %989 = vmatprep.subr.mxu0 0.0
  %990 = vmatpush1.msra.mxu0 0.0
  %991 = vmatprep.subr.mxu0 0.0
  %992 = vmatpush1.msra.mxu0 0.0
  %993 = vmatprep.subr.mxu0 0.0
  %994 = vmatpush1.msra.mxu0 0.0
  %995 = vmatprep.subr.mxu0 0.0
  %996 = vmatpush1.msra.mxu0 0.0
  %997 = vmatprep.subr.mxu0 0.0
  %998 = vmatpush1.msra.mxu0 0.0
  %999 = vmatprep.subr.mxu0 0.0
  %1000 = vmatpush1.msra.mxu0 0.0
  %1001 = vmatprep.subr.mxu0 0.0
  %1002 = vmatpush1.msra.mxu0 0.0
  %1003 = vmatprep.subr.mxu0 0.0
  %1004 = vmatpush1.msra.mxu0 0.0
  %1005 = vmatprep.subr.mxu0 0.0
  %1006 = vmatpush1.msra.mxu0 0.0
  %1007 = vmatprep.subr.mxu0 0.0
  %1008 = vmatpush1.msra.mxu0 0.0
  %1009 = vmatprep.subr.mxu0 0.0
  %1010 = vmatpush1.msra.mxu0 0.0
  %1011 = vmatprep.subr.mxu0 0.0
  %1012 = vmatpush1.msra.mxu0 0.0
  %1013 = vmatprep.subr.mxu0 0.0
  %1014 = vmatpush1.msra.mxu0 0.0
  %1015 = vmatprep.subr.mxu0 0.0
  %1016 = vmatpush1.msra.mxu0 0.0
  %1017 = vmatprep.subr.mxu0 0.0
  %1018 = vmatpush1.msra.mxu0 0.0
  %1019 = vmatprep.subr.mxu0 0.0
  %1020 = vmatpush1.msra.mxu0 0.0
  %1021 = vmatprep.subr.mxu0 0.0
  %1022 = vmatpush1.msra.mxu0 0.0
  %1023 = vmatprep.mubr.f32.mxu0 0.0
  %1024 = vmatmul.mubr.f32.gmra.mrb[0].mxu0 %v954
  %v1025 = vpop.f32.mrb[0].mxu0
  %v1026 = vadd.f32 0.0, %v1025
  %v1027 = vpop.f32.mrb[0].mxu0
  %1028 = vmatprep.mubr.f32.mxu0 0.0
  %1029 = vmatmul.mubr.f32.gmra.mrb[0].mxu0 %v957
  %v1030 = vpop.f32.mrb[0].mxu0
  %v1031 = vadd.f32 0.0, %v1030
  %v1032 = vpop.f32.mrb[0].mxu0
  %1033 = vdwg.mxu0
  %v1035 = vsel %vm952, %v758, 0
  %v1038 = vsel %vm952, %v759, 0
  %1040 = vmatprep.subr.mxu0 0.0
  %1041 = vmatpush1.msra.mxu0 %v565
  %1042 = vmatprep.subr.mxu0 0.0
  %1043 = vmatpush1.msra.mxu0 0.0
  %1044 = vmatprep.subr.mxu0 0.0
  %1045 = vmatpush1.msra.mxu0 0.0
  %1046 = vmatprep.subr.mxu0 0.0
  %1047 = vmatpush1.msra.mxu0 0.0
  %1048 = vmatprep.subr.mxu0 0.0
  %1049 = vmatpush1.msra.mxu0 0.0
  %1050 = vmatprep.subr.mxu0 0.0
  %1051 = vmatpush1.msra.mxu0 0.0
  %1052 = vmatprep.subr.mxu0 0.0
  %1053 = vmatpush1.msra.mxu0 0.0
  %1054 = vmatprep.subr.mxu0 0.0
  %1055 = vmatpush1.msra.mxu0 0.0
  %1056 = vmatprep.subr.mxu0 0.0
  %1057 = vmatpush1.msra.mxu0 0.0
  %1058 = vmatprep.subr.mxu0 0.0
  %1059 = vmatpush1.msra.mxu0 0.0
  %1060 = vmatprep.subr.mxu0 0.0
  %1061 = vmatpush1.msra.mxu0 0.0
  %1062 = vmatprep.subr.mxu0 0.0
  %1063 = vmatpush1.msra.mxu0 0.0
  %1064 = vmatprep.subr.mxu0 0.0
  %1065 = vmatpush1.msra.mxu0 0.0
  %1066 = vmatprep.subr.mxu0 0.0
  %1067 = vmatpush1.msra.mxu0 0.0
  %1068 = vmatprep.subr.mxu0 0.0
  %1069 = vmatpush1.msra.mxu0 0.0
  %1070 = vmatprep.subr.mxu0 0.0
  %1071 = vmatpush1.msra.mxu0 0.0
  %1072 = vmatprep.subr.mxu0 0.0
  %1073 = vmatpush1.msra.mxu0 0.0
  %1074 = vmatprep.subr.mxu0 0.0
  %1075 = vmatpush1.msra.mxu0 0.0
  %1076 = vmatprep.subr.mxu0 0.0
  %1077 = vmatpush1.msra.mxu0 0.0
  %1078 = vmatprep.subr.mxu0 0.0
  %1079 = vmatpush1.msra.mxu0 0.0
  %1080 = vmatprep.subr.mxu0 0.0
  %1081 = vmatpush1.msra.mxu0 0.0
  %1082 = vmatprep.subr.mxu0 0.0
  %1083 = vmatpush1.msra.mxu0 0.0
  %1084 = vmatprep.subr.mxu0 0.0
  %1085 = vmatpush1.msra.mxu0 0.0
  %1086 = vmatprep.subr.mxu0 0.0
  %1087 = vmatpush1.msra.mxu0 0.0
  %1088 = vmatprep.subr.mxu0 0.0
  %1089 = vmatpush1.msra.mxu0 0.0
  %1090 = vmatprep.subr.mxu0 0.0
  %1091 = vmatpush1.msra.mxu0 0.0
  %1092 = vmatprep.subr.mxu0 0.0
  %1093 = vmatpush1.msra.mxu0 0.0
  %1094 = vmatprep.subr.mxu0 0.0
  %1095 = vmatpush1.msra.mxu0 0.0
  %1096 = vmatprep.subr.mxu0 0.0
  %1097 = vmatpush1.msra.mxu0 0.0
  %1098 = vmatprep.subr.mxu0 0.0
  %1099 = vmatpush1.msra.mxu0 0.0
  %1100 = vmatprep.subr.mxu0 0.0
  %1101 = vmatpush1.msra.mxu0 0.0
  %1102 = vmatprep.subr.mxu0 0.0
  %1103 = vmatpush1.msra.mxu0 0.0
  %1104 = vmatprep.mubr.f32.mxu0 0.0
  %1105 = vmatmul.mubr.f32.gmra.mrb[0].mxu0 %v1035
  %v1106 = vpop.f32.mrb[0].mxu0
  %v1107 = vadd.f32 %v1026, %v1106
  %v1108 = vpop.f32.mrb[0].mxu0
  %1109 = vmatprep.mubr.f32.mxu0 0.0
  %1110 = vmatmul.mubr.f32.gmra.mrb[0].mxu0 %v1038
  %v1111 = vpop.f32.mrb[0].mxu0
  %v1112 = vadd.f32 %v1031, %v1111
  %v1113 = vpop.f32.mrb[0].mxu0
  %1114 = vdwg.mxu0
  %1115 = vrot.lane.b32.xlu0 %v553, 96
  %v1116 = vpop.permute.xlu0 %1115
  %1117 = vrot.lane.b32.xlu0 %v554, 96
  %v1118 = vpop.permute.xlu0 %1117
  %1119 = vrot.lane.b32.xlu0 %v561, 96
  %v1120 = vpop.permute.xlu0 %1119
  %1121 = vrot.lane.b32.xlu0 %v562, 96
  %v1122 = vpop.permute.xlu0 %1121
  %v1123 = vsel %vm569, %v1116, 0
  %v1125 = vsel %vm569, %v1118, 0
  %v1127 = vsel %vm569, %v1120, 0
  %v1129 = vsel %vm569, %v1122, 0
  %1131 = vmatprep.subr.mxu0 0.0
  %1132 = vmatpush1.xpose.msra.mxu0 %v1127
  %1133 = vmatprep.subr.mxu0 0.0
  %1134 = vmatpush1.xpose.msra.mxu0 %v1129
  %1135 = vmatprep.subr.mxu0 0.0
  %1136 = vmatpush1.xpose.msra.mxu0 0.0
  %1137 = vmatprep.subr.mxu0 0.0
  %1138 = vmatpush1.xpose.msra.mxu0 0.0
  %1139 = vmatprep.subr.mxu0 0.0
  %1140 = vmatpush1.xpose.msra.mxu0 0.0
  %1141 = vmatprep.subr.mxu0 0.0
  %1142 = vmatpush1.xpose.msra.mxu0 0.0
  %1143 = vmatprep.subr.mxu0 0.0
  %1144 = vmatpush1.xpose.msra.mxu0 0.0
  %1145 = vmatprep.subr.mxu0 0.0
  %1146 = vmatpush1.xpose.msra.mxu0 0.0
  %1147 = vmatprep.subr.mxu0 0.0
  %1148 = vmatpush1.xpose.msra.mxu0 0.0
  %1149 = vmatprep.subr.mxu0 0.0
  %1150 = vmatpush1.xpose.msra.mxu0 0.0
  %1151 = vmatprep.subr.mxu0 0.0
  %1152 = vmatpush1.xpose.msra.mxu0 0.0
  %1153 = vmatprep.subr.mxu0 0.0
  %1154 = vmatpush1.xpose.msra.mxu0 0.0
  %1155 = vmatprep.subr.mxu0 0.0
  %1156 = vmatpush1.xpose.msra.mxu0 0.0
  %1157 = vmatprep.subr.mxu0 0.0
  %1158 = vmatpush1.xpose.msra.mxu0 0.0
  %1159 = vmatprep.subr.mxu0 0.0
  %1160 = vmatpush1.xpose.msra.mxu0 0.0
  %1161 = vmatprep.subr.mxu0 0.0
  %1162 = vmatpush1.xpose.msra.mxu0 0.0
  %1163 = vmatprep.subr.mxu0 0.0
  %1164 = vmatpush1.xpose.msra.mxu0 0.0
  %1165 = vmatprep.subr.mxu0 0.0
  %1166 = vmatpush1.xpose.msra.mxu0 0.0
  %1167 = vmatprep.subr.mxu0 0.0
  %1168 = vmatpush1.xpose.msra.mxu0 0.0
  %1169 = vmatprep.subr.mxu0 0.0
  %1170 = vmatpush1.xpose.msra.mxu0 0.0
  %1171 = vmatprep.subr.mxu0 0.0
  %1172 = vmatpush1.xpose.msra.mxu0 0.0
  %1173 = vmatprep.subr.mxu0 0.0
  %1174 = vmatpush1.xpose.msra.mxu0 0.0
  %1175 = vmatprep.subr.mxu0 0.0
  %1176 = vmatpush1.xpose.msra.mxu0 0.0
  %1177 = vmatprep.subr.mxu0 0.0
  %1178 = vmatpush1.xpose.msra.mxu0 0.0
  %1179 = vmatprep.subr.mxu0 0.0
  %1180 = vmatpush1.xpose.msra.mxu0 0.0
  %1181 = vmatprep.subr.mxu0 0.0
  %1182 = vmatpush1.xpose.msra.mxu0 0.0
  %1183 = vmatprep.subr.mxu0 0.0
  %1184 = vmatpush1.xpose.msra.mxu0 0.0
  %1185 = vmatprep.subr.mxu0 0.0
  %1186 = vmatpush1.xpose.msra.mxu0 0.0
  %1187 = vmatprep.subr.mxu0 0.0
  %1188 = vmatpush1.xpose.msra.mxu0 0.0
  %1189 = vmatprep.subr.mxu0 0.0
  %1190 = vmatpush1.xpose.msra.mxu0 0.0
  %1191 = vmatprep.subr.mxu0 0.0
  %1192 = vmatpush1.xpose.msra.mxu0 0.0
  %1193 = vmatprep.subr.mxu0 0.0
  %1194 = vmatpush1.xpose.msra.mxu0 0.0
  %1195 = vmatprep.mubr.f32.mxu0 0.0
  %1196 = vmatmul.mubr.f32.gmra.mrb[0].mxu0 %v1123
  %v1197 = vpop.f32.mrb[0].mxu0
  %v1198 = vadd.f32 0.0, %v1197
  %v1199 = vpop.f32.mrb[0].mxu0
  %1200 = vmatprep.mubr.f32.mxu0 0.0
  %1201 = vmatmul.mubr.f32.gmra.mrb[0].mxu0 %v1125
  %v1202 = vpop.f32.mrb[0].mxu0
  %v1203 = vadd.f32 0.0, %v1202
  %v1204 = vpop.f32.mrb[0].mxu0
  %1205 = vdwg.mxu0
  %v1206 = vmul.f32 %v1198, %v563
  %v1207 = vmul.f32 %v1203, %v564
  %1208 = vrot.lane.b32.xlu0 %v171, 48
  %v1209 = vpop.permute.xlu0 %1208
  %1210 = vrot.lane.b32.xlu0 %v176, 48
  %v1211 = vpop.permute.xlu0 %1210
  %v1215 = vsel %vm569, %v1206, 0
  %v1218 = vsel %vm569, %v1207, 0
  %1220 = vmatprep.subr.mxu0 0.0
  %1221 = vmatpush1.msra.mxu0 %v1209
  %1222 = vmatprep.subr.mxu0 0.0
  %1223 = vmatpush1.msra.mxu0 %v1211
  %1224 = vmatprep.subr.mxu0 0.0
  %1225 = vmatpush1.msra.mxu0 0.0
  %1226 = vmatprep.subr.mxu0 0.0
  %1227 = vmatpush1.msra.mxu0 0.0
  %1228 = vmatprep.subr.mxu0 0.0
  %1229 = vmatpush1.msra.mxu0 0.0
  %1230 = vmatprep.subr.mxu0 0.0
  %1231 = vmatpush1.msra.mxu0 0.0
  %1232 = vmatprep.subr.mxu0 0.0
  %1233 = vmatpush1.msra.mxu0 0.0
  %1234 = vmatprep.subr.mxu0 0.0
  %1235 = vmatpush1.msra.mxu0 0.0
  %1236 = vmatprep.subr.mxu0 0.0
  %1237 = vmatpush1.msra.mxu0 0.0
  %1238 = vmatprep.subr.mxu0 0.0
  %1239 = vmatpush1.msra.mxu0 0.0
  %1240 = vmatprep.subr.mxu0 0.0
  %1241 = vmatpush1.msra.mxu0 0.0
  %1242 = vmatprep.subr.mxu0 0.0
  %1243 = vmatpush1.msra.mxu0 0.0
  %1244 = vmatprep.subr.mxu0 0.0
  %1245 = vmatpush1.msra.mxu0 0.0
  %1246 = vmatprep.subr.mxu0 0.0
  %1247 = vmatpush1.msra.mxu0 0.0
  %1248 = vmatprep.subr.mxu0 0.0
  %1249 = vmatpush1.msra.mxu0 0.0
  %1250 = vmatprep.subr.mxu0 0.0
  %1251 = vmatpush1.msra.mxu0 0.0
  %1252 = vmatprep.subr.mxu0 0.0
  %1253 = vmatpush1.msra.mxu0 0.0
  %1254 = vmatprep.subr.mxu0 0.0
  %1255 = vmatpush1.msra.mxu0 0.0
  %1256 = vmatprep.subr.mxu0 0.0
  %1257 = vmatpush1.msra.mxu0 0.0
  %1258 = vmatprep.subr.mxu0 0.0
  %1259 = vmatpush1.msra.mxu0 0.0
  %1260 = vmatprep.subr.mxu0 0.0
  %1261 = vmatpush1.msra.mxu0 0.0
  %1262 = vmatprep.subr.mxu0 0.0
  %1263 = vmatpush1.msra.mxu0 0.0
  %1264 = vmatprep.subr.mxu0 0.0
  %1265 = vmatpush1.msra.mxu0 0.0
  %1266 = vmatprep.subr.mxu0 0.0
  %1267 = vmatpush1.msra.mxu0 0.0
  %1268 = vmatprep.subr.mxu0 0.0
  %1269 = vmatpush1.msra.mxu0 0.0
  %1270 = vmatprep.subr.mxu0 0.0
  %1271 = vmatpush1.msra.mxu0 0.0
  %1272 = vmatprep.subr.mxu0 0.0
  %1273 = vmatpush1.msra.mxu0 0.0
  %1274 = vmatprep.subr.mxu0 0.0
  %1275 = vmatpush1.msra.mxu0 0.0
  %1276 = vmatprep.subr.mxu0 0.0
  %1277 = vmatpush1.msra.mxu0 0.0
  %1278 = vmatprep.subr.mxu0 0.0
  %1279 = vmatpush1.msra.mxu0 0.0
  %1280 = vmatprep.subr.mxu0 0.0
  %1281 = vmatpush1.msra.mxu0 0.0
  %1282 = vmatprep.subr.mxu0 0.0
  %1283 = vmatpush1.msra.mxu0 0.0
  %1284 = vmatprep.mubr.f32.mxu0 0.0
  %1285 = vmatmul.mubr.f32.gmra.mrb[0].mxu0 %v1215
  %v1286 = vpop.f32.mrb[0].mxu0
  %v1287 = vadd.f32 0.0, %v1286
  %v1288 = vpop.f32.mrb[0].mxu0
  %1289 = vmatprep.mubr.f32.mxu0 0.0
  %1290 = vmatmul.mubr.f32.gmra.mrb[0].mxu0 %v1218
  %v1291 = vpop.f32.mrb[0].mxu0
  %v1292 = vadd.f32 0.0, %v1291
  %v1293 = vpop.f32.mrb[0].mxu0
  %1294 = vdwg.mxu0
  %v1295 = vsel %vm569, %v1206, 0.0
  %1296 = vadd.xlane.f32.xlu0 %v1295
  %v1297 = vpop.xlane.xlu0 %1296
  %v1298 = vsel %vm569, %v1207, 0.0
  %1299 = vadd.xlane.f32.xlu0 %v1298
  %v1300 = vpop.xlane.xlu0 %1299
  %v1301 = vadd.f32 %v1297, 1e-06
  %v1302 = vadd.f32 %v1300, 1e-06
  %v1303 = vrcp.pop %v1301
  %v1304 = vrcp.pop %v1302
  %v1305 = vmul.f32 %v1287, %v1303
  %v1306 = vmul.f32 %v1292, %v1304
  %v1308 = vsel %vm952, %v1305, 0
  %v1311 = vsel %vm952, %v1306, 0
  %1313 = vmatprep.subr.mxu0 0.0
  %1314 = vmatpush1.msra.mxu0 %v567
  %1315 = vmatprep.subr.mxu0 0.0
  %1316 = vmatpush1.msra.mxu0 0.0
  %1317 = vmatprep.subr.mxu0 0.0
  %1318 = vmatpush1.msra.mxu0 0.0
  %1319 = vmatprep.subr.mxu0 0.0
  %1320 = vmatpush1.msra.mxu0 0.0
  %1321 = vmatprep.subr.mxu0 0.0
  %1322 = vmatpush1.msra.mxu0 0.0
  %1323 = vmatprep.subr.mxu0 0.0
  %1324 = vmatpush1.msra.mxu0 0.0
  %1325 = vmatprep.subr.mxu0 0.0
  %1326 = vmatpush1.msra.mxu0 0.0
  %1327 = vmatprep.subr.mxu0 0.0
  %1328 = vmatpush1.msra.mxu0 0.0
  %1329 = vmatprep.subr.mxu0 0.0
  %1330 = vmatpush1.msra.mxu0 0.0
  %1331 = vmatprep.subr.mxu0 0.0
  %1332 = vmatpush1.msra.mxu0 0.0
  %1333 = vmatprep.subr.mxu0 0.0
  %1334 = vmatpush1.msra.mxu0 0.0
  %1335 = vmatprep.subr.mxu0 0.0
  %1336 = vmatpush1.msra.mxu0 0.0
  %1337 = vmatprep.subr.mxu0 0.0
  %1338 = vmatpush1.msra.mxu0 0.0
  %1339 = vmatprep.subr.mxu0 0.0
  %1340 = vmatpush1.msra.mxu0 0.0
  %1341 = vmatprep.subr.mxu0 0.0
  %1342 = vmatpush1.msra.mxu0 0.0
  %1343 = vmatprep.subr.mxu0 0.0
  %1344 = vmatpush1.msra.mxu0 0.0
  %1345 = vmatprep.subr.mxu0 0.0
  %1346 = vmatpush1.msra.mxu0 0.0
  %1347 = vmatprep.subr.mxu0 0.0
  %1348 = vmatpush1.msra.mxu0 0.0
  %1349 = vmatprep.subr.mxu0 0.0
  %1350 = vmatpush1.msra.mxu0 0.0
  %1351 = vmatprep.subr.mxu0 0.0
  %1352 = vmatpush1.msra.mxu0 0.0
  %1353 = vmatprep.subr.mxu0 0.0
  %1354 = vmatpush1.msra.mxu0 0.0
  %1355 = vmatprep.subr.mxu0 0.0
  %1356 = vmatpush1.msra.mxu0 0.0
  %1357 = vmatprep.subr.mxu0 0.0
  %1358 = vmatpush1.msra.mxu0 0.0
  %1359 = vmatprep.subr.mxu0 0.0
  %1360 = vmatpush1.msra.mxu0 0.0
  %1361 = vmatprep.subr.mxu0 0.0
  %1362 = vmatpush1.msra.mxu0 0.0
  %1363 = vmatprep.subr.mxu0 0.0
  %1364 = vmatpush1.msra.mxu0 0.0
  %1365 = vmatprep.subr.mxu0 0.0
  %1366 = vmatpush1.msra.mxu0 0.0
  %1367 = vmatprep.subr.mxu0 0.0
  %1368 = vmatpush1.msra.mxu0 0.0
  %1369 = vmatprep.subr.mxu0 0.0
  %1370 = vmatpush1.msra.mxu0 0.0
  %1371 = vmatprep.subr.mxu0 0.0
  %1372 = vmatpush1.msra.mxu0 0.0
  %1373 = vmatprep.subr.mxu0 0.0
  %1374 = vmatpush1.msra.mxu0 0.0
  %1375 = vmatprep.subr.mxu0 0.0
  %1376 = vmatpush1.msra.mxu0 0.0
  %1377 = vmatprep.mubr.f32.mxu0 0.0
  %1378 = vmatmul.mubr.f32.gmra.mrb[0].mxu0 %v1308
  %v1379 = vpop.f32.mrb[0].mxu0
  %v1380 = vadd.f32 0.0, %v1379
  %v1381 = vpop.f32.mrb[0].mxu0
  %1382 = vmatprep.mubr.f32.mxu0 0.0
  %1383 = vmatmul.mubr.f32.gmra.mrb[0].mxu0 %v1311
  %v1384 = vpop.f32.mrb[0].mxu0
  %v1385 = vadd.f32 0.0, %v1384
  %v1386 = vpop.f32.mrb[0].mxu0
  %1387 = vdwg.mxu0
  %v1388 = vadd.f32 %v1107, %v1380
  %v1389 = vadd.f32 %v1112, %v1385
  %1390 = vrot.lane.b32.xlu0 %v553, 80
  %v1391 = vpop.permute.xlu0 %1390
  %1392 = vrot.lane.b32.xlu0 %v554, 80
  %v1393 = vpop.permute.xlu0 %1392
  %1394 = vrot.lane.b32.xlu0 %v561, 80
  %v1395 = vpop.permute.xlu0 %1394
  %1396 = vrot.lane.b32.xlu0 %v562, 80
  %v1397 = vpop.permute.xlu0 %1396
  %v1398 = vsel %vm569, %v1391, 0
  %v1400 = vsel %vm569, %v1393, 0
  %v1402 = vsel %vm569, %v1395, 0
  %v1404 = vsel %vm569, %v1397, 0
  %1406 = vmatprep.subr.mxu0 0.0
  %1407 = vmatpush1.xpose.msra.mxu0 %v1402
  %1408 = vmatprep.subr.mxu0 0.0
  %1409 = vmatpush1.xpose.msra.mxu0 %v1404
  %1410 = vmatprep.subr.mxu0 0.0
  %1411 = vmatpush1.xpose.msra.mxu0 0.0
  %1412 = vmatprep.subr.mxu0 0.0
  %1413 = vmatpush1.xpose.msra.mxu0 0.0
  %1414 = vmatprep.subr.mxu0 0.0
  %1415 = vmatpush1.xpose.msra.mxu0 0.0
  %1416 = vmatprep.subr.mxu0 0.0
  %1417 = vmatpush1.xpose.msra.mxu0 0.0
  %1418 = vmatprep.subr.mxu0 0.0
  %1419 = vmatpush1.xpose.msra.mxu0 0.0
  %1420 = vmatprep.subr.mxu0 0.0
  %1421 = vmatpush1.xpose.msra.mxu0 0.0
  %1422 = vmatprep.subr.mxu0 0.0
  %1423 = vmatpush1.xpose.msra.mxu0 0.0
  %1424 = vmatprep.subr.mxu0 0.0
  %1425 = vmatpush1.xpose.msra.mxu0 0.0
  %1426 = vmatprep.subr.mxu0 0.0
  %1427 = vmatpush1.xpose.msra.mxu0 0.0
  %1428 = vmatprep.subr.mxu0 0.0
  %1429 = vmatpush1.xpose.msra.mxu0 0.0
  %1430 = vmatprep.subr.mxu0 0.0
  %1431 = vmatpush1.xpose.msra.mxu0 0.0
  %1432 = vmatprep.subr.mxu0 0.0
  %1433 = vmatpush1.xpose.msra.mxu0 0.0
  %1434 = vmatprep.subr.mxu0 0.0
  %1435 = vmatpush1.xpose.msra.mxu0 0.0
  %1436 = vmatprep.subr.mxu0 0.0
  %1437 = vmatpush1.xpose.msra.mxu0 0.0
  %1438 = vmatprep.subr.mxu0 0.0
  %1439 = vmatpush1.xpose.msra.mxu0 0.0
  %1440 = vmatprep.subr.mxu0 0.0
  %1441 = vmatpush1.xpose.msra.mxu0 0.0
  %1442 = vmatprep.subr.mxu0 0.0
  %1443 = vmatpush1.xpose.msra.mxu0 0.0
  %1444 = vmatprep.subr.mxu0 0.0
  %1445 = vmatpush1.xpose.msra.mxu0 0.0
  %1446 = vmatprep.subr.mxu0 0.0
  %1447 = vmatpush1.xpose.msra.mxu0 0.0
  %1448 = vmatprep.subr.mxu0 0.0
  %1449 = vmatpush1.xpose.msra.mxu0 0.0
  %1450 = vmatprep.subr.mxu0 0.0
  %1451 = vmatpush1.xpose.msra.mxu0 0.0
  %1452 = vmatprep.subr.mxu0 0.0
  %1453 = vmatpush1.xpose.msra.mxu0 0.0
  %1454 = vmatprep.subr.mxu0 0.0
  %1455 = vmatpush1.xpose.msra.mxu0 0.0
  %1456 = vmatprep.subr.mxu0 0.0
  %1457 = vmatpush1.xpose.msra.mxu0 0.0
  %1458 = vmatprep.subr.mxu0 0.0
  %1459 = vmatpush1.xpose.msra.mxu0 0.0
  %1460 = vmatprep.subr.mxu0 0.0
  %1461 = vmatpush1.xpose.msra.mxu0 0.0
  %1462 = vmatprep.subr.mxu0 0.0
  %1463 = vmatpush1.xpose.msra.mxu0 0.0
  %1464 = vmatprep.subr.mxu0 0.0
  %1465 = vmatpush1.xpose.msra.mxu0 0.0
  %1466 = vmatprep.subr.mxu0 0.0
  %1467 = vmatpush1.xpose.msra.mxu0 0.0
  %1468 = vmatprep.subr.mxu0 0.0
  %1469 = vmatpush1.xpose.msra.mxu0 0.0
  %1470 = vmatprep.mubr.f32.mxu0 0.0
  %1471 = vmatmul.mubr.f32.gmra.mrb[0].mxu0 %v1398
  %v1472 = vpop.f32.mrb[0].mxu0
  %v1473 = vadd.f32 0.0, %v1472
  %v1474 = vpop.f32.mrb[0].mxu0
  %1475 = vmatprep.mubr.f32.mxu0 0.0
  %1476 = vmatmul.mubr.f32.gmra.mrb[0].mxu0 %v1400
  %v1477 = vpop.f32.mrb[0].mxu0
  %v1478 = vadd.f32 0.0, %v1477
  %v1479 = vpop.f32.mrb[0].mxu0
  %1480 = vdwg.mxu0
  %v1481 = vmul.f32 %v1473, %v563
  %v1482 = vmul.f32 %v1478, %v564
  %1483 = vrot.lane.b32.xlu0 %v171, 40
  %v1484 = vpop.permute.xlu0 %1483
  %1485 = vrot.lane.b32.xlu0 %v176, 40
  %v1486 = vpop.permute.xlu0 %1485
  %v1490 = vsel %vm569, %v1481, 0
  %v1493 = vsel %vm569, %v1482, 0
  %1495 = vmatprep.subr.mxu0 0.0
  %1496 = vmatpush1.msra.mxu0 %v1484
  %1497 = vmatprep.subr.mxu0 0.0
  %1498 = vmatpush1.msra.mxu0 %v1486
  %1499 = vmatprep.subr.mxu0 0.0
  %1500 = vmatpush1.msra.mxu0 0.0
  %1501 = vmatprep.subr.mxu0 0.0
  %1502 = vmatpush1.msra.mxu0 0.0
  %1503 = vmatprep.subr.mxu0 0.0
  %1504 = vmatpush1.msra.mxu0 0.0
  %1505 = vmatprep.subr.mxu0 0.0
  %1506 = vmatpush1.msra.mxu0 0.0
  %1507 = vmatprep.subr.mxu0 0.0
  %1508 = vmatpush1.msra.mxu0 0.0
  %1509 = vmatprep.subr.mxu0 0.0
  %1510 = vmatpush1.msra.mxu0 0.0
  %1511 = vmatprep.subr.mxu0 0.0
  %1512 = vmatpush1.msra.mxu0 0.0
  %1513 = vmatprep.subr.mxu0 0.0
  %1514 = vmatpush1.msra.mxu0 0.0
  %1515 = vmatprep.subr.mxu0 0.0
  %1516 = vmatpush1.msra.mxu0 0.0
  %1517 = vmatprep.subr.mxu0 0.0
  %1518 = vmatpush1.msra.mxu0 0.0
  %1519 = vmatprep.subr.mxu0 0.0
  %1520 = vmatpush1.msra.mxu0 0.0
  %1521 = vmatprep.subr.mxu0 0.0
  %1522 = vmatpush1.msra.mxu0 0.0
  %1523 = vmatprep.subr.mxu0 0.0
  %1524 = vmatpush1.msra.mxu0 0.0
  %1525 = vmatprep.subr.mxu0 0.0
  %1526 = vmatpush1.msra.mxu0 0.0
  %1527 = vmatprep.subr.mxu0 0.0
  %1528 = vmatpush1.msra.mxu0 0.0
  %1529 = vmatprep.subr.mxu0 0.0
  %1530 = vmatpush1.msra.mxu0 0.0
  %1531 = vmatprep.subr.mxu0 0.0
  %1532 = vmatpush1.msra.mxu0 0.0
  %1533 = vmatprep.subr.mxu0 0.0
  %1534 = vmatpush1.msra.mxu0 0.0
  %1535 = vmatprep.subr.mxu0 0.0
  %1536 = vmatpush1.msra.mxu0 0.0
  %1537 = vmatprep.subr.mxu0 0.0
  %1538 = vmatpush1.msra.mxu0 0.0
  %1539 = vmatprep.subr.mxu0 0.0
  %1540 = vmatpush1.msra.mxu0 0.0
  %1541 = vmatprep.subr.mxu0 0.0
  %1542 = vmatpush1.msra.mxu0 0.0
  %1543 = vmatprep.subr.mxu0 0.0
  %1544 = vmatpush1.msra.mxu0 0.0
  %1545 = vmatprep.subr.mxu0 0.0
  %1546 = vmatpush1.msra.mxu0 0.0
  %1547 = vmatprep.subr.mxu0 0.0
  %1548 = vmatpush1.msra.mxu0 0.0
  %1549 = vmatprep.subr.mxu0 0.0
  %1550 = vmatpush1.msra.mxu0 0.0
  %1551 = vmatprep.subr.mxu0 0.0
  %1552 = vmatpush1.msra.mxu0 0.0
  %1553 = vmatprep.subr.mxu0 0.0
  %1554 = vmatpush1.msra.mxu0 0.0
  %1555 = vmatprep.subr.mxu0 0.0
  %1556 = vmatpush1.msra.mxu0 0.0
  %1557 = vmatprep.subr.mxu0 0.0
  %1558 = vmatpush1.msra.mxu0 0.0
  %1559 = vmatprep.mubr.f32.mxu0 0.0
  %1560 = vmatmul.mubr.f32.gmra.mrb[0].mxu0 %v1490
  %v1561 = vpop.f32.mrb[0].mxu0
  %v1562 = vadd.f32 0.0, %v1561
  %v1563 = vpop.f32.mrb[0].mxu0
  %1564 = vmatprep.mubr.f32.mxu0 0.0
  %1565 = vmatmul.mubr.f32.gmra.mrb[0].mxu0 %v1493
  %v1566 = vpop.f32.mrb[0].mxu0
  %v1567 = vadd.f32 0.0, %v1566
  %v1568 = vpop.f32.mrb[0].mxu0
  %1569 = vdwg.mxu0
  %v1570 = vsel %vm569, %v1481, 0.0
  %1571 = vadd.xlane.f32.xlu0 %v1570
  %v1572 = vpop.xlane.xlu0 %1571
  %v1573 = vsel %vm569, %v1482, 0.0
  %1574 = vadd.xlane.f32.xlu0 %v1573
  %v1575 = vpop.xlane.xlu0 %1574
  %v1576 = vadd.f32 %v1572, 1e-06
  %v1577 = vadd.f32 %v1575, 1e-06
  %v1578 = vrcp.pop %v1576
  %v1579 = vrcp.pop %v1577
  %v1580 = vmul.f32 %v1562, %v1578
  %v1581 = vmul.f32 %v1567, %v1579
  %v1583 = vsel %vm952, %v1580, 0
  %v1586 = vsel %vm952, %v1581, 0
  %1588 = vmatprep.subr.mxu0 0.0
  %1589 = vmatpush1.msra.mxu0 %v568
  %1590 = vmatprep.subr.mxu0 0.0
  %1591 = vmatpush1.msra.mxu0 0.0
  %1592 = vmatprep.subr.mxu0 0.0
  %1593 = vmatpush1.msra.mxu0 0.0
  %1594 = vmatprep.subr.mxu0 0.0
  %1595 = vmatpush1.msra.mxu0 0.0
  %1596 = vmatprep.subr.mxu0 0.0
  %1597 = vmatpush1.msra.mxu0 0.0
  %1598 = vmatprep.subr.mxu0 0.0
  %1599 = vmatpush1.msra.mxu0 0.0
  %1600 = vmatprep.subr.mxu0 0.0
  %1601 = vmatpush1.msra.mxu0 0.0
  %1602 = vmatprep.subr.mxu0 0.0
  %1603 = vmatpush1.msra.mxu0 0.0
  %1604 = vmatprep.subr.mxu0 0.0
  %1605 = vmatpush1.msra.mxu0 0.0
  %1606 = vmatprep.subr.mxu0 0.0
  %1607 = vmatpush1.msra.mxu0 0.0
  %1608 = vmatprep.subr.mxu0 0.0
  %1609 = vmatpush1.msra.mxu0 0.0
  %1610 = vmatprep.subr.mxu0 0.0
  %1611 = vmatpush1.msra.mxu0 0.0
  %1612 = vmatprep.subr.mxu0 0.0
  %1613 = vmatpush1.msra.mxu0 0.0
  %1614 = vmatprep.subr.mxu0 0.0
  %1615 = vmatpush1.msra.mxu0 0.0
  %1616 = vmatprep.subr.mxu0 0.0
  %1617 = vmatpush1.msra.mxu0 0.0
  %1618 = vmatprep.subr.mxu0 0.0
  %1619 = vmatpush1.msra.mxu0 0.0
  %1620 = vmatprep.subr.mxu0 0.0
  %1621 = vmatpush1.msra.mxu0 0.0
  %1622 = vmatprep.subr.mxu0 0.0
  %1623 = vmatpush1.msra.mxu0 0.0
  %1624 = vmatprep.subr.mxu0 0.0
  %1625 = vmatpush1.msra.mxu0 0.0
  %1626 = vmatprep.subr.mxu0 0.0
  %1627 = vmatpush1.msra.mxu0 0.0
  %1628 = vmatprep.subr.mxu0 0.0
  %1629 = vmatpush1.msra.mxu0 0.0
  %1630 = vmatprep.subr.mxu0 0.0
  %1631 = vmatpush1.msra.mxu0 0.0
  %1632 = vmatprep.subr.mxu0 0.0
  %1633 = vmatpush1.msra.mxu0 0.0
  %1634 = vmatprep.subr.mxu0 0.0
  %1635 = vmatpush1.msra.mxu0 0.0
  %1636 = vmatprep.subr.mxu0 0.0
  %1637 = vmatpush1.msra.mxu0 0.0
  %1638 = vmatprep.subr.mxu0 0.0
  %1639 = vmatpush1.msra.mxu0 0.0
  %1640 = vmatprep.subr.mxu0 0.0
  %1641 = vmatpush1.msra.mxu0 0.0
  %1642 = vmatprep.subr.mxu0 0.0
  %1643 = vmatpush1.msra.mxu0 0.0
  %1644 = vmatprep.subr.mxu0 0.0
  %1645 = vmatpush1.msra.mxu0 0.0
  %1646 = vmatprep.subr.mxu0 0.0
  %1647 = vmatpush1.msra.mxu0 0.0
  %1648 = vmatprep.subr.mxu0 0.0
  %1649 = vmatpush1.msra.mxu0 0.0
  %1650 = vmatprep.subr.mxu0 0.0
  %1651 = vmatpush1.msra.mxu0 0.0
  %1652 = vmatprep.mubr.f32.mxu0 0.0
  %1653 = vmatmul.mubr.f32.gmra.mrb[0].mxu0 %v1583
  %v1654 = vpop.f32.mrb[0].mxu0
  %v1655 = vadd.f32 0.0, %v1654
  %v1656 = vpop.f32.mrb[0].mxu0
  %1657 = vmatprep.mubr.f32.mxu0 0.0
  %1658 = vmatmul.mubr.f32.gmra.mrb[0].mxu0 %v1586
  %v1659 = vpop.f32.mrb[0].mxu0
  %v1660 = vadd.f32 0.0, %v1659
  %v1661 = vpop.f32.mrb[0].mxu0
  %1662 = vdwg.mxu0
  %v1663 = vadd.f32 %v1388, %v1655
  %v1664 = vadd.f32 %v1389, %v1660
  %v1665 = vld [vmem:[%s5] sm:$0x1]
  %v1667 = vlaneseq
  %v1668 = vshrl.u32 %v1667, 7
  %v1669 = vsub.s32 0, %v1668
  %v1670 = vrot.slane %v1665, %v1669
  %v1672 = vadd.f32 %v1663, %v1670
  %v1673 = vadd.f32 %v1664, %v1670
  %v1674 = vadd.f32 %v83, %v1672
  %v1675 = vadd.f32 %v84, %v1673
  %v1676 = vld [vmem:[%s9] sm:$0x1]
  %v1677 = vld [vmem:[%s10] sm:$0x1]
  %v1678 = vsel %vm97, %v1674, 0.0
  %1679 = vadd.xlane.f32.xlu0 %v1678
  %v1680 = vpop.xlane.xlu0 %1679
  %v1681 = vsel %vm97, %v1675, 0.0
  %1682 = vadd.xlane.f32.xlu0 %v1681
  %v1683 = vpop.xlane.xlu0 %1682
  %v1684 = vrcp.pop 32.0
  %v1685 = vmul.f32 %v1680, %v1684
  %v1686 = vmul.f32 %v1683, %v1684
  %v1687 = vsub.f32 %v1674, %v1685
  %v1688 = vsub.f32 %v1675, %v1686
  %v1689 = vmul.f32 %v1687, %v1687
  %v1690 = vmul.f32 %v1688, %v1688
  %v1691 = vsel %vm97, %v1689, 0.0
  %1692 = vadd.xlane.f32.xlu0 %v1691
  %v1693 = vpop.xlane.xlu0 %1692
  %v1694 = vsel %vm97, %v1690, 0.0
  %1695 = vadd.xlane.f32.xlu0 %v1694
  %v1696 = vpop.xlane.xlu0 %1695
  %v1697 = vmul.f32 %v1693, %v1684
  %v1698 = vmul.f32 %v1696, %v1684
  %v1699 = vadd.f32 %v1697, 1e-05
  %v1700 = vadd.f32 %v1698, 1e-05
  %v1701 = vrsqrt.pop %v1699
  %v1702 = vrsqrt.pop %v1700
  %v1703 = vmul.f32 %v1687, %v1701
  %v1704 = vmul.f32 %v1688, %v1702
  %v1706 = vlaneseq
  %v1707 = vshrl.u32 %v1706, 7
  %v1708 = vsub.s32 0, %v1707
  %v1709 = vrot.slane %v1676, %v1708
  %v1711 = vmul.f32 %v1703, %v1709
  %v1712 = vmul.f32 %v1704, %v1709
  %v1714 = vlaneseq
  %v1715 = vshrl.u32 %v1714, 7
  %v1716 = vsub.s32 0, %v1715
  %v1717 = vrot.slane %v1677, %v1716
  %v1719 = vadd.f32 %v1711, %v1717
  %v1720 = vadd.f32 %v1712, %v1717
  %v1721 = vld [vmem:[%s11] sm:$0xff]
  %v1722 = vld [vmem:[%s11 + $0x8] sm:$0xff]
  %v1723 = vld [vmem:[%s11 + $0x10] sm:$0xff]
  %v1724 = vld [vmem:[%s11 + $0x18] sm:$0xff]
  %v1725 = vld [vmem:[%s12] sm:$0x1]
  %v1727 = vlaneseq
  %v1728 = vshrl.u32 %v1727, 7
  %v1729 = vsub.s32 0, %v1728
  %v1730 = vrot.slane %v1725, %v1729
  %v1733 = vsel %vm97, %v1719, 0
  %v1736 = vsel %vm97, %v1720, 0
  %1738 = vmatprep.subr.mxu0 0.0
  %1739 = vmatpush1.msra.mxu0 %v1721
  %1740 = vmatprep.subr.mxu0 0.0
  %1741 = vmatpush1.msra.mxu0 %v1722
  %1742 = vmatprep.subr.mxu0 0.0
  %1743 = vmatpush1.msra.mxu0 %v1723
  %1744 = vmatprep.subr.mxu0 0.0
  %1745 = vmatpush1.msra.mxu0 %v1724
  %1746 = vmatprep.subr.mxu0 0.0
  %1747 = vmatpush1.msra.mxu0 0.0
  %1748 = vmatprep.subr.mxu0 0.0
  %1749 = vmatpush1.msra.mxu0 0.0
  %1750 = vmatprep.subr.mxu0 0.0
  %1751 = vmatpush1.msra.mxu0 0.0
  %1752 = vmatprep.subr.mxu0 0.0
  %1753 = vmatpush1.msra.mxu0 0.0
  %1754 = vmatprep.subr.mxu0 0.0
  %1755 = vmatpush1.msra.mxu0 0.0
  %1756 = vmatprep.subr.mxu0 0.0
  %1757 = vmatpush1.msra.mxu0 0.0
  %1758 = vmatprep.subr.mxu0 0.0
  %1759 = vmatpush1.msra.mxu0 0.0
  %1760 = vmatprep.subr.mxu0 0.0
  %1761 = vmatpush1.msra.mxu0 0.0
  %1762 = vmatprep.subr.mxu0 0.0
  %1763 = vmatpush1.msra.mxu0 0.0
  %1764 = vmatprep.subr.mxu0 0.0
  %1765 = vmatpush1.msra.mxu0 0.0
  %1766 = vmatprep.subr.mxu0 0.0
  %1767 = vmatpush1.msra.mxu0 0.0
  %1768 = vmatprep.subr.mxu0 0.0
  %1769 = vmatpush1.msra.mxu0 0.0
  %1770 = vmatprep.subr.mxu0 0.0
  %1771 = vmatpush1.msra.mxu0 0.0
  %1772 = vmatprep.subr.mxu0 0.0
  %1773 = vmatpush1.msra.mxu0 0.0
  %1774 = vmatprep.subr.mxu0 0.0
  %1775 = vmatpush1.msra.mxu0 0.0
  %1776 = vmatprep.subr.mxu0 0.0
  %1777 = vmatpush1.msra.mxu0 0.0
  %1778 = vmatprep.subr.mxu0 0.0
  %1779 = vmatpush1.msra.mxu0 0.0
  %1780 = vmatprep.subr.mxu0 0.0
  %1781 = vmatpush1.msra.mxu0 0.0
  %1782 = vmatprep.subr.mxu0 0.0
  %1783 = vmatpush1.msra.mxu0 0.0
  %1784 = vmatprep.subr.mxu0 0.0
  %1785 = vmatpush1.msra.mxu0 0.0
  %1786 = vmatprep.subr.mxu0 0.0
  %1787 = vmatpush1.msra.mxu0 0.0
  %1788 = vmatprep.subr.mxu0 0.0
  %1789 = vmatpush1.msra.mxu0 0.0
  %1790 = vmatprep.subr.mxu0 0.0
  %1791 = vmatpush1.msra.mxu0 0.0
  %1792 = vmatprep.subr.mxu0 0.0
  %1793 = vmatpush1.msra.mxu0 0.0
  %1794 = vmatprep.subr.mxu0 0.0
  %1795 = vmatpush1.msra.mxu0 0.0
  %1796 = vmatprep.subr.mxu0 0.0
  %1797 = vmatpush1.msra.mxu0 0.0
  %1798 = vmatprep.subr.mxu0 0.0
  %1799 = vmatpush1.msra.mxu0 0.0
  %1800 = vmatprep.subr.mxu0 0.0
  %1801 = vmatpush1.msra.mxu0 0.0
  %1802 = vmatprep.mubr.f32.mxu0 0.0
  %1803 = vmatmul.mubr.f32.gmra.mrb[0].mxu0 %v1733
  %v1804 = vpop.f32.mrb[0].mxu0
  %v1805 = vadd.f32 %v1730, %v1804
  %v1806 = vpop.f32.mrb[0].mxu0
  %1807 = vmatprep.mubr.f32.mxu0 0.0
  %1808 = vmatmul.mubr.f32.gmra.mrb[0].mxu0 %v1736
  %v1809 = vpop.f32.mrb[0].mxu0
  %v1810 = vadd.f32 %v1730, %v1809
  %v1811 = vpop.f32.mrb[0].mxu0
  %1812 = vdwg.mxu0
  %v1813 = vld [vmem:[%s13] sm:$0xff]
  %v1814 = vld [vmem:[%s13 + $0x8] sm:$0xff]
  %v1815 = vld [vmem:[%s13 + $0x10] sm:$0xff]
  %v1816 = vld [vmem:[%s13 + $0x18] sm:$0xff]
  %v1817 = vld [vmem:[%s14] sm:$0x1]
  %v1819 = vlaneseq
  %v1820 = vshrl.u32 %v1819, 7
  %v1821 = vsub.s32 0, %v1820
  %v1822 = vrot.slane %v1817, %v1821
  %v1825 = vsel %vm97, %v85, 0
  %1827 = vmatprep.subr.mxu0 0.0
  %1828 = vmatpush1.msra.mxu0 %v1813
  %1829 = vmatprep.subr.mxu0 0.0
  %1830 = vmatpush1.msra.mxu0 %v1814
  %1831 = vmatprep.subr.mxu0 0.0
  %1832 = vmatpush1.msra.mxu0 %v1815
  %1833 = vmatprep.subr.mxu0 0.0
  %1834 = vmatpush1.msra.mxu0 %v1816
  %1835 = vmatprep.subr.mxu0 0.0
  %1836 = vmatpush1.msra.mxu0 0.0
  %1837 = vmatprep.subr.mxu0 0.0
  %1838 = vmatpush1.msra.mxu0 0.0
  %1839 = vmatprep.subr.mxu0 0.0
  %1840 = vmatpush1.msra.mxu0 0.0
  %1841 = vmatprep.subr.mxu0 0.0
  %1842 = vmatpush1.msra.mxu0 0.0
  %1843 = vmatprep.subr.mxu0 0.0
  %1844 = vmatpush1.msra.mxu0 0.0
  %1845 = vmatprep.subr.mxu0 0.0
  %1846 = vmatpush1.msra.mxu0 0.0
  %1847 = vmatprep.subr.mxu0 0.0
  %1848 = vmatpush1.msra.mxu0 0.0
  %1849 = vmatprep.subr.mxu0 0.0
  %1850 = vmatpush1.msra.mxu0 0.0
  %1851 = vmatprep.subr.mxu0 0.0
  %1852 = vmatpush1.msra.mxu0 0.0
  %1853 = vmatprep.subr.mxu0 0.0
  %1854 = vmatpush1.msra.mxu0 0.0
  %1855 = vmatprep.subr.mxu0 0.0
  %1856 = vmatpush1.msra.mxu0 0.0
  %1857 = vmatprep.subr.mxu0 0.0
  %1858 = vmatpush1.msra.mxu0 0.0
  %1859 = vmatprep.subr.mxu0 0.0
  %1860 = vmatpush1.msra.mxu0 0.0
  %1861 = vmatprep.subr.mxu0 0.0
  %1862 = vmatpush1.msra.mxu0 0.0
  %1863 = vmatprep.subr.mxu0 0.0
  %1864 = vmatpush1.msra.mxu0 0.0
  %1865 = vmatprep.subr.mxu0 0.0
  %1866 = vmatpush1.msra.mxu0 0.0
  %1867 = vmatprep.subr.mxu0 0.0
  %1868 = vmatpush1.msra.mxu0 0.0
  %1869 = vmatprep.subr.mxu0 0.0
  %1870 = vmatpush1.msra.mxu0 0.0
  %1871 = vmatprep.subr.mxu0 0.0
  %1872 = vmatpush1.msra.mxu0 0.0
  %1873 = vmatprep.subr.mxu0 0.0
  %1874 = vmatpush1.msra.mxu0 0.0
  %1875 = vmatprep.subr.mxu0 0.0
  %1876 = vmatpush1.msra.mxu0 0.0
  %1877 = vmatprep.subr.mxu0 0.0
  %1878 = vmatpush1.msra.mxu0 0.0
  %1879 = vmatprep.subr.mxu0 0.0
  %1880 = vmatpush1.msra.mxu0 0.0
  %1881 = vmatprep.subr.mxu0 0.0
  %1882 = vmatpush1.msra.mxu0 0.0
  %1883 = vmatprep.subr.mxu0 0.0
  %1884 = vmatpush1.msra.mxu0 0.0
  %1885 = vmatprep.subr.mxu0 0.0
  %1886 = vmatpush1.msra.mxu0 0.0
  %1887 = vmatprep.subr.mxu0 0.0
  %1888 = vmatpush1.msra.mxu0 0.0
  %1889 = vmatprep.subr.mxu0 0.0
  %1890 = vmatpush1.msra.mxu0 0.0
  %1891 = vmatprep.mubr.f32.mxu0 0.0
  %1892 = vmatmul.mubr.f32.gmra.mrb[0].mxu0 %v1825
  %v1893 = vpop.f32.mrb[0].mxu0
  %v1894 = vadd.f32 %v1822, %v1893
  %v1895 = vpop.f32.mrb[0].mxu0
  %1896 = vdwg.mxu0
  %v1897 = vld [vmem:[%s17] sm:$0xff]
  %v1898 = vld [vmem:[%s17 + $0x8] sm:$0xff]
  %v1899 = vld [vmem:[%s15] sm:$0xff]
  %v1900 = vld [vmem:[%s15 + $0x8] sm:$0xff]
  %v1901 = vld [vmem:[%s15 + $0x10] sm:$0xff]
  %v1902 = vld [vmem:[%s15 + $0x18] sm:$0xff]
  %v1904 = vsel %vm952, %v1805, 0
  %v1907 = vsel %vm952, %v1810, 0
  %v1910 = vsel %vm952, %v1894, 0
  %1912 = vmatprep.subr.mxu0 0.0
  %1913 = vmatpush1.xpose.msra.mxu0 %v1910
  %1914 = vmatprep.subr.mxu0 0.0
  %1915 = vmatpush1.xpose.msra.mxu0 0.0
  %1916 = vmatprep.subr.mxu0 0.0
  %1917 = vmatpush1.xpose.msra.mxu0 0.0
  %1918 = vmatprep.subr.mxu0 0.0
  %1919 = vmatpush1.xpose.msra.mxu0 0.0
  %1920 = vmatprep.subr.mxu0 0.0
  %1921 = vmatpush1.xpose.msra.mxu0 0.0
  %1922 = vmatprep.subr.mxu0 0.0
  %1923 = vmatpush1.xpose.msra.mxu0 0.0
  %1924 = vmatprep.subr.mxu0 0.0
  %1925 = vmatpush1.xpose.msra.mxu0 0.0
  %1926 = vmatprep.subr.mxu0 0.0
  %1927 = vmatpush1.xpose.msra.mxu0 0.0
  %1928 = vmatprep.subr.mxu0 0.0
  %1929 = vmatpush1.xpose.msra.mxu0 0.0
  %1930 = vmatprep.subr.mxu0 0.0
  %1931 = vmatpush1.xpose.msra.mxu0 0.0
  %1932 = vmatprep.subr.mxu0 0.0
  %1933 = vmatpush1.xpose.msra.mxu0 0.0
  %1934 = vmatprep.subr.mxu0 0.0
  %1935 = vmatpush1.xpose.msra.mxu0 0.0
  %1936 = vmatprep.subr.mxu0 0.0
  %1937 = vmatpush1.xpose.msra.mxu0 0.0
  %1938 = vmatprep.subr.mxu0 0.0
  %1939 = vmatpush1.xpose.msra.mxu0 0.0
  %1940 = vmatprep.subr.mxu0 0.0
  %1941 = vmatpush1.xpose.msra.mxu0 0.0
  %1942 = vmatprep.subr.mxu0 0.0
  %1943 = vmatpush1.xpose.msra.mxu0 0.0
  %1944 = vmatprep.subr.mxu0 0.0
  %1945 = vmatpush1.xpose.msra.mxu0 0.0
  %1946 = vmatprep.subr.mxu0 0.0
  %1947 = vmatpush1.xpose.msra.mxu0 0.0
  %1948 = vmatprep.subr.mxu0 0.0
  %1949 = vmatpush1.xpose.msra.mxu0 0.0
  %1950 = vmatprep.subr.mxu0 0.0
  %1951 = vmatpush1.xpose.msra.mxu0 0.0
  %1952 = vmatprep.subr.mxu0 0.0
  %1953 = vmatpush1.xpose.msra.mxu0 0.0
  %1954 = vmatprep.subr.mxu0 0.0
  %1955 = vmatpush1.xpose.msra.mxu0 0.0
  %1956 = vmatprep.subr.mxu0 0.0
  %1957 = vmatpush1.xpose.msra.mxu0 0.0
  %1958 = vmatprep.subr.mxu0 0.0
  %1959 = vmatpush1.xpose.msra.mxu0 0.0
  %1960 = vmatprep.subr.mxu0 0.0
  %1961 = vmatpush1.xpose.msra.mxu0 0.0
  %1962 = vmatprep.subr.mxu0 0.0
  %1963 = vmatpush1.xpose.msra.mxu0 0.0
  %1964 = vmatprep.subr.mxu0 0.0
  %1965 = vmatpush1.xpose.msra.mxu0 0.0
  %1966 = vmatprep.subr.mxu0 0.0
  %1967 = vmatpush1.xpose.msra.mxu0 0.0
  %1968 = vmatprep.subr.mxu0 0.0
  %1969 = vmatpush1.xpose.msra.mxu0 0.0
  %1970 = vmatprep.subr.mxu0 0.0
  %1971 = vmatpush1.xpose.msra.mxu0 0.0
  %1972 = vmatprep.subr.mxu0 0.0
  %1973 = vmatpush1.xpose.msra.mxu0 0.0
  %1974 = vmatprep.subr.mxu0 0.0
  %1975 = vmatpush1.xpose.msra.mxu0 0.0
  %1976 = vmatprep.mubr.f32.mxu0 0.0
  %1977 = vmatmul.mubr.f32.gmra.mrb[0].mxu0 %v1904
  %v1978 = vpop.f32.mrb[0].mxu0
  %v1979 = vadd.f32 0.0, %v1978
  %v1980 = vpop.f32.mrb[0].mxu0
  %1981 = vmatprep.mubr.f32.mxu0 0.0
  %1982 = vmatmul.mubr.f32.gmra.mrb[0].mxu0 %v1907
  %v1983 = vpop.f32.mrb[0].mxu0
  %v1984 = vadd.f32 0.0, %v1983
  %v1985 = vpop.f32.mrb[0].mxu0
  %1986 = vdwg.mxu0
  %v1987 = vmul.f32 %v1979, 0.35355338
  %v1988 = vmul.f32 %v1984, 0.35355338
  %v1989 = vadd.f32 %v1987, %v1897
  %v1990 = vadd.f32 %v1988, %v1898
  %v1991 = vsel %vm952, %v1989, -inf
  %1992 = vmax.xlane.f32.xlu0 %v1991
  %v1993 = vpop.xlane.xlu0 %1992
  %v1994 = vsel %vm952, %v1990, -inf
  %1995 = vmax.xlane.f32.xlu0 %v1994
  %v1996 = vpop.xlane.xlu0 %1995
  %v1997 = vsub.f32 %v1989, %v1993
  %v1998 = vsub.f32 %v1990, %v1996
  %v1999 = vmul.f32 %v1997, 1.442695
  %v2000 = vpow.pop %v1999
  %v2001 = vmul.f32 %v1998, 1.442695
  %v2002 = vpow.pop %v2001
  %v2003 = vsel %vm952, %v2000, 0.0
  %2004 = vadd.xlane.f32.xlu0 %v2003
  %v2005 = vpop.xlane.xlu0 %2004
  %v2006 = vsel %vm952, %v2002, 0.0
  %2007 = vadd.xlane.f32.xlu0 %v2006
  %v2008 = vpop.xlane.xlu0 %2007
  %v2009 = vrcp.pop %v2005
  %v2010 = vrcp.pop %v2008
  %v2011 = vmul.f32 %v2000, %v2009
  %v2012 = vmul.f32 %v2002, %v2010
  %2013 = vrot.lane.b32.xlu0 %v1894, 96
  %v2014 = vpop.permute.xlu0 %2013
  %v2017 = vsel %vm952, %v2011, 0
  %v2020 = vsel %vm952, %v2012, 0
  %2022 = vmatprep.subr.mxu0 0.0
  %2023 = vmatpush1.msra.mxu0 %v2014
  %2024 = vmatprep.subr.mxu0 0.0
  %2025 = vmatpush1.msra.mxu0 0.0
  %2026 = vmatprep.subr.mxu0 0.0
  %2027 = vmatpush1.msra.mxu0 0.0
  %2028 = vmatprep.subr.mxu0 0.0
  %2029 = vmatpush1.msra.mxu0 0.0
  %2030 = vmatprep.subr.mxu0 0.0
  %2031 = vmatpush1.msra.mxu0 0.0
  %2032 = vmatprep.subr.mxu0 0.0
  %2033 = vmatpush1.msra.mxu0 0.0
  %2034 = vmatprep.subr.mxu0 0.0
  %2035 = vmatpush1.msra.mxu0 0.0
  %2036 = vmatprep.subr.mxu0 0.0
  %2037 = vmatpush1.msra.mxu0 0.0
  %2038 = vmatprep.subr.mxu0 0.0
  %2039 = vmatpush1.msra.mxu0 0.0
  %2040 = vmatprep.subr.mxu0 0.0
  %2041 = vmatpush1.msra.mxu0 0.0
  %2042 = vmatprep.subr.mxu0 0.0
  %2043 = vmatpush1.msra.mxu0 0.0
  %2044 = vmatprep.subr.mxu0 0.0
  %2045 = vmatpush1.msra.mxu0 0.0
  %2046 = vmatprep.subr.mxu0 0.0
  %2047 = vmatpush1.msra.mxu0 0.0
  %2048 = vmatprep.subr.mxu0 0.0
  %2049 = vmatpush1.msra.mxu0 0.0
  %2050 = vmatprep.subr.mxu0 0.0
  %2051 = vmatpush1.msra.mxu0 0.0
  %2052 = vmatprep.subr.mxu0 0.0
  %2053 = vmatpush1.msra.mxu0 0.0
  %2054 = vmatprep.subr.mxu0 0.0
  %2055 = vmatpush1.msra.mxu0 0.0
  %2056 = vmatprep.subr.mxu0 0.0
  %2057 = vmatpush1.msra.mxu0 0.0
  %2058 = vmatprep.subr.mxu0 0.0
  %2059 = vmatpush1.msra.mxu0 0.0
  %2060 = vmatprep.subr.mxu0 0.0
  %2061 = vmatpush1.msra.mxu0 0.0
  %2062 = vmatprep.subr.mxu0 0.0
  %2063 = vmatpush1.msra.mxu0 0.0
  %2064 = vmatprep.subr.mxu0 0.0
  %2065 = vmatpush1.msra.mxu0 0.0
  %2066 = vmatprep.subr.mxu0 0.0
  %2067 = vmatpush1.msra.mxu0 0.0
  %2068 = vmatprep.subr.mxu0 0.0
  %2069 = vmatpush1.msra.mxu0 0.0
  %2070 = vmatprep.subr.mxu0 0.0
  %2071 = vmatpush1.msra.mxu0 0.0
  %2072 = vmatprep.subr.mxu0 0.0
  %2073 = vmatpush1.msra.mxu0 0.0
  %2074 = vmatprep.subr.mxu0 0.0
  %2075 = vmatpush1.msra.mxu0 0.0
  %2076 = vmatprep.subr.mxu0 0.0
  %2077 = vmatpush1.msra.mxu0 0.0
  %2078 = vmatprep.subr.mxu0 0.0
  %2079 = vmatpush1.msra.mxu0 0.0
  %2080 = vmatprep.subr.mxu0 0.0
  %2081 = vmatpush1.msra.mxu0 0.0
  %2082 = vmatprep.subr.mxu0 0.0
  %2083 = vmatpush1.msra.mxu0 0.0
  %2084 = vmatprep.subr.mxu0 0.0
  %2085 = vmatpush1.msra.mxu0 0.0
  %2086 = vmatprep.mubr.f32.mxu0 0.0
  %2087 = vmatmul.mubr.f32.gmra.mrb[0].mxu0 %v2017
  %v2088 = vpop.f32.mrb[0].mxu0
  %v2089 = vadd.f32 0.0, %v2088
  %v2090 = vpop.f32.mrb[0].mxu0
  %2091 = vmatprep.mubr.f32.mxu0 0.0
  %2092 = vmatmul.mubr.f32.gmra.mrb[0].mxu0 %v2020
  %v2093 = vpop.f32.mrb[0].mxu0
  %v2094 = vadd.f32 0.0, %v2093
  %v2095 = vpop.f32.mrb[0].mxu0
  %2096 = vdwg.mxu0
  %2097 = vrot.lane.b32.xlu0 %v1805, 120
  %v2098 = vpop.permute.xlu0 %2097
  %2099 = vrot.lane.b32.xlu0 %v1810, 120
  %v2100 = vpop.permute.xlu0 %2099
  %2101 = vrot.lane.b32.xlu0 %v1894, 120
  %v2102 = vpop.permute.xlu0 %2101
  %v2103 = vsel %vm952, %v2098, 0
  %v2105 = vsel %vm952, %v2100, 0
  %v2107 = vsel %vm952, %v2102, 0
  %2109 = vmatprep.subr.mxu0 0.0
  %2110 = vmatpush1.xpose.msra.mxu0 %v2107
  %2111 = vmatprep.subr.mxu0 0.0
  %2112 = vmatpush1.xpose.msra.mxu0 0.0
  %2113 = vmatprep.subr.mxu0 0.0
  %2114 = vmatpush1.xpose.msra.mxu0 0.0
  %2115 = vmatprep.subr.mxu0 0.0
  %2116 = vmatpush1.xpose.msra.mxu0 0.0
  %2117 = vmatprep.subr.mxu0 0.0
  %2118 = vmatpush1.xpose.msra.mxu0 0.0
  %2119 = vmatprep.subr.mxu0 0.0
  %2120 = vmatpush1.xpose.msra.mxu0 0.0
  %2121 = vmatprep.subr.mxu0 0.0
  %2122 = vmatpush1.xpose.msra.mxu0 0.0
  %2123 = vmatprep.subr.mxu0 0.0
  %2124 = vmatpush1.xpose.msra.mxu0 0.0
  %2125 = vmatprep.subr.mxu0 0.0
  %2126 = vmatpush1.xpose.msra.mxu0 0.0
  %2127 = vmatprep.subr.mxu0 0.0
  %2128 = vmatpush1.xpose.msra.mxu0 0.0
  %2129 = vmatprep.subr.mxu0 0.0
  %2130 = vmatpush1.xpose.msra.mxu0 0.0
  %2131 = vmatprep.subr.mxu0 0.0
  %2132 = vmatpush1.xpose.msra.mxu0 0.0
  %2133 = vmatprep.subr.mxu0 0.0
  %2134 = vmatpush1.xpose.msra.mxu0 0.0
  %2135 = vmatprep.subr.mxu0 0.0
  %2136 = vmatpush1.xpose.msra.mxu0 0.0
  %2137 = vmatprep.subr.mxu0 0.0
  %2138 = vmatpush1.xpose.msra.mxu0 0.0
  %2139 = vmatprep.subr.mxu0 0.0
  %2140 = vmatpush1.xpose.msra.mxu0 0.0
  %2141 = vmatprep.subr.mxu0 0.0
  %2142 = vmatpush1.xpose.msra.mxu0 0.0
  %2143 = vmatprep.subr.mxu0 0.0
  %2144 = vmatpush1.xpose.msra.mxu0 0.0
  %2145 = vmatprep.subr.mxu0 0.0
  %2146 = vmatpush1.xpose.msra.mxu0 0.0
  %2147 = vmatprep.subr.mxu0 0.0
  %2148 = vmatpush1.xpose.msra.mxu0 0.0
  %2149 = vmatprep.subr.mxu0 0.0
  %2150 = vmatpush1.xpose.msra.mxu0 0.0
  %2151 = vmatprep.subr.mxu0 0.0
  %2152 = vmatpush1.xpose.msra.mxu0 0.0
  %2153 = vmatprep.subr.mxu0 0.0
  %2154 = vmatpush1.xpose.msra.mxu0 0.0
  %2155 = vmatprep.subr.mxu0 0.0
  %2156 = vmatpush1.xpose.msra.mxu0 0.0
  %2157 = vmatprep.subr.mxu0 0.0
  %2158 = vmatpush1.xpose.msra.mxu0 0.0
  %2159 = vmatprep.subr.mxu0 0.0
  %2160 = vmatpush1.xpose.msra.mxu0 0.0
  %2161 = vmatprep.subr.mxu0 0.0
  %2162 = vmatpush1.xpose.msra.mxu0 0.0
  %2163 = vmatprep.subr.mxu0 0.0
  %2164 = vmatpush1.xpose.msra.mxu0 0.0
  %2165 = vmatprep.subr.mxu0 0.0
  %2166 = vmatpush1.xpose.msra.mxu0 0.0
  %2167 = vmatprep.subr.mxu0 0.0
  %2168 = vmatpush1.xpose.msra.mxu0 0.0
  %2169 = vmatprep.subr.mxu0 0.0
  %2170 = vmatpush1.xpose.msra.mxu0 0.0
  %2171 = vmatprep.subr.mxu0 0.0
  %2172 = vmatpush1.xpose.msra.mxu0 0.0
  %2173 = vmatprep.mubr.f32.mxu0 0.0
  %2174 = vmatmul.mubr.f32.gmra.mrb[0].mxu0 %v2103
  %v2175 = vpop.f32.mrb[0].mxu0
  %v2176 = vadd.f32 0.0, %v2175
  %v2177 = vpop.f32.mrb[0].mxu0
  %2178 = vmatprep.mubr.f32.mxu0 0.0
  %2179 = vmatmul.mubr.f32.gmra.mrb[0].mxu0 %v2105
  %v2180 = vpop.f32.mrb[0].mxu0
  %v2181 = vadd.f32 0.0, %v2180
  %v2182 = vpop.f32.mrb[0].mxu0
  %2183 = vdwg.mxu0
  %v2184 = vmul.f32 %v2176, 0.35355338
  %v2185 = vmul.f32 %v2181, 0.35355338
  %v2186 = vadd.f32 %v2184, %v1897
  %v2187 = vadd.f32 %v2185, %v1898
  %v2188 = vsel %vm952, %v2186, -inf
  %2189 = vmax.xlane.f32.xlu0 %v2188
  %v2190 = vpop.xlane.xlu0 %2189
  %v2191 = vsel %vm952, %v2187, -inf
  %2192 = vmax.xlane.f32.xlu0 %v2191
  %v2193 = vpop.xlane.xlu0 %2192
  %v2194 = vsub.f32 %v2186, %v2190
  %v2195 = vsub.f32 %v2187, %v2193
  %v2196 = vmul.f32 %v2194, 1.442695
  %v2197 = vpow.pop %v2196
  %v2198 = vmul.f32 %v2195, 1.442695
  %v2199 = vpow.pop %v2198
  %v2200 = vsel %vm952, %v2197, 0.0
  %2201 = vadd.xlane.f32.xlu0 %v2200
  %v2202 = vpop.xlane.xlu0 %2201
  %v2203 = vsel %vm952, %v2199, 0.0
  %2204 = vadd.xlane.f32.xlu0 %v2203
  %v2205 = vpop.xlane.xlu0 %2204
  %v2206 = vrcp.pop %v2202
  %v2207 = vrcp.pop %v2205
  %v2208 = vmul.f32 %v2197, %v2206
  %v2209 = vmul.f32 %v2199, %v2207
  %2210 = vrot.lane.b32.xlu0 %v1894, 88
  %v2211 = vpop.permute.xlu0 %2210
  %v2214 = vsel %vm952, %v2208, 0
  %v2217 = vsel %vm952, %v2209, 0
  %2219 = vmatprep.subr.mxu0 0.0
  %2220 = vmatpush1.msra.mxu0 %v2211
  %2221 = vmatprep.subr.mxu0 0.0
  %2222 = vmatpush1.msra.mxu0 0.0
  %2223 = vmatprep.subr.mxu0 0.0
  %2224 = vmatpush1.msra.mxu0 0.0
  %2225 = vmatprep.subr.mxu0 0.0
  %2226 = vmatpush1.msra.mxu0 0.0
  %2227 = vmatprep.subr.mxu0 0.0
  %2228 = vmatpush1.msra.mxu0 0.0
  %2229 = vmatprep.subr.mxu0 0.0
  %2230 = vmatpush1.msra.mxu0 0.0
  %2231 = vmatprep.subr.mxu0 0.0
  %2232 = vmatpush1.msra.mxu0 0.0
  %2233 = vmatprep.subr.mxu0 0.0
  %2234 = vmatpush1.msra.mxu0 0.0
  %2235 = vmatprep.subr.mxu0 0.0
  %2236 = vmatpush1.msra.mxu0 0.0
  %2237 = vmatprep.subr.mxu0 0.0
  %2238 = vmatpush1.msra.mxu0 0.0
  %2239 = vmatprep.subr.mxu0 0.0
  %2240 = vmatpush1.msra.mxu0 0.0
  %2241 = vmatprep.subr.mxu0 0.0
  %2242 = vmatpush1.msra.mxu0 0.0
  %2243 = vmatprep.subr.mxu0 0.0
  %2244 = vmatpush1.msra.mxu0 0.0
  %2245 = vmatprep.subr.mxu0 0.0
  %2246 = vmatpush1.msra.mxu0 0.0
  %2247 = vmatprep.subr.mxu0 0.0
  %2248 = vmatpush1.msra.mxu0 0.0
  %2249 = vmatprep.subr.mxu0 0.0
  %2250 = vmatpush1.msra.mxu0 0.0
  %2251 = vmatprep.subr.mxu0 0.0
  %2252 = vmatpush1.msra.mxu0 0.0
  %2253 = vmatprep.subr.mxu0 0.0
  %2254 = vmatpush1.msra.mxu0 0.0
  %2255 = vmatprep.subr.mxu0 0.0
  %2256 = vmatpush1.msra.mxu0 0.0
  %2257 = vmatprep.subr.mxu0 0.0
  %2258 = vmatpush1.msra.mxu0 0.0
  %2259 = vmatprep.subr.mxu0 0.0
  %2260 = vmatpush1.msra.mxu0 0.0
  %2261 = vmatprep.subr.mxu0 0.0
  %2262 = vmatpush1.msra.mxu0 0.0
  %2263 = vmatprep.subr.mxu0 0.0
  %2264 = vmatpush1.msra.mxu0 0.0
  %2265 = vmatprep.subr.mxu0 0.0
  %2266 = vmatpush1.msra.mxu0 0.0
  %2267 = vmatprep.subr.mxu0 0.0
  %2268 = vmatpush1.msra.mxu0 0.0
  %2269 = vmatprep.subr.mxu0 0.0
  %2270 = vmatpush1.msra.mxu0 0.0
  %2271 = vmatprep.subr.mxu0 0.0
  %2272 = vmatpush1.msra.mxu0 0.0
  %2273 = vmatprep.subr.mxu0 0.0
  %2274 = vmatpush1.msra.mxu0 0.0
  %2275 = vmatprep.subr.mxu0 0.0
  %2276 = vmatpush1.msra.mxu0 0.0
  %2277 = vmatprep.subr.mxu0 0.0
  %2278 = vmatpush1.msra.mxu0 0.0
  %2279 = vmatprep.subr.mxu0 0.0
  %2280 = vmatpush1.msra.mxu0 0.0
  %2281 = vmatprep.subr.mxu0 0.0
  %2282 = vmatpush1.msra.mxu0 0.0
  %2283 = vmatprep.mubr.f32.mxu0 0.0
  %2284 = vmatmul.mubr.f32.gmra.mrb[0].mxu0 %v2214
  %v2285 = vpop.f32.mrb[0].mxu0
  %v2286 = vadd.f32 0.0, %v2285
  %v2287 = vpop.f32.mrb[0].mxu0
  %2288 = vmatprep.mubr.f32.mxu0 0.0
  %2289 = vmatmul.mubr.f32.gmra.mrb[0].mxu0 %v2217
  %v2290 = vpop.f32.mrb[0].mxu0
  %v2291 = vadd.f32 0.0, %v2290
  %v2292 = vpop.f32.mrb[0].mxu0
  %2293 = vdwg.mxu0
  %v2295 = vsel %vm952, %v2286, 0
  %v2298 = vsel %vm952, %v2291, 0
  %2300 = vmatprep.subr.mxu0 0.0
  %2301 = vmatpush1.msra.mxu0 %v1900
  %2302 = vmatprep.subr.mxu0 0.0
  %2303 = vmatpush1.msra.mxu0 0.0
  %2304 = vmatprep.subr.mxu0 0.0
  %2305 = vmatpush1.msra.mxu0 0.0
  %2306 = vmatprep.subr.mxu0 0.0
  %2307 = vmatpush1.msra.mxu0 0.0
  %2308 = vmatprep.subr.mxu0 0.0
  %2309 = vmatpush1.msra.mxu0 0.0
  %2310 = vmatprep.subr.mxu0 0.0
  %2311 = vmatpush1.msra.mxu0 0.0
  %2312 = vmatprep.subr.mxu0 0.0
  %2313 = vmatpush1.msra.mxu0 0.0
  %2314 = vmatprep.subr.mxu0 0.0
  %2315 = vmatpush1.msra.mxu0 0.0
  %2316 = vmatprep.subr.mxu0 0.0
  %2317 = vmatpush1.msra.mxu0 0.0
  %2318 = vmatprep.subr.mxu0 0.0
  %2319 = vmatpush1.msra.mxu0 0.0
  %2320 = vmatprep.subr.mxu0 0.0
  %2321 = vmatpush1.msra.mxu0 0.0
  %2322 = vmatprep.subr.mxu0 0.0
  %2323 = vmatpush1.msra.mxu0 0.0
  %2324 = vmatprep.subr.mxu0 0.0
  %2325 = vmatpush1.msra.mxu0 0.0
  %2326 = vmatprep.subr.mxu0 0.0
  %2327 = vmatpush1.msra.mxu0 0.0
  %2328 = vmatprep.subr.mxu0 0.0
  %2329 = vmatpush1.msra.mxu0 0.0
  %2330 = vmatprep.subr.mxu0 0.0
  %2331 = vmatpush1.msra.mxu0 0.0
  %2332 = vmatprep.subr.mxu0 0.0
  %2333 = vmatpush1.msra.mxu0 0.0
  %2334 = vmatprep.subr.mxu0 0.0
  %2335 = vmatpush1.msra.mxu0 0.0
  %2336 = vmatprep.subr.mxu0 0.0
  %2337 = vmatpush1.msra.mxu0 0.0
  %2338 = vmatprep.subr.mxu0 0.0
  %2339 = vmatpush1.msra.mxu0 0.0
  %2340 = vmatprep.subr.mxu0 0.0
  %2341 = vmatpush1.msra.mxu0 0.0
  %2342 = vmatprep.subr.mxu0 0.0
  %2343 = vmatpush1.msra.mxu0 0.0
  %2344 = vmatprep.subr.mxu0 0.0
  %2345 = vmatpush1.msra.mxu0 0.0
  %2346 = vmatprep.subr.mxu0 0.0
  %2347 = vmatpush1.msra.mxu0 0.0
  %2348 = vmatprep.subr.mxu0 0.0
  %2349 = vmatpush1.msra.mxu0 0.0
  %2350 = vmatprep.subr.mxu0 0.0
  %2351 = vmatpush1.msra.mxu0 0.0
  %2352 = vmatprep.subr.mxu0 0.0
  %2353 = vmatpush1.msra.mxu0 0.0
  %2354 = vmatprep.subr.mxu0 0.0
  %2355 = vmatpush1.msra.mxu0 0.0
  %2356 = vmatprep.subr.mxu0 0.0
  %2357 = vmatpush1.msra.mxu0 0.0
  %2358 = vmatprep.subr.mxu0 0.0
  %2359 = vmatpush1.msra.mxu0 0.0
  %2360 = vmatprep.subr.mxu0 0.0
  %2361 = vmatpush1.msra.mxu0 0.0
  %2362 = vmatprep.subr.mxu0 0.0
  %2363 = vmatpush1.msra.mxu0 0.0
  %2364 = vmatprep.mubr.f32.mxu0 0.0
  %2365 = vmatmul.mubr.f32.gmra.mrb[0].mxu0 %v2295
  %v2366 = vpop.f32.mrb[0].mxu0
  %v2367 = vadd.f32 0.0, %v2366
  %v2368 = vpop.f32.mrb[0].mxu0
  %2369 = vmatprep.mubr.f32.mxu0 0.0
  %2370 = vmatmul.mubr.f32.gmra.mrb[0].mxu0 %v2298
  %v2371 = vpop.f32.mrb[0].mxu0
  %v2372 = vadd.f32 0.0, %v2371
  %v2373 = vpop.f32.mrb[0].mxu0
  %2374 = vdwg.mxu0
  %v2376 = vsel %vm952, %v2089, 0
  %v2379 = vsel %vm952, %v2094, 0
  %2381 = vmatprep.subr.mxu0 0.0
  %2382 = vmatpush1.msra.mxu0 %v1899
  %2383 = vmatprep.subr.mxu0 0.0
  %2384 = vmatpush1.msra.mxu0 0.0
  %2385 = vmatprep.subr.mxu0 0.0
  %2386 = vmatpush1.msra.mxu0 0.0
  %2387 = vmatprep.subr.mxu0 0.0
  %2388 = vmatpush1.msra.mxu0 0.0
  %2389 = vmatprep.subr.mxu0 0.0
  %2390 = vmatpush1.msra.mxu0 0.0
  %2391 = vmatprep.subr.mxu0 0.0
  %2392 = vmatpush1.msra.mxu0 0.0
  %2393 = vmatprep.subr.mxu0 0.0
  %2394 = vmatpush1.msra.mxu0 0.0
  %2395 = vmatprep.subr.mxu0 0.0
  %2396 = vmatpush1.msra.mxu0 0.0
  %2397 = vmatprep.subr.mxu0 0.0
  %2398 = vmatpush1.msra.mxu0 0.0
  %2399 = vmatprep.subr.mxu0 0.0
  %2400 = vmatpush1.msra.mxu0 0.0
  %2401 = vmatprep.subr.mxu0 0.0
  %2402 = vmatpush1.msra.mxu0 0.0
  %2403 = vmatprep.subr.mxu0 0.0
  %2404 = vmatpush1.msra.mxu0 0.0
  %2405 = vmatprep.subr.mxu0 0.0
  %2406 = vmatpush1.msra.mxu0 0.0
  %2407 = vmatprep.subr.mxu0 0.0
  %2408 = vmatpush1.msra.mxu0 0.0
  %2409 = vmatprep.subr.mxu0 0.0
  %2410 = vmatpush1.msra.mxu0 0.0
  %2411 = vmatprep.subr.mxu0 0.0
  %2412 = vmatpush1.msra.mxu0 0.0
  %2413 = vmatprep.subr.mxu0 0.0
  %2414 = vmatpush1.msra.mxu0 0.0
  %2415 = vmatprep.subr.mxu0 0.0
  %2416 = vmatpush1.msra.mxu0 0.0
  %2417 = vmatprep.subr.mxu0 0.0
  %2418 = vmatpush1.msra.mxu0 0.0
  %2419 = vmatprep.subr.mxu0 0.0
  %2420 = vmatpush1.msra.mxu0 0.0
  %2421 = vmatprep.subr.mxu0 0.0
  %2422 = vmatpush1.msra.mxu0 0.0
  %2423 = vmatprep.subr.mxu0 0.0
  %2424 = vmatpush1.msra.mxu0 0.0
  %2425 = vmatprep.subr.mxu0 0.0
  %2426 = vmatpush1.msra.mxu0 0.0
  %2427 = vmatprep.subr.mxu0 0.0
  %2428 = vmatpush1.msra.mxu0 0.0
  %2429 = vmatprep.subr.mxu0 0.0
  %2430 = vmatpush1.msra.mxu0 0.0
  %2431 = vmatprep.subr.mxu0 0.0
  %2432 = vmatpush1.msra.mxu0 0.0
  %2433 = vmatprep.subr.mxu0 0.0
  %2434 = vmatpush1.msra.mxu0 0.0
  %2435 = vmatprep.subr.mxu0 0.0
  %2436 = vmatpush1.msra.mxu0 0.0
  %2437 = vmatprep.subr.mxu0 0.0
  %2438 = vmatpush1.msra.mxu0 0.0
  %2439 = vmatprep.subr.mxu0 0.0
  %2440 = vmatpush1.msra.mxu0 0.0
  %2441 = vmatprep.subr.mxu0 0.0
  %2442 = vmatpush1.msra.mxu0 0.0
  %2443 = vmatprep.subr.mxu0 0.0
  %2444 = vmatpush1.msra.mxu0 0.0
  %2445 = vmatprep.mubr.f32.mxu0 0.0
  %2446 = vmatmul.mubr.f32.gmra.mrb[0].mxu0 %v2376
  %v2447 = vpop.f32.mrb[0].mxu0
  %v2448 = vadd.f32 %v2367, %v2447
  %v2449 = vpop.f32.mrb[0].mxu0
  %2450 = vmatprep.mubr.f32.mxu0 0.0
  %2451 = vmatmul.mubr.f32.gmra.mrb[0].mxu0 %v2379
  %v2452 = vpop.f32.mrb[0].mxu0
  %v2453 = vadd.f32 %v2372, %v2452
  %v2454 = vpop.f32.mrb[0].mxu0
  %2455 = vdwg.mxu0
  %2456 = vrot.lane.b32.xlu0 %v1805, 112
  %v2457 = vpop.permute.xlu0 %2456
  %2458 = vrot.lane.b32.xlu0 %v1810, 112
  %v2459 = vpop.permute.xlu0 %2458
  %2460 = vrot.lane.b32.xlu0 %v1894, 112
  %v2461 = vpop.permute.xlu0 %2460
  %v2462 = vsel %vm952, %v2457, 0
  %v2464 = vsel %vm952, %v2459, 0
  %v2466 = vsel %vm952, %v2461, 0
  %2468 = vmatprep.subr.mxu0 0.0
  %2469 = vmatpush1.xpose.msra.mxu0 %v2466
  %2470 = vmatprep.subr.mxu0 0.0
  %2471 = vmatpush1.xpose.msra.mxu0 0.0
  %2472 = vmatprep.subr.mxu0 0.0
  %2473 = vmatpush1.xpose.msra.mxu0 0.0
  %2474 = vmatprep.subr.mxu0 0.0
  %2475 = vmatpush1.xpose.msra.mxu0 0.0
  %2476 = vmatprep.subr.mxu0 0.0
  %2477 = vmatpush1.xpose.msra.mxu0 0.0
  %2478 = vmatprep.subr.mxu0 0.0
  %2479 = vmatpush1.xpose.msra.mxu0 0.0
  %2480 = vmatprep.subr.mxu0 0.0
  %2481 = vmatpush1.xpose.msra.mxu0 0.0
  %2482 = vmatprep.subr.mxu0 0.0
  %2483 = vmatpush1.xpose.msra.mxu0 0.0
  %2484 = vmatprep.subr.mxu0 0.0
  %2485 = vmatpush1.xpose.msra.mxu0 0.0
  %2486 = vmatprep.subr.mxu0 0.0
  %2487 = vmatpush1.xpose.msra.mxu0 0.0
  %2488 = vmatprep.subr.mxu0 0.0
  %2489 = vmatpush1.xpose.msra.mxu0 0.0
  %2490 = vmatprep.subr.mxu0 0.0
  %2491 = vmatpush1.xpose.msra.mxu0 0.0
  %2492 = vmatprep.subr.mxu0 0.0
  %2493 = vmatpush1.xpose.msra.mxu0 0.0
  %2494 = vmatprep.subr.mxu0 0.0
  %2495 = vmatpush1.xpose.msra.mxu0 0.0
  %2496 = vmatprep.subr.mxu0 0.0
  %2497 = vmatpush1.xpose.msra.mxu0 0.0
  %2498 = vmatprep.subr.mxu0 0.0
  %2499 = vmatpush1.xpose.msra.mxu0 0.0
  %2500 = vmatprep.subr.mxu0 0.0
  %2501 = vmatpush1.xpose.msra.mxu0 0.0
  %2502 = vmatprep.subr.mxu0 0.0
  %2503 = vmatpush1.xpose.msra.mxu0 0.0
  %2504 = vmatprep.subr.mxu0 0.0
  %2505 = vmatpush1.xpose.msra.mxu0 0.0
  %2506 = vmatprep.subr.mxu0 0.0
  %2507 = vmatpush1.xpose.msra.mxu0 0.0
  %2508 = vmatprep.subr.mxu0 0.0
  %2509 = vmatpush1.xpose.msra.mxu0 0.0
  %2510 = vmatprep.subr.mxu0 0.0
  %2511 = vmatpush1.xpose.msra.mxu0 0.0
  %2512 = vmatprep.subr.mxu0 0.0
  %2513 = vmatpush1.xpose.msra.mxu0 0.0
  %2514 = vmatprep.subr.mxu0 0.0
  %2515 = vmatpush1.xpose.msra.mxu0 0.0
  %2516 = vmatprep.subr.mxu0 0.0
  %2517 = vmatpush1.xpose.msra.mxu0 0.0
  %2518 = vmatprep.subr.mxu0 0.0
  %2519 = vmatpush1.xpose.msra.mxu0 0.0
  %2520 = vmatprep.subr.mxu0 0.0
  %2521 = vmatpush1.xpose.msra.mxu0 0.0
  %2522 = vmatprep.subr.mxu0 0.0
  %2523 = vmatpush1.xpose.msra.mxu0 0.0
  %2524 = vmatprep.subr.mxu0 0.0
  %2525 = vmatpush1.xpose.msra.mxu0 0.0
  %2526 = vmatprep.subr.mxu0 0.0
  %2527 = vmatpush1.xpose.msra.mxu0 0.0
  %2528 = vmatprep.subr.mxu0 0.0
  %2529 = vmatpush1.xpose.msra.mxu0 0.0
  %2530 = vmatprep.subr.mxu0 0.0
  %2531 = vmatpush1.xpose.msra.mxu0 0.0
  %2532 = vmatprep.mubr.f32.mxu0 0.0
  %2533 = vmatmul.mubr.f32.gmra.mrb[0].mxu0 %v2462
  %v2534 = vpop.f32.mrb[0].mxu0
  %v2535 = vadd.f32 0.0, %v2534
  %v2536 = vpop.f32.mrb[0].mxu0
  %2537 = vmatprep.mubr.f32.mxu0 0.0
  %2538 = vmatmul.mubr.f32.gmra.mrb[0].mxu0 %v2464
  %v2539 = vpop.f32.mrb[0].mxu0
  %v2540 = vadd.f32 0.0, %v2539
  %v2541 = vpop.f32.mrb[0].mxu0
  %2542 = vdwg.mxu0
  %v2543 = vmul.f32 %v2535, 0.35355338
  %v2544 = vmul.f32 %v2540, 0.35355338
  %v2545 = vadd.f32 %v2543, %v1897
  %v2546 = vadd.f32 %v2544, %v1898
  %v2547 = vsel %vm952, %v2545, -inf
  %2548 = vmax.xlane.f32.xlu0 %v2547
  %v2549 = vpop.xlane.xlu0 %2548
  %v2550 = vsel %vm952, %v2546, -inf
  %2551 = vmax.xlane.f32.xlu0 %v2550
  %v2552 = vpop.xlane.xlu0 %2551
  %v2553 = vsub.f32 %v2545, %v2549
  %v2554 = vsub.f32 %v2546, %v2552
  %v2555 = vmul.f32 %v2553, 1.442695
  %v2556 = vpow.pop %v2555
  %v2557 = vmul.f32 %v2554, 1.442695
  %v2558 = vpow.pop %v2557
  %v2559 = vsel %vm952, %v2556, 0.0
  %2560 = vadd.xlane.f32.xlu0 %v2559
  %v2561 = vpop.xlane.xlu0 %2560
  %v2562 = vsel %vm952, %v2558, 0.0
  %2563 = vadd.xlane.f32.xlu0 %v2562
  %v2564 = vpop.xlane.xlu0 %2563
  %v2565 = vrcp.pop %v2561
  %v2566 = vrcp.pop %v2564
  %v2567 = vmul.f32 %v2556, %v2565
  %v2568 = vmul.f32 %v2558, %v2566
  %2569 = vrot.lane.b32.xlu0 %v1894, 80
  %v2570 = vpop.permute.xlu0 %2569
  %v2573 = vsel %vm952, %v2567, 0
  %v2576 = vsel %vm952, %v2568, 0
  %2578 = vmatprep.subr.mxu0 0.0
  %2579 = vmatpush1.msra.mxu0 %v2570
  %2580 = vmatprep.subr.mxu0 0.0
  %2581 = vmatpush1.msra.mxu0 0.0
  %2582 = vmatprep.subr.mxu0 0.0
  %2583 = vmatpush1.msra.mxu0 0.0
  %2584 = vmatprep.subr.mxu0 0.0
  %2585 = vmatpush1.msra.mxu0 0.0
  %2586 = vmatprep.subr.mxu0 0.0
  %2587 = vmatpush1.msra.mxu0 0.0
  %2588 = vmatprep.subr.mxu0 0.0
  %2589 = vmatpush1.msra.mxu0 0.0
  %2590 = vmatprep.subr.mxu0 0.0
  %2591 = vmatpush1.msra.mxu0 0.0
  %2592 = vmatprep.subr.mxu0 0.0
  %2593 = vmatpush1.msra.mxu0 0.0
  %2594 = vmatprep.subr.mxu0 0.0
  %2595 = vmatpush1.msra.mxu0 0.0
  %2596 = vmatprep.subr.mxu0 0.0
  %2597 = vmatpush1.msra.mxu0 0.0
  %2598 = vmatprep.subr.mxu0 0.0
  %2599 = vmatpush1.msra.mxu0 0.0
  %2600 = vmatprep.subr.mxu0 0.0
  %2601 = vmatpush1.msra.mxu0 0.0
  %2602 = vmatprep.subr.mxu0 0.0
  %2603 = vmatpush1.msra.mxu0 0.0
  %2604 = vmatprep.subr.mxu0 0.0
  %2605 = vmatpush1.msra.mxu0 0.0
  %2606 = vmatprep.subr.mxu0 0.0
  %2607 = vmatpush1.msra.mxu0 0.0
  %2608 = vmatprep.subr.mxu0 0.0
  %2609 = vmatpush1.msra.mxu0 0.0
  %2610 = vmatprep.subr.mxu0 0.0
  %2611 = vmatpush1.msra.mxu0 0.0
  %2612 = vmatprep.subr.mxu0 0.0
  %2613 = vmatpush1.msra.mxu0 0.0
  %2614 = vmatprep.subr.mxu0 0.0
  %2615 = vmatpush1.msra.mxu0 0.0
  %2616 = vmatprep.subr.mxu0 0.0
  %2617 = vmatpush1.msra.mxu0 0.0
  %2618 = vmatprep.subr.mxu0 0.0
  %2619 = vmatpush1.msra.mxu0 0.0
  %2620 = vmatprep.subr.mxu0 0.0
  %2621 = vmatpush1.msra.mxu0 0.0
  %2622 = vmatprep.subr.mxu0 0.0
  %2623 = vmatpush1.msra.mxu0 0.0
  %2624 = vmatprep.subr.mxu0 0.0
  %2625 = vmatpush1.msra.mxu0 0.0
  %2626 = vmatprep.subr.mxu0 0.0
  %2627 = vmatpush1.msra.mxu0 0.0
  %2628 = vmatprep.subr.mxu0 0.0
  %2629 = vmatpush1.msra.mxu0 0.0
  %2630 = vmatprep.subr.mxu0 0.0
  %2631 = vmatpush1.msra.mxu0 0.0
  %2632 = vmatprep.subr.mxu0 0.0
  %2633 = vmatpush1.msra.mxu0 0.0
  %2634 = vmatprep.subr.mxu0 0.0
  %2635 = vmatpush1.msra.mxu0 0.0
  %2636 = vmatprep.subr.mxu0 0.0
  %2637 = vmatpush1.msra.mxu0 0.0
  %2638 = vmatprep.subr.mxu0 0.0
  %2639 = vmatpush1.msra.mxu0 0.0
  %2640 = vmatprep.subr.mxu0 0.0
  %2641 = vmatpush1.msra.mxu0 0.0
  %2642 = vmatprep.mubr.f32.mxu0 0.0
  %2643 = vmatmul.mubr.f32.gmra.mrb[0].mxu0 %v2573
  %v2644 = vpop.f32.mrb[0].mxu0
  %v2645 = vadd.f32 0.0, %v2644
  %v2646 = vpop.f32.mrb[0].mxu0
  %2647 = vmatprep.mubr.f32.mxu0 0.0
  %2648 = vmatmul.mubr.f32.gmra.mrb[0].mxu0 %v2576
  %v2649 = vpop.f32.mrb[0].mxu0
  %v2650 = vadd.f32 0.0, %v2649
  %v2651 = vpop.f32.mrb[0].mxu0
  %2652 = vdwg.mxu0
  %v2654 = vsel %vm952, %v2645, 0
  %v2657 = vsel %vm952, %v2650, 0
  %2659 = vmatprep.subr.mxu0 0.0
  %2660 = vmatpush1.msra.mxu0 %v1901
  %2661 = vmatprep.subr.mxu0 0.0
  %2662 = vmatpush1.msra.mxu0 0.0
  %2663 = vmatprep.subr.mxu0 0.0
  %2664 = vmatpush1.msra.mxu0 0.0
  %2665 = vmatprep.subr.mxu0 0.0
  %2666 = vmatpush1.msra.mxu0 0.0
  %2667 = vmatprep.subr.mxu0 0.0
  %2668 = vmatpush1.msra.mxu0 0.0
  %2669 = vmatprep.subr.mxu0 0.0
  %2670 = vmatpush1.msra.mxu0 0.0
  %2671 = vmatprep.subr.mxu0 0.0
  %2672 = vmatpush1.msra.mxu0 0.0
  %2673 = vmatprep.subr.mxu0 0.0
  %2674 = vmatpush1.msra.mxu0 0.0
  %2675 = vmatprep.subr.mxu0 0.0
  %2676 = vmatpush1.msra.mxu0 0.0
  %2677 = vmatprep.subr.mxu0 0.0
  %2678 = vmatpush1.msra.mxu0 0.0
  %2679 = vmatprep.subr.mxu0 0.0
  %2680 = vmatpush1.msra.mxu0 0.0
  %2681 = vmatprep.subr.mxu0 0.0
  %2682 = vmatpush1.msra.mxu0 0.0
  %2683 = vmatprep.subr.mxu0 0.0
  %2684 = vmatpush1.msra.mxu0 0.0
  %2685 = vmatprep.subr.mxu0 0.0
  %2686 = vmatpush1.msra.mxu0 0.0
  %2687 = vmatprep.subr.mxu0 0.0
  %2688 = vmatpush1.msra.mxu0 0.0
  %2689 = vmatprep.subr.mxu0 0.0
  %2690 = vmatpush1.msra.mxu0 0.0
  %2691 = vmatprep.subr.mxu0 0.0
  %2692 = vmatpush1.msra.mxu0 0.0
  %2693 = vmatprep.subr.mxu0 0.0
  %2694 = vmatpush1.msra.mxu0 0.0
  %2695 = vmatprep.subr.mxu0 0.0
  %2696 = vmatpush1.msra.mxu0 0.0
  %2697 = vmatprep.subr.mxu0 0.0
  %2698 = vmatpush1.msra.mxu0 0.0
  %2699 = vmatprep.subr.mxu0 0.0
  %2700 = vmatpush1.msra.mxu0 0.0
  %2701 = vmatprep.subr.mxu0 0.0
  %2702 = vmatpush1.msra.mxu0 0.0
  %2703 = vmatprep.subr.mxu0 0.0
  %2704 = vmatpush1.msra.mxu0 0.0
  %2705 = vmatprep.subr.mxu0 0.0
  %2706 = vmatpush1.msra.mxu0 0.0
  %2707 = vmatprep.subr.mxu0 0.0
  %2708 = vmatpush1.msra.mxu0 0.0
  %2709 = vmatprep.subr.mxu0 0.0
  %2710 = vmatpush1.msra.mxu0 0.0
  %2711 = vmatprep.subr.mxu0 0.0
  %2712 = vmatpush1.msra.mxu0 0.0
  %2713 = vmatprep.subr.mxu0 0.0
  %2714 = vmatpush1.msra.mxu0 0.0
  %2715 = vmatprep.subr.mxu0 0.0
  %2716 = vmatpush1.msra.mxu0 0.0
  %2717 = vmatprep.subr.mxu0 0.0
  %2718 = vmatpush1.msra.mxu0 0.0
  %2719 = vmatprep.subr.mxu0 0.0
  %2720 = vmatpush1.msra.mxu0 0.0
  %2721 = vmatprep.subr.mxu0 0.0
  %2722 = vmatpush1.msra.mxu0 0.0
  %2723 = vmatprep.mubr.f32.mxu0 0.0
  %2724 = vmatmul.mubr.f32.gmra.mrb[0].mxu0 %v2654
  %v2725 = vpop.f32.mrb[0].mxu0
  %v2726 = vadd.f32 0.0, %v2725
  %v2727 = vpop.f32.mrb[0].mxu0
  %2728 = vmatprep.mubr.f32.mxu0 0.0
  %2729 = vmatmul.mubr.f32.gmra.mrb[0].mxu0 %v2657
  %v2730 = vpop.f32.mrb[0].mxu0
  %v2731 = vadd.f32 0.0, %v2730
  %v2732 = vpop.f32.mrb[0].mxu0
  %2733 = vdwg.mxu0
  %v2734 = vadd.f32 %v2448, %v2726
  %v2735 = vadd.f32 %v2453, %v2731
  %2736 = vrot.lane.b32.xlu0 %v1805, 104
  %v2737 = vpop.permute.xlu0 %2736
  %2738 = vrot.lane.b32.xlu0 %v1810, 104
  %v2739 = vpop.permute.xlu0 %2738
  %2740 = vrot.lane.b32.xlu0 %v1894, 104
  %v2741 = vpop.permute.xlu0 %2740
  %v2742 = vsel %vm952, %v2737, 0
  %v2744 = vsel %vm952, %v2739, 0
  %v2746 = vsel %vm952, %v2741, 0
  %2748 = vmatprep.subr.mxu0 0.0
  %2749 = vmatpush1.xpose.msra.mxu0 %v2746
  %2750 = vmatprep.subr.mxu0 0.0
  %2751 = vmatpush1.xpose.msra.mxu0 0.0
  %2752 = vmatprep.subr.mxu0 0.0
  %2753 = vmatpush1.xpose.msra.mxu0 0.0
  %2754 = vmatprep.subr.mxu0 0.0
  %2755 = vmatpush1.xpose.msra.mxu0 0.0
  %2756 = vmatprep.subr.mxu0 0.0
  %2757 = vmatpush1.xpose.msra.mxu0 0.0
  %2758 = vmatprep.subr.mxu0 0.0
  %2759 = vmatpush1.xpose.msra.mxu0 0.0
  %2760 = vmatprep.subr.mxu0 0.0
  %2761 = vmatpush1.xpose.msra.mxu0 0.0
  %2762 = vmatprep.subr.mxu0 0.0
  %2763 = vmatpush1.xpose.msra.mxu0 0.0
  %2764 = vmatprep.subr.mxu0 0.0
  %2765 = vmatpush1.xpose.msra.mxu0 0.0
  %2766 = vmatprep.subr.mxu0 0.0
  %2767 = vmatpush1.xpose.msra.mxu0 0.0
  %2768 = vmatprep.subr.mxu0 0.0
  %2769 = vmatpush1.xpose.msra.mxu0 0.0
  %2770 = vmatprep.subr.mxu0 0.0
  %2771 = vmatpush1.xpose.msra.mxu0 0.0
  %2772 = vmatprep.subr.mxu0 0.0
  %2773 = vmatpush1.xpose.msra.mxu0 0.0
  %2774 = vmatprep.subr.mxu0 0.0
  %2775 = vmatpush1.xpose.msra.mxu0 0.0
  %2776 = vmatprep.subr.mxu0 0.0
  %2777 = vmatpush1.xpose.msra.mxu0 0.0
  %2778 = vmatprep.subr.mxu0 0.0
  %2779 = vmatpush1.xpose.msra.mxu0 0.0
  %2780 = vmatprep.subr.mxu0 0.0
  %2781 = vmatpush1.xpose.msra.mxu0 0.0
  %2782 = vmatprep.subr.mxu0 0.0
  %2783 = vmatpush1.xpose.msra.mxu0 0.0
  %2784 = vmatprep.subr.mxu0 0.0
  %2785 = vmatpush1.xpose.msra.mxu0 0.0
  %2786 = vmatprep.subr.mxu0 0.0
  %2787 = vmatpush1.xpose.msra.mxu0 0.0
  %2788 = vmatprep.subr.mxu0 0.0
  %2789 = vmatpush1.xpose.msra.mxu0 0.0
  %2790 = vmatprep.subr.mxu0 0.0
  %2791 = vmatpush1.xpose.msra.mxu0 0.0
  %2792 = vmatprep.subr.mxu0 0.0
  %2793 = vmatpush1.xpose.msra.mxu0 0.0
  %2794 = vmatprep.subr.mxu0 0.0
  %2795 = vmatpush1.xpose.msra.mxu0 0.0
  %2796 = vmatprep.subr.mxu0 0.0
  %2797 = vmatpush1.xpose.msra.mxu0 0.0
  %2798 = vmatprep.subr.mxu0 0.0
  %2799 = vmatpush1.xpose.msra.mxu0 0.0
  %2800 = vmatprep.subr.mxu0 0.0
  %2801 = vmatpush1.xpose.msra.mxu0 0.0
  %2802 = vmatprep.subr.mxu0 0.0
  %2803 = vmatpush1.xpose.msra.mxu0 0.0
  %2804 = vmatprep.subr.mxu0 0.0
  %2805 = vmatpush1.xpose.msra.mxu0 0.0
  %2806 = vmatprep.subr.mxu0 0.0
  %2807 = vmatpush1.xpose.msra.mxu0 0.0
  %2808 = vmatprep.subr.mxu0 0.0
  %2809 = vmatpush1.xpose.msra.mxu0 0.0
  %2810 = vmatprep.subr.mxu0 0.0
  %2811 = vmatpush1.xpose.msra.mxu0 0.0
  %2812 = vmatprep.mubr.f32.mxu0 0.0
  %2813 = vmatmul.mubr.f32.gmra.mrb[0].mxu0 %v2742
  %v2814 = vpop.f32.mrb[0].mxu0
  %v2815 = vadd.f32 0.0, %v2814
  %v2816 = vpop.f32.mrb[0].mxu0
  %2817 = vmatprep.mubr.f32.mxu0 0.0
  %2818 = vmatmul.mubr.f32.gmra.mrb[0].mxu0 %v2744
  %v2819 = vpop.f32.mrb[0].mxu0
  %v2820 = vadd.f32 0.0, %v2819
  %v2821 = vpop.f32.mrb[0].mxu0
  %2822 = vdwg.mxu0
  %v2823 = vmul.f32 %v2815, 0.35355338
  %v2824 = vmul.f32 %v2820, 0.35355338
  %v2825 = vadd.f32 %v2823, %v1897
  %v2826 = vadd.f32 %v2824, %v1898
  %v2827 = vsel %vm952, %v2825, -inf
  %2828 = vmax.xlane.f32.xlu0 %v2827
  %v2829 = vpop.xlane.xlu0 %2828
  %v2830 = vsel %vm952, %v2826, -inf
  %2831 = vmax.xlane.f32.xlu0 %v2830
  %v2832 = vpop.xlane.xlu0 %2831
  %v2833 = vsub.f32 %v2825, %v2829
  %v2834 = vsub.f32 %v2826, %v2832
  %v2835 = vmul.f32 %v2833, 1.442695
  %v2836 = vpow.pop %v2835
  %v2837 = vmul.f32 %v2834, 1.442695
  %v2838 = vpow.pop %v2837
  %v2839 = vsel %vm952, %v2836, 0.0
  %2840 = vadd.xlane.f32.xlu0 %v2839
  %v2841 = vpop.xlane.xlu0 %2840
  %v2842 = vsel %vm952, %v2838, 0.0
  %2843 = vadd.xlane.f32.xlu0 %v2842
  %v2844 = vpop.xlane.xlu0 %2843
  %v2845 = vrcp.pop %v2841
  %v2846 = vrcp.pop %v2844
  %v2847 = vmul.f32 %v2836, %v2845
  %v2848 = vmul.f32 %v2838, %v2846
  %2849 = vrot.lane.b32.xlu0 %v1894, 72
  %v2850 = vpop.permute.xlu0 %2849
  %v2853 = vsel %vm952, %v2847, 0
  %v2856 = vsel %vm952, %v2848, 0
  %2858 = vmatprep.subr.mxu0 0.0
  %2859 = vmatpush1.msra.mxu0 %v2850
  %2860 = vmatprep.subr.mxu0 0.0
  %2861 = vmatpush1.msra.mxu0 0.0
  %2862 = vmatprep.subr.mxu0 0.0
  %2863 = vmatpush1.msra.mxu0 0.0
  %2864 = vmatprep.subr.mxu0 0.0
  %2865 = vmatpush1.msra.mxu0 0.0
  %2866 = vmatprep.subr.mxu0 0.0
  %2867 = vmatpush1.msra.mxu0 0.0
  %2868 = vmatprep.subr.mxu0 0.0
  %2869 = vmatpush1.msra.mxu0 0.0
  %2870 = vmatprep.subr.mxu0 0.0
  %2871 = vmatpush1.msra.mxu0 0.0
  %2872 = vmatprep.subr.mxu0 0.0
  %2873 = vmatpush1.msra.mxu0 0.0
  %2874 = vmatprep.subr.mxu0 0.0
  %2875 = vmatpush1.msra.mxu0 0.0
  %2876 = vmatprep.subr.mxu0 0.0
  %2877 = vmatpush1.msra.mxu0 0.0
  %2878 = vmatprep.subr.mxu0 0.0
  %2879 = vmatpush1.msra.mxu0 0.0
  %2880 = vmatprep.subr.mxu0 0.0
  %2881 = vmatpush1.msra.mxu0 0.0
  %2882 = vmatprep.subr.mxu0 0.0
  %2883 = vmatpush1.msra.mxu0 0.0
  %2884 = vmatprep.subr.mxu0 0.0
  %2885 = vmatpush1.msra.mxu0 0.0
  %2886 = vmatprep.subr.mxu0 0.0
  %2887 = vmatpush1.msra.mxu0 0.0
  %2888 = vmatprep.subr.mxu0 0.0
  %2889 = vmatpush1.msra.mxu0 0.0
  %2890 = vmatprep.subr.mxu0 0.0
  %2891 = vmatpush1.msra.mxu0 0.0
  %2892 = vmatprep.subr.mxu0 0.0
  %2893 = vmatpush1.msra.mxu0 0.0
  %2894 = vmatprep.subr.mxu0 0.0
  %2895 = vmatpush1.msra.mxu0 0.0
  %2896 = vmatprep.subr.mxu0 0.0
  %2897 = vmatpush1.msra.mxu0 0.0
  %2898 = vmatprep.subr.mxu0 0.0
  %2899 = vmatpush1.msra.mxu0 0.0
  %2900 = vmatprep.subr.mxu0 0.0
  %2901 = vmatpush1.msra.mxu0 0.0
  %2902 = vmatprep.subr.mxu0 0.0
  %2903 = vmatpush1.msra.mxu0 0.0
  %2904 = vmatprep.subr.mxu0 0.0
  %2905 = vmatpush1.msra.mxu0 0.0
  %2906 = vmatprep.subr.mxu0 0.0
  %2907 = vmatpush1.msra.mxu0 0.0
  %2908 = vmatprep.subr.mxu0 0.0
  %2909 = vmatpush1.msra.mxu0 0.0
  %2910 = vmatprep.subr.mxu0 0.0
  %2911 = vmatpush1.msra.mxu0 0.0
  %2912 = vmatprep.subr.mxu0 0.0
  %2913 = vmatpush1.msra.mxu0 0.0
  %2914 = vmatprep.subr.mxu0 0.0
  %2915 = vmatpush1.msra.mxu0 0.0
  %2916 = vmatprep.subr.mxu0 0.0
  %2917 = vmatpush1.msra.mxu0 0.0
  %2918 = vmatprep.subr.mxu0 0.0
  %2919 = vmatpush1.msra.mxu0 0.0
  %2920 = vmatprep.subr.mxu0 0.0
  %2921 = vmatpush1.msra.mxu0 0.0
  %2922 = vmatprep.mubr.f32.mxu0 0.0
  %2923 = vmatmul.mubr.f32.gmra.mrb[0].mxu0 %v2853
  %v2924 = vpop.f32.mrb[0].mxu0
  %v2925 = vadd.f32 0.0, %v2924
  %v2926 = vpop.f32.mrb[0].mxu0
  %2927 = vmatprep.mubr.f32.mxu0 0.0
  %2928 = vmatmul.mubr.f32.gmra.mrb[0].mxu0 %v2856
  %v2929 = vpop.f32.mrb[0].mxu0
  %v2930 = vadd.f32 0.0, %v2929
  %v2931 = vpop.f32.mrb[0].mxu0
  %2932 = vdwg.mxu0
  %v2934 = vsel %vm952, %v2925, 0
  %v2937 = vsel %vm952, %v2930, 0
  %2939 = vmatprep.subr.mxu0 0.0
  %2940 = vmatpush1.msra.mxu0 %v1902
  %2941 = vmatprep.subr.mxu0 0.0
  %2942 = vmatpush1.msra.mxu0 0.0
  %2943 = vmatprep.subr.mxu0 0.0
  %2944 = vmatpush1.msra.mxu0 0.0
  %2945 = vmatprep.subr.mxu0 0.0
  %2946 = vmatpush1.msra.mxu0 0.0
  %2947 = vmatprep.subr.mxu0 0.0
  %2948 = vmatpush1.msra.mxu0 0.0
  %2949 = vmatprep.subr.mxu0 0.0
  %2950 = vmatpush1.msra.mxu0 0.0
  %2951 = vmatprep.subr.mxu0 0.0
  %2952 = vmatpush1.msra.mxu0 0.0
  %2953 = vmatprep.subr.mxu0 0.0
  %2954 = vmatpush1.msra.mxu0 0.0
  %2955 = vmatprep.subr.mxu0 0.0
  %2956 = vmatpush1.msra.mxu0 0.0
  %2957 = vmatprep.subr.mxu0 0.0
  %2958 = vmatpush1.msra.mxu0 0.0
  %2959 = vmatprep.subr.mxu0 0.0
  %2960 = vmatpush1.msra.mxu0 0.0
  %2961 = vmatprep.subr.mxu0 0.0
  %2962 = vmatpush1.msra.mxu0 0.0
  %2963 = vmatprep.subr.mxu0 0.0
  %2964 = vmatpush1.msra.mxu0 0.0
  %2965 = vmatprep.subr.mxu0 0.0
  %2966 = vmatpush1.msra.mxu0 0.0
  %2967 = vmatprep.subr.mxu0 0.0
  %2968 = vmatpush1.msra.mxu0 0.0
  %2969 = vmatprep.subr.mxu0 0.0
  %2970 = vmatpush1.msra.mxu0 0.0
  %2971 = vmatprep.subr.mxu0 0.0
  %2972 = vmatpush1.msra.mxu0 0.0
  %2973 = vmatprep.subr.mxu0 0.0
  %2974 = vmatpush1.msra.mxu0 0.0
  %2975 = vmatprep.subr.mxu0 0.0
  %2976 = vmatpush1.msra.mxu0 0.0
  %2977 = vmatprep.subr.mxu0 0.0
  %2978 = vmatpush1.msra.mxu0 0.0
  %2979 = vmatprep.subr.mxu0 0.0
  %2980 = vmatpush1.msra.mxu0 0.0
  %2981 = vmatprep.subr.mxu0 0.0
  %2982 = vmatpush1.msra.mxu0 0.0
  %2983 = vmatprep.subr.mxu0 0.0
  %2984 = vmatpush1.msra.mxu0 0.0
  %2985 = vmatprep.subr.mxu0 0.0
  %2986 = vmatpush1.msra.mxu0 0.0
  %2987 = vmatprep.subr.mxu0 0.0
  %2988 = vmatpush1.msra.mxu0 0.0
  %2989 = vmatprep.subr.mxu0 0.0
  %2990 = vmatpush1.msra.mxu0 0.0
  %2991 = vmatprep.subr.mxu0 0.0
  %2992 = vmatpush1.msra.mxu0 0.0
  %2993 = vmatprep.subr.mxu0 0.0
  %2994 = vmatpush1.msra.mxu0 0.0
  %2995 = vmatprep.subr.mxu0 0.0
  %2996 = vmatpush1.msra.mxu0 0.0
  %2997 = vmatprep.subr.mxu0 0.0
  %2998 = vmatpush1.msra.mxu0 0.0
  %2999 = vmatprep.subr.mxu0 0.0
  %3000 = vmatpush1.msra.mxu0 0.0
  %3001 = vmatprep.subr.mxu0 0.0
  %3002 = vmatpush1.msra.mxu0 0.0
  %3003 = vmatprep.mubr.f32.mxu0 0.0
  %3004 = vmatmul.mubr.f32.gmra.mrb[0].mxu0 %v2934
  %v3005 = vpop.f32.mrb[0].mxu0
  %v3006 = vadd.f32 0.0, %v3005
  %v3007 = vpop.f32.mrb[0].mxu0
  %3008 = vmatprep.mubr.f32.mxu0 0.0
  %3009 = vmatmul.mubr.f32.gmra.mrb[0].mxu0 %v2937
  %v3010 = vpop.f32.mrb[0].mxu0
  %v3011 = vadd.f32 0.0, %v3010
  %v3012 = vpop.f32.mrb[0].mxu0
  %3013 = vdwg.mxu0
  %v3014 = vadd.f32 %v2734, %v3006
  %v3015 = vadd.f32 %v2735, %v3011
  %v3016 = vld [vmem:[%s16] sm:$0x1]
  %v3018 = vlaneseq
  %v3019 = vshrl.u32 %v3018, 7
  %v3020 = vsub.s32 0, %v3019
  %v3021 = vrot.slane %v3016, %v3020
  %v3023 = vadd.f32 %v3014, %v3021
  %v3024 = vadd.f32 %v3015, %v3021
  %v3025 = vadd.f32 %v1719, %v3023
  %v3026 = vadd.f32 %v1720, %v3024
  %v3027 = vld [vmem:[%s18] sm:$0x1]
  %v3028 = vld [vmem:[%s19] sm:$0x1]
  %v3029 = vsel %vm97, %v3025, 0.0
  %3030 = vadd.xlane.f32.xlu0 %v3029
  %v3031 = vpop.xlane.xlu0 %3030
  %v3032 = vsel %vm97, %v3026, 0.0
  %3033 = vadd.xlane.f32.xlu0 %v3032
  %v3034 = vpop.xlane.xlu0 %3033
  %v3035 = vmul.f32 %v3031, %v1684
  %v3036 = vmul.f32 %v3034, %v1684
  %v3037 = vsub.f32 %v3025, %v3035
  %v3038 = vsub.f32 %v3026, %v3036
  %v3039 = vmul.f32 %v3037, %v3037
  %v3040 = vmul.f32 %v3038, %v3038
  %v3041 = vsel %vm97, %v3039, 0.0
  %3042 = vadd.xlane.f32.xlu0 %v3041
  %v3043 = vpop.xlane.xlu0 %3042
  %v3044 = vsel %vm97, %v3040, 0.0
  %3045 = vadd.xlane.f32.xlu0 %v3044
  %v3046 = vpop.xlane.xlu0 %3045
  %v3047 = vmul.f32 %v3043, %v1684
  %v3048 = vmul.f32 %v3046, %v1684
  %v3049 = vadd.f32 %v3047, 1e-05
  %v3050 = vadd.f32 %v3048, 1e-05
  %v3051 = vrsqrt.pop %v3049
  %v3052 = vrsqrt.pop %v3050
  %v3053 = vmul.f32 %v3037, %v3051
  %v3054 = vmul.f32 %v3038, %v3052
  %v3056 = vlaneseq
  %v3057 = vshrl.u32 %v3056, 7
  %v3058 = vsub.s32 0, %v3057
  %v3059 = vrot.slane %v3027, %v3058
  %v3061 = vmul.f32 %v3053, %v3059
  %v3062 = vmul.f32 %v3054, %v3059
  %v3064 = vlaneseq
  %v3065 = vshrl.u32 %v3064, 7
  %v3066 = vsub.s32 0, %v3065
  %v3067 = vrot.slane %v3028, %v3066
  %v3069 = vadd.f32 %v3061, %v3067
  %v3070 = vadd.f32 %v3062, %v3067
  %v3071 = vld [vmem:[%s20] sm:$0xff]
  %v3072 = vld [vmem:[%s20 + $0x8] sm:$0xff]
  %v3073 = vld [vmem:[%s20 + $0x10] sm:$0xff]
  %v3074 = vld [vmem:[%s20 + $0x18] sm:$0xff]
  %v3075 = vld [vmem:[%s21] sm:$0x1]
  %v3077 = vlaneseq
  %v3078 = vshrl.u32 %v3077, 7
  %v3079 = vsub.s32 0, %v3078
  %v3080 = vrot.slane %v3075, %v3079
  %v3083 = vsel %vm97, %v3069, 0
  %v3086 = vsel %vm97, %v3070, 0
  %3088 = vmatprep.subr.mxu0 0.0
  %3089 = vmatpush1.msra.mxu0 %v3071
  %3090 = vmatprep.subr.mxu0 0.0
  %3091 = vmatpush1.msra.mxu0 %v3072
  %3092 = vmatprep.subr.mxu0 0.0
  %3093 = vmatpush1.msra.mxu0 %v3073
  %3094 = vmatprep.subr.mxu0 0.0
  %3095 = vmatpush1.msra.mxu0 %v3074
  %3096 = vmatprep.subr.mxu0 0.0
  %3097 = vmatpush1.msra.mxu0 0.0
  %3098 = vmatprep.subr.mxu0 0.0
  %3099 = vmatpush1.msra.mxu0 0.0
  %3100 = vmatprep.subr.mxu0 0.0
  %3101 = vmatpush1.msra.mxu0 0.0
  %3102 = vmatprep.subr.mxu0 0.0
  %3103 = vmatpush1.msra.mxu0 0.0
  %3104 = vmatprep.subr.mxu0 0.0
  %3105 = vmatpush1.msra.mxu0 0.0
  %3106 = vmatprep.subr.mxu0 0.0
  %3107 = vmatpush1.msra.mxu0 0.0
  %3108 = vmatprep.subr.mxu0 0.0
  %3109 = vmatpush1.msra.mxu0 0.0
  %3110 = vmatprep.subr.mxu0 0.0
  %3111 = vmatpush1.msra.mxu0 0.0
  %3112 = vmatprep.subr.mxu0 0.0
  %3113 = vmatpush1.msra.mxu0 0.0
  %3114 = vmatprep.subr.mxu0 0.0
  %3115 = vmatpush1.msra.mxu0 0.0
  %3116 = vmatprep.subr.mxu0 0.0
  %3117 = vmatpush1.msra.mxu0 0.0
  %3118 = vmatprep.subr.mxu0 0.0
  %3119 = vmatpush1.msra.mxu0 0.0
  %3120 = vmatprep.subr.mxu0 0.0
  %3121 = vmatpush1.msra.mxu0 0.0
  %3122 = vmatprep.subr.mxu0 0.0
  %3123 = vmatpush1.msra.mxu0 0.0
  %3124 = vmatprep.subr.mxu0 0.0
  %3125 = vmatpush1.msra.mxu0 0.0
  %3126 = vmatprep.subr.mxu0 0.0
  %3127 = vmatpush1.msra.mxu0 0.0
  %3128 = vmatprep.subr.mxu0 0.0
  %3129 = vmatpush1.msra.mxu0 0.0
  %3130 = vmatprep.subr.mxu0 0.0
  %3131 = vmatpush1.msra.mxu0 0.0
  %3132 = vmatprep.subr.mxu0 0.0
  %3133 = vmatpush1.msra.mxu0 0.0
  %3134 = vmatprep.subr.mxu0 0.0
  %3135 = vmatpush1.msra.mxu0 0.0
  %3136 = vmatprep.subr.mxu0 0.0
  %3137 = vmatpush1.msra.mxu0 0.0
  %3138 = vmatprep.subr.mxu0 0.0
  %3139 = vmatpush1.msra.mxu0 0.0
  %3140 = vmatprep.subr.mxu0 0.0
  %3141 = vmatpush1.msra.mxu0 0.0
  %3142 = vmatprep.subr.mxu0 0.0
  %3143 = vmatpush1.msra.mxu0 0.0
  %3144 = vmatprep.subr.mxu0 0.0
  %3145 = vmatpush1.msra.mxu0 0.0
  %3146 = vmatprep.subr.mxu0 0.0
  %3147 = vmatpush1.msra.mxu0 0.0
  %3148 = vmatprep.subr.mxu0 0.0
  %3149 = vmatpush1.msra.mxu0 0.0
  %3150 = vmatprep.subr.mxu0 0.0
  %3151 = vmatpush1.msra.mxu0 0.0
  %3152 = vmatprep.mubr.f32.mxu0 0.0
  %3153 = vmatmul.mubr.f32.gmra.mrb[0].mxu0 %v3083
  %v3154 = vpop.f32.mrb[0].mxu0
  %v3155 = vadd.f32 %v3080, %v3154
  %v3156 = vpop.f32.mrb[0].mxu0
  %3157 = vmatprep.mubr.f32.mxu0 0.0
  %3158 = vmatmul.mubr.f32.gmra.mrb[0].mxu0 %v3086
  %v3159 = vpop.f32.mrb[0].mxu0
  %v3160 = vadd.f32 %v3080, %v3159
  %v3161 = vpop.f32.mrb[0].mxu0
  %3162 = vdwg.mxu0
  %v3163 = vmul.f32 %v3155, %v3155
  %v3164 = vmul.f32 %v3160, %v3160
  %v3165 = vmul.f32 %v3155, %v3163
  %v3166 = vmul.f32 %v3160, %v3164
  %v3167 = vmul.f32 %v3165, 0.044715
  %v3168 = vmul.f32 %v3166, 0.044715
  %v3169 = vadd.f32 %v3155, %v3167
  %v3170 = vadd.f32 %v3160, %v3168
  %v3171 = vmul.f32 %v3169, 0.7978846
  %v3172 = vmul.f32 %v3170, 0.7978846
  %v3173 = vtanh.pop %v3171
  %v3174 = vtanh.pop %v3172
  %v3175 = vadd.f32 %v3173, 1.0
  %v3176 = vadd.f32 %v3174, 1.0
  %v3177 = vmul.f32 %v3175, 0.5
  %v3178 = vmul.f32 %v3176, 0.5
  %v3179 = vmul.f32 %v3155, %v3177
  %v3180 = vmul.f32 %v3160, %v3178
  %v3181 = vld [vmem:[%s22] sm:$0xff]
  %v3182 = vld [vmem:[%s22 + $0x8] sm:$0xff]
  %v3183 = vld [vmem:[%s22 + $0x10] sm:$0xff]
  %v3184 = vld [vmem:[%s22 + $0x18] sm:$0xff]
  %v3185 = vld [vmem:[%s22 + $0x20] sm:$0xff]
  %v3186 = vld [vmem:[%s22 + $0x28] sm:$0xff]
  %v3187 = vld [vmem:[%s22 + $0x30] sm:$0xff]
  %v3188 = vld [vmem:[%s22 + $0x38] sm:$0xff]
  %v3189 = vld [vmem:[%s23] sm:$0x1]
  %v3191 = vlaneseq
  %v3192 = vshrl.u32 %v3191, 7
  %v3193 = vsub.s32 0, %v3192
  %v3194 = vrot.slane %v3189, %v3193
  %v3197 = vsel %vm527, %v3179, 0
  %v3200 = vsel %vm527, %v3180, 0
  %3202 = vmatprep.subr.mxu0 0.0
  %3203 = vmatpush1.msra.mxu0 %v3181
  %3204 = vmatprep.subr.mxu0 0.0
  %3205 = vmatpush1.msra.mxu0 %v3182
  %3206 = vmatprep.subr.mxu0 0.0
  %3207 = vmatpush1.msra.mxu0 %v3183
  %3208 = vmatprep.subr.mxu0 0.0
  %3209 = vmatpush1.msra.mxu0 %v3184
  %3210 = vmatprep.subr.mxu0 0.0
  %3211 = vmatpush1.msra.mxu0 %v3185
  %3212 = vmatprep.subr.mxu0 0.0
  %3213 = vmatpush1.msra.mxu0 %v3186
  %3214 = vmatprep.subr.mxu0 0.0
  %3215 = vmatpush1.msra.mxu0 %v3187
  %3216 = vmatprep.subr.mxu0 0.0
  %3217 = vmatpush1.msra.mxu0 %v3188
  %3218 = vmatprep.subr.mxu0 0.0
  %3219 = vmatpush1.msra.mxu0 0.0
  %3220 = vmatprep.subr.mxu0 0.0
  %3221 = vmatpush1.msra.mxu0 0.0
  %3222 = vmatprep.subr.mxu0 0.0
  %3223 = vmatpush1.msra.mxu0 0.0
  %3224 = vmatprep.subr.mxu0 0.0
  %3225 = vmatpush1.msra.mxu0 0.0
  %3226 = vmatprep.subr.mxu0 0.0
  %3227 = vmatpush1.msra.mxu0 0.0
  %3228 = vmatprep.subr.mxu0 0.0
  %3229 = vmatpush1.msra.mxu0 0.0
  %3230 = vmatprep.subr.mxu0 0.0
  %3231 = vmatpush1.msra.mxu0 0.0
  %3232 = vmatprep.subr.mxu0 0.0
  %3233 = vmatpush1.msra.mxu0 0.0
  %3234 = vmatprep.subr.mxu0 0.0
  %3235 = vmatpush1.msra.mxu0 0.0
  %3236 = vmatprep.subr.mxu0 0.0
  %3237 = vmatpush1.msra.mxu0 0.0
  %3238 = vmatprep.subr.mxu0 0.0
  %3239 = vmatpush1.msra.mxu0 0.0
  %3240 = vmatprep.subr.mxu0 0.0
  %3241 = vmatpush1.msra.mxu0 0.0
  %3242 = vmatprep.subr.mxu0 0.0
  %3243 = vmatpush1.msra.mxu0 0.0
  %3244 = vmatprep.subr.mxu0 0.0
  %3245 = vmatpush1.msra.mxu0 0.0
  %3246 = vmatprep.subr.mxu0 0.0
  %3247 = vmatpush1.msra.mxu0 0.0
  %3248 = vmatprep.subr.mxu0 0.0
  %3249 = vmatpush1.msra.mxu0 0.0
  %3250 = vmatprep.subr.mxu0 0.0
  %3251 = vmatpush1.msra.mxu0 0.0
  %3252 = vmatprep.subr.mxu0 0.0
  %3253 = vmatpush1.msra.mxu0 0.0
  %3254 = vmatprep.subr.mxu0 0.0
  %3255 = vmatpush1.msra.mxu0 0.0
  %3256 = vmatprep.subr.mxu0 0.0
  %3257 = vmatpush1.msra.mxu0 0.0
  %3258 = vmatprep.subr.mxu0 0.0
  %3259 = vmatpush1.msra.mxu0 0.0
  %3260 = vmatprep.subr.mxu0 0.0
  %3261 = vmatpush1.msra.mxu0 0.0
  %3262 = vmatprep.subr.mxu0 0.0
  %3263 = vmatpush1.msra.mxu0 0.0
  %3264 = vmatprep.subr.mxu0 0.0
  %3265 = vmatpush1.msra.mxu0 0.0
  %3266 = vmatprep.mubr.f32.mxu0 0.0
  %3267 = vmatmul.mubr.f32.gmra.mrb[0].mxu0 %v3197
  %v3268 = vpop.f32.mrb[0].mxu0
  %v3269 = vadd.f32 %v3194, %v3268
  %v3270 = vpop.f32.mrb[0].mxu0
  %3271 = vmatprep.mubr.f32.mxu0 0.0
  %3272 = vmatmul.mubr.f32.gmra.mrb[0].mxu0 %v3200
  %v3273 = vpop.f32.mrb[0].mxu0
  %v3274 = vadd.f32 %v3194, %v3273
  %v3275 = vpop.f32.mrb[0].mxu0
  %3276 = vdwg.mxu0
  %v3277 = vadd.f32 %v3069, %v3269
  %v3278 = vadd.f32 %v3070, %v3274
  %v3279 = vld [vmem:[%s24] sm:$0x1]
  %v3280 = vld [vmem:[%s25] sm:$0x1]
  %v3281 = vsel %vm97, %v3277, 0.0
  %3282 = vadd.xlane.f32.xlu0 %v3281
  %v3283 = vpop.xlane.xlu0 %3282
  %v3284 = vsel %vm97, %v3278, 0.0
  %3285 = vadd.xlane.f32.xlu0 %v3284
  %v3286 = vpop.xlane.xlu0 %3285
  %v3287 = vmul.f32 %v3283, %v1684
  %v3288 = vmul.f32 %v3286, %v1684
  %v3289 = vsub.f32 %v3277, %v3287
  %v3290 = vsub.f32 %v3278, %v3288
  %v3291 = vmul.f32 %v3289, %v3289
  %v3292 = vmul.f32 %v3290, %v3290
  %v3293 = vsel %vm97, %v3291, 0.0
  %3294 = vadd.xlane.f32.xlu0 %v3293
  %v3295 = vpop.xlane.xlu0 %3294
  %v3296 = vsel %vm97, %v3292, 0.0
  %3297 = vadd.xlane.f32.xlu0 %v3296
  %v3298 = vpop.xlane.xlu0 %3297
  %v3299 = vmul.f32 %v3295, %v1684
  %v3300 = vmul.f32 %v3298, %v1684
  %v3301 = vadd.f32 %v3299, 1e-05
  %v3302 = vadd.f32 %v3300, 1e-05
  %v3303 = vrsqrt.pop %v3301
  %v3304 = vrsqrt.pop %v3302
  %v3305 = vmul.f32 %v3289, %v3303
  %v3306 = vmul.f32 %v3290, %v3304
  %v3308 = vlaneseq
  %v3309 = vshrl.u32 %v3308, 7
  %v3310 = vsub.s32 0, %v3309
  %v3311 = vrot.slane %v3279, %v3310
  %v3313 = vmul.f32 %v3305, %v3311
  %v3314 = vmul.f32 %v3306, %v3311
  %v3316 = vlaneseq
  %v3317 = vshrl.u32 %v3316, 7
  %v3318 = vsub.s32 0, %v3317
  %v3319 = vrot.slane %v3280, %v3318
  %v3321 = vadd.f32 %v3313, %v3319
  %v3322 = vadd.f32 %v3314, %v3319
  %3323 = vst.msk [vmem:[%s26] sm:$0xff] %vm97, %v3321
  %3324 = vst.msk [vmem:[%s26 + $0x8] sm:$0xff] %vm97, %v3322
  // Predicated region
  $region106: #{_lambda_.14} parent=0 // pred_check
    _
  $region107: #{_lambda_.14} parent=0 // pred_check_branch
    %3326 = sbr.rel (0) target = $region109
  $region108: #{_lambda_.14} parent=0 // pred_region
    _
  $region109: #{_lambda_.14} parent=0 // pred_fallthru
    _
  // Predicated region
  $region110: #{_lambda_.14} parent=0 // pred_check
    _
  $region111: #{_lambda_.14} parent=0 // pred_check_branch
    %3328 = sbr.rel (0) target = $region113
  $region112: #{_lambda_.14} parent=0 // pred_region
    _
  $region113: #{_lambda_.14} parent=0 // pred_fallthru
    _

</llo_original>
